<compile_context>
chip_gen: v7x
topology: tpu7x:2x2x1
jax: 0.10.0
libtpu: 0.0.40
codegen_flags: <defaults>
</compile_context>

<pallas_src>
import functools

import jax
import jax.numpy as jnp
from jax.experimental import pallas as pl
from jax.experimental.pallas import tpu as pltpu


def _round_up(x, m):
    return (x + m - 1) // m * m


# ----------------------------------------------------------------------------
# Fused tiled matmul kernel:  y = act(x @ w + b)
#   grid = (rows // TM, K // TK), f32 accumulator in VMEM scratch.
# ----------------------------------------------------------------------------
def _matmul_fused_kernel(x_ref, w_ref, b_ref, o_ref, acc_ref, *, activation):
    @pl.when(pl.program_id(1) == 0)
    def _init():
        acc_ref[...] = jnp.zeros_like(acc_ref)

    acc_ref[...] += jnp.dot(x_ref[...], w_ref[...],
                            preferred_element_type=jnp.float32)

    @pl.when(pl.program_id(1) == pl.num_programs(1) - 1)
    def _finalize():
        y = acc_ref[...] + b_ref[...]
        if activation == "relu":
            y = jnp.maximum(y, 0.0)
        elif activation == "tanh":
            y = jnp.tanh(y)
        o_ref[...] = y.astype(o_ref.dtype)


_TM_MAX = 256     # row tile
_TK_MAX = 2048    # reduction tile


def matmul_bias_act(x, w, b, *, activation="none", out_dtype=jnp.float32):
    """act(x @ w + b) with x:[M,K] (bf16), w:[K,Cout] (bf16), b:[1,Cout] (f32)."""
    M, K = x.shape
    K2, Cout = w.shape
    assert K == K2, (K, K2)

    # --- row (M) tiling --------------------------------------------------
    if M <= _TM_MAX:
        TM = _round_up(max(M, 1), 8)
        Mp = TM
    else:
        TM = _TM_MAX
        Mp = _round_up(M, TM)

    # --- reduction (K) tiling --------------------------------------------
    if K <= _TK_MAX:
        TK, Kp = K, K
    else:
        Kp = _round_up(K, 128)
        units = Kp // 128
        d = max(d for d in range(1, units + 1)
                if units % d == 0 and d * 128 <= _TK_MAX)
        TK = d * 128

    if (Mp, Kp) != (M, K):
        x = jnp.pad(x, ((0, Mp - M), (0, Kp - K)))
    if Kp != K:
        w = jnp.pad(w, ((0, Kp - K), (0, 0)))

    grid = (Mp // TM, Kp // TK)
    kernel = functools.partial(_matmul_fused_kernel, activation=activation)

    out = pl.pallas_call(
        kernel,
        out_shape=jax.ShapeDtypeStruct((Mp, Cout), out_dtype),
        grid_spec=pltpu.PrefetchScalarGridSpec(
            num_scalar_prefetch=0,
            grid=grid,
            in_specs=[
                pl.BlockSpec((TM, TK), lambda i, k: (i, k)),
                pl.BlockSpec((TK, Cout), lambda i, k: (k, 0)),
                pl.BlockSpec((1, Cout), lambda i, k: (0, 0)),
            ],
            out_specs=pl.BlockSpec((TM, Cout), lambda i, k: (i, 0)),
            scratch_shapes=[pltpu.VMEM((TM, Cout), jnp.float32)],
        ),
        compiler_params=pltpu.CompilerParams(
            dimension_semantics=("parallel", "arbitrary"),
            vmem_limit_bytes=32 * 1024 * 1024,
        ),
    )(x, w, b)
    return out[:M]


# ----------------------------------------------------------------------------
# im2col: NHWC -> [N*Ho*Wo, k*k*C] patch matrix (zero padding, stride).
# ----------------------------------------------------------------------------
def _im2col(x_nhwc, k, stride, pad):
    n, h, w, c = x_nhwc.shape
    xp = jnp.pad(x_nhwc, ((0, 0), (pad, pad), (pad, pad), (0, 0)))
    ho = (h + 2 * pad - k) // stride + 1
    wo = (w + 2 * pad - k) // stride + 1
    cols = []
    for kh in range(k):
        for kw in range(k):
            cols.append(xp[:, kh:kh + stride * ho:stride,
                           kw:kw + stride * wo:stride, :])
    patches = jnp.concatenate(cols, axis=-1)          # [N, Ho, Wo, k*k*C]
    return patches.reshape(n * ho * wo, k * k * c), ho, wo


# ----------------------------------------------------------------------------
# FeatureRegression module.
# ----------------------------------------------------------------------------
class FeatureRegressionPallas:
    def __init__(self, in_channels=512, out_channels=6,
                 inter_channels=(512, 256, 128, 64), seed=0):
        self.out_channels = out_channels
        self._conv_cfg = [(4, 2, 1), (4, 2, 1), (3, 1, 1), (3, 1, 1)]
        chans = [in_channels] + list(inter_channels)
        eps = 1e-5

        key = jax.random.PRNGKey(seed)
        self.params = []
        for li, (k, s, p) in enumerate(self._conv_cfg):
            cin, cout = chans[li], chans[li + 1]
            key, kw_, kg_ = jax.random.split(key, 3)
            # init matching init_weights(): conv ~ N(0, 0.02), BN gamma ~ N(1, 0.02)
            w = 0.02 * jax.random.normal(kw_, (k, k, cin, cout), jnp.float32)
            conv_b = jnp.zeros((cout,), jnp.float32)
            gamma = 1.0 + 0.02 * jax.random.normal(kg_, (cout,), jnp.float32)
            beta = jnp.zeros((cout,), jnp.float32)
            run_mean = jnp.zeros((cout,), jnp.float32)
            run_var = jnp.ones((cout,), jnp.float32)
            # fold eval-mode BatchNorm into conv weight / bias
            scale = gamma / jnp.sqrt(run_var + eps)
            w_fold = (w * scale).reshape(k * k * cin, cout)
            b_fold = beta + scale * (conv_b - run_mean)
            self.params.append(dict(
                w=w_fold.astype(jnp.bfloat16),
                b=b_fold.reshape(1, cout).astype(jnp.float32),
                k=k, stride=s, pad=p))

        # final Linear (+ tanh); pad output width to 128 for lane-dense stores
        lin_in = inter_channels[3] * 4 * 3
        self._out_pad = max(_round_up(out_channels, 128), 128)
        key, kl = jax.random.split(key)
        wl = 0.02 * jax.random.normal(kl, (lin_in, out_channels), jnp.float32)
        bl = jnp.zeros((out_channels,), jnp.float32)
        wl = jnp.pad(wl, ((0, 0), (0, self._out_pad - out_channels)))
        bl = jnp.pad(bl, (0, self._out_pad - out_channels))
        self.w_lin = wl.astype(jnp.bfloat16)
        self.b_lin = bl.reshape(1, self._out_pad).astype(jnp.float32)

        self._forward = jax.jit(self._forward_impl)

    # ---- forward ---------------------------------------------------------
    def _forward_impl(self, x_nchw):
        # single NCHW -> NHWC relayout; channels ride the 128-lane axis from here
        x = jnp.transpose(x_nchw, (0, 2, 3, 1)).astype(jnp.bfloat16)
        n = x.shape[0]
        for p in self.params:
            cols, ho, wo = _im2col(x, p["k"], p["stride"], p["pad"])
            cout = p["w"].shape[1]
            y = matmul_bias_act(cols, p["w"], p["b"],
                                activation="relu", out_dtype=jnp.bfloat16)
            x = y.reshape(n, ho, wo, cout)
        # flatten in PyTorch's NCHW order (matches nn.Linear weight layout)
        feat = jnp.transpose(x, (0, 3, 1, 2)).reshape(n, -1)
        out = matmul_bias_act(feat, self.w_lin, self.b_lin,
                              activation="tanh", out_dtype=jnp.float32)
        return out[:, :self.out_channels]

    def forward(self, x):
        return self._forward(x)

    __call__ = forward

    def init_weights(self, pretrained=None):
        if pretrained is not None:
            # TODO(synk): load_checkpoint from file not implemented.
            print("load model from: {}".format(pretrained))


# ----------------------------------------------------------------------------
# Pure-JAX reference (f32) for a correctness check.
# ----------------------------------------------------------------------------
def _reference_forward(model, x_nchw):
    x = jnp.transpose(x_nchw, (0, 2, 3, 1)).astype(jnp.float32)
    for p in model.params:
        k = p["k"]
        cout = p["w"].shape[1]
        w = p["w"].astype(jnp.float32).reshape(k, k, -1, cout)
        x = jax.lax.conv_general_dilated(
            x, w, window_strides=(p["stride"], p["stride"]),
            padding=[(p["pad"], p["pad"]), (p["pad"], p["pad"])],
            dimension_numbers=("NHWC", "HWIO", "NHWC"))
        x = jnp.maximum(x + p["b"].reshape(1, 1, 1, -1), 0.0)
    n = x.shape[0]
    feat = jnp.transpose(x, (0, 3, 1, 2)).reshape(n, -1)
    out = jnp.tanh(feat @ model.w_lin.astype(jnp.float32) + model.b_lin)
    return out[:, :model.out_channels]


if __name__ == "__main__":
    key = jax.random.PRNGKey(0)
    # Module defaults: Conv stack reduces 16x12 -> 4x3, Linear(64*4*3 -> 6).
    N, C, H, W = 2, 512, 16, 12
    x = jax.random.normal(key, (N, C, H, W), jnp.float32)

    model = FeatureRegressionPallas(in_channels=C, out_channels=6,
                                    inter_channels=(512, 256, 128, 64), seed=0)

    y = model(x)
    y = jax.block_until_ready(y)
    assert y.shape == (N, 6), y.shape

    y_ref = jax.block_until_ready(_reference_forward(model, x))
    max_err = float(jnp.max(jnp.abs(y - y_ref)))
    assert max_err < 5e-2, f"mismatch vs reference: {max_err}"

    print("KERNEL_OK")
</pallas_src>

<mosaic_0001>
module attributes {stable_mosaic.version = 11 : i64} {
  func.func @_matmul_fused_kernel(%arg0: i32, %arg1: i32, %arg2: memref<96x2048xbf16, #tpu.memory_space<vmem>>, %arg3: memref<2048x512xbf16, #tpu.memory_space<vmem>>, %arg4: memref<1x512xf32, #tpu.memory_space<vmem>>, %arg5: memref<96x512xbf16, #tpu.memory_space<vmem>>, %arg6: memref<96x512xf32, #tpu.memory_space<vmem>>) attributes {dimension_semantics = [#tpu.dimension_semantics<parallel>, #tpu.dimension_semantics<arbitrary>], iteration_bounds = array<i64: 1, 4>, scalar_prefetch = 0 : i64, scratch_operands = 1 : i64, tpu.core_type = #tpu.core_type<tc>, window_params = [{transform_indices = @transform_0, window_bounds = array<i64: 96, 2048>}, {transform_indices = @transform_1, window_bounds = array<i64: 2048, 512>}, {pipeline_mode = #tpu.pipeline_mode<synchronous>, transform_indices = @transform_2, window_bounds = array<i64: 1, 512>}, {transform_indices = @transform_3, window_bounds = array<i64: 96, 512>}]} {
    %c0_i32 = arith.constant 0 : i32
    %0 = arith.cmpi eq, %arg1, %c0_i32 : i32
    %1 = arith.extui %0 : i1 to i32
    %c0_i32_0 = arith.constant 0 : i32
    %2 = arith.cmpi ne, %1, %c0_i32_0 : i32
    scf.if %2 {
      %cst_9 = arith.constant 0.000000e+00 : f32
      %12 = vector.broadcast %cst_9 : f32 to vector<96x512xf32>
      %c0_10 = arith.constant 0 : index
      %c0_11 = arith.constant 0 : index
      %13 = vector.load %arg6[%c0_10, %c0_11] : memref<96x512xf32, #tpu.memory_space<vmem>>, vector<96x512xf32>
      tpu.vector_store %arg6[%c0_10, %c0_11], %12 {strides = array<i32>} : memref<96x512xf32, #tpu.memory_space<vmem>>, vector<96x512xf32>,
    } else {
    }
    %c0 = arith.constant 0 : index
    %c0_1 = arith.constant 0 : index
    %3 = vector.load %arg6[%c0, %c0_1] : memref<96x512xf32, #tpu.memory_space<vmem>>, vector<96x512xf32>
    %c0_2 = arith.constant 0 : index
    %c0_3 = arith.constant 0 : index
    %4 = vector.load %arg2[%c0_2, %c0_3] : memref<96x2048xbf16, #tpu.memory_space<vmem>>, vector<96x2048xbf16>
    %c0_4 = arith.constant 0 : index
    %c0_5 = arith.constant 0 : index
    %5 = vector.load %arg3[%c0_4, %c0_5] : memref<2048x512xbf16, #tpu.memory_space<vmem>>, vector<2048x512xbf16>
    %cst = arith.constant dense<0.000000e+00> : vector<96x512xf32>
    %6 = tpu.matmul %4, %5, %cst {dimension_numbers = #tpu.dot_dimension_numbers<[1], [0], [0], [1], [0, 0, 1, 1], [], []>} : vector<96x2048xbf16>, vector<2048x512xbf16>, vector<96x512xf32> -> vector<96x512xf32>
    %7 = arith.addf %3, %6 : vector<96x512xf32>
    %c0_6 = arith.constant 0 : index
    %c0_7 = arith.constant 0 : index
    %8 = vector.load %arg6[%c0_6, %c0_7] : memref<96x512xf32, #tpu.memory_space<vmem>>, vector<96x512xf32>
    tpu.vector_store %arg6[%c0_6, %c0_7], %7 {strides = array<i32>} : memref<96x512xf32, #tpu.memory_space<vmem>>, vector<96x512xf32>,
    %c3_i32 = arith.constant 3 : i32
    %9 = arith.cmpi eq, %arg1, %c3_i32 : i32
    %10 = arith.extui %9 : i1 to i32
    %c0_i32_8 = arith.constant 0 : i32
    %11 = arith.cmpi ne, %10, %c0_i32_8 : i32
    scf.if %11 {
      %c0_9 = arith.constant 0 : index
      %c0_10 = arith.constant 0 : index
      %12 = vector.load %arg6[%c0_9, %c0_10] : memref<96x512xf32, #tpu.memory_space<vmem>>, vector<96x512xf32>
      %c0_11 = arith.constant 0 : index
      %c0_12 = arith.constant 0 : index
      %13 = vector.load %arg4[%c0_11, %c0_12] : memref<1x512xf32, #tpu.memory_space<vmem>>, vector<1x512xf32>
      %14 = vector.broadcast %13 : vector<1x512xf32> to vector<96x512xf32>
      %15 = arith.addf %12, %14 : vector<96x512xf32>
      %cst_13 = arith.constant 0.000000e+00 : f32
      %16 = vector.broadcast %cst_13 : f32 to vector<96x512xf32>
      %17 = arith.maximumf %15, %16 : vector<96x512xf32>
      %18 = arith.truncf %17 : vector<96x512xf32> to vector<96x512xbf16>
      %c0_14 = arith.constant 0 : index
      %c0_15 = arith.constant 0 : index
      %19 = vector.load %arg5[%c0_14, %c0_15] : memref<96x512xbf16, #tpu.memory_space<vmem>>, vector<96x512xbf16>
      tpu.vector_store %arg5[%c0_14, %c0_15], %18 {strides = array<i32>} : memref<96x512xbf16, #tpu.memory_space<vmem>>, vector<96x512xbf16>,
    } else {
    }
    return
  }
  func.func @transform_0(%arg0: i32, %arg1: i32) -> (i32, i32) {
    %c0_i32 = arith.constant 0 : i32
    return %arg0, %arg1 : i32, i32
  }
  func.func @transform_1(%arg0: i32, %arg1: i32) -> (i32, i32) {
    %c0_i32 = arith.constant 0 : i32
    %c0_i32_0 = arith.constant 0 : i32
    return %arg1, %c0_i32 : i32, i32
  }
  func.func @transform_2(%arg0: i32, %arg1: i32) -> (i32, i32) {
    %c0_i32 = arith.constant 0 : i32
    %c0_i32_0 = arith.constant 0 : i32
    %c0_i32_1 = arith.constant 0 : i32
    return %c0_i32, %c0_i32_0 : i32, i32
  }
  func.func @transform_3(%arg0: i32, %arg1: i32) -> (i32, i32) {
    %c0_i32 = arith.constant 0 : i32
    %c0_i32_0 = arith.constant 0 : i32
    return %arg0, %c0_i32 : i32, i32
  }
}

module attributes {stable_mosaic.version = 11 : i64} {
  func.func @_matmul_fused_kernel(%arg0: i32, %arg1: i32, %arg2: memref<24x2048xbf16, #tpu.memory_space<vmem>>, %arg3: memref<2048x256xbf16, #tpu.memory_space<vmem>>, %arg4: memref<1x256xf32, #tpu.memory_space<vmem>>, %arg5: memref<24x256xbf16, #tpu.memory_space<vmem>>, %arg6: memref<24x256xf32, #tpu.memory_space<vmem>>) attributes {dimension_semantics = [#tpu.dimension_semantics<parallel>, #tpu.dimension_semantics<arbitrary>], iteration_bounds = array<i64: 1, 4>, scalar_prefetch = 0 : i64, scratch_operands = 1 : i64, tpu.core_type = #tpu.core_type<tc>, window_params = [{transform_indices = @transform_0, window_bounds = array<i64: 24, 2048>}, {transform_indices = @transform_1, window_bounds = array<i64: 2048, 256>}, {pipeline_mode = #tpu.pipeline_mode<synchronous>, transform_indices = @transform_2, window_bounds = array<i64: 1, 256>}, {transform_indices = @transform_3, window_bounds = array<i64: 24, 256>}]} {
    %c0_i32 = arith.constant 0 : i32
    %0 = arith.cmpi eq, %arg1, %c0_i32 : i32
    %1 = arith.extui %0 : i1 to i32
    %c0_i32_0 = arith.constant 0 : i32
    %2 = arith.cmpi ne, %1, %c0_i32_0 : i32
    scf.if %2 {
      %cst_9 = arith.constant 0.000000e+00 : f32
      %12 = vector.broadcast %cst_9 : f32 to vector<24x256xf32>
      %c0_10 = arith.constant 0 : index
      %c0_11 = arith.constant 0 : index
      %13 = vector.load %arg6[%c0_10, %c0_11] : memref<24x256xf32, #tpu.memory_space<vmem>>, vector<24x256xf32>
      tpu.vector_store %arg6[%c0_10, %c0_11], %12 {strides = array<i32>} : memref<24x256xf32, #tpu.memory_space<vmem>>, vector<24x256xf32>,
    } else {
    }
    %c0 = arith.constant 0 : index
    %c0_1 = arith.constant 0 : index
    %3 = vector.load %arg6[%c0, %c0_1] : memref<24x256xf32, #tpu.memory_space<vmem>>, vector<24x256xf32>
    %c0_2 = arith.constant 0 : index
    %c0_3 = arith.constant 0 : index
    %4 = vector.load %arg2[%c0_2, %c0_3] : memref<24x2048xbf16, #tpu.memory_space<vmem>>, vector<24x2048xbf16>
    %c0_4 = arith.constant 0 : index
    %c0_5 = arith.constant 0 : index
    %5 = vector.load %arg3[%c0_4, %c0_5] : memref<2048x256xbf16, #tpu.memory_space<vmem>>, vector<2048x256xbf16>
    %cst = arith.constant dense<0.000000e+00> : vector<24x256xf32>
    %6 = tpu.matmul %4, %5, %cst {dimension_numbers = #tpu.dot_dimension_numbers<[1], [0], [0], [1], [0, 0, 1, 1], [], []>} : vector<24x2048xbf16>, vector<2048x256xbf16>, vector<24x256xf32> -> vector<24x256xf32>
    %7 = arith.addf %3, %6 : vector<24x256xf32>
    %c0_6 = arith.constant 0 : index
    %c0_7 = arith.constant 0 : index
    %8 = vector.load %arg6[%c0_6, %c0_7] : memref<24x256xf32, #tpu.memory_space<vmem>>, vector<24x256xf32>
    tpu.vector_store %arg6[%c0_6, %c0_7], %7 {strides = array<i32>} : memref<24x256xf32, #tpu.memory_space<vmem>>, vector<24x256xf32>,
    %c3_i32 = arith.constant 3 : i32
    %9 = arith.cmpi eq, %arg1, %c3_i32 : i32
    %10 = arith.extui %9 : i1 to i32
    %c0_i32_8 = arith.constant 0 : i32
    %11 = arith.cmpi ne, %10, %c0_i32_8 : i32
    scf.if %11 {
      %c0_9 = arith.constant 0 : index
      %c0_10 = arith.constant 0 : index
      %12 = vector.load %arg6[%c0_9, %c0_10] : memref<24x256xf32, #tpu.memory_space<vmem>>, vector<24x256xf32>
      %c0_11 = arith.constant 0 : index
      %c0_12 = arith.constant 0 : index
      %13 = vector.load %arg4[%c0_11, %c0_12] : memref<1x256xf32, #tpu.memory_space<vmem>>, vector<1x256xf32>
      %14 = vector.broadcast %13 : vector<1x256xf32> to vector<24x256xf32>
      %15 = arith.addf %12, %14 : vector<24x256xf32>
      %cst_13 = arith.constant 0.000000e+00 : f32
      %16 = vector.broadcast %cst_13 : f32 to vector<24x256xf32>
      %17 = arith.maximumf %15, %16 : vector<24x256xf32>
      %18 = arith.truncf %17 : vector<24x256xf32> to vector<24x256xbf16>
      %c0_14 = arith.constant 0 : index
      %c0_15 = arith.constant 0 : index
      %19 = vector.load %arg5[%c0_14, %c0_15] : memref<24x256xbf16, #tpu.memory_space<vmem>>, vector<24x256xbf16>
      tpu.vector_store %arg5[%c0_14, %c0_15], %18 {strides = array<i32>} : memref<24x256xbf16, #tpu.memory_space<vmem>>, vector<24x256xbf16>,
    } else {
    }
    return
  }
  func.func @transform_0(%arg0: i32, %arg1: i32) -> (i32, i32) {
    %c0_i32 = arith.constant 0 : i32
    return %arg0, %arg1 : i32, i32
  }
  func.func @transform_1(%arg0: i32, %arg1: i32) -> (i32, i32) {
    %c0_i32 = arith.constant 0 : i32
    %c0_i32_0 = arith.constant 0 : i32
    return %arg1, %c0_i32 : i32, i32
  }
  func.func @transform_2(%arg0: i32, %arg1: i32) -> (i32, i32) {
    %c0_i32 = arith.constant 0 : i32
    %c0_i32_0 = arith.constant 0 : i32
    %c0_i32_1 = arith.constant 0 : i32
    return %c0_i32, %c0_i32_0 : i32, i32
  }
  func.func @transform_3(%arg0: i32, %arg1: i32) -> (i32, i32) {
    %c0_i32 = arith.constant 0 : i32
    %c0_i32_0 = arith.constant 0 : i32
    return %arg0, %c0_i32 : i32, i32
  }
}

module attributes {stable_mosaic.version = 11 : i64} {
  func.func @_matmul_fused_kernel(%arg0: i32, %arg1: i32, %arg2: memref<24x1152xbf16, #tpu.memory_space<vmem>>, %arg3: memref<1152x128xbf16, #tpu.memory_space<vmem>>, %arg4: memref<1x128xf32, #tpu.memory_space<vmem>>, %arg5: memref<24x128xbf16, #tpu.memory_space<vmem>>, %arg6: memref<24x128xf32, #tpu.memory_space<vmem>>) attributes {dimension_semantics = [#tpu.dimension_semantics<parallel>, #tpu.dimension_semantics<arbitrary>], iteration_bounds = array<i64: 1, 2>, scalar_prefetch = 0 : i64, scratch_operands = 1 : i64, tpu.core_type = #tpu.core_type<tc>, window_params = [{transform_indices = @transform_0, window_bounds = array<i64: 24, 1152>}, {transform_indices = @transform_1, window_bounds = array<i64: 1152, 128>}, {pipeline_mode = #tpu.pipeline_mode<synchronous>, transform_indices = @transform_2, window_bounds = array<i64: 1, 128>}, {transform_indices = @transform_3, window_bounds = array<i64: 24, 128>}]} {
    %c0_i32 = arith.constant 0 : i32
    %0 = arith.cmpi eq, %arg1, %c0_i32 : i32
    %1 = arith.extui %0 : i1 to i32
    %c0_i32_0 = arith.constant 0 : i32
    %2 = arith.cmpi ne, %1, %c0_i32_0 : i32
    scf.if %2 {
      %cst_9 = arith.constant 0.000000e+00 : f32
      %12 = vector.broadcast %cst_9 : f32 to vector<24x128xf32>
      %c0_10 = arith.constant 0 : index
      %c0_11 = arith.constant 0 : index
      %13 = vector.load %arg6[%c0_10, %c0_11] : memref<24x128xf32, #tpu.memory_space<vmem>>, vector<24x128xf32>
      tpu.vector_store %arg6[%c0_10, %c0_11], %12 {strides = array<i32>} : memref<24x128xf32, #tpu.memory_space<vmem>>, vector<24x128xf32>,
    } else {
    }
    %c0 = arith.constant 0 : index
    %c0_1 = arith.constant 0 : index
    %3 = vector.load %arg6[%c0, %c0_1] : memref<24x128xf32, #tpu.memory_space<vmem>>, vector<24x128xf32>
    %c0_2 = arith.constant 0 : index
    %c0_3 = arith.constant 0 : index
    %4 = vector.load %arg2[%c0_2, %c0_3] : memref<24x1152xbf16, #tpu.memory_space<vmem>>, vector<24x1152xbf16>
    %c0_4 = arith.constant 0 : index
    %c0_5 = arith.constant 0 : index
    %5 = vector.load %arg3[%c0_4, %c0_5] : memref<1152x128xbf16, #tpu.memory_space<vmem>>, vector<1152x128xbf16>
    %cst = arith.constant dense<0.000000e+00> : vector<24x128xf32>
    %6 = tpu.matmul %4, %5, %cst {dimension_numbers = #tpu.dot_dimension_numbers<[1], [0], [0], [1], [0, 0, 1, 1], [], []>} : vector<24x1152xbf16>, vector<1152x128xbf16>, vector<24x128xf32> -> vector<24x128xf32>
    %7 = arith.addf %3, %6 : vector<24x128xf32>
    %c0_6 = arith.constant 0 : index
    %c0_7 = arith.constant 0 : index
    %8 = vector.load %arg6[%c0_6, %c0_7] : memref<24x128xf32, #tpu.memory_space<vmem>>, vector<24x128xf32>
    tpu.vector_store %arg6[%c0_6, %c0_7], %7 {strides = array<i32>} : memref<24x128xf32, #tpu.memory_space<vmem>>, vector<24x128xf32>,
    %c1_i32 = arith.constant 1 : i32
    %9 = arith.cmpi eq, %arg1, %c1_i32 : i32
    %10 = arith.extui %9 : i1 to i32
    %c0_i32_8 = arith.constant 0 : i32
    %11 = arith.cmpi ne, %10, %c0_i32_8 : i32
    scf.if %11 {
      %c0_9 = arith.constant 0 : index
      %c0_10 = arith.constant 0 : index
      %12 = vector.load %arg6[%c0_9, %c0_10] : memref<24x128xf32, #tpu.memory_space<vmem>>, vector<24x128xf32>
      %c0_11 = arith.constant 0 : index
      %c0_12 = arith.constant 0 : index
      %13 = vector.load %arg4[%c0_11, %c0_12] : memref<1x128xf32, #tpu.memory_space<vmem>>, vector<1x128xf32>
      %14 = vector.broadcast %13 : vector<1x128xf32> to vector<24x128xf32>
      %15 = arith.addf %12, %14 : vector<24x128xf32>
      %cst_13 = arith.constant 0.000000e+00 : f32
      %16 = vector.broadcast %cst_13 : f32 to vector<24x128xf32>
      %17 = arith.maximumf %15, %16 : vector<24x128xf32>
      %18 = arith.truncf %17 : vector<24x128xf32> to vector<24x128xbf16>
      %c0_14 = arith.constant 0 : index
      %c0_15 = arith.constant 0 : index
      %19 = vector.load %arg5[%c0_14, %c0_15] : memref<24x128xbf16, #tpu.memory_space<vmem>>, vector<24x128xbf16>
      tpu.vector_store %arg5[%c0_14, %c0_15], %18 {strides = array<i32>} : memref<24x128xbf16, #tpu.memory_space<vmem>>, vector<24x128xbf16>,
    } else {
    }
    return
  }
  func.func @transform_0(%arg0: i32, %arg1: i32) -> (i32, i32) {
    %c0_i32 = arith.constant 0 : i32
    return %arg0, %arg1 : i32, i32
  }
  func.func @transform_1(%arg0: i32, %arg1: i32) -> (i32, i32) {
    %c0_i32 = arith.constant 0 : i32
    %c0_i32_0 = arith.constant 0 : i32
    return %arg1, %c0_i32 : i32, i32
  }
  func.func @transform_2(%arg0: i32, %arg1: i32) -> (i32, i32) {
    %c0_i32 = arith.constant 0 : i32
    %c0_i32_0 = arith.constant 0 : i32
    %c0_i32_1 = arith.constant 0 : i32
    return %c0_i32, %c0_i32_0 : i32, i32
  }
  func.func @transform_3(%arg0: i32, %arg1: i32) -> (i32, i32) {
    %c0_i32 = arith.constant 0 : i32
    %c0_i32_0 = arith.constant 0 : i32
    return %arg0, %c0_i32 : i32, i32
  }
}

module attributes {stable_mosaic.version = 11 : i64} {
  func.func @_matmul_fused_kernel(%arg0: i32, %arg1: i32, %arg2: memref<24x1152xbf16, #tpu.memory_space<vmem>>, %arg3: memref<1152x64xbf16, #tpu.memory_space<vmem>>, %arg4: memref<1x64xf32, #tpu.memory_space<vmem>>, %arg5: memref<24x64xbf16, #tpu.memory_space<vmem>>, %arg6: memref<24x64xf32, #tpu.memory_space<vmem>>) attributes {dimension_semantics = [#tpu.dimension_semantics<parallel>, #tpu.dimension_semantics<arbitrary>], iteration_bounds = array<i64: 1, 1>, scalar_prefetch = 0 : i64, scratch_operands = 1 : i64, tpu.core_type = #tpu.core_type<tc>, window_params = [{transform_indices = @transform_0, window_bounds = array<i64: 24, 1152>}, {transform_indices = @transform_1, window_bounds = array<i64: 1152, 64>}, {pipeline_mode = #tpu.pipeline_mode<synchronous>, transform_indices = @transform_2, window_bounds = array<i64: 1, 64>}, {transform_indices = @transform_3, window_bounds = array<i64: 24, 64>}]} {
    %c0_i32 = arith.constant 0 : i32
    %0 = arith.cmpi eq, %arg1, %c0_i32 : i32
    %1 = arith.extui %0 : i1 to i32
    %c0_i32_0 = arith.constant 0 : i32
    %2 = arith.cmpi ne, %1, %c0_i32_0 : i32
    scf.if %2 {
      %cst_10 = arith.constant 0.000000e+00 : f32
      %12 = vector.broadcast %cst_10 : f32 to vector<24x64xf32>
      %c0_11 = arith.constant 0 : index
      %c0_12 = arith.constant 0 : index
      %13 = vector.load %arg6[%c0_11, %c0_12] : memref<24x64xf32, #tpu.memory_space<vmem>>, vector<24x64xf32>
      tpu.vector_store %arg6[%c0_11, %c0_12], %12 {strides = array<i32>} : memref<24x64xf32, #tpu.memory_space<vmem>>, vector<24x64xf32>,
    } else {
    }
    %c0 = arith.constant 0 : index
    %c0_1 = arith.constant 0 : index
    %3 = vector.load %arg6[%c0, %c0_1] : memref<24x64xf32, #tpu.memory_space<vmem>>, vector<24x64xf32>
    %c0_2 = arith.constant 0 : index
    %c0_3 = arith.constant 0 : index
    %4 = vector.load %arg2[%c0_2, %c0_3] : memref<24x1152xbf16, #tpu.memory_space<vmem>>, vector<24x1152xbf16>
    %c0_4 = arith.constant 0 : index
    %c0_5 = arith.constant 0 : index
    %5 = vector.load %arg3[%c0_4, %c0_5] : memref<1152x64xbf16, #tpu.memory_space<vmem>>, vector<1152x64xbf16>
    %cst = arith.constant dense<0.000000e+00> : vector<24x64xf32>
    %6 = tpu.matmul %4, %5, %cst {dimension_numbers = #tpu.dot_dimension_numbers<[1], [0], [0], [1], [0, 0, 1, 1], [], []>} : vector<24x1152xbf16>, vector<1152x64xbf16>, vector<24x64xf32> -> vector<24x64xf32>
    %7 = arith.addf %3, %6 : vector<24x64xf32>
    %c0_6 = arith.constant 0 : index
    %c0_7 = arith.constant 0 : index
    %8 = vector.load %arg6[%c0_6, %c0_7] : memref<24x64xf32, #tpu.memory_space<vmem>>, vector<24x64xf32>
    tpu.vector_store %arg6[%c0_6, %c0_7], %7 {strides = array<i32>} : memref<24x64xf32, #tpu.memory_space<vmem>>, vector<24x64xf32>,
    %c0_i32_8 = arith.constant 0 : i32
    %9 = arith.cmpi eq, %arg1, %c0_i32_8 : i32
    %10 = arith.extui %9 : i1 to i32
    %c0_i32_9 = arith.constant 0 : i32
    %11 = arith.cmpi ne, %10, %c0_i32_9 : i32
    scf.if %11 {
      %c0_10 = arith.constant 0 : index
      %c0_11 = arith.constant 0 : index
      %12 = vector.load %arg6[%c0_10, %c0_11] : memref<24x64xf32, #tpu.memory_space<vmem>>, vector<24x64xf32>
      %c0_12 = arith.constant 0 : index
      %c0_13 = arith.constant 0 : index
      %13 = vector.load %arg4[%c0_12, %c0_13] : memref<1x64xf32, #tpu.memory_space<vmem>>, vector<1x64xf32>
      %14 = vector.broadcast %13 : vector<1x64xf32> to vector<24x64xf32>
      %15 = arith.addf %12, %14 : vector<24x64xf32>
      %cst_14 = arith.constant 0.000000e+00 : f32
      %16 = vector.broadcast %cst_14 : f32 to vector<24x64xf32>
      %17 = arith.maximumf %15, %16 : vector<24x64xf32>
      %18 = arith.truncf %17 : vector<24x64xf32> to vector<24x64xbf16>
      %c0_15 = arith.constant 0 : index
      %c0_16 = arith.constant 0 : index
      %19 = vector.load %arg5[%c0_15, %c0_16] : memref<24x64xbf16, #tpu.memory_space<vmem>>, vector<24x64xbf16>
      tpu.vector_store %arg5[%c0_15, %c0_16], %18 {strides = array<i32>} : memref<24x64xbf16, #tpu.memory_space<vmem>>, vector<24x64xbf16>,
    } else {
    }
    return
  }
  func.func @transform_0(%arg0: i32, %arg1: i32) -> (i32, i32) {
    %c0_i32 = arith.constant 0 : i32
    return %arg0, %arg1 : i32, i32
  }
  func.func @transform_1(%arg0: i32, %arg1: i32) -> (i32, i32) {
    %c0_i32 = arith.constant 0 : i32
    %c0_i32_0 = arith.constant 0 : i32
    return %arg1, %c0_i32 : i32, i32
  }
  func.func @transform_2(%arg0: i32, %arg1: i32) -> (i32, i32) {
    %c0_i32 = arith.constant 0 : i32
    %c0_i32_0 = arith.constant 0 : i32
    %c0_i32_1 = arith.constant 0 : i32
    return %c0_i32, %c0_i32_0 : i32, i32
  }
  func.func @transform_3(%arg0: i32, %arg1: i32) -> (i32, i32) {
    %c0_i32 = arith.constant 0 : i32
    %c0_i32_0 = arith.constant 0 : i32
    return %arg0, %c0_i32 : i32, i32
  }
}

module attributes {stable_mosaic.version = 11 : i64} {
  func.func @_matmul_fused_kernel(%arg0: i32, %arg1: i32, %arg2: memref<8x768xbf16, #tpu.memory_space<vmem>>, %arg3: memref<768x128xbf16, #tpu.memory_space<vmem>>, %arg4: memref<1x128xf32, #tpu.memory_space<vmem>>, %arg5: memref<8x128xf32, #tpu.memory_space<vmem>>, %arg6: memref<8x128xf32, #tpu.memory_space<vmem>>) attributes {dimension_semantics = [#tpu.dimension_semantics<parallel>, #tpu.dimension_semantics<arbitrary>], iteration_bounds = array<i64: 1, 1>, scalar_prefetch = 0 : i64, scratch_operands = 1 : i64, tpu.core_type = #tpu.core_type<tc>, window_params = [{transform_indices = @transform_0, window_bounds = array<i64: 8, 768>}, {transform_indices = @transform_1, window_bounds = array<i64: 768, 128>}, {pipeline_mode = #tpu.pipeline_mode<synchronous>, transform_indices = @transform_2, window_bounds = array<i64: 1, 128>}, {transform_indices = @transform_3, window_bounds = array<i64: 8, 128>}]} {
    %c0_i32 = arith.constant 0 : i32
    %0 = arith.cmpi eq, %arg1, %c0_i32 : i32
    %1 = arith.extui %0 : i1 to i32
    %c0_i32_0 = arith.constant 0 : i32
    %2 = arith.cmpi ne, %1, %c0_i32_0 : i32
    scf.if %2 {
      %cst_10 = arith.constant 0.000000e+00 : f32
      %12 = vector.broadcast %cst_10 : f32 to vector<8x128xf32>
      %c0_11 = arith.constant 0 : index
      %c0_12 = arith.constant 0 : index
      %13 = vector.load %arg6[%c0_11, %c0_12] : memref<8x128xf32, #tpu.memory_space<vmem>>, vector<8x128xf32>
      tpu.vector_store %arg6[%c0_11, %c0_12], %12 {strides = array<i32>} : memref<8x128xf32, #tpu.memory_space<vmem>>, vector<8x128xf32>,
    } else {
    }
    %c0 = arith.constant 0 : index
    %c0_1 = arith.constant 0 : index
    %3 = vector.load %arg6[%c0, %c0_1] : memref<8x128xf32, #tpu.memory_space<vmem>>, vector<8x128xf32>
    %c0_2 = arith.constant 0 : index
    %c0_3 = arith.constant 0 : index
    %4 = vector.load %arg2[%c0_2, %c0_3] : memref<8x768xbf16, #tpu.memory_space<vmem>>, vector<8x768xbf16>
    %c0_4 = arith.constant 0 : index
    %c0_5 = arith.constant 0 : index
    %5 = vector.load %arg3[%c0_4, %c0_5] : memref<768x128xbf16, #tpu.memory_space<vmem>>, vector<768x128xbf16>
    %cst = arith.constant dense<0.000000e+00> : vector<8x128xf32>
    %6 = tpu.matmul %4, %5, %cst {dimension_numbers = #tpu.dot_dimension_numbers<[1], [0], [0], [1], [0, 0, 1, 1], [], []>} : vector<8x768xbf16>, vector<768x128xbf16>, vector<8x128xf32> -> vector<8x128xf32>
    %7 = arith.addf %3, %6 : vector<8x128xf32>
    %c0_6 = arith.constant 0 : index
    %c0_7 = arith.constant 0 : index
    %8 = vector.load %arg6[%c0_6, %c0_7] : memref<8x128xf32, #tpu.memory_space<vmem>>, vector<8x128xf32>
    tpu.vector_store %arg6[%c0_6, %c0_7], %7 {strides = array<i32>} : memref<8x128xf32, #tpu.memory_space<vmem>>, vector<8x128xf32>,
    %c0_i32_8 = arith.constant 0 : i32
    %9 = arith.cmpi eq, %arg1, %c0_i32_8 : i32
    %10 = arith.extui %9 : i1 to i32
    %c0_i32_9 = arith.constant 0 : i32
    %11 = arith.cmpi ne, %10, %c0_i32_9 : i32
    scf.if %11 {
      %c0_10 = arith.constant 0 : index
      %c0_11 = arith.constant 0 : index
      %12 = vector.load %arg6[%c0_10, %c0_11] : memref<8x128xf32, #tpu.memory_space<vmem>>, vector<8x128xf32>
      %c0_12 = arith.constant 0 : index
      %c0_13 = arith.constant 0 : index
      %13 = vector.load %arg4[%c0_12, %c0_13] : memref<1x128xf32, #tpu.memory_space<vmem>>, vector<1x128xf32>
      %14 = vector.broadcast %13 : vector<1x128xf32> to vector<8x128xf32>
      %15 = arith.addf %12, %14 : vector<8x128xf32>
      %16 = math.tanh %15 : vector<8x128xf32>
      %c0_14 = arith.constant 0 : index
      %c0_15 = arith.constant 0 : index
      %17 = vector.load %arg5[%c0_14, %c0_15] : memref<8x128xf32, #tpu.memory_space<vmem>>, vector<8x128xf32>
      tpu.vector_store %arg5[%c0_14, %c0_15], %16 {strides = array<i32>} : memref<8x128xf32, #tpu.memory_space<vmem>>, vector<8x128xf32>,
    } else {
    }
    return
  }
  func.func @transform_0(%arg0: i32, %arg1: i32) -> (i32, i32) {
    %c0_i32 = arith.constant 0 : i32
    return %arg0, %arg1 : i32, i32
  }
  func.func @transform_1(%arg0: i32, %arg1: i32) -> (i32, i32) {
    %c0_i32 = arith.constant 0 : i32
    %c0_i32_0 = arith.constant 0 : i32
    return %arg1, %c0_i32 : i32, i32
  }
  func.func @transform_2(%arg0: i32, %arg1: i32) -> (i32, i32) {
    %c0_i32 = arith.constant 0 : i32
    %c0_i32_0 = arith.constant 0 : i32
    %c0_i32_1 = arith.constant 0 : i32
    return %c0_i32, %c0_i32_0 : i32, i32
  }
  func.func @transform_3(%arg0: i32, %arg1: i32) -> (i32, i32) {
    %c0_i32 = arith.constant 0 : i32
    %c0_i32_0 = arith.constant 0 : i32
    return %arg0, %c0_i32 : i32, i32
  }
}

</mosaic_0001>

<llo_original>
// kernel: _forward_impl.5
$region0: #{_forward_impl.5}
  #allocation0 [shape = 'u32[]', space=smem, size = 0x4, offset = 0x4, fixed_abs, tag = 'smem constant byte address 0x4 - core index']
  #allocation1 [shape = 'u32[144,128]{1,0:T(1,128)}', space=vmem, size = 0x12000, scoped, tag = 'internal scratch']
  #allocation2 [shape = 'f32[96,512]{1,0:T(8,128)}', space=vmem, size = 0x30000, scoped, tag = 'scratch operand']
  %s0 = inlined_call_operand.vmem [shape: bf16[96,8192], index: 0, kind: input, shape index: {}]
  %s1 = inlined_call_operand.vmem [shape: bf16[8192,512], index: 1, kind: input, shape index: {}]
  %s2 = inlined_call_operand.vmem [shape: f32[1,512], index: 2, kind: input, shape index: {}]
  %s3 = inlined_call_operand.vmem [shape: bf16[96,512], index: 3, kind: output, shape index: {}]
  %s4 = sld [smem:[#allocation0]]
  $region76: #{_forward_impl.5} parent=0
    _
  %s6 = ssub.s32 1, %s4
  %s7 = scalar_select 0, %s6, %s4
  $region1: #{_forward_impl.5} parent=0
    #allocation3 [shape = 'u8[786432]{0}', space=vmem, size = 0xc0000, scoped, tag = 'input window, operand 0']
    loop: start=0, step=1, limit=6
    $region2: #{_forward_impl.5} parent=1 // loop_pre_header
      _
    $region3: #{_forward_impl.5} parent=1 // loop_header
      %s9 = sphi 0, %s13
      %p10 = scmp.ge.s32.totalorder %s9, 6
      %s16 = sphi 0, %s28
      %s17 = sphi 0, %s24
      %s18 = sphi 0, %s16
      %s19 = sphi 0, %s17
      %s20 = sphi 0, %s18
      %s21 = sphi 0, %s19
      %s33 = sphi 0, %s35
      %s36 = sphi 0, %s33
      %s37 = sphi 0, %s36
      %s53 = sphi 0, %s37
      %s59 = sphi 0, %s61
      %s62 = sphi 0, %s59
      %s63 = sphi 0, %s62
      %s79 = sphi 0, %s63
      %s83 = sphi 0, %s83
      %s85 = sphi 0, %s83
      %s86 = sphi 0, %s85
      %s100 = sphi 0, %s86
      %s106 = sphi 0, %s108
      %s109 = sphi 0, %s106
      %s110 = sphi 0, %s109
      %s126 = sphi 0, %s110
    $region4: #{_forward_impl.5} parent=1 // loop_header_branch
      %12 = sbr.rel (%p10) target = $region8
    $region5: #{_forward_impl.5} parent=1 // loop_body
      %s14 = ssub.s32 %s9, 1
      %s15 = ssub.s32 %s9, 2
      %s22 = sadd.s32 1, %s17
      %p23 = scmp.ge.s32.totalorder %s22, 4
      %s24 = scalar_select %p23, 0, %s22
      %s25 = sadd.s32 1, %s16
      %s26 = scalar_select %p23, %s25, %s16
      %p27 = scmp.ge.s32.totalorder %s26, 1
      %s28 = scalar_select %p27, 0, %s26
      %s29 = ssub.s32 %s16, %s28
      %s30 = ssub.s32 %s17, %s24
      %s31 = sor.u32 %s29, %s30
      %p32 = scmp.eq.s32.totalorder %s31, 0
      %s34 = sadd.s32 %s33, 1
      %s35 = scalar_select %p32, %s33, %s34
      %p38 = pneg %p32
      %p39 = scmp.eq.s32.totalorder %s9, 3
      %p40 = por %p38, %p39
      %p41 = scmp.ne.s32.totalorder %s33, %s36
      %p42 = scmp.eq.s32.totalorder %s9, 0
      %p43 = por %p41, %p42
      %p44 = scmp.ne.s32.totalorder %s33, %s36
      %p45 = scmp.eq.s32.totalorder %s14, 3
      %p46 = por %p44, %p45
      %p47 = scmp.ne.s32.totalorder %s36, %s37
      %p48 = scmp.eq.s32.totalorder %s14, 0
      %p49 = por %p47, %p48
      %p50 = scmp.ne.s32.totalorder %s36, %s37
      %p51 = scmp.eq.s32.totalorder %s15, 3
      %p52 = por %p50, %p51
      %p54 = scmp.ne.s32.totalorder %s37, %s53
      %p55 = scmp.eq.s32.totalorder %s15, 0
      %p56 = por %p54, %p55
      %s57 = ssub.s32 %s17, %s24
      %p58 = scmp.eq.s32.totalorder %s57, 0
      %s60 = sadd.s32 %s59, 1
      %s61 = scalar_select %p58, %s59, %s60
      %p64 = pneg %p58
      %p65 = scmp.eq.s32.totalorder %s9, 3
      %p66 = por %p64, %p65
      %p67 = scmp.ne.s32.totalorder %s59, %s62
      %p68 = scmp.eq.s32.totalorder %s9, 0
      %p69 = por %p67, %p68
      %p70 = scmp.ne.s32.totalorder %s59, %s62
      %p71 = scmp.eq.s32.totalorder %s14, 3
      %p72 = por %p70, %p71
      %p73 = scmp.ne.s32.totalorder %s62, %s63
      %p74 = scmp.eq.s32.totalorder %s14, 0
      %p75 = por %p73, %p74
      %p76 = scmp.ne.s32.totalorder %s62, %s63
      %p77 = scmp.eq.s32.totalorder %s15, 3
      %p78 = por %p76, %p77
      %p80 = scmp.ne.s32.totalorder %s63, %s79
      %p81 = scmp.eq.s32.totalorder %s15, 0
      %p82 = por %p80, %p81
      %s84 = sadd.s32 %s83, 1
      %p87 = scmp.eq.s32.totalorder %s9, 3
      %p88 = scmp.ne.s32.totalorder %s83, %s85
      %p89 = scmp.eq.s32.totalorder %s9, 0
      %p90 = por %p88, %p89
      %p91 = scmp.ne.s32.totalorder %s83, %s85
      %p92 = scmp.eq.s32.totalorder %s14, 3
      %p93 = por %p91, %p92
      %p94 = scmp.ne.s32.totalorder %s85, %s86
      %p95 = scmp.eq.s32.totalorder %s14, 0
      %p96 = por %p94, %p95
      %p97 = scmp.ne.s32.totalorder %s85, %s86
      %p98 = scmp.eq.s32.totalorder %s15, 3
      %p99 = por %p97, %p98
      %p101 = scmp.ne.s32.totalorder %s86, %s100
      %p102 = scmp.eq.s32.totalorder %s15, 0
      %p103 = por %p101, %p102
      %s104 = ssub.s32 %s16, %s28
      %p105 = scmp.eq.s32.totalorder %s104, 0
      %s107 = sadd.s32 %s106, 1
      %s108 = scalar_select %p105, %s106, %s107
      %p111 = pneg %p105
      %p112 = scmp.eq.s32.totalorder %s9, 3
      %p113 = por %p111, %p112
      %p114 = scmp.ne.s32.totalorder %s106, %s109
      %p115 = scmp.eq.s32.totalorder %s9, 0
      %p116 = por %p114, %p115
      %p117 = scmp.ne.s32.totalorder %s106, %s109
      %p118 = scmp.eq.s32.totalorder %s14, 3
      %p119 = por %p117, %p118
      %p120 = scmp.ne.s32.totalorder %s109, %s110
      %p121 = scmp.eq.s32.totalorder %s14, 0
      %p122 = por %p120, %p121
      %p123 = scmp.ne.s32.totalorder %s109, %s110
      %p124 = scmp.eq.s32.totalorder %s15, 3
      %p125 = por %p123, %p124
      %p127 = scmp.ne.s32.totalorder %s110, %s126
      %p128 = scmp.eq.s32.totalorder %s15, 0
      %p129 = por %p127, %p128
      %p130 = scmp.le.s32.totalorder 1, %s9
      %p131 = scmp.lt.s32.totalorder %s9, 5
      %p132 = pnand %p130, %p131
      %p133 = pneg %p132
      // Predicated region
      $region9: #{_forward_impl.5} parent=5 // pred_check
        _
      $region10: #{_forward_impl.5} parent=5 // pred_check_branch
        %135 = sbr.rel (%p132) target = $region12
      $region11: #{_forward_impl.5} parent=5 // pred_region
        %s136 = ssub.s32 %s9, 1
        // Predicated region
        $region13: #{_forward_impl.5} parent=11 // pred_check
          %p137 = pneg %p96
        $region14: #{_forward_impl.5} parent=11 // pred_check_branch
          %139 = sbr.rel (%p137) target = $region16
        $region15: #{_forward_impl.5} parent=11 // pred_region
          _
        $region16: #{_forward_impl.5} parent=11 // pred_fallthru
          _
      $region12: #{_forward_impl.5} parent=5 // pred_fallthru
        _
      %p140 = scmp.lt.s32.totalorder %s9, 4
      // Predicated region
      $region17: #{_forward_impl.5} parent=5 // pred_check
        %p141 = pneg %p140
      $region18: #{_forward_impl.5} parent=5 // pred_check_branch
        %143 = sbr.rel (%p141) target = $region20
      $region19: #{_forward_impl.5} parent=5 // pred_region
        // Predicated region
        $region21: #{_forward_impl.5} parent=19 // pred_check
          %p144 = pneg %p43
        $region22: #{_forward_impl.5} parent=19 // pred_check_branch
          %146 = sbr.rel (%p144) target = $region24
        $region23: #{_forward_impl.5} parent=19 // pred_region
          %s147 = sand.u32 %s33, 1
          %s148 = sand.u32 %s33, 1
          %s149 = smul.addr %s148, 768
          %s150 = scalar_lea.vmem [#allocation3], %s149
          %s151 = smul.u32 12, %s16
          %s152 = smul.u32 16, %s17
          %s153 = smul.addr %s151, 64
          %s154 = sadd.s32 %s152, %s153
          %s155 = smul.addr %s154, 4
          %s156 = scalar_lea.vmem %s0, %s155
          // Predicated region
          $region25: #{_forward_impl.5} parent=23 // pred_check
            _
          $region26: #{_forward_impl.5} parent=23 // pred_check_branch
            %158 = sbr.rel (0) target = $region28
          $region27: #{_forward_impl.5} parent=23 // pred_region
            // Predicated region
            $region29: #{_forward_impl.5} parent=27 // pred_check
              _
            $region30: #{_forward_impl.5} parent=27 // pred_check_branch
              %160 = sbr.rel (0) target = $region32
            $region31: #{_forward_impl.5} parent=27 // pred_region
              loop: start=0, step=1, limit=1
              $region33: #{_forward_impl.5} parent=31 // loop_pre_header
                _
              $region34: #{_forward_impl.5} parent=31 // loop_header
                %s162 = sphi 0, %s166
                %p163 = scmp.ge.s32.totalorder %s162, 1
                %s167 = sphi %s156, %s156
                %s168 = sphi %s150, %s150
              $region35: #{_forward_impl.5} parent=31 // loop_header_branch
                %165 = sbr.rel (%p163) target = $region39
              $region36: #{_forward_impl.5} parent=31 // loop_body
                %v169 = vld [vmem:[%s167] sm:$0xff]
                %170 = vst [vmem:[%s168] sm:$0xff] %v169
                %v171 = vld [vmem:[%s167 + $0x8] sm:$0xff]
                %172 = vst [vmem:[%s168 + $0x8] sm:$0xff] %v171
                %v173 = vld [vmem:[%s167 + $0x10] sm:$0xff]
                %174 = vst [vmem:[%s168 + $0x10] sm:$0xff] %v173
                %v175 = vld [vmem:[%s167 + $0x18] sm:$0xff]
                %176 = vst [vmem:[%s168 + $0x18] sm:$0xff] %v175
                %v177 = vld [vmem:[%s167 + $0x20] sm:$0xff]
                %178 = vst [vmem:[%s168 + $0x20] sm:$0xff] %v177
                %v179 = vld [vmem:[%s167 + $0x28] sm:$0xff]
                %180 = vst [vmem:[%s168 + $0x28] sm:$0xff] %v179
                %v181 = vld [vmem:[%s167 + $0x30] sm:$0xff]
                %182 = vst [vmem:[%s168 + $0x30] sm:$0xff] %v181
                %v183 = vld [vmem:[%s167 + $0x38] sm:$0xff]
                %184 = vst [vmem:[%s168 + $0x38] sm:$0xff] %v183
                %v185 = vld [vmem:[%s167 + $0x100] sm:$0xff]
                %186 = vst [vmem:[%s168 + $0x40] sm:$0xff] %v185
                %v187 = vld [vmem:[%s167 + $0x108] sm:$0xff]
                %188 = vst [vmem:[%s168 + $0x48] sm:$0xff] %v187
                %v189 = vld [vmem:[%s167 + $0x110] sm:$0xff]
                %190 = vst [vmem:[%s168 + $0x50] sm:$0xff] %v189
                %v191 = vld [vmem:[%s167 + $0x118] sm:$0xff]
                %192 = vst [vmem:[%s168 + $0x58] sm:$0xff] %v191
                %v193 = vld [vmem:[%s167 + $0x120] sm:$0xff]
                %194 = vst [vmem:[%s168 + $0x60] sm:$0xff] %v193
                %v195 = vld [vmem:[%s167 + $0x128] sm:$0xff]
                %196 = vst [vmem:[%s168 + $0x68] sm:$0xff] %v195
                %v197 = vld [vmem:[%s167 + $0x130] sm:$0xff]
                %198 = vst [vmem:[%s168 + $0x70] sm:$0xff] %v197
                %v199 = vld [vmem:[%s167 + $0x138] sm:$0xff]
                %200 = vst [vmem:[%s168 + $0x78] sm:$0xff] %v199
                %v201 = vld [vmem:[%s167 + $0x200] sm:$0xff]
                %202 = vst [vmem:[%s168 + $0x80] sm:$0xff] %v201
                %v203 = vld [vmem:[%s167 + $0x208] sm:$0xff]
                %204 = vst [vmem:[%s168 + $0x88] sm:$0xff] %v203
                %v205 = vld [vmem:[%s167 + $0x210] sm:$0xff]
                %206 = vst [vmem:[%s168 + $0x90] sm:$0xff] %v205
                %v207 = vld [vmem:[%s167 + $0x218] sm:$0xff]
                %208 = vst [vmem:[%s168 + $0x98] sm:$0xff] %v207
                %v209 = vld [vmem:[%s167 + $0x220] sm:$0xff]
                %210 = vst [vmem:[%s168 + $0xa0] sm:$0xff] %v209
                %v211 = vld [vmem:[%s167 + $0x228] sm:$0xff]
                %212 = vst [vmem:[%s168 + $0xa8] sm:$0xff] %v211
                %v213 = vld [vmem:[%s167 + $0x230] sm:$0xff]
                %214 = vst [vmem:[%s168 + $0xb0] sm:$0xff] %v213
                %v215 = vld [vmem:[%s167 + $0x238] sm:$0xff]
                %216 = vst [vmem:[%s168 + $0xb8] sm:$0xff] %v215
                %v217 = vld [vmem:[%s167 + $0x300] sm:$0xff]
                %218 = vst [vmem:[%s168 + $0xc0] sm:$0xff] %v217
                %v219 = vld [vmem:[%s167 + $0x308] sm:$0xff]
                %220 = vst [vmem:[%s168 + $0xc8] sm:$0xff] %v219
                %v221 = vld [vmem:[%s167 + $0x310] sm:$0xff]
                %222 = vst [vmem:[%s168 + $0xd0] sm:$0xff] %v221
                %v223 = vld [vmem:[%s167 + $0x318] sm:$0xff]
                %224 = vst [vmem:[%s168 + $0xd8] sm:$0xff] %v223
                %v225 = vld [vmem:[%s167 + $0x320] sm:$0xff]
                %226 = vst [vmem:[%s168 + $0xe0] sm:$0xff] %v225
                %v227 = vld [vmem:[%s167 + $0x328] sm:$0xff]
                %228 = vst [vmem:[%s168 + $0xe8] sm:$0xff] %v227
                %v229 = vld [vmem:[%s167 + $0x330] sm:$0xff]
                %230 = vst [vmem:[%s168 + $0xf0] sm:$0xff] %v229
                %v231 = vld [vmem:[%s167 + $0x338] sm:$0xff]
                %232 = vst [vmem:[%s168 + $0xf8] sm:$0xff] %v231
                %v233 = vld [vmem:[%s167 + $0x400] sm:$0xff]
                %234 = vst [vmem:[%s168 + $0x100] sm:$0xff] %v233
                %v235 = vld [vmem:[%s167 + $0x408] sm:$0xff]
                %236 = vst [vmem:[%s168 + $0x108] sm:$0xff] %v235
                %v237 = vld [vmem:[%s167 + $0x410] sm:$0xff]
                %238 = vst [vmem:[%s168 + $0x110] sm:$0xff] %v237
                %v239 = vld [vmem:[%s167 + $0x418] sm:$0xff]
                %240 = vst [vmem:[%s168 + $0x118] sm:$0xff] %v239
                %v241 = vld [vmem:[%s167 + $0x420] sm:$0xff]
                %242 = vst [vmem:[%s168 + $0x120] sm:$0xff] %v241
                %v243 = vld [vmem:[%s167 + $0x428] sm:$0xff]
                %244 = vst [vmem:[%s168 + $0x128] sm:$0xff] %v243
                %v245 = vld [vmem:[%s167 + $0x430] sm:$0xff]
                %246 = vst [vmem:[%s168 + $0x130] sm:$0xff] %v245
                %v247 = vld [vmem:[%s167 + $0x438] sm:$0xff]
                %248 = vst [vmem:[%s168 + $0x138] sm:$0xff] %v247
                %v249 = vld [vmem:[%s167 + $0x500] sm:$0xff]
                %250 = vst [vmem:[%s168 + $0x140] sm:$0xff] %v249
                %v251 = vld [vmem:[%s167 + $0x508] sm:$0xff]
                %252 = vst [vmem:[%s168 + $0x148] sm:$0xff] %v251
                %v253 = vld [vmem:[%s167 + $0x510] sm:$0xff]
                %254 = vst [vmem:[%s168 + $0x150] sm:$0xff] %v253
                %v255 = vld [vmem:[%s167 + $0x518] sm:$0xff]
                %256 = vst [vmem:[%s168 + $0x158] sm:$0xff] %v255
                %v257 = vld [vmem:[%s167 + $0x520] sm:$0xff]
                %258 = vst [vmem:[%s168 + $0x160] sm:$0xff] %v257
                %v259 = vld [vmem:[%s167 + $0x528] sm:$0xff]
                %260 = vst [vmem:[%s168 + $0x168] sm:$0xff] %v259
                %v261 = vld [vmem:[%s167 + $0x530] sm:$0xff]
                %262 = vst [vmem:[%s168 + $0x170] sm:$0xff] %v261
                %v263 = vld [vmem:[%s167 + $0x538] sm:$0xff]
                %264 = vst [vmem:[%s168 + $0x178] sm:$0xff] %v263
                %v265 = vld [vmem:[%s167 + $0x600] sm:$0xff]
                %266 = vst [vmem:[%s168 + $0x180] sm:$0xff] %v265
                %v267 = vld [vmem:[%s167 + $0x608] sm:$0xff]
                %268 = vst [vmem:[%s168 + $0x188] sm:$0xff] %v267
                %v269 = vld [vmem:[%s167 + $0x610] sm:$0xff]
                %270 = vst [vmem:[%s168 + $0x190] sm:$0xff] %v269
                %v271 = vld [vmem:[%s167 + $0x618] sm:$0xff]
                %272 = vst [vmem:[%s168 + $0x198] sm:$0xff] %v271
                %v273 = vld [vmem:[%s167 + $0x620] sm:$0xff]
                %274 = vst [vmem:[%s168 + $0x1a0] sm:$0xff] %v273
                %v275 = vld [vmem:[%s167 + $0x628] sm:$0xff]
                %276 = vst [vmem:[%s168 + $0x1a8] sm:$0xff] %v275
                %v277 = vld [vmem:[%s167 + $0x630] sm:$0xff]
                %278 = vst [vmem:[%s168 + $0x1b0] sm:$0xff] %v277
                %v279 = vld [vmem:[%s167 + $0x638] sm:$0xff]
                %280 = vst [vmem:[%s168 + $0x1b8] sm:$0xff] %v279
                %v281 = vld [vmem:[%s167 + $0x700] sm:$0xff]
                %282 = vst [vmem:[%s168 + $0x1c0] sm:$0xff] %v281
                %v283 = vld [vmem:[%s167 + $0x708] sm:$0xff]
                %284 = vst [vmem:[%s168 + $0x1c8] sm:$0xff] %v283
                %v285 = vld [vmem:[%s167 + $0x710] sm:$0xff]
                %286 = vst [vmem:[%s168 + $0x1d0] sm:$0xff] %v285
                %v287 = vld [vmem:[%s167 + $0x718] sm:$0xff]
                %288 = vst [vmem:[%s168 + $0x1d8] sm:$0xff] %v287
                %v289 = vld [vmem:[%s167 + $0x720] sm:$0xff]
                %290 = vst [vmem:[%s168 + $0x1e0] sm:$0xff] %v289
                %v291 = vld [vmem:[%s167 + $0x728] sm:$0xff]
                %292 = vst [vmem:[%s168 + $0x1e8] sm:$0xff] %v291
                %v293 = vld [vmem:[%s167 + $0x730] sm:$0xff]
                %294 = vst [vmem:[%s168 + $0x1f0] sm:$0xff] %v293
                %v295 = vld [vmem:[%s167 + $0x738] sm:$0xff]
                %296 = vst [vmem:[%s168 + $0x1f8] sm:$0xff] %v295
                %v297 = vld [vmem:[%s167 + $0x800] sm:$0xff]
                %298 = vst [vmem:[%s168 + $0x200] sm:$0xff] %v297
                %v299 = vld [vmem:[%s167 + $0x808] sm:$0xff]
                %300 = vst [vmem:[%s168 + $0x208] sm:$0xff] %v299
                %v301 = vld [vmem:[%s167 + $0x810] sm:$0xff]
                %302 = vst [vmem:[%s168 + $0x210] sm:$0xff] %v301
                %v303 = vld [vmem:[%s167 + $0x818] sm:$0xff]
                %304 = vst [vmem:[%s168 + $0x218] sm:$0xff] %v303
                %v305 = vld [vmem:[%s167 + $0x820] sm:$0xff]
                %306 = vst [vmem:[%s168 + $0x220] sm:$0xff] %v305
                %v307 = vld [vmem:[%s167 + $0x828] sm:$0xff]
                %308 = vst [vmem:[%s168 + $0x228] sm:$0xff] %v307
                %v309 = vld [vmem:[%s167 + $0x830] sm:$0xff]
                %310 = vst [vmem:[%s168 + $0x230] sm:$0xff] %v309
                %v311 = vld [vmem:[%s167 + $0x838] sm:$0xff]
                %312 = vst [vmem:[%s168 + $0x238] sm:$0xff] %v311
                %v313 = vld [vmem:[%s167 + $0x900] sm:$0xff]
                %314 = vst [vmem:[%s168 + $0x240] sm:$0xff] %v313
                %v315 = vld [vmem:[%s167 + $0x908] sm:$0xff]
                %316 = vst [vmem:[%s168 + $0x248] sm:$0xff] %v315
                %v317 = vld [vmem:[%s167 + $0x910] sm:$0xff]
                %318 = vst [vmem:[%s168 + $0x250] sm:$0xff] %v317
                %v319 = vld [vmem:[%s167 + $0x918] sm:$0xff]
                %320 = vst [vmem:[%s168 + $0x258] sm:$0xff] %v319
                %v321 = vld [vmem:[%s167 + $0x920] sm:$0xff]
                %322 = vst [vmem:[%s168 + $0x260] sm:$0xff] %v321
                %v323 = vld [vmem:[%s167 + $0x928] sm:$0xff]
                %324 = vst [vmem:[%s168 + $0x268] sm:$0xff] %v323
                %v325 = vld [vmem:[%s167 + $0x930] sm:$0xff]
                %326 = vst [vmem:[%s168 + $0x270] sm:$0xff] %v325
                %v327 = vld [vmem:[%s167 + $0x938] sm:$0xff]
                %328 = vst [vmem:[%s168 + $0x278] sm:$0xff] %v327
                %v329 = vld [vmem:[%s167 + $0xa00] sm:$0xff]
                %330 = vst [vmem:[%s168 + $0x280] sm:$0xff] %v329
                %v331 = vld [vmem:[%s167 + $0xa08] sm:$0xff]
                %332 = vst [vmem:[%s168 + $0x288] sm:$0xff] %v331
                %v333 = vld [vmem:[%s167 + $0xa10] sm:$0xff]
                %334 = vst [vmem:[%s168 + $0x290] sm:$0xff] %v333
                %v335 = vld [vmem:[%s167 + $0xa18] sm:$0xff]
                %336 = vst [vmem:[%s168 + $0x298] sm:$0xff] %v335
                %v337 = vld [vmem:[%s167 + $0xa20] sm:$0xff]
                %338 = vst [vmem:[%s168 + $0x2a0] sm:$0xff] %v337
                %v339 = vld [vmem:[%s167 + $0xa28] sm:$0xff]
                %340 = vst [vmem:[%s168 + $0x2a8] sm:$0xff] %v339
                %v341 = vld [vmem:[%s167 + $0xa30] sm:$0xff]
                %342 = vst [vmem:[%s168 + $0x2b0] sm:$0xff] %v341
                %v343 = vld [vmem:[%s167 + $0xa38] sm:$0xff]
                %344 = vst [vmem:[%s168 + $0x2b8] sm:$0xff] %v343
                %v345 = vld [vmem:[%s167 + $0xb00] sm:$0xff]
                %346 = vst [vmem:[%s168 + $0x2c0] sm:$0xff] %v345
                %v347 = vld [vmem:[%s167 + $0xb08] sm:$0xff]
                %348 = vst [vmem:[%s168 + $0x2c8] sm:$0xff] %v347
                %v349 = vld [vmem:[%s167 + $0xb10] sm:$0xff]
                %350 = vst [vmem:[%s168 + $0x2d0] sm:$0xff] %v349
                %v351 = vld [vmem:[%s167 + $0xb18] sm:$0xff]
                %352 = vst [vmem:[%s168 + $0x2d8] sm:$0xff] %v351
                %v353 = vld [vmem:[%s167 + $0xb20] sm:$0xff]
                %354 = vst [vmem:[%s168 + $0x2e0] sm:$0xff] %v353
                %v355 = vld [vmem:[%s167 + $0xb28] sm:$0xff]
                %356 = vst [vmem:[%s168 + $0x2e8] sm:$0xff] %v355
                %v357 = vld [vmem:[%s167 + $0xb30] sm:$0xff]
                %358 = vst [vmem:[%s168 + $0x2f0] sm:$0xff] %v357
                %v359 = vld [vmem:[%s167 + $0xb38] sm:$0xff]
                %360 = vst [vmem:[%s168 + $0x2f8] sm:$0xff] %v359
              $region37: #{_forward_impl.5} parent=31 // loop_footer
                %s166 = sadd.s32 1, %s162
              $region38: #{_forward_impl.5} parent=31 // loop_footer_branch
                %161 = sbr.rel target = $region34
              $region39: #{_forward_impl.5} parent=31 // loop_exit
                _
            $region32: #{_forward_impl.5} parent=27 // pred_fallthru
              _
            // Predicated region
            $region40: #{_forward_impl.5} parent=27 // pred_check
              _
            $region41: #{_forward_impl.5} parent=27 // pred_check_branch
              %362 = sbr.rel target = $region43
            $region42: #{_forward_impl.5} parent=27 // pred_region
              _
            $region43: #{_forward_impl.5} parent=27 // pred_fallthru
              _
          $region28: #{_forward_impl.5} parent=23 // pred_fallthru
            _
          %363 = vnop
        $region24: #{_forward_impl.5} parent=19 // pred_fallthru
          _
        // Predicated region
        $region44: #{_forward_impl.5} parent=19 // pred_check
          %p364 = pneg %p69
        $region45: #{_forward_impl.5} parent=19 // pred_check_branch
          %366 = sbr.rel (%p364) target = $region47
        $region46: #{_forward_impl.5} parent=19 // pred_region
          %s367 = smul.u32 256, %s17
          %p368 = scmp.lt.s32.totalorder %s367, 1023
          %s369 = scalar_select %p368, %s367, 1023
          %s370 = smul.addr %s369, 4
          %s371 = smul.addr %s370, 4
          %s372 = scalar_lea.vmem %s1, %s371
          %s373 = smul.u32 256, %s17
        $region47: #{_forward_impl.5} parent=19 // pred_fallthru
          _
      $region20: #{_forward_impl.5} parent=5 // pred_fallthru
        _
      %p374 = scmp.le.s32.totalorder 1, %s9
      %p375 = scmp.lt.s32.totalorder %s9, 5
      %p376 = pnand %p374, %p375
      %p377 = pneg %p376
      // Predicated region
      $region48: #{_forward_impl.5} parent=5 // pred_check
        _
      $region49: #{_forward_impl.5} parent=5 // pred_check_branch
        %379 = sbr.rel (%p376) target = $region51
      $region50: #{_forward_impl.5} parent=5 // pred_region
        %s380 = ssub.s32 %s9, 1
        %s381 = sand.u32 %s36, 1
        %s382 = sand.u32 %s36, 1
        %s383 = smul.addr %s382, 768
        %s384 = scalar_lea.vmem [#allocation3], %s383
        // Predicated region
        $region52: #{_forward_impl.5} parent=50 // pred_check
          %p385 = pneg %p49
        $region53: #{_forward_impl.5} parent=50 // pred_check_branch
          %387 = sbr.rel (%p385) target = $region55
        $region54: #{_forward_impl.5} parent=50 // pred_region
          _
        $region55: #{_forward_impl.5} parent=50 // pred_fallthru
          _
        %s388 = sand.u32 %s36, 1
        %s389 = sand.u32 %s36, 1
        %s390 = smul.addr %s389, 768
        %s391 = scalar_lea.vmem [#allocation3], %s390
        %p392 = pneg %p49
        %p393 = pneg %p46
        %s394 = smul.u32 256, %s19
        %p395 = scmp.lt.s32.totalorder %s394, 1023
        %s396 = scalar_select %p395, %s394, 1023
        %s397 = smul.addr %s396, 4
        %s398 = smul.addr %s397, 4
        %s399 = scalar_lea.vmem %s1, %s398
        %p400 = pneg %p75
        %p401 = pneg %p72
        %p402 = pneg %p96
        %p403 = pneg %p93
        %p404 = pneg %p122
        %p405 = pneg %p119
        %s406 = smul.u32 12, %s18
        %p407 = scmp.lt.s32.totalorder %s406, 11
        %s408 = scalar_select %p407, %s406, 11
        %s409 = smul.addr %s408, 4
        %s410 = smul.addr %s409, 4
        %s411 = scalar_lea.vmem %s3, %s410
        %s412 = smul.u32 12, %s18
        %s413 = smul.u32 16, %s19
        %s414 = smul.u32 256, %s19
        %p415 = scmp.lt.s32.totalorder %s414, 1023
        %s416 = scalar_select %p415, %s414, 1023
        %s417 = smul.addr %s416, 4
        %s418 = smul.addr %s417, 4
        %s419 = scalar_lea.vmem %s1, %s418
        %s420 = smul.u32 256, %s19
        %s421 = smul.u32 12, %s18
        %p422 = scmp.lt.s32.totalorder %s421, 11
        %s423 = scalar_select %p422, %s421, 11
        %s424 = smul.addr %s423, 4
        %s425 = smul.addr %s424, 4
        %s426 = scalar_lea.vmem %s3, %s425
        %s427 = smul.u32 12, %s18
        %p428 = scmp.eq.s32.totalorder %s19, 0
        // Predicated region
        $region56: #{_forward_impl.5} parent=50 // pred_check
          %p429 = pneg %p428
        $region57: #{_forward_impl.5} parent=50 // pred_check_branch
          %431 = sbr.rel (%p429) target = $region59
        $region58: #{_forward_impl.5} parent=50 // pred_region
          %432 = vst [vmem:[#allocation2] sm:$0xff] 0.0
          %433 = vst [vmem:[#allocation2 + $0x8] sm:$0xff] 0.0
          %434 = vst [vmem:[#allocation2 + $0x10] sm:$0xff] 0.0
          %435 = vst [vmem:[#allocation2 + $0x18] sm:$0xff] 0.0
          %436 = vst [vmem:[#allocation2 + $0x20] sm:$0xff] 0.0
          %437 = vst [vmem:[#allocation2 + $0x28] sm:$0xff] 0.0
          %438 = vst [vmem:[#allocation2 + $0x30] sm:$0xff] 0.0
          %439 = vst [vmem:[#allocation2 + $0x38] sm:$0xff] 0.0
          %440 = vst [vmem:[#allocation2 + $0x40] sm:$0xff] 0.0
          %441 = vst [vmem:[#allocation2 + $0x48] sm:$0xff] 0.0
          %442 = vst [vmem:[#allocation2 + $0x50] sm:$0xff] 0.0
          %443 = vst [vmem:[#allocation2 + $0x58] sm:$0xff] 0.0
          %444 = vst [vmem:[#allocation2 + $0x60] sm:$0xff] 0.0
          %445 = vst [vmem:[#allocation2 + $0x68] sm:$0xff] 0.0
          %446 = vst [vmem:[#allocation2 + $0x70] sm:$0xff] 0.0
          %447 = vst [vmem:[#allocation2 + $0x78] sm:$0xff] 0.0
          %448 = vst [vmem:[#allocation2 + $0x80] sm:$0xff] 0.0
          %449 = vst [vmem:[#allocation2 + $0x88] sm:$0xff] 0.0
          %450 = vst [vmem:[#allocation2 + $0x90] sm:$0xff] 0.0
          %451 = vst [vmem:[#allocation2 + $0x98] sm:$0xff] 0.0
          %452 = vst [vmem:[#allocation2 + $0xa0] sm:$0xff] 0.0
          %453 = vst [vmem:[#allocation2 + $0xa8] sm:$0xff] 0.0
          %454 = vst [vmem:[#allocation2 + $0xb0] sm:$0xff] 0.0
          %455 = vst [vmem:[#allocation2 + $0xb8] sm:$0xff] 0.0
          %456 = vst [vmem:[#allocation2 + $0xc0] sm:$0xff] 0.0
          %457 = vst [vmem:[#allocation2 + $0xc8] sm:$0xff] 0.0
          %458 = vst [vmem:[#allocation2 + $0xd0] sm:$0xff] 0.0
          %459 = vst [vmem:[#allocation2 + $0xd8] sm:$0xff] 0.0
          %460 = vst [vmem:[#allocation2 + $0xe0] sm:$0xff] 0.0
          %461 = vst [vmem:[#allocation2 + $0xe8] sm:$0xff] 0.0
          %462 = vst [vmem:[#allocation2 + $0xf0] sm:$0xff] 0.0
          %463 = vst [vmem:[#allocation2 + $0xf8] sm:$0xff] 0.0
          %464 = vst [vmem:[#allocation2 + $0x100] sm:$0xff] 0.0
          %465 = vst [vmem:[#allocation2 + $0x108] sm:$0xff] 0.0
          %466 = vst [vmem:[#allocation2 + $0x110] sm:$0xff] 0.0
          %467 = vst [vmem:[#allocation2 + $0x118] sm:$0xff] 0.0
          %468 = vst [vmem:[#allocation2 + $0x120] sm:$0xff] 0.0
          %469 = vst [vmem:[#allocation2 + $0x128] sm:$0xff] 0.0
          %470 = vst [vmem:[#allocation2 + $0x130] sm:$0xff] 0.0
          %471 = vst [vmem:[#allocation2 + $0x138] sm:$0xff] 0.0
          %472 = vst [vmem:[#allocation2 + $0x140] sm:$0xff] 0.0
          %473 = vst [vmem:[#allocation2 + $0x148] sm:$0xff] 0.0
          %474 = vst [vmem:[#allocation2 + $0x150] sm:$0xff] 0.0
          %475 = vst [vmem:[#allocation2 + $0x158] sm:$0xff] 0.0
          %476 = vst [vmem:[#allocation2 + $0x160] sm:$0xff] 0.0
          %477 = vst [vmem:[#allocation2 + $0x168] sm:$0xff] 0.0
          %478 = vst [vmem:[#allocation2 + $0x170] sm:$0xff] 0.0
          %479 = vst [vmem:[#allocation2 + $0x178] sm:$0xff] 0.0
        $region59: #{_forward_impl.5} parent=50 // pred_fallthru
          _
        %v480 = vld [vmem:[#allocation2] sm:$0xff]
        %v481 = vld [vmem:[#allocation2 + $0x8] sm:$0xff]
        %v482 = vld [vmem:[#allocation2 + $0x10] sm:$0xff]
        %v483 = vld [vmem:[#allocation2 + $0x18] sm:$0xff]
        %v484 = vld [vmem:[#allocation2 + $0x20] sm:$0xff]
        %v485 = vld [vmem:[#allocation2 + $0x28] sm:$0xff]
        %v486 = vld [vmem:[#allocation2 + $0x30] sm:$0xff]
        %v487 = vld [vmem:[#allocation2 + $0x38] sm:$0xff]
        %v488 = vld [vmem:[#allocation2 + $0x40] sm:$0xff]
        %v489 = vld [vmem:[#allocation2 + $0x48] sm:$0xff]
        %v490 = vld [vmem:[#allocation2 + $0x50] sm:$0xff]
        %v491 = vld [vmem:[#allocation2 + $0x58] sm:$0xff]
        %v492 = vld [vmem:[#allocation2 + $0x60] sm:$0xff]
        %v493 = vld [vmem:[#allocation2 + $0x68] sm:$0xff]
        %v494 = vld [vmem:[#allocation2 + $0x70] sm:$0xff]
        %v495 = vld [vmem:[#allocation2 + $0x78] sm:$0xff]
        %v496 = vld [vmem:[#allocation2 + $0x80] sm:$0xff]
        %v497 = vld [vmem:[#allocation2 + $0x88] sm:$0xff]
        %v498 = vld [vmem:[#allocation2 + $0x90] sm:$0xff]
        %v499 = vld [vmem:[#allocation2 + $0x98] sm:$0xff]
        %v500 = vld [vmem:[#allocation2 + $0xa0] sm:$0xff]
        %v501 = vld [vmem:[#allocation2 + $0xa8] sm:$0xff]
        %v502 = vld [vmem:[#allocation2 + $0xb0] sm:$0xff]
        %v503 = vld [vmem:[#allocation2 + $0xb8] sm:$0xff]
        %v504 = vld [vmem:[#allocation2 + $0xc0] sm:$0xff]
        %v505 = vld [vmem:[#allocation2 + $0xc8] sm:$0xff]
        %v506 = vld [vmem:[#allocation2 + $0xd0] sm:$0xff]
        %v507 = vld [vmem:[#allocation2 + $0xd8] sm:$0xff]
        %v508 = vld [vmem:[#allocation2 + $0xe0] sm:$0xff]
        %v509 = vld [vmem:[#allocation2 + $0xe8] sm:$0xff]
        %v510 = vld [vmem:[#allocation2 + $0xf0] sm:$0xff]
        %v511 = vld [vmem:[#allocation2 + $0xf8] sm:$0xff]
        %v512 = vld [vmem:[#allocation2 + $0x100] sm:$0xff]
        %v513 = vld [vmem:[#allocation2 + $0x108] sm:$0xff]
        %v514 = vld [vmem:[#allocation2 + $0x110] sm:$0xff]
        %v515 = vld [vmem:[#allocation2 + $0x118] sm:$0xff]
        %v516 = vld [vmem:[#allocation2 + $0x120] sm:$0xff]
        %v517 = vld [vmem:[#allocation2 + $0x128] sm:$0xff]
        %v518 = vld [vmem:[#allocation2 + $0x130] sm:$0xff]
        %v519 = vld [vmem:[#allocation2 + $0x138] sm:$0xff]
        %v520 = vld [vmem:[#allocation2 + $0x140] sm:$0xff]
        %v521 = vld [vmem:[#allocation2 + $0x148] sm:$0xff]
        %v522 = vld [vmem:[#allocation2 + $0x150] sm:$0xff]
        %v523 = vld [vmem:[#allocation2 + $0x158] sm:$0xff]
        %v524 = vld [vmem:[#allocation2 + $0x160] sm:$0xff]
        %v525 = vld [vmem:[#allocation2 + $0x168] sm:$0xff]
        %v526 = vld [vmem:[#allocation2 + $0x170] sm:$0xff]
        %v527 = vld [vmem:[#allocation2 + $0x178] sm:$0xff]
        %v528 = vld [vmem:[%s384] sm:$0xff]
        %v529 = vld [vmem:[%s384 + $0x8] sm:$0xff]
        %v530 = vld [vmem:[%s384 + $0x10] sm:$0xff]
        %v531 = vld [vmem:[%s384 + $0x18] sm:$0xff]
        %v532 = vld [vmem:[%s384 + $0x20] sm:$0xff]
        %v533 = vld [vmem:[%s384 + $0x28] sm:$0xff]
        %v534 = vld [vmem:[%s384 + $0x30] sm:$0xff]
        %v535 = vld [vmem:[%s384 + $0x38] sm:$0xff]
        %v536 = vld [vmem:[%s384 + $0x40] sm:$0xff]
        %v537 = vld [vmem:[%s384 + $0x48] sm:$0xff]
        %v538 = vld [vmem:[%s384 + $0x50] sm:$0xff]
        %v539 = vld [vmem:[%s384 + $0x58] sm:$0xff]
        %v540 = vld [vmem:[%s384 + $0x60] sm:$0xff]
        %v541 = vld [vmem:[%s384 + $0x68] sm:$0xff]
        %v542 = vld [vmem:[%s384 + $0x70] sm:$0xff]
        %v543 = vld [vmem:[%s384 + $0x78] sm:$0xff]
        %v544 = vld [vmem:[%s384 + $0x80] sm:$0xff]
        %v545 = vld [vmem:[%s384 + $0x88] sm:$0xff]
        %v546 = vld [vmem:[%s384 + $0x90] sm:$0xff]
        %v547 = vld [vmem:[%s384 + $0x98] sm:$0xff]
        %v548 = vld [vmem:[%s384 + $0xa0] sm:$0xff]
        %v549 = vld [vmem:[%s384 + $0xa8] sm:$0xff]
        %v550 = vld [vmem:[%s384 + $0xb0] sm:$0xff]
        %v551 = vld [vmem:[%s384 + $0xb8] sm:$0xff]
        %v552 = vld [vmem:[%s384 + $0xc0] sm:$0xff]
        %v553 = vld [vmem:[%s384 + $0xc8] sm:$0xff]
        %v554 = vld [vmem:[%s384 + $0xd0] sm:$0xff]
        %v555 = vld [vmem:[%s384 + $0xd8] sm:$0xff]
        %v556 = vld [vmem:[%s384 + $0xe0] sm:$0xff]
        %v557 = vld [vmem:[%s384 + $0xe8] sm:$0xff]
        %v558 = vld [vmem:[%s384 + $0xf0] sm:$0xff]
        %v559 = vld [vmem:[%s384 + $0xf8] sm:$0xff]
        %v560 = vld [vmem:[%s384 + $0x100] sm:$0xff]
        %v561 = vld [vmem:[%s384 + $0x108] sm:$0xff]
        %v562 = vld [vmem:[%s384 + $0x110] sm:$0xff]
        %v563 = vld [vmem:[%s384 + $0x118] sm:$0xff]
        %v564 = vld [vmem:[%s384 + $0x120] sm:$0xff]
        %v565 = vld [vmem:[%s384 + $0x128] sm:$0xff]
        %v566 = vld [vmem:[%s384 + $0x130] sm:$0xff]
        %v567 = vld [vmem:[%s384 + $0x138] sm:$0xff]
        %v568 = vld [vmem:[%s384 + $0x140] sm:$0xff]
        %v569 = vld [vmem:[%s384 + $0x148] sm:$0xff]
        %v570 = vld [vmem:[%s384 + $0x150] sm:$0xff]
        %v571 = vld [vmem:[%s384 + $0x158] sm:$0xff]
        %v572 = vld [vmem:[%s384 + $0x160] sm:$0xff]
        %v573 = vld [vmem:[%s384 + $0x168] sm:$0xff]
        %v574 = vld [vmem:[%s384 + $0x170] sm:$0xff]
        %v575 = vld [vmem:[%s384 + $0x178] sm:$0xff]
        %v576 = vld [vmem:[%s384 + $0x180] sm:$0xff]
        %v577 = vld [vmem:[%s384 + $0x188] sm:$0xff]
        %v578 = vld [vmem:[%s384 + $0x190] sm:$0xff]
        %v579 = vld [vmem:[%s384 + $0x198] sm:$0xff]
        %v580 = vld [vmem:[%s384 + $0x1a0] sm:$0xff]
        %v581 = vld [vmem:[%s384 + $0x1a8] sm:$0xff]
        %v582 = vld [vmem:[%s384 + $0x1b0] sm:$0xff]
        %v583 = vld [vmem:[%s384 + $0x1b8] sm:$0xff]
        %v584 = vld [vmem:[%s384 + $0x1c0] sm:$0xff]
        %v585 = vld [vmem:[%s384 + $0x1c8] sm:$0xff]
        %v586 = vld [vmem:[%s384 + $0x1d0] sm:$0xff]
        %v587 = vld [vmem:[%s384 + $0x1d8] sm:$0xff]
        %v588 = vld [vmem:[%s384 + $0x1e0] sm:$0xff]
        %v589 = vld [vmem:[%s384 + $0x1e8] sm:$0xff]
        %v590 = vld [vmem:[%s384 + $0x1f0] sm:$0xff]
        %v591 = vld [vmem:[%s384 + $0x1f8] sm:$0xff]
        %v592 = vld [vmem:[%s384 + $0x200] sm:$0xff]
        %v593 = vld [vmem:[%s384 + $0x208] sm:$0xff]
        %v594 = vld [vmem:[%s384 + $0x210] sm:$0xff]
        %v595 = vld [vmem:[%s384 + $0x218] sm:$0xff]
        %v596 = vld [vmem:[%s384 + $0x220] sm:$0xff]
        %v597 = vld [vmem:[%s384 + $0x228] sm:$0xff]
        %v598 = vld [vmem:[%s384 + $0x230] sm:$0xff]
        %v599 = vld [vmem:[%s384 + $0x238] sm:$0xff]
        %v600 = vld [vmem:[%s384 + $0x240] sm:$0xff]
        %v601 = vld [vmem:[%s384 + $0x248] sm:$0xff]
        %v602 = vld [vmem:[%s384 + $0x250] sm:$0xff]
        %v603 = vld [vmem:[%s384 + $0x258] sm:$0xff]
        %v604 = vld [vmem:[%s384 + $0x260] sm:$0xff]
        %v605 = vld [vmem:[%s384 + $0x268] sm:$0xff]
        %v606 = vld [vmem:[%s384 + $0x270] sm:$0xff]
        %v607 = vld [vmem:[%s384 + $0x278] sm:$0xff]
        %v608 = vld [vmem:[%s384 + $0x280] sm:$0xff]
        %v609 = vld [vmem:[%s384 + $0x288] sm:$0xff]
        %v610 = vld [vmem:[%s384 + $0x290] sm:$0xff]
        %v611 = vld [vmem:[%s384 + $0x298] sm:$0xff]
        %v612 = vld [vmem:[%s384 + $0x2a0] sm:$0xff]
        %v613 = vld [vmem:[%s384 + $0x2a8] sm:$0xff]
        %v614 = vld [vmem:[%s384 + $0x2b0] sm:$0xff]
        %v615 = vld [vmem:[%s384 + $0x2b8] sm:$0xff]
        %v616 = vld [vmem:[%s384 + $0x2c0] sm:$0xff]
        %v617 = vld [vmem:[%s384 + $0x2c8] sm:$0xff]
        %v618 = vld [vmem:[%s384 + $0x2d0] sm:$0xff]
        %v619 = vld [vmem:[%s384 + $0x2d8] sm:$0xff]
        %v620 = vld [vmem:[%s384 + $0x2e0] sm:$0xff]
        %v621 = vld [vmem:[%s384 + $0x2e8] sm:$0xff]
        %v622 = vld [vmem:[%s384 + $0x2f0] sm:$0xff]
        %v623 = vld [vmem:[%s384 + $0x2f8] sm:$0xff]
        %v624 = vld [vmem:[%s419] sm:$0xff]
        %v625 = vld [vmem:[%s419 + $0x8] sm:$0xff]
        %v626 = vld [vmem:[%s419 + $0x10] sm:$0xff]
        %v627 = vld [vmem:[%s419 + $0x18] sm:$0xff]
        %v628 = vld [vmem:[%s419 + $0x20] sm:$0xff]
        %v629 = vld [vmem:[%s419 + $0x28] sm:$0xff]
        %v630 = vld [vmem:[%s419 + $0x30] sm:$0xff]
        %v631 = vld [vmem:[%s419 + $0x38] sm:$0xff]
        %v632 = vld [vmem:[%s419 + $0x40] sm:$0xff]
        %v633 = vld [vmem:[%s419 + $0x48] sm:$0xff]
        %v634 = vld [vmem:[%s419 + $0x50] sm:$0xff]
        %v635 = vld [vmem:[%s419 + $0x58] sm:$0xff]
        %v636 = vld [vmem:[%s419 + $0x60] sm:$0xff]
        %v637 = vld [vmem:[%s419 + $0x68] sm:$0xff]
        %v638 = vld [vmem:[%s419 + $0x70] sm:$0xff]
        %v639 = vld [vmem:[%s419 + $0x78] sm:$0xff]
        %v640 = vld [vmem:[%s419 + $0x80] sm:$0xff]
        %v641 = vld [vmem:[%s419 + $0x88] sm:$0xff]
        %v642 = vld [vmem:[%s419 + $0x90] sm:$0xff]
        %v643 = vld [vmem:[%s419 + $0x98] sm:$0xff]
        %v644 = vld [vmem:[%s419 + $0xa0] sm:$0xff]
        %v645 = vld [vmem:[%s419 + $0xa8] sm:$0xff]
        %v646 = vld [vmem:[%s419 + $0xb0] sm:$0xff]
        %v647 = vld [vmem:[%s419 + $0xb8] sm:$0xff]
        %v648 = vld [vmem:[%s419 + $0xc0] sm:$0xff]
        %v649 = vld [vmem:[%s419 + $0xc8] sm:$0xff]
        %v650 = vld [vmem:[%s419 + $0xd0] sm:$0xff]
        %v651 = vld [vmem:[%s419 + $0xd8] sm:$0xff]
        %v652 = vld [vmem:[%s419 + $0xe0] sm:$0xff]
        %v653 = vld [vmem:[%s419 + $0xe8] sm:$0xff]
        %v654 = vld [vmem:[%s419 + $0xf0] sm:$0xff]
        %v655 = vld [vmem:[%s419 + $0xf8] sm:$0xff]
        %v656 = vld [vmem:[%s419 + $0x100] sm:$0xff]
        %v657 = vld [vmem:[%s419 + $0x108] sm:$0xff]
        %v658 = vld [vmem:[%s419 + $0x110] sm:$0xff]
        %v659 = vld [vmem:[%s419 + $0x118] sm:$0xff]
        %v660 = vld [vmem:[%s419 + $0x120] sm:$0xff]
        %v661 = vld [vmem:[%s419 + $0x128] sm:$0xff]
        %v662 = vld [vmem:[%s419 + $0x130] sm:$0xff]
        %v663 = vld [vmem:[%s419 + $0x138] sm:$0xff]
        %v664 = vld [vmem:[%s419 + $0x140] sm:$0xff]
        %v665 = vld [vmem:[%s419 + $0x148] sm:$0xff]
        %v666 = vld [vmem:[%s419 + $0x150] sm:$0xff]
        %v667 = vld [vmem:[%s419 + $0x158] sm:$0xff]
        %v668 = vld [vmem:[%s419 + $0x160] sm:$0xff]
        %v669 = vld [vmem:[%s419 + $0x168] sm:$0xff]
        %v670 = vld [vmem:[%s419 + $0x170] sm:$0xff]
        %v671 = vld [vmem:[%s419 + $0x178] sm:$0xff]
        %v672 = vld [vmem:[%s419 + $0x180] sm:$0xff]
        %v673 = vld [vmem:[%s419 + $0x188] sm:$0xff]
        %v674 = vld [vmem:[%s419 + $0x190] sm:$0xff]
        %v675 = vld [vmem:[%s419 + $0x198] sm:$0xff]
        %v676 = vld [vmem:[%s419 + $0x1a0] sm:$0xff]
        %v677 = vld [vmem:[%s419 + $0x1a8] sm:$0xff]
        %v678 = vld [vmem:[%s419 + $0x1b0] sm:$0xff]
        %v679 = vld [vmem:[%s419 + $0x1b8] sm:$0xff]
        %v680 = vld [vmem:[%s419 + $0x1c0] sm:$0xff]
        %v681 = vld [vmem:[%s419 + $0x1c8] sm:$0xff]
        %v682 = vld [vmem:[%s419 + $0x1d0] sm:$0xff]
        %v683 = vld [vmem:[%s419 + $0x1d8] sm:$0xff]
        %v684 = vld [vmem:[%s419 + $0x1e0] sm:$0xff]
        %v685 = vld [vmem:[%s419 + $0x1e8] sm:$0xff]
        %v686 = vld [vmem:[%s419 + $0x1f0] sm:$0xff]
        %v687 = vld [vmem:[%s419 + $0x1f8] sm:$0xff]
        %v688 = vld [vmem:[%s419 + $0x200] sm:$0xff]
        %v689 = vld [vmem:[%s419 + $0x208] sm:$0xff]
        %v690 = vld [vmem:[%s419 + $0x210] sm:$0xff]
        %v691 = vld [vmem:[%s419 + $0x218] sm:$0xff]
        %v692 = vld [vmem:[%s419 + $0x220] sm:$0xff]
        %v693 = vld [vmem:[%s419 + $0x228] sm:$0xff]
        %v694 = vld [vmem:[%s419 + $0x230] sm:$0xff]
        %v695 = vld [vmem:[%s419 + $0x238] sm:$0xff]
        %v696 = vld [vmem:[%s419 + $0x240] sm:$0xff]
        %v697 = vld [vmem:[%s419 + $0x248] sm:$0xff]
        %v698 = vld [vmem:[%s419 + $0x250] sm:$0xff]
        %v699 = vld [vmem:[%s419 + $0x258] sm:$0xff]
        %v700 = vld [vmem:[%s419 + $0x260] sm:$0xff]
        %v701 = vld [vmem:[%s419 + $0x268] sm:$0xff]
        %v702 = vld [vmem:[%s419 + $0x270] sm:$0xff]
        %v703 = vld [vmem:[%s419 + $0x278] sm:$0xff]
        %v704 = vld [vmem:[%s419 + $0x280] sm:$0xff]
        %v705 = vld [vmem:[%s419 + $0x288] sm:$0xff]
        %v706 = vld [vmem:[%s419 + $0x290] sm:$0xff]
        %v707 = vld [vmem:[%s419 + $0x298] sm:$0xff]
        %v708 = vld [vmem:[%s419 + $0x2a0] sm:$0xff]
        %v709 = vld [vmem:[%s419 + $0x2a8] sm:$0xff]
        %v710 = vld [vmem:[%s419 + $0x2b0] sm:$0xff]
        %v711 = vld [vmem:[%s419 + $0x2b8] sm:$0xff]
        %v712 = vld [vmem:[%s419 + $0x2c0] sm:$0xff]
        %v713 = vld [vmem:[%s419 + $0x2c8] sm:$0xff]
        %v714 = vld [vmem:[%s419 + $0x2d0] sm:$0xff]
        %v715 = vld [vmem:[%s419 + $0x2d8] sm:$0xff]
        %v716 = vld [vmem:[%s419 + $0x2e0] sm:$0xff]
        %v717 = vld [vmem:[%s419 + $0x2e8] sm:$0xff]
        %v718 = vld [vmem:[%s419 + $0x2f0] sm:$0xff]
        %v719 = vld [vmem:[%s419 + $0x2f8] sm:$0xff]
        %v720 = vld [vmem:[%s419 + $0x300] sm:$0xff]
        %v721 = vld [vmem:[%s419 + $0x308] sm:$0xff]
        %v722 = vld [vmem:[%s419 + $0x310] sm:$0xff]
        %v723 = vld [vmem:[%s419 + $0x318] sm:$0xff]
        %v724 = vld [vmem:[%s419 + $0x320] sm:$0xff]
        %v725 = vld [vmem:[%s419 + $0x328] sm:$0xff]
        %v726 = vld [vmem:[%s419 + $0x330] sm:$0xff]
        %v727 = vld [vmem:[%s419 + $0x338] sm:$0xff]
        %v728 = vld [vmem:[%s419 + $0x340] sm:$0xff]
        %v729 = vld [vmem:[%s419 + $0x348] sm:$0xff]
        %v730 = vld [vmem:[%s419 + $0x350] sm:$0xff]
        %v731 = vld [vmem:[%s419 + $0x358] sm:$0xff]
        %v732 = vld [vmem:[%s419 + $0x360] sm:$0xff]
        %v733 = vld [vmem:[%s419 + $0x368] sm:$0xff]
        %v734 = vld [vmem:[%s419 + $0x370] sm:$0xff]
        %v735 = vld [vmem:[%s419 + $0x378] sm:$0xff]
        %v736 = vld [vmem:[%s419 + $0x380] sm:$0xff]
        %v737 = vld [vmem:[%s419 + $0x388] sm:$0xff]
        %v738 = vld [vmem:[%s419 + $0x390] sm:$0xff]
        %v739 = vld [vmem:[%s419 + $0x398] sm:$0xff]
        %v740 = vld [vmem:[%s419 + $0x3a0] sm:$0xff]
        %v741 = vld [vmem:[%s419 + $0x3a8] sm:$0xff]
        %v742 = vld [vmem:[%s419 + $0x3b0] sm:$0xff]
        %v743 = vld [vmem:[%s419 + $0x3b8] sm:$0xff]
        %v744 = vld [vmem:[%s419 + $0x3c0] sm:$0xff]
        %v745 = vld [vmem:[%s419 + $0x3c8] sm:$0xff]
        %v746 = vld [vmem:[%s419 + $0x3d0] sm:$0xff]
        %v747 = vld [vmem:[%s419 + $0x3d8] sm:$0xff]
        %v748 = vld [vmem:[%s419 + $0x3e0] sm:$0xff]
        %v749 = vld [vmem:[%s419 + $0x3e8] sm:$0xff]
        %v750 = vld [vmem:[%s419 + $0x3f0] sm:$0xff]
        %v751 = vld [vmem:[%s419 + $0x3f8] sm:$0xff]
        %v752 = vld [vmem:[%s419 + $0x400] sm:$0xff]
        %v753 = vld [vmem:[%s419 + $0x408] sm:$0xff]
        %v754 = vld [vmem:[%s419 + $0x410] sm:$0xff]
        %v755 = vld [vmem:[%s419 + $0x418] sm:$0xff]
        %v756 = vld [vmem:[%s419 + $0x420] sm:$0xff]
        %v757 = vld [vmem:[%s419 + $0x428] sm:$0xff]
        %v758 = vld [vmem:[%s419 + $0x430] sm:$0xff]
        %v759 = vld [vmem:[%s419 + $0x438] sm:$0xff]
        %v760 = vld [vmem:[%s419 + $0x440] sm:$0xff]
        %v761 = vld [vmem:[%s419 + $0x448] sm:$0xff]
        %v762 = vld [vmem:[%s419 + $0x450] sm:$0xff]
        %v763 = vld [vmem:[%s419 + $0x458] sm:$0xff]
        %v764 = vld [vmem:[%s419 + $0x460] sm:$0xff]
        %v765 = vld [vmem:[%s419 + $0x468] sm:$0xff]
        %v766 = vld [vmem:[%s419 + $0x470] sm:$0xff]
        %v767 = vld [vmem:[%s419 + $0x478] sm:$0xff]
        %v768 = vld [vmem:[%s419 + $0x480] sm:$0xff]
        %v769 = vld [vmem:[%s419 + $0x488] sm:$0xff]
        %v770 = vld [vmem:[%s419 + $0x490] sm:$0xff]
        %v771 = vld [vmem:[%s419 + $0x498] sm:$0xff]
        %v772 = vld [vmem:[%s419 + $0x4a0] sm:$0xff]
        %v773 = vld [vmem:[%s419 + $0x4a8] sm:$0xff]
        %v774 = vld [vmem:[%s419 + $0x4b0] sm:$0xff]
        %v775 = vld [vmem:[%s419 + $0x4b8] sm:$0xff]
        %v776 = vld [vmem:[%s419 + $0x4c0] sm:$0xff]
        %v777 = vld [vmem:[%s419 + $0x4c8] sm:$0xff]
        %v778 = vld [vmem:[%s419 + $0x4d0] sm:$0xff]
        %v779 = vld [vmem:[%s419 + $0x4d8] sm:$0xff]
        %v780 = vld [vmem:[%s419 + $0x4e0] sm:$0xff]
        %v781 = vld [vmem:[%s419 + $0x4e8] sm:$0xff]
        %v782 = vld [vmem:[%s419 + $0x4f0] sm:$0xff]
        %v783 = vld [vmem:[%s419 + $0x4f8] sm:$0xff]
        %v784 = vld [vmem:[%s419 + $0x500] sm:$0xff]
        %v785 = vld [vmem:[%s419 + $0x508] sm:$0xff]
        %v786 = vld [vmem:[%s419 + $0x510] sm:$0xff]
        %v787 = vld [vmem:[%s419 + $0x518] sm:$0xff]
        %v788 = vld [vmem:[%s419 + $0x520] sm:$0xff]
        %v789 = vld [vmem:[%s419 + $0x528] sm:$0xff]
        %v790 = vld [vmem:[%s419 + $0x530] sm:$0xff]
        %v791 = vld [vmem:[%s419 + $0x538] sm:$0xff]
        %v792 = vld [vmem:[%s419 + $0x540] sm:$0xff]
        %v793 = vld [vmem:[%s419 + $0x548] sm:$0xff]
        %v794 = vld [vmem:[%s419 + $0x550] sm:$0xff]
        %v795 = vld [vmem:[%s419 + $0x558] sm:$0xff]
        %v796 = vld [vmem:[%s419 + $0x560] sm:$0xff]
        %v797 = vld [vmem:[%s419 + $0x568] sm:$0xff]
        %v798 = vld [vmem:[%s419 + $0x570] sm:$0xff]
        %v799 = vld [vmem:[%s419 + $0x578] sm:$0xff]
        %v800 = vld [vmem:[%s419 + $0x580] sm:$0xff]
        %v801 = vld [vmem:[%s419 + $0x588] sm:$0xff]
        %v802 = vld [vmem:[%s419 + $0x590] sm:$0xff]
        %v803 = vld [vmem:[%s419 + $0x598] sm:$0xff]
        %v804 = vld [vmem:[%s419 + $0x5a0] sm:$0xff]
        %v805 = vld [vmem:[%s419 + $0x5a8] sm:$0xff]
        %v806 = vld [vmem:[%s419 + $0x5b0] sm:$0xff]
        %v807 = vld [vmem:[%s419 + $0x5b8] sm:$0xff]
        %v808 = vld [vmem:[%s419 + $0x5c0] sm:$0xff]
        %v809 = vld [vmem:[%s419 + $0x5c8] sm:$0xff]
        %v810 = vld [vmem:[%s419 + $0x5d0] sm:$0xff]
        %v811 = vld [vmem:[%s419 + $0x5d8] sm:$0xff]
        %v812 = vld [vmem:[%s419 + $0x5e0] sm:$0xff]
        %v813 = vld [vmem:[%s419 + $0x5e8] sm:$0xff]
        %v814 = vld [vmem:[%s419 + $0x5f0] sm:$0xff]
        %v815 = vld [vmem:[%s419 + $0x5f8] sm:$0xff]
        %v816 = vld [vmem:[%s419 + $0x600] sm:$0xff]
        %v817 = vld [vmem:[%s419 + $0x608] sm:$0xff]
        %v818 = vld [vmem:[%s419 + $0x610] sm:$0xff]
        %v819 = vld [vmem:[%s419 + $0x618] sm:$0xff]
        %v820 = vld [vmem:[%s419 + $0x620] sm:$0xff]
        %v821 = vld [vmem:[%s419 + $0x628] sm:$0xff]
        %v822 = vld [vmem:[%s419 + $0x630] sm:$0xff]
        %v823 = vld [vmem:[%s419 + $0x638] sm:$0xff]
        %v824 = vld [vmem:[%s419 + $0x640] sm:$0xff]
        %v825 = vld [vmem:[%s419 + $0x648] sm:$0xff]
        %v826 = vld [vmem:[%s419 + $0x650] sm:$0xff]
        %v827 = vld [vmem:[%s419 + $0x658] sm:$0xff]
        %v828 = vld [vmem:[%s419 + $0x660] sm:$0xff]
        %v829 = vld [vmem:[%s419 + $0x668] sm:$0xff]
        %v830 = vld [vmem:[%s419 + $0x670] sm:$0xff]
        %v831 = vld [vmem:[%s419 + $0x678] sm:$0xff]
        %v832 = vld [vmem:[%s419 + $0x680] sm:$0xff]
        %v833 = vld [vmem:[%s419 + $0x688] sm:$0xff]
        %v834 = vld [vmem:[%s419 + $0x690] sm:$0xff]
        %v835 = vld [vmem:[%s419 + $0x698] sm:$0xff]
        %v836 = vld [vmem:[%s419 + $0x6a0] sm:$0xff]
        %v837 = vld [vmem:[%s419 + $0x6a8] sm:$0xff]
        %v838 = vld [vmem:[%s419 + $0x6b0] sm:$0xff]
        %v839 = vld [vmem:[%s419 + $0x6b8] sm:$0xff]
        %v840 = vld [vmem:[%s419 + $0x6c0] sm:$0xff]
        %v841 = vld [vmem:[%s419 + $0x6c8] sm:$0xff]
        %v842 = vld [vmem:[%s419 + $0x6d0] sm:$0xff]
        %v843 = vld [vmem:[%s419 + $0x6d8] sm:$0xff]
        %v844 = vld [vmem:[%s419 + $0x6e0] sm:$0xff]
        %v845 = vld [vmem:[%s419 + $0x6e8] sm:$0xff]
        %v846 = vld [vmem:[%s419 + $0x6f0] sm:$0xff]
        %v847 = vld [vmem:[%s419 + $0x6f8] sm:$0xff]
        %v848 = vld [vmem:[%s419 + $0x700] sm:$0xff]
        %v849 = vld [vmem:[%s419 + $0x708] sm:$0xff]
        %v850 = vld [vmem:[%s419 + $0x710] sm:$0xff]
        %v851 = vld [vmem:[%s419 + $0x718] sm:$0xff]
        %v852 = vld [vmem:[%s419 + $0x720] sm:$0xff]
        %v853 = vld [vmem:[%s419 + $0x728] sm:$0xff]
        %v854 = vld [vmem:[%s419 + $0x730] sm:$0xff]
        %v855 = vld [vmem:[%s419 + $0x738] sm:$0xff]
        %v856 = vld [vmem:[%s419 + $0x740] sm:$0xff]
        %v857 = vld [vmem:[%s419 + $0x748] sm:$0xff]
        %v858 = vld [vmem:[%s419 + $0x750] sm:$0xff]
        %v859 = vld [vmem:[%s419 + $0x758] sm:$0xff]
        %v860 = vld [vmem:[%s419 + $0x760] sm:$0xff]
        %v861 = vld [vmem:[%s419 + $0x768] sm:$0xff]
        %v862 = vld [vmem:[%s419 + $0x770] sm:$0xff]
        %v863 = vld [vmem:[%s419 + $0x778] sm:$0xff]
        %v864 = vld [vmem:[%s419 + $0x780] sm:$0xff]
        %v865 = vld [vmem:[%s419 + $0x788] sm:$0xff]
        %v866 = vld [vmem:[%s419 + $0x790] sm:$0xff]
        %v867 = vld [vmem:[%s419 + $0x798] sm:$0xff]
        %v868 = vld [vmem:[%s419 + $0x7a0] sm:$0xff]
        %v869 = vld [vmem:[%s419 + $0x7a8] sm:$0xff]
        %v870 = vld [vmem:[%s419 + $0x7b0] sm:$0xff]
        %v871 = vld [vmem:[%s419 + $0x7b8] sm:$0xff]
        %v872 = vld [vmem:[%s419 + $0x7c0] sm:$0xff]
        %v873 = vld [vmem:[%s419 + $0x7c8] sm:$0xff]
        %v874 = vld [vmem:[%s419 + $0x7d0] sm:$0xff]
        %v875 = vld [vmem:[%s419 + $0x7d8] sm:$0xff]
        %v876 = vld [vmem:[%s419 + $0x7e0] sm:$0xff]
        %v877 = vld [vmem:[%s419 + $0x7e8] sm:$0xff]
        %v878 = vld [vmem:[%s419 + $0x7f0] sm:$0xff]
        %v879 = vld [vmem:[%s419 + $0x7f8] sm:$0xff]
        %v880 = vld [vmem:[%s419 + $0x800] sm:$0xff]
        %v881 = vld [vmem:[%s419 + $0x808] sm:$0xff]
        %v882 = vld [vmem:[%s419 + $0x810] sm:$0xff]
        %v883 = vld [vmem:[%s419 + $0x818] sm:$0xff]
        %v884 = vld [vmem:[%s419 + $0x820] sm:$0xff]
        %v885 = vld [vmem:[%s419 + $0x828] sm:$0xff]
        %v886 = vld [vmem:[%s419 + $0x830] sm:$0xff]
        %v887 = vld [vmem:[%s419 + $0x838] sm:$0xff]
        %v888 = vld [vmem:[%s419 + $0x840] sm:$0xff]
        %v889 = vld [vmem:[%s419 + $0x848] sm:$0xff]
        %v890 = vld [vmem:[%s419 + $0x850] sm:$0xff]
        %v891 = vld [vmem:[%s419 + $0x858] sm:$0xff]
        %v892 = vld [vmem:[%s419 + $0x860] sm:$0xff]
        %v893 = vld [vmem:[%s419 + $0x868] sm:$0xff]
        %v894 = vld [vmem:[%s419 + $0x870] sm:$0xff]
        %v895 = vld [vmem:[%s419 + $0x878] sm:$0xff]
        %v896 = vld [vmem:[%s419 + $0x880] sm:$0xff]
        %v897 = vld [vmem:[%s419 + $0x888] sm:$0xff]
        %v898 = vld [vmem:[%s419 + $0x890] sm:$0xff]
        %v899 = vld [vmem:[%s419 + $0x898] sm:$0xff]
        %v900 = vld [vmem:[%s419 + $0x8a0] sm:$0xff]
        %v901 = vld [vmem:[%s419 + $0x8a8] sm:$0xff]
        %v902 = vld [vmem:[%s419 + $0x8b0] sm:$0xff]
        %v903 = vld [vmem:[%s419 + $0x8b8] sm:$0xff]
        %v904 = vld [vmem:[%s419 + $0x8c0] sm:$0xff]
        %v905 = vld [vmem:[%s419 + $0x8c8] sm:$0xff]
        %v906 = vld [vmem:[%s419 + $0x8d0] sm:$0xff]
        %v907 = vld [vmem:[%s419 + $0x8d8] sm:$0xff]
        %v908 = vld [vmem:[%s419 + $0x8e0] sm:$0xff]
        %v909 = vld [vmem:[%s419 + $0x8e8] sm:$0xff]
        %v910 = vld [vmem:[%s419 + $0x8f0] sm:$0xff]
        %v911 = vld [vmem:[%s419 + $0x8f8] sm:$0xff]
        %v912 = vld [vmem:[%s419 + $0x900] sm:$0xff]
        %v913 = vld [vmem:[%s419 + $0x908] sm:$0xff]
        %v914 = vld [vmem:[%s419 + $0x910] sm:$0xff]
        %v915 = vld [vmem:[%s419 + $0x918] sm:$0xff]
        %v916 = vld [vmem:[%s419 + $0x920] sm:$0xff]
        %v917 = vld [vmem:[%s419 + $0x928] sm:$0xff]
        %v918 = vld [vmem:[%s419 + $0x930] sm:$0xff]
        %v919 = vld [vmem:[%s419 + $0x938] sm:$0xff]
        %v920 = vld [vmem:[%s419 + $0x940] sm:$0xff]
        %v921 = vld [vmem:[%s419 + $0x948] sm:$0xff]
        %v922 = vld [vmem:[%s419 + $0x950] sm:$0xff]
        %v923 = vld [vmem:[%s419 + $0x958] sm:$0xff]
        %v924 = vld [vmem:[%s419 + $0x960] sm:$0xff]
        %v925 = vld [vmem:[%s419 + $0x968] sm:$0xff]
        %v926 = vld [vmem:[%s419 + $0x970] sm:$0xff]
        %v927 = vld [vmem:[%s419 + $0x978] sm:$0xff]
        %v928 = vld [vmem:[%s419 + $0x980] sm:$0xff]
        %v929 = vld [vmem:[%s419 + $0x988] sm:$0xff]
        %v930 = vld [vmem:[%s419 + $0x990] sm:$0xff]
        %v931 = vld [vmem:[%s419 + $0x998] sm:$0xff]
        %v932 = vld [vmem:[%s419 + $0x9a0] sm:$0xff]
        %v933 = vld [vmem:[%s419 + $0x9a8] sm:$0xff]
        %v934 = vld [vmem:[%s419 + $0x9b0] sm:$0xff]
        %v935 = vld [vmem:[%s419 + $0x9b8] sm:$0xff]
        %v936 = vld [vmem:[%s419 + $0x9c0] sm:$0xff]
        %v937 = vld [vmem:[%s419 + $0x9c8] sm:$0xff]
        %v938 = vld [vmem:[%s419 + $0x9d0] sm:$0xff]
        %v939 = vld [vmem:[%s419 + $0x9d8] sm:$0xff]
        %v940 = vld [vmem:[%s419 + $0x9e0] sm:$0xff]
        %v941 = vld [vmem:[%s419 + $0x9e8] sm:$0xff]
        %v942 = vld [vmem:[%s419 + $0x9f0] sm:$0xff]
        %v943 = vld [vmem:[%s419 + $0x9f8] sm:$0xff]
        %v944 = vld [vmem:[%s419 + $0xa00] sm:$0xff]
        %v945 = vld [vmem:[%s419 + $0xa08] sm:$0xff]
        %v946 = vld [vmem:[%s419 + $0xa10] sm:$0xff]
        %v947 = vld [vmem:[%s419 + $0xa18] sm:$0xff]
        %v948 = vld [vmem:[%s419 + $0xa20] sm:$0xff]
        %v949 = vld [vmem:[%s419 + $0xa28] sm:$0xff]
        %v950 = vld [vmem:[%s419 + $0xa30] sm:$0xff]
        %v951 = vld [vmem:[%s419 + $0xa38] sm:$0xff]
        %v952 = vld [vmem:[%s419 + $0xa40] sm:$0xff]
        %v953 = vld [vmem:[%s419 + $0xa48] sm:$0xff]
        %v954 = vld [vmem:[%s419 + $0xa50] sm:$0xff]
        %v955 = vld [vmem:[%s419 + $0xa58] sm:$0xff]
        %v956 = vld [vmem:[%s419 + $0xa60] sm:$0xff]
        %v957 = vld [vmem:[%s419 + $0xa68] sm:$0xff]
        %v958 = vld [vmem:[%s419 + $0xa70] sm:$0xff]
        %v959 = vld [vmem:[%s419 + $0xa78] sm:$0xff]
        %v960 = vld [vmem:[%s419 + $0xa80] sm:$0xff]
        %v961 = vld [vmem:[%s419 + $0xa88] sm:$0xff]
        %v962 = vld [vmem:[%s419 + $0xa90] sm:$0xff]
        %v963 = vld [vmem:[%s419 + $0xa98] sm:$0xff]
        %v964 = vld [vmem:[%s419 + $0xaa0] sm:$0xff]
        %v965 = vld [vmem:[%s419 + $0xaa8] sm:$0xff]
        %v966 = vld [vmem:[%s419 + $0xab0] sm:$0xff]
        %v967 = vld [vmem:[%s419 + $0xab8] sm:$0xff]
        %v968 = vld [vmem:[%s419 + $0xac0] sm:$0xff]
        %v969 = vld [vmem:[%s419 + $0xac8] sm:$0xff]
        %v970 = vld [vmem:[%s419 + $0xad0] sm:$0xff]
        %v971 = vld [vmem:[%s419 + $0xad8] sm:$0xff]
        %v972 = vld [vmem:[%s419 + $0xae0] sm:$0xff]
        %v973 = vld [vmem:[%s419 + $0xae8] sm:$0xff]
        %v974 = vld [vmem:[%s419 + $0xaf0] sm:$0xff]
        %v975 = vld [vmem:[%s419 + $0xaf8] sm:$0xff]
        %v976 = vld [vmem:[%s419 + $0xb00] sm:$0xff]
        %v977 = vld [vmem:[%s419 + $0xb08] sm:$0xff]
        %v978 = vld [vmem:[%s419 + $0xb10] sm:$0xff]
        %v979 = vld [vmem:[%s419 + $0xb18] sm:$0xff]
        %v980 = vld [vmem:[%s419 + $0xb20] sm:$0xff]
        %v981 = vld [vmem:[%s419 + $0xb28] sm:$0xff]
        %v982 = vld [vmem:[%s419 + $0xb30] sm:$0xff]
        %v983 = vld [vmem:[%s419 + $0xb38] sm:$0xff]
        %v984 = vld [vmem:[%s419 + $0xb40] sm:$0xff]
        %v985 = vld [vmem:[%s419 + $0xb48] sm:$0xff]
        %v986 = vld [vmem:[%s419 + $0xb50] sm:$0xff]
        %v987 = vld [vmem:[%s419 + $0xb58] sm:$0xff]
        %v988 = vld [vmem:[%s419 + $0xb60] sm:$0xff]
        %v989 = vld [vmem:[%s419 + $0xb68] sm:$0xff]
        %v990 = vld [vmem:[%s419 + $0xb70] sm:$0xff]
        %v991 = vld [vmem:[%s419 + $0xb78] sm:$0xff]
        %v992 = vld [vmem:[%s419 + $0xb80] sm:$0xff]
        %v993 = vld [vmem:[%s419 + $0xb88] sm:$0xff]
        %v994 = vld [vmem:[%s419 + $0xb90] sm:$0xff]
        %v995 = vld [vmem:[%s419 + $0xb98] sm:$0xff]
        %v996 = vld [vmem:[%s419 + $0xba0] sm:$0xff]
        %v997 = vld [vmem:[%s419 + $0xba8] sm:$0xff]
        %v998 = vld [vmem:[%s419 + $0xbb0] sm:$0xff]
        %v999 = vld [vmem:[%s419 + $0xbb8] sm:$0xff]
        %v1000 = vld [vmem:[%s419 + $0xbc0] sm:$0xff]
        %v1001 = vld [vmem:[%s419 + $0xbc8] sm:$0xff]
        %v1002 = vld [vmem:[%s419 + $0xbd0] sm:$0xff]
        %v1003 = vld [vmem:[%s419 + $0xbd8] sm:$0xff]
        %v1004 = vld [vmem:[%s419 + $0xbe0] sm:$0xff]
        %v1005 = vld [vmem:[%s419 + $0xbe8] sm:$0xff]
        %v1006 = vld [vmem:[%s419 + $0xbf0] sm:$0xff]
        %v1007 = vld [vmem:[%s419 + $0xbf8] sm:$0xff]
        %v1008 = vld [vmem:[%s419 + $0xc00] sm:$0xff]
        %v1009 = vld [vmem:[%s419 + $0xc08] sm:$0xff]
        %v1010 = vld [vmem:[%s419 + $0xc10] sm:$0xff]
        %v1011 = vld [vmem:[%s419 + $0xc18] sm:$0xff]
        %v1012 = vld [vmem:[%s419 + $0xc20] sm:$0xff]
        %v1013 = vld [vmem:[%s419 + $0xc28] sm:$0xff]
        %v1014 = vld [vmem:[%s419 + $0xc30] sm:$0xff]
        %v1015 = vld [vmem:[%s419 + $0xc38] sm:$0xff]
        %v1016 = vld [vmem:[%s419 + $0xc40] sm:$0xff]
        %v1017 = vld [vmem:[%s419 + $0xc48] sm:$0xff]
        %v1018 = vld [vmem:[%s419 + $0xc50] sm:$0xff]
        %v1019 = vld [vmem:[%s419 + $0xc58] sm:$0xff]
        %v1020 = vld [vmem:[%s419 + $0xc60] sm:$0xff]
        %v1021 = vld [vmem:[%s419 + $0xc68] sm:$0xff]
        %v1022 = vld [vmem:[%s419 + $0xc70] sm:$0xff]
        %v1023 = vld [vmem:[%s419 + $0xc78] sm:$0xff]
        %v1024 = vld [vmem:[%s419 + $0xc80] sm:$0xff]
        %v1025 = vld [vmem:[%s419 + $0xc88] sm:$0xff]
        %v1026 = vld [vmem:[%s419 + $0xc90] sm:$0xff]
        %v1027 = vld [vmem:[%s419 + $0xc98] sm:$0xff]
        %v1028 = vld [vmem:[%s419 + $0xca0] sm:$0xff]
        %v1029 = vld [vmem:[%s419 + $0xca8] sm:$0xff]
        %v1030 = vld [vmem:[%s419 + $0xcb0] sm:$0xff]
        %v1031 = vld [vmem:[%s419 + $0xcb8] sm:$0xff]
        %v1032 = vld [vmem:[%s419 + $0xcc0] sm:$0xff]
        %v1033 = vld [vmem:[%s419 + $0xcc8] sm:$0xff]
        %v1034 = vld [vmem:[%s419 + $0xcd0] sm:$0xff]
        %v1035 = vld [vmem:[%s419 + $0xcd8] sm:$0xff]
        %v1036 = vld [vmem:[%s419 + $0xce0] sm:$0xff]
        %v1037 = vld [vmem:[%s419 + $0xce8] sm:$0xff]
        %v1038 = vld [vmem:[%s419 + $0xcf0] sm:$0xff]
        %v1039 = vld [vmem:[%s419 + $0xcf8] sm:$0xff]
        %v1040 = vld [vmem:[%s419 + $0xd00] sm:$0xff]
        %v1041 = vld [vmem:[%s419 + $0xd08] sm:$0xff]
        %v1042 = vld [vmem:[%s419 + $0xd10] sm:$0xff]
        %v1043 = vld [vmem:[%s419 + $0xd18] sm:$0xff]
        %v1044 = vld [vmem:[%s419 + $0xd20] sm:$0xff]
        %v1045 = vld [vmem:[%s419 + $0xd28] sm:$0xff]
        %v1046 = vld [vmem:[%s419 + $0xd30] sm:$0xff]
        %v1047 = vld [vmem:[%s419 + $0xd38] sm:$0xff]
        %v1048 = vld [vmem:[%s419 + $0xd40] sm:$0xff]
        %v1049 = vld [vmem:[%s419 + $0xd48] sm:$0xff]
        %v1050 = vld [vmem:[%s419 + $0xd50] sm:$0xff]
        %v1051 = vld [vmem:[%s419 + $0xd58] sm:$0xff]
        %v1052 = vld [vmem:[%s419 + $0xd60] sm:$0xff]
        %v1053 = vld [vmem:[%s419 + $0xd68] sm:$0xff]
        %v1054 = vld [vmem:[%s419 + $0xd70] sm:$0xff]
        %v1055 = vld [vmem:[%s419 + $0xd78] sm:$0xff]
        %v1056 = vld [vmem:[%s419 + $0xd80] sm:$0xff]
        %v1057 = vld [vmem:[%s419 + $0xd88] sm:$0xff]
        %v1058 = vld [vmem:[%s419 + $0xd90] sm:$0xff]
        %v1059 = vld [vmem:[%s419 + $0xd98] sm:$0xff]
        %v1060 = vld [vmem:[%s419 + $0xda0] sm:$0xff]
        %v1061 = vld [vmem:[%s419 + $0xda8] sm:$0xff]
        %v1062 = vld [vmem:[%s419 + $0xdb0] sm:$0xff]
        %v1063 = vld [vmem:[%s419 + $0xdb8] sm:$0xff]
        %v1064 = vld [vmem:[%s419 + $0xdc0] sm:$0xff]
        %v1065 = vld [vmem:[%s419 + $0xdc8] sm:$0xff]
        %v1066 = vld [vmem:[%s419 + $0xdd0] sm:$0xff]
        %v1067 = vld [vmem:[%s419 + $0xdd8] sm:$0xff]
        %v1068 = vld [vmem:[%s419 + $0xde0] sm:$0xff]
        %v1069 = vld [vmem:[%s419 + $0xde8] sm:$0xff]
        %v1070 = vld [vmem:[%s419 + $0xdf0] sm:$0xff]
        %v1071 = vld [vmem:[%s419 + $0xdf8] sm:$0xff]
        %v1072 = vld [vmem:[%s419 + $0xe00] sm:$0xff]
        %v1073 = vld [vmem:[%s419 + $0xe08] sm:$0xff]
        %v1074 = vld [vmem:[%s419 + $0xe10] sm:$0xff]
        %v1075 = vld [vmem:[%s419 + $0xe18] sm:$0xff]
        %v1076 = vld [vmem:[%s419 + $0xe20] sm:$0xff]
        %v1077 = vld [vmem:[%s419 + $0xe28] sm:$0xff]
        %v1078 = vld [vmem:[%s419 + $0xe30] sm:$0xff]
        %v1079 = vld [vmem:[%s419 + $0xe38] sm:$0xff]
        %v1080 = vld [vmem:[%s419 + $0xe40] sm:$0xff]
        %v1081 = vld [vmem:[%s419 + $0xe48] sm:$0xff]
        %v1082 = vld [vmem:[%s419 + $0xe50] sm:$0xff]
        %v1083 = vld [vmem:[%s419 + $0xe58] sm:$0xff]
        %v1084 = vld [vmem:[%s419 + $0xe60] sm:$0xff]
        %v1085 = vld [vmem:[%s419 + $0xe68] sm:$0xff]
        %v1086 = vld [vmem:[%s419 + $0xe70] sm:$0xff]
        %v1087 = vld [vmem:[%s419 + $0xe78] sm:$0xff]
        %v1088 = vld [vmem:[%s419 + $0xe80] sm:$0xff]
        %v1089 = vld [vmem:[%s419 + $0xe88] sm:$0xff]
        %v1090 = vld [vmem:[%s419 + $0xe90] sm:$0xff]
        %v1091 = vld [vmem:[%s419 + $0xe98] sm:$0xff]
        %v1092 = vld [vmem:[%s419 + $0xea0] sm:$0xff]
        %v1093 = vld [vmem:[%s419 + $0xea8] sm:$0xff]
        %v1094 = vld [vmem:[%s419 + $0xeb0] sm:$0xff]
        %v1095 = vld [vmem:[%s419 + $0xeb8] sm:$0xff]
        %v1096 = vld [vmem:[%s419 + $0xec0] sm:$0xff]
        %v1097 = vld [vmem:[%s419 + $0xec8] sm:$0xff]
        %v1098 = vld [vmem:[%s419 + $0xed0] sm:$0xff]
        %v1099 = vld [vmem:[%s419 + $0xed8] sm:$0xff]
        %v1100 = vld [vmem:[%s419 + $0xee0] sm:$0xff]
        %v1101 = vld [vmem:[%s419 + $0xee8] sm:$0xff]
        %v1102 = vld [vmem:[%s419 + $0xef0] sm:$0xff]
        %v1103 = vld [vmem:[%s419 + $0xef8] sm:$0xff]
        %v1104 = vld [vmem:[%s419 + $0xf00] sm:$0xff]
        %v1105 = vld [vmem:[%s419 + $0xf08] sm:$0xff]
        %v1106 = vld [vmem:[%s419 + $0xf10] sm:$0xff]
        %v1107 = vld [vmem:[%s419 + $0xf18] sm:$0xff]
        %v1108 = vld [vmem:[%s419 + $0xf20] sm:$0xff]
        %v1109 = vld [vmem:[%s419 + $0xf28] sm:$0xff]
        %v1110 = vld [vmem:[%s419 + $0xf30] sm:$0xff]
        %v1111 = vld [vmem:[%s419 + $0xf38] sm:$0xff]
        %v1112 = vld [vmem:[%s419 + $0xf40] sm:$0xff]
        %v1113 = vld [vmem:[%s419 + $0xf48] sm:$0xff]
        %v1114 = vld [vmem:[%s419 + $0xf50] sm:$0xff]
        %v1115 = vld [vmem:[%s419 + $0xf58] sm:$0xff]
        %v1116 = vld [vmem:[%s419 + $0xf60] sm:$0xff]
        %v1117 = vld [vmem:[%s419 + $0xf68] sm:$0xff]
        %v1118 = vld [vmem:[%s419 + $0xf70] sm:$0xff]
        %v1119 = vld [vmem:[%s419 + $0xf78] sm:$0xff]
        %v1120 = vld [vmem:[%s419 + $0xf80] sm:$0xff]
        %v1121 = vld [vmem:[%s419 + $0xf88] sm:$0xff]
        %v1122 = vld [vmem:[%s419 + $0xf90] sm:$0xff]
        %v1123 = vld [vmem:[%s419 + $0xf98] sm:$0xff]
        %v1124 = vld [vmem:[%s419 + $0xfa0] sm:$0xff]
        %v1125 = vld [vmem:[%s419 + $0xfa8] sm:$0xff]
        %v1126 = vld [vmem:[%s419 + $0xfb0] sm:$0xff]
        %v1127 = vld [vmem:[%s419 + $0xfb8] sm:$0xff]
        %v1128 = vld [vmem:[%s419 + $0xfc0] sm:$0xff]
        %v1129 = vld [vmem:[%s419 + $0xfc8] sm:$0xff]
        %v1130 = vld [vmem:[%s419 + $0xfd0] sm:$0xff]
        %v1131 = vld [vmem:[%s419 + $0xfd8] sm:$0xff]
        %v1132 = vld [vmem:[%s419 + $0xfe0] sm:$0xff]
        %v1133 = vld [vmem:[%s419 + $0xfe8] sm:$0xff]
        %v1134 = vld [vmem:[%s419 + $0xff0] sm:$0xff]
        %v1135 = vld [vmem:[%s419 + $0xff8] sm:$0xff]
        %v1232 = vunpack.c.l.b16 %v528
        %v1233 = vunpack.c.h.b16 %v528
        %v1234 = vunpack.c.l.b16 %v529
        %v1235 = vunpack.c.h.b16 %v529
        %v1236 = vunpack.c.l.b16 %v530
        %v1237 = vunpack.c.h.b16 %v530
        %v1238 = vunpack.c.l.b16 %v531
        %v1239 = vunpack.c.h.b16 %v531
        %v1240 = vunpack.c.l.b16 %v532
        %v1241 = vunpack.c.h.b16 %v532
        %v1242 = vunpack.c.l.b16 %v533
        %v1243 = vunpack.c.h.b16 %v533
        %v1244 = vunpack.c.l.b16 %v534
        %v1245 = vunpack.c.h.b16 %v534
        %v1246 = vunpack.c.l.b16 %v535
        %v1247 = vunpack.c.h.b16 %v535
        %v1248 = vunpack.c.l.b16 %v536
        %v1249 = vunpack.c.h.b16 %v536
        %v1250 = vunpack.c.l.b16 %v537
        %v1251 = vunpack.c.h.b16 %v537
        %v1252 = vunpack.c.l.b16 %v538
        %v1253 = vunpack.c.h.b16 %v538
        %v1254 = vunpack.c.l.b16 %v539
        %v1255 = vunpack.c.h.b16 %v539
        %v1256 = vunpack.c.l.b16 %v540
        %v1257 = vunpack.c.h.b16 %v540
        %v1258 = vunpack.c.l.b16 %v541
        %v1259 = vunpack.c.h.b16 %v541
        %v1260 = vunpack.c.l.b16 %v542
        %v1261 = vunpack.c.h.b16 %v542
        %v1262 = vunpack.c.l.b16 %v543
        %v1263 = vunpack.c.h.b16 %v543
        %v1264 = vunpack.c.l.b16 %v544
        %v1265 = vunpack.c.h.b16 %v544
        %v1266 = vunpack.c.l.b16 %v545
        %v1267 = vunpack.c.h.b16 %v545
        %v1268 = vunpack.c.l.b16 %v546
        %v1269 = vunpack.c.h.b16 %v546
        %v1270 = vunpack.c.l.b16 %v547
        %v1271 = vunpack.c.h.b16 %v547
        %v1272 = vunpack.c.l.b16 %v548
        %v1273 = vunpack.c.h.b16 %v548
        %v1274 = vunpack.c.l.b16 %v549
        %v1275 = vunpack.c.h.b16 %v549
        %v1276 = vunpack.c.l.b16 %v550
        %v1277 = vunpack.c.h.b16 %v550
        %v1278 = vunpack.c.l.b16 %v551
        %v1279 = vunpack.c.h.b16 %v551
        %v1280 = vunpack.c.l.b16 %v552
        %v1281 = vunpack.c.h.b16 %v552
        %v1282 = vunpack.c.l.b16 %v553
        %v1283 = vunpack.c.h.b16 %v553
        %v1284 = vunpack.c.l.b16 %v554
        %v1285 = vunpack.c.h.b16 %v554
        %v1286 = vunpack.c.l.b16 %v555
        %v1287 = vunpack.c.h.b16 %v555
        %v1288 = vunpack.c.l.b16 %v556
        %v1289 = vunpack.c.h.b16 %v556
        %v1290 = vunpack.c.l.b16 %v557
        %v1291 = vunpack.c.h.b16 %v557
        %v1292 = vunpack.c.l.b16 %v558
        %v1293 = vunpack.c.h.b16 %v558
        %v1294 = vunpack.c.l.b16 %v559
        %v1295 = vunpack.c.h.b16 %v559
        %v1296 = vunpack.c.l.b16 %v560
        %v1297 = vunpack.c.h.b16 %v560
        %v1298 = vunpack.c.l.b16 %v561
        %v1299 = vunpack.c.h.b16 %v561
        %v1300 = vunpack.c.l.b16 %v562
        %v1301 = vunpack.c.h.b16 %v562
        %v1302 = vunpack.c.l.b16 %v563
        %v1303 = vunpack.c.h.b16 %v563
        %v1304 = vunpack.c.l.b16 %v564
        %v1305 = vunpack.c.h.b16 %v564
        %v1306 = vunpack.c.l.b16 %v565
        %v1307 = vunpack.c.h.b16 %v565
        %v1308 = vunpack.c.l.b16 %v566
        %v1309 = vunpack.c.h.b16 %v566
        %v1310 = vunpack.c.l.b16 %v567
        %v1311 = vunpack.c.h.b16 %v567
        %v1312 = vunpack.c.l.b16 %v568
        %v1313 = vunpack.c.h.b16 %v568
        %v1314 = vunpack.c.l.b16 %v569
        %v1315 = vunpack.c.h.b16 %v569
        %v1316 = vunpack.c.l.b16 %v570
        %v1317 = vunpack.c.h.b16 %v570
        %v1318 = vunpack.c.l.b16 %v571
        %v1319 = vunpack.c.h.b16 %v571
        %v1320 = vunpack.c.l.b16 %v572
        %v1321 = vunpack.c.h.b16 %v572
        %v1322 = vunpack.c.l.b16 %v573
        %v1323 = vunpack.c.h.b16 %v573
        %v1324 = vunpack.c.l.b16 %v574
        %v1325 = vunpack.c.h.b16 %v574
        %v1326 = vunpack.c.l.b16 %v575
        %v1327 = vunpack.c.h.b16 %v575
        %v1328 = vunpack.c.l.b16 %v576
        %v1329 = vunpack.c.h.b16 %v576
        %v1330 = vunpack.c.l.b16 %v577
        %v1331 = vunpack.c.h.b16 %v577
        %v1332 = vunpack.c.l.b16 %v578
        %v1333 = vunpack.c.h.b16 %v578
        %v1334 = vunpack.c.l.b16 %v579
        %v1335 = vunpack.c.h.b16 %v579
        %v1336 = vunpack.c.l.b16 %v580
        %v1337 = vunpack.c.h.b16 %v580
        %v1338 = vunpack.c.l.b16 %v581
        %v1339 = vunpack.c.h.b16 %v581
        %v1340 = vunpack.c.l.b16 %v582
        %v1341 = vunpack.c.h.b16 %v582
        %v1342 = vunpack.c.l.b16 %v583
        %v1343 = vunpack.c.h.b16 %v583
        %v1344 = vunpack.c.l.b16 %v584
        %v1345 = vunpack.c.h.b16 %v584
        %v1346 = vunpack.c.l.b16 %v585
        %v1347 = vunpack.c.h.b16 %v585
        %v1348 = vunpack.c.l.b16 %v586
        %v1349 = vunpack.c.h.b16 %v586
        %v1350 = vunpack.c.l.b16 %v587
        %v1351 = vunpack.c.h.b16 %v587
        %v1352 = vunpack.c.l.b16 %v588
        %v1353 = vunpack.c.h.b16 %v588
        %v1354 = vunpack.c.l.b16 %v589
        %v1355 = vunpack.c.h.b16 %v589
        %v1356 = vunpack.c.l.b16 %v590
        %v1357 = vunpack.c.h.b16 %v590
        %v1358 = vunpack.c.l.b16 %v591
        %v1359 = vunpack.c.h.b16 %v591
        %v1360 = vunpack.c.l.b16 %v592
        %v1361 = vunpack.c.h.b16 %v592
        %v1362 = vunpack.c.l.b16 %v593
        %v1363 = vunpack.c.h.b16 %v593
        %v1364 = vunpack.c.l.b16 %v594
        %v1365 = vunpack.c.h.b16 %v594
        %v1366 = vunpack.c.l.b16 %v595
        %v1367 = vunpack.c.h.b16 %v595
        %v1368 = vunpack.c.l.b16 %v596
        %v1369 = vunpack.c.h.b16 %v596
        %v1370 = vunpack.c.l.b16 %v597
        %v1371 = vunpack.c.h.b16 %v597
        %v1372 = vunpack.c.l.b16 %v598
        %v1373 = vunpack.c.h.b16 %v598
        %v1374 = vunpack.c.l.b16 %v599
        %v1375 = vunpack.c.h.b16 %v599
        %v1376 = vunpack.c.l.b16 %v600
        %v1377 = vunpack.c.h.b16 %v600
        %v1378 = vunpack.c.l.b16 %v601
        %v1379 = vunpack.c.h.b16 %v601
        %v1380 = vunpack.c.l.b16 %v602
        %v1381 = vunpack.c.h.b16 %v602
        %v1382 = vunpack.c.l.b16 %v603
        %v1383 = vunpack.c.h.b16 %v603
        %v1384 = vunpack.c.l.b16 %v604
        %v1385 = vunpack.c.h.b16 %v604
        %v1386 = vunpack.c.l.b16 %v605
        %v1387 = vunpack.c.h.b16 %v605
        %v1388 = vunpack.c.l.b16 %v606
        %v1389 = vunpack.c.h.b16 %v606
        %v1390 = vunpack.c.l.b16 %v607
        %v1391 = vunpack.c.h.b16 %v607
        %v1392 = vunpack.c.l.b16 %v608
        %v1393 = vunpack.c.h.b16 %v608
        %v1394 = vunpack.c.l.b16 %v609
        %v1395 = vunpack.c.h.b16 %v609
        %v1396 = vunpack.c.l.b16 %v610
        %v1397 = vunpack.c.h.b16 %v610
        %v1398 = vunpack.c.l.b16 %v611
        %v1399 = vunpack.c.h.b16 %v611
        %v1400 = vunpack.c.l.b16 %v612
        %v1401 = vunpack.c.h.b16 %v612
        %v1402 = vunpack.c.l.b16 %v613
        %v1403 = vunpack.c.h.b16 %v613
        %v1404 = vunpack.c.l.b16 %v614
        %v1405 = vunpack.c.h.b16 %v614
        %v1406 = vunpack.c.l.b16 %v615
        %v1407 = vunpack.c.h.b16 %v615
        %v1408 = vunpack.c.l.b16 %v616
        %v1409 = vunpack.c.h.b16 %v616
        %v1410 = vunpack.c.l.b16 %v617
        %v1411 = vunpack.c.h.b16 %v617
        %v1412 = vunpack.c.l.b16 %v618
        %v1413 = vunpack.c.h.b16 %v618
        %v1414 = vunpack.c.l.b16 %v619
        %v1415 = vunpack.c.h.b16 %v619
        %v1416 = vunpack.c.l.b16 %v620
        %v1417 = vunpack.c.h.b16 %v620
        %v1418 = vunpack.c.l.b16 %v621
        %v1419 = vunpack.c.h.b16 %v621
        %v1420 = vunpack.c.l.b16 %v622
        %v1421 = vunpack.c.h.b16 %v622
        %v1422 = vunpack.c.l.b16 %v623
        %v1423 = vunpack.c.h.b16 %v623
        %v1424 = vpack.c.b16 %v1248, %v1232
        %v1425 = vpack.c.b16 %v1249, %v1233
        %v1426 = vpack.c.b16 %v1250, %v1234
        %v1427 = vpack.c.b16 %v1251, %v1235
        %v1428 = vpack.c.b16 %v1252, %v1236
        %v1429 = vpack.c.b16 %v1253, %v1237
        %v1430 = vpack.c.b16 %v1254, %v1238
        %v1431 = vpack.c.b16 %v1255, %v1239
        %v1432 = vpack.c.b16 %v1256, %v1240
        %v1433 = vpack.c.b16 %v1257, %v1241
        %v1434 = vpack.c.b16 %v1258, %v1242
        %v1435 = vpack.c.b16 %v1259, %v1243
        %v1436 = vpack.c.b16 %v1260, %v1244
        %v1437 = vpack.c.b16 %v1261, %v1245
        %v1438 = vpack.c.b16 %v1262, %v1246
        %v1439 = vpack.c.b16 %v1263, %v1247
        %v1440 = vpack.c.b16 %v1280, %v1264
        %v1441 = vpack.c.b16 %v1281, %v1265
        %v1442 = vpack.c.b16 %v1282, %v1266
        %v1443 = vpack.c.b16 %v1283, %v1267
        %v1444 = vpack.c.b16 %v1284, %v1268
        %v1445 = vpack.c.b16 %v1285, %v1269
        %v1446 = vpack.c.b16 %v1286, %v1270
        %v1447 = vpack.c.b16 %v1287, %v1271
        %v1448 = vpack.c.b16 %v1288, %v1272
        %v1449 = vpack.c.b16 %v1289, %v1273
        %v1450 = vpack.c.b16 %v1290, %v1274
        %v1451 = vpack.c.b16 %v1291, %v1275
        %v1452 = vpack.c.b16 %v1292, %v1276
        %v1453 = vpack.c.b16 %v1293, %v1277
        %v1454 = vpack.c.b16 %v1294, %v1278
        %v1455 = vpack.c.b16 %v1295, %v1279
        %v1456 = vpack.c.b16 %v1312, %v1296
        %v1457 = vpack.c.b16 %v1313, %v1297
        %v1458 = vpack.c.b16 %v1314, %v1298
        %v1459 = vpack.c.b16 %v1315, %v1299
        %v1460 = vpack.c.b16 %v1316, %v1300
        %v1461 = vpack.c.b16 %v1317, %v1301
        %v1462 = vpack.c.b16 %v1318, %v1302
        %v1463 = vpack.c.b16 %v1319, %v1303
        %v1464 = vpack.c.b16 %v1320, %v1304
        %v1465 = vpack.c.b16 %v1321, %v1305
        %v1466 = vpack.c.b16 %v1322, %v1306
        %v1467 = vpack.c.b16 %v1323, %v1307
        %v1468 = vpack.c.b16 %v1324, %v1308
        %v1469 = vpack.c.b16 %v1325, %v1309
        %v1470 = vpack.c.b16 %v1326, %v1310
        %v1471 = vpack.c.b16 %v1327, %v1311
        %v1472 = vpack.c.b16 %v1344, %v1328
        %v1473 = vpack.c.b16 %v1345, %v1329
        %v1474 = vpack.c.b16 %v1346, %v1330
        %v1475 = vpack.c.b16 %v1347, %v1331
        %v1476 = vpack.c.b16 %v1348, %v1332
        %v1477 = vpack.c.b16 %v1349, %v1333
        %v1478 = vpack.c.b16 %v1350, %v1334
        %v1479 = vpack.c.b16 %v1351, %v1335
        %v1480 = vpack.c.b16 %v1352, %v1336
        %v1481 = vpack.c.b16 %v1353, %v1337
        %v1482 = vpack.c.b16 %v1354, %v1338
        %v1483 = vpack.c.b16 %v1355, %v1339
        %v1484 = vpack.c.b16 %v1356, %v1340
        %v1485 = vpack.c.b16 %v1357, %v1341
        %v1486 = vpack.c.b16 %v1358, %v1342
        %v1487 = vpack.c.b16 %v1359, %v1343
        %v1488 = vpack.c.b16 %v1376, %v1360
        %v1489 = vpack.c.b16 %v1377, %v1361
        %v1490 = vpack.c.b16 %v1378, %v1362
        %v1491 = vpack.c.b16 %v1379, %v1363
        %v1492 = vpack.c.b16 %v1380, %v1364
        %v1493 = vpack.c.b16 %v1381, %v1365
        %v1494 = vpack.c.b16 %v1382, %v1366
        %v1495 = vpack.c.b16 %v1383, %v1367
        %v1496 = vpack.c.b16 %v1384, %v1368
        %v1497 = vpack.c.b16 %v1385, %v1369
        %v1498 = vpack.c.b16 %v1386, %v1370
        %v1499 = vpack.c.b16 %v1387, %v1371
        %v1500 = vpack.c.b16 %v1388, %v1372
        %v1501 = vpack.c.b16 %v1389, %v1373
        %v1502 = vpack.c.b16 %v1390, %v1374
        %v1503 = vpack.c.b16 %v1391, %v1375
        %v1504 = vpack.c.b16 %v1408, %v1392
        %v1505 = vpack.c.b16 %v1409, %v1393
        %v1506 = vpack.c.b16 %v1410, %v1394
        %v1507 = vpack.c.b16 %v1411, %v1395
        %v1508 = vpack.c.b16 %v1412, %v1396
        %v1509 = vpack.c.b16 %v1413, %v1397
        %v1510 = vpack.c.b16 %v1414, %v1398
        %v1511 = vpack.c.b16 %v1415, %v1399
        %v1512 = vpack.c.b16 %v1416, %v1400
        %v1513 = vpack.c.b16 %v1417, %v1401
        %v1514 = vpack.c.b16 %v1418, %v1402
        %v1515 = vpack.c.b16 %v1419, %v1403
        %v1516 = vpack.c.b16 %v1420, %v1404
        %v1517 = vpack.c.b16 %v1421, %v1405
        %v1518 = vpack.c.b16 %v1422, %v1406
        %v1519 = vpack.c.b16 %v1423, %v1407
        %v2128 = vunpack.c.l.b16 %v624
        %v2129 = vunpack.c.h.b16 %v624
        %v2130 = vunpack.c.l.b16 %v625
        %v2131 = vunpack.c.h.b16 %v625
        %v2132 = vunpack.c.l.b16 %v626
        %v2133 = vunpack.c.h.b16 %v626
        %v2134 = vunpack.c.l.b16 %v627
        %v2135 = vunpack.c.h.b16 %v627
        %v2136 = vunpack.c.l.b16 %v628
        %v2137 = vunpack.c.h.b16 %v628
        %v2138 = vunpack.c.l.b16 %v629
        %v2139 = vunpack.c.h.b16 %v629
        %v2140 = vunpack.c.l.b16 %v630
        %v2141 = vunpack.c.h.b16 %v630
        %v2142 = vunpack.c.l.b16 %v631
        %v2143 = vunpack.c.h.b16 %v631
        %v2144 = vunpack.c.l.b16 %v632
        %v2145 = vunpack.c.h.b16 %v632
        %v2146 = vunpack.c.l.b16 %v633
        %v2147 = vunpack.c.h.b16 %v633
        %v2148 = vunpack.c.l.b16 %v634
        %v2149 = vunpack.c.h.b16 %v634
        %v2150 = vunpack.c.l.b16 %v635
        %v2151 = vunpack.c.h.b16 %v635
        %v2152 = vunpack.c.l.b16 %v636
        %v2153 = vunpack.c.h.b16 %v636
        %v2154 = vunpack.c.l.b16 %v637
        %v2155 = vunpack.c.h.b16 %v637
        %v2156 = vunpack.c.l.b16 %v638
        %v2157 = vunpack.c.h.b16 %v638
        %v2158 = vunpack.c.l.b16 %v639
        %v2159 = vunpack.c.h.b16 %v639
        %v2160 = vunpack.c.l.b16 %v640
        %v2161 = vunpack.c.h.b16 %v640
        %v2162 = vunpack.c.l.b16 %v641
        %v2163 = vunpack.c.h.b16 %v641
        %v2164 = vunpack.c.l.b16 %v642
        %v2165 = vunpack.c.h.b16 %v642
        %v2166 = vunpack.c.l.b16 %v643
        %v2167 = vunpack.c.h.b16 %v643
        %v2168 = vunpack.c.l.b16 %v644
        %v2169 = vunpack.c.h.b16 %v644
        %v2170 = vunpack.c.l.b16 %v645
        %v2171 = vunpack.c.h.b16 %v645
        %v2172 = vunpack.c.l.b16 %v646
        %v2173 = vunpack.c.h.b16 %v646
        %v2174 = vunpack.c.l.b16 %v647
        %v2175 = vunpack.c.h.b16 %v647
        %v2176 = vunpack.c.l.b16 %v648
        %v2177 = vunpack.c.h.b16 %v648
        %v2178 = vunpack.c.l.b16 %v649
        %v2179 = vunpack.c.h.b16 %v649
        %v2180 = vunpack.c.l.b16 %v650
        %v2181 = vunpack.c.h.b16 %v650
        %v2182 = vunpack.c.l.b16 %v651
        %v2183 = vunpack.c.h.b16 %v651
        %v2184 = vunpack.c.l.b16 %v652
        %v2185 = vunpack.c.h.b16 %v652
        %v2186 = vunpack.c.l.b16 %v653
        %v2187 = vunpack.c.h.b16 %v653
        %v2188 = vunpack.c.l.b16 %v654
        %v2189 = vunpack.c.h.b16 %v654
        %v2190 = vunpack.c.l.b16 %v655
        %v2191 = vunpack.c.h.b16 %v655
        %v2192 = vunpack.c.l.b16 %v656
        %v2193 = vunpack.c.h.b16 %v656
        %v2194 = vunpack.c.l.b16 %v657
        %v2195 = vunpack.c.h.b16 %v657
        %v2196 = vunpack.c.l.b16 %v658
        %v2197 = vunpack.c.h.b16 %v658
        %v2198 = vunpack.c.l.b16 %v659
        %v2199 = vunpack.c.h.b16 %v659
        %v2200 = vunpack.c.l.b16 %v660
        %v2201 = vunpack.c.h.b16 %v660
        %v2202 = vunpack.c.l.b16 %v661
        %v2203 = vunpack.c.h.b16 %v661
        %v2204 = vunpack.c.l.b16 %v662
        %v2205 = vunpack.c.h.b16 %v662
        %v2206 = vunpack.c.l.b16 %v663
        %v2207 = vunpack.c.h.b16 %v663
        %v2208 = vunpack.c.l.b16 %v664
        %v2209 = vunpack.c.h.b16 %v664
        %v2210 = vunpack.c.l.b16 %v665
        %v2211 = vunpack.c.h.b16 %v665
        %v2212 = vunpack.c.l.b16 %v666
        %v2213 = vunpack.c.h.b16 %v666
        %v2214 = vunpack.c.l.b16 %v667
        %v2215 = vunpack.c.h.b16 %v667
        %v2216 = vunpack.c.l.b16 %v668
        %v2217 = vunpack.c.h.b16 %v668
        %v2218 = vunpack.c.l.b16 %v669
        %v2219 = vunpack.c.h.b16 %v669
        %v2220 = vunpack.c.l.b16 %v670
        %v2221 = vunpack.c.h.b16 %v670
        %v2222 = vunpack.c.l.b16 %v671
        %v2223 = vunpack.c.h.b16 %v671
        %v2224 = vunpack.c.l.b16 %v672
        %v2225 = vunpack.c.h.b16 %v672
        %v2226 = vunpack.c.l.b16 %v673
        %v2227 = vunpack.c.h.b16 %v673
        %v2228 = vunpack.c.l.b16 %v674
        %v2229 = vunpack.c.h.b16 %v674
        %v2230 = vunpack.c.l.b16 %v675
        %v2231 = vunpack.c.h.b16 %v675
        %v2232 = vunpack.c.l.b16 %v676
        %v2233 = vunpack.c.h.b16 %v676
        %v2234 = vunpack.c.l.b16 %v677
        %v2235 = vunpack.c.h.b16 %v677
        %v2236 = vunpack.c.l.b16 %v678
        %v2237 = vunpack.c.h.b16 %v678
        %v2238 = vunpack.c.l.b16 %v679
        %v2239 = vunpack.c.h.b16 %v679
        %v2240 = vunpack.c.l.b16 %v680
        %v2241 = vunpack.c.h.b16 %v680
        %v2242 = vunpack.c.l.b16 %v681
        %v2243 = vunpack.c.h.b16 %v681
        %v2244 = vunpack.c.l.b16 %v682
        %v2245 = vunpack.c.h.b16 %v682
        %v2246 = vunpack.c.l.b16 %v683
        %v2247 = vunpack.c.h.b16 %v683
        %v2248 = vunpack.c.l.b16 %v684
        %v2249 = vunpack.c.h.b16 %v684
        %v2250 = vunpack.c.l.b16 %v685
        %v2251 = vunpack.c.h.b16 %v685
        %v2252 = vunpack.c.l.b16 %v686
        %v2253 = vunpack.c.h.b16 %v686
        %v2254 = vunpack.c.l.b16 %v687
        %v2255 = vunpack.c.h.b16 %v687
        %v2256 = vunpack.c.l.b16 %v688
        %v2257 = vunpack.c.h.b16 %v688
        %v2258 = vunpack.c.l.b16 %v689
        %v2259 = vunpack.c.h.b16 %v689
        %v2260 = vunpack.c.l.b16 %v690
        %v2261 = vunpack.c.h.b16 %v690
        %v2262 = vunpack.c.l.b16 %v691
        %v2263 = vunpack.c.h.b16 %v691
        %v2264 = vunpack.c.l.b16 %v692
        %v2265 = vunpack.c.h.b16 %v692
        %v2266 = vunpack.c.l.b16 %v693
        %v2267 = vunpack.c.h.b16 %v693
        %v2268 = vunpack.c.l.b16 %v694
        %v2269 = vunpack.c.h.b16 %v694
        %v2270 = vunpack.c.l.b16 %v695
        %v2271 = vunpack.c.h.b16 %v695
        %v2272 = vunpack.c.l.b16 %v696
        %v2273 = vunpack.c.h.b16 %v696
        %v2274 = vunpack.c.l.b16 %v697
        %v2275 = vunpack.c.h.b16 %v697
        %v2276 = vunpack.c.l.b16 %v698
        %v2277 = vunpack.c.h.b16 %v698
        %v2278 = vunpack.c.l.b16 %v699
        %v2279 = vunpack.c.h.b16 %v699
        %v2280 = vunpack.c.l.b16 %v700
        %v2281 = vunpack.c.h.b16 %v700
        %v2282 = vunpack.c.l.b16 %v701
        %v2283 = vunpack.c.h.b16 %v701
        %v2284 = vunpack.c.l.b16 %v702
        %v2285 = vunpack.c.h.b16 %v702
        %v2286 = vunpack.c.l.b16 %v703
        %v2287 = vunpack.c.h.b16 %v703
        %v2288 = vunpack.c.l.b16 %v704
        %v2289 = vunpack.c.h.b16 %v704
        %v2290 = vunpack.c.l.b16 %v705
        %v2291 = vunpack.c.h.b16 %v705
        %v2292 = vunpack.c.l.b16 %v706
        %v2293 = vunpack.c.h.b16 %v706
        %v2294 = vunpack.c.l.b16 %v707
        %v2295 = vunpack.c.h.b16 %v707
        %v2296 = vunpack.c.l.b16 %v708
        %v2297 = vunpack.c.h.b16 %v708
        %v2298 = vunpack.c.l.b16 %v709
        %v2299 = vunpack.c.h.b16 %v709
        %v2300 = vunpack.c.l.b16 %v710
        %v2301 = vunpack.c.h.b16 %v710
        %v2302 = vunpack.c.l.b16 %v711
        %v2303 = vunpack.c.h.b16 %v711
        %v2304 = vunpack.c.l.b16 %v712
        %v2305 = vunpack.c.h.b16 %v712
        %v2306 = vunpack.c.l.b16 %v713
        %v2307 = vunpack.c.h.b16 %v713
        %v2308 = vunpack.c.l.b16 %v714
        %v2309 = vunpack.c.h.b16 %v714
        %v2310 = vunpack.c.l.b16 %v715
        %v2311 = vunpack.c.h.b16 %v715
        %v2312 = vunpack.c.l.b16 %v716
        %v2313 = vunpack.c.h.b16 %v716
        %v2314 = vunpack.c.l.b16 %v717
        %v2315 = vunpack.c.h.b16 %v717
        %v2316 = vunpack.c.l.b16 %v718
        %v2317 = vunpack.c.h.b16 %v718
        %v2318 = vunpack.c.l.b16 %v719
        %v2319 = vunpack.c.h.b16 %v719
        %v2320 = vunpack.c.l.b16 %v720
        %v2321 = vunpack.c.h.b16 %v720
        %v2322 = vunpack.c.l.b16 %v721
        %v2323 = vunpack.c.h.b16 %v721
        %v2324 = vunpack.c.l.b16 %v722
        %v2325 = vunpack.c.h.b16 %v722
        %v2326 = vunpack.c.l.b16 %v723
        %v2327 = vunpack.c.h.b16 %v723
        %v2328 = vunpack.c.l.b16 %v724
        %v2329 = vunpack.c.h.b16 %v724
        %v2330 = vunpack.c.l.b16 %v725
        %v2331 = vunpack.c.h.b16 %v725
        %v2332 = vunpack.c.l.b16 %v726
        %v2333 = vunpack.c.h.b16 %v726
        %v2334 = vunpack.c.l.b16 %v727
        %v2335 = vunpack.c.h.b16 %v727
        %v2336 = vunpack.c.l.b16 %v728
        %v2337 = vunpack.c.h.b16 %v728
        %v2338 = vunpack.c.l.b16 %v729
        %v2339 = vunpack.c.h.b16 %v729
        %v2340 = vunpack.c.l.b16 %v730
        %v2341 = vunpack.c.h.b16 %v730
        %v2342 = vunpack.c.l.b16 %v731
        %v2343 = vunpack.c.h.b16 %v731
        %v2344 = vunpack.c.l.b16 %v732
        %v2345 = vunpack.c.h.b16 %v732
        %v2346 = vunpack.c.l.b16 %v733
        %v2347 = vunpack.c.h.b16 %v733
        %v2348 = vunpack.c.l.b16 %v734
        %v2349 = vunpack.c.h.b16 %v734
        %v2350 = vunpack.c.l.b16 %v735
        %v2351 = vunpack.c.h.b16 %v735
        %v2352 = vunpack.c.l.b16 %v736
        %v2353 = vunpack.c.h.b16 %v736
        %v2354 = vunpack.c.l.b16 %v737
        %v2355 = vunpack.c.h.b16 %v737
        %v2356 = vunpack.c.l.b16 %v738
        %v2357 = vunpack.c.h.b16 %v738
        %v2358 = vunpack.c.l.b16 %v739
        %v2359 = vunpack.c.h.b16 %v739
        %v2360 = vunpack.c.l.b16 %v740
        %v2361 = vunpack.c.h.b16 %v740
        %v2362 = vunpack.c.l.b16 %v741
        %v2363 = vunpack.c.h.b16 %v741
        %v2364 = vunpack.c.l.b16 %v742
        %v2365 = vunpack.c.h.b16 %v742
        %v2366 = vunpack.c.l.b16 %v743
        %v2367 = vunpack.c.h.b16 %v743
        %v2368 = vunpack.c.l.b16 %v744
        %v2369 = vunpack.c.h.b16 %v744
        %v2370 = vunpack.c.l.b16 %v745
        %v2371 = vunpack.c.h.b16 %v745
        %v2372 = vunpack.c.l.b16 %v746
        %v2373 = vunpack.c.h.b16 %v746
        %v2374 = vunpack.c.l.b16 %v747
        %v2375 = vunpack.c.h.b16 %v747
        %v2376 = vunpack.c.l.b16 %v748
        %v2377 = vunpack.c.h.b16 %v748
        %v2378 = vunpack.c.l.b16 %v749
        %v2379 = vunpack.c.h.b16 %v749
        %v2380 = vunpack.c.l.b16 %v750
        %v2381 = vunpack.c.h.b16 %v750
        %v2382 = vunpack.c.l.b16 %v751
        %v2383 = vunpack.c.h.b16 %v751
        %v2384 = vunpack.c.l.b16 %v752
        %v2385 = vunpack.c.h.b16 %v752
        %v2386 = vunpack.c.l.b16 %v753
        %v2387 = vunpack.c.h.b16 %v753
        %v2388 = vunpack.c.l.b16 %v754
        %v2389 = vunpack.c.h.b16 %v754
        %v2390 = vunpack.c.l.b16 %v755
        %v2391 = vunpack.c.h.b16 %v755
        %v2392 = vunpack.c.l.b16 %v756
        %v2393 = vunpack.c.h.b16 %v756
        %v2394 = vunpack.c.l.b16 %v757
        %v2395 = vunpack.c.h.b16 %v757
        %v2396 = vunpack.c.l.b16 %v758
        %v2397 = vunpack.c.h.b16 %v758
        %v2398 = vunpack.c.l.b16 %v759
        %v2399 = vunpack.c.h.b16 %v759
        %v2400 = vunpack.c.l.b16 %v760
        %v2401 = vunpack.c.h.b16 %v760
        %v2402 = vunpack.c.l.b16 %v761
        %v2403 = vunpack.c.h.b16 %v761
        %v2404 = vunpack.c.l.b16 %v762
        %v2405 = vunpack.c.h.b16 %v762
        %v2406 = vunpack.c.l.b16 %v763
        %v2407 = vunpack.c.h.b16 %v763
        %v2408 = vunpack.c.l.b16 %v764
        %v2409 = vunpack.c.h.b16 %v764
        %v2410 = vunpack.c.l.b16 %v765
        %v2411 = vunpack.c.h.b16 %v765
        %v2412 = vunpack.c.l.b16 %v766
        %v2413 = vunpack.c.h.b16 %v766
        %v2414 = vunpack.c.l.b16 %v767
        %v2415 = vunpack.c.h.b16 %v767
        %v2416 = vunpack.c.l.b16 %v768
        %v2417 = vunpack.c.h.b16 %v768
        %v2418 = vunpack.c.l.b16 %v769
        %v2419 = vunpack.c.h.b16 %v769
        %v2420 = vunpack.c.l.b16 %v770
        %v2421 = vunpack.c.h.b16 %v770
        %v2422 = vunpack.c.l.b16 %v771
        %v2423 = vunpack.c.h.b16 %v771
        %v2424 = vunpack.c.l.b16 %v772
        %v2425 = vunpack.c.h.b16 %v772
        %v2426 = vunpack.c.l.b16 %v773
        %v2427 = vunpack.c.h.b16 %v773
        %v2428 = vunpack.c.l.b16 %v774
        %v2429 = vunpack.c.h.b16 %v774
        %v2430 = vunpack.c.l.b16 %v775
        %v2431 = vunpack.c.h.b16 %v775
        %v2432 = vunpack.c.l.b16 %v776
        %v2433 = vunpack.c.h.b16 %v776
        %v2434 = vunpack.c.l.b16 %v777
        %v2435 = vunpack.c.h.b16 %v777
        %v2436 = vunpack.c.l.b16 %v778
        %v2437 = vunpack.c.h.b16 %v778
        %v2438 = vunpack.c.l.b16 %v779
        %v2439 = vunpack.c.h.b16 %v779
        %v2440 = vunpack.c.l.b16 %v780
        %v2441 = vunpack.c.h.b16 %v780
        %v2442 = vunpack.c.l.b16 %v781
        %v2443 = vunpack.c.h.b16 %v781
        %v2444 = vunpack.c.l.b16 %v782
        %v2445 = vunpack.c.h.b16 %v782
        %v2446 = vunpack.c.l.b16 %v783
        %v2447 = vunpack.c.h.b16 %v783
        %v2448 = vunpack.c.l.b16 %v784
        %v2449 = vunpack.c.h.b16 %v784
        %v2450 = vunpack.c.l.b16 %v785
        %v2451 = vunpack.c.h.b16 %v785
        %v2452 = vunpack.c.l.b16 %v786
        %v2453 = vunpack.c.h.b16 %v786
        %v2454 = vunpack.c.l.b16 %v787
        %v2455 = vunpack.c.h.b16 %v787
        %v2456 = vunpack.c.l.b16 %v788
        %v2457 = vunpack.c.h.b16 %v788
        %v2458 = vunpack.c.l.b16 %v789
        %v2459 = vunpack.c.h.b16 %v789
        %v2460 = vunpack.c.l.b16 %v790
        %v2461 = vunpack.c.h.b16 %v790
        %v2462 = vunpack.c.l.b16 %v791
        %v2463 = vunpack.c.h.b16 %v791
        %v2464 = vunpack.c.l.b16 %v792
        %v2465 = vunpack.c.h.b16 %v792
        %v2466 = vunpack.c.l.b16 %v793
        %v2467 = vunpack.c.h.b16 %v793
        %v2468 = vunpack.c.l.b16 %v794
        %v2469 = vunpack.c.h.b16 %v794
        %v2470 = vunpack.c.l.b16 %v795
        %v2471 = vunpack.c.h.b16 %v795
        %v2472 = vunpack.c.l.b16 %v796
        %v2473 = vunpack.c.h.b16 %v796
        %v2474 = vunpack.c.l.b16 %v797
        %v2475 = vunpack.c.h.b16 %v797
        %v2476 = vunpack.c.l.b16 %v798
        %v2477 = vunpack.c.h.b16 %v798
        %v2478 = vunpack.c.l.b16 %v799
        %v2479 = vunpack.c.h.b16 %v799
        %v2480 = vunpack.c.l.b16 %v800
        %v2481 = vunpack.c.h.b16 %v800
        %v2482 = vunpack.c.l.b16 %v801
        %v2483 = vunpack.c.h.b16 %v801
        %v2484 = vunpack.c.l.b16 %v802
        %v2485 = vunpack.c.h.b16 %v802
        %v2486 = vunpack.c.l.b16 %v803
        %v2487 = vunpack.c.h.b16 %v803
        %v2488 = vunpack.c.l.b16 %v804
        %v2489 = vunpack.c.h.b16 %v804
        %v2490 = vunpack.c.l.b16 %v805
        %v2491 = vunpack.c.h.b16 %v805
        %v2492 = vunpack.c.l.b16 %v806
        %v2493 = vunpack.c.h.b16 %v806
        %v2494 = vunpack.c.l.b16 %v807
        %v2495 = vunpack.c.h.b16 %v807
        %v2496 = vunpack.c.l.b16 %v808
        %v2497 = vunpack.c.h.b16 %v808
        %v2498 = vunpack.c.l.b16 %v809
        %v2499 = vunpack.c.h.b16 %v809
        %v2500 = vunpack.c.l.b16 %v810
        %v2501 = vunpack.c.h.b16 %v810
        %v2502 = vunpack.c.l.b16 %v811
        %v2503 = vunpack.c.h.b16 %v811
        %v2504 = vunpack.c.l.b16 %v812
        %v2505 = vunpack.c.h.b16 %v812
        %v2506 = vunpack.c.l.b16 %v813
        %v2507 = vunpack.c.h.b16 %v813
        %v2508 = vunpack.c.l.b16 %v814
        %v2509 = vunpack.c.h.b16 %v814
        %v2510 = vunpack.c.l.b16 %v815
        %v2511 = vunpack.c.h.b16 %v815
        %v2512 = vunpack.c.l.b16 %v816
        %v2513 = vunpack.c.h.b16 %v816
        %v2514 = vunpack.c.l.b16 %v817
        %v2515 = vunpack.c.h.b16 %v817
        %v2516 = vunpack.c.l.b16 %v818
        %v2517 = vunpack.c.h.b16 %v818
        %v2518 = vunpack.c.l.b16 %v819
        %v2519 = vunpack.c.h.b16 %v819
        %v2520 = vunpack.c.l.b16 %v820
        %v2521 = vunpack.c.h.b16 %v820
        %v2522 = vunpack.c.l.b16 %v821
        %v2523 = vunpack.c.h.b16 %v821
        %v2524 = vunpack.c.l.b16 %v822
        %v2525 = vunpack.c.h.b16 %v822
        %v2526 = vunpack.c.l.b16 %v823
        %v2527 = vunpack.c.h.b16 %v823
        %v2528 = vunpack.c.l.b16 %v824
        %v2529 = vunpack.c.h.b16 %v824
        %v2530 = vunpack.c.l.b16 %v825
        %v2531 = vunpack.c.h.b16 %v825
        %v2532 = vunpack.c.l.b16 %v826
        %v2533 = vunpack.c.h.b16 %v826
        %v2534 = vunpack.c.l.b16 %v827
        %v2535 = vunpack.c.h.b16 %v827
        %v2536 = vunpack.c.l.b16 %v828
        %v2537 = vunpack.c.h.b16 %v828
        %v2538 = vunpack.c.l.b16 %v829
        %v2539 = vunpack.c.h.b16 %v829
        %v2540 = vunpack.c.l.b16 %v830
        %v2541 = vunpack.c.h.b16 %v830
        %v2542 = vunpack.c.l.b16 %v831
        %v2543 = vunpack.c.h.b16 %v831
        %v2544 = vunpack.c.l.b16 %v832
        %v2545 = vunpack.c.h.b16 %v832
        %v2546 = vunpack.c.l.b16 %v833
        %v2547 = vunpack.c.h.b16 %v833
        %v2548 = vunpack.c.l.b16 %v834
        %v2549 = vunpack.c.h.b16 %v834
        %v2550 = vunpack.c.l.b16 %v835
        %v2551 = vunpack.c.h.b16 %v835
        %v2552 = vunpack.c.l.b16 %v836
        %v2553 = vunpack.c.h.b16 %v836
        %v2554 = vunpack.c.l.b16 %v837
        %v2555 = vunpack.c.h.b16 %v837
        %v2556 = vunpack.c.l.b16 %v838
        %v2557 = vunpack.c.h.b16 %v838
        %v2558 = vunpack.c.l.b16 %v839
        %v2559 = vunpack.c.h.b16 %v839
        %v2560 = vunpack.c.l.b16 %v840
        %v2561 = vunpack.c.h.b16 %v840
        %v2562 = vunpack.c.l.b16 %v841
        %v2563 = vunpack.c.h.b16 %v841
        %v2564 = vunpack.c.l.b16 %v842
        %v2565 = vunpack.c.h.b16 %v842
        %v2566 = vunpack.c.l.b16 %v843
        %v2567 = vunpack.c.h.b16 %v843
        %v2568 = vunpack.c.l.b16 %v844
        %v2569 = vunpack.c.h.b16 %v844
        %v2570 = vunpack.c.l.b16 %v845
        %v2571 = vunpack.c.h.b16 %v845
        %v2572 = vunpack.c.l.b16 %v846
        %v2573 = vunpack.c.h.b16 %v846
        %v2574 = vunpack.c.l.b16 %v847
        %v2575 = vunpack.c.h.b16 %v847
        %v2576 = vunpack.c.l.b16 %v848
        %v2577 = vunpack.c.h.b16 %v848
        %v2578 = vunpack.c.l.b16 %v849
        %v2579 = vunpack.c.h.b16 %v849
        %v2580 = vunpack.c.l.b16 %v850
        %v2581 = vunpack.c.h.b16 %v850
        %v2582 = vunpack.c.l.b16 %v851
        %v2583 = vunpack.c.h.b16 %v851
        %v2584 = vunpack.c.l.b16 %v852
        %v2585 = vunpack.c.h.b16 %v852
        %v2586 = vunpack.c.l.b16 %v853
        %v2587 = vunpack.c.h.b16 %v853
        %v2588 = vunpack.c.l.b16 %v854
        %v2589 = vunpack.c.h.b16 %v854
        %v2590 = vunpack.c.l.b16 %v855
        %v2591 = vunpack.c.h.b16 %v855
        %v2592 = vunpack.c.l.b16 %v856
        %v2593 = vunpack.c.h.b16 %v856
        %v2594 = vunpack.c.l.b16 %v857
        %v2595 = vunpack.c.h.b16 %v857
        %v2596 = vunpack.c.l.b16 %v858
        %v2597 = vunpack.c.h.b16 %v858
        %v2598 = vunpack.c.l.b16 %v859
        %v2599 = vunpack.c.h.b16 %v859
        %v2600 = vunpack.c.l.b16 %v860
        %v2601 = vunpack.c.h.b16 %v860
        %v2602 = vunpack.c.l.b16 %v861
        %v2603 = vunpack.c.h.b16 %v861
        %v2604 = vunpack.c.l.b16 %v862
        %v2605 = vunpack.c.h.b16 %v862
        %v2606 = vunpack.c.l.b16 %v863
        %v2607 = vunpack.c.h.b16 %v863
        %v2608 = vunpack.c.l.b16 %v864
        %v2609 = vunpack.c.h.b16 %v864
        %v2610 = vunpack.c.l.b16 %v865
        %v2611 = vunpack.c.h.b16 %v865
        %v2612 = vunpack.c.l.b16 %v866
        %v2613 = vunpack.c.h.b16 %v866
        %v2614 = vunpack.c.l.b16 %v867
        %v2615 = vunpack.c.h.b16 %v867
        %v2616 = vunpack.c.l.b16 %v868
        %v2617 = vunpack.c.h.b16 %v868
        %v2618 = vunpack.c.l.b16 %v869
        %v2619 = vunpack.c.h.b16 %v869
        %v2620 = vunpack.c.l.b16 %v870
        %v2621 = vunpack.c.h.b16 %v870
        %v2622 = vunpack.c.l.b16 %v871
        %v2623 = vunpack.c.h.b16 %v871
        %v2624 = vunpack.c.l.b16 %v872
        %v2625 = vunpack.c.h.b16 %v872
        %v2626 = vunpack.c.l.b16 %v873
        %v2627 = vunpack.c.h.b16 %v873
        %v2628 = vunpack.c.l.b16 %v874
        %v2629 = vunpack.c.h.b16 %v874
        %v2630 = vunpack.c.l.b16 %v875
        %v2631 = vunpack.c.h.b16 %v875
        %v2632 = vunpack.c.l.b16 %v876
        %v2633 = vunpack.c.h.b16 %v876
        %v2634 = vunpack.c.l.b16 %v877
        %v2635 = vunpack.c.h.b16 %v877
        %v2636 = vunpack.c.l.b16 %v878
        %v2637 = vunpack.c.h.b16 %v878
        %v2638 = vunpack.c.l.b16 %v879
        %v2639 = vunpack.c.h.b16 %v879
        %v2640 = vunpack.c.l.b16 %v880
        %v2641 = vunpack.c.h.b16 %v880
        %v2642 = vunpack.c.l.b16 %v881
        %v2643 = vunpack.c.h.b16 %v881
        %v2644 = vunpack.c.l.b16 %v882
        %v2645 = vunpack.c.h.b16 %v882
        %v2646 = vunpack.c.l.b16 %v883
        %v2647 = vunpack.c.h.b16 %v883
        %v2648 = vunpack.c.l.b16 %v884
        %v2649 = vunpack.c.h.b16 %v884
        %v2650 = vunpack.c.l.b16 %v885
        %v2651 = vunpack.c.h.b16 %v885
        %v2652 = vunpack.c.l.b16 %v886
        %v2653 = vunpack.c.h.b16 %v886
        %v2654 = vunpack.c.l.b16 %v887
        %v2655 = vunpack.c.h.b16 %v887
        %v2656 = vunpack.c.l.b16 %v888
        %v2657 = vunpack.c.h.b16 %v888
        %v2658 = vunpack.c.l.b16 %v889
        %v2659 = vunpack.c.h.b16 %v889
        %v2660 = vunpack.c.l.b16 %v890
        %v2661 = vunpack.c.h.b16 %v890
        %v2662 = vunpack.c.l.b16 %v891
        %v2663 = vunpack.c.h.b16 %v891
        %v2664 = vunpack.c.l.b16 %v892
        %v2665 = vunpack.c.h.b16 %v892
        %v2666 = vunpack.c.l.b16 %v893
        %v2667 = vunpack.c.h.b16 %v893
        %v2668 = vunpack.c.l.b16 %v894
        %v2669 = vunpack.c.h.b16 %v894
        %v2670 = vunpack.c.l.b16 %v895
        %v2671 = vunpack.c.h.b16 %v895
        %v2672 = vunpack.c.l.b16 %v896
        %v2673 = vunpack.c.h.b16 %v896
        %v2674 = vunpack.c.l.b16 %v897
        %v2675 = vunpack.c.h.b16 %v897
        %v2676 = vunpack.c.l.b16 %v898
        %v2677 = vunpack.c.h.b16 %v898
        %v2678 = vunpack.c.l.b16 %v899
        %v2679 = vunpack.c.h.b16 %v899
        %v2680 = vunpack.c.l.b16 %v900
        %v2681 = vunpack.c.h.b16 %v900
        %v2682 = vunpack.c.l.b16 %v901
        %v2683 = vunpack.c.h.b16 %v901
        %v2684 = vunpack.c.l.b16 %v902
        %v2685 = vunpack.c.h.b16 %v902
        %v2686 = vunpack.c.l.b16 %v903
        %v2687 = vunpack.c.h.b16 %v903
        %v2688 = vunpack.c.l.b16 %v904
        %v2689 = vunpack.c.h.b16 %v904
        %v2690 = vunpack.c.l.b16 %v905
        %v2691 = vunpack.c.h.b16 %v905
        %v2692 = vunpack.c.l.b16 %v906
        %v2693 = vunpack.c.h.b16 %v906
        %v2694 = vunpack.c.l.b16 %v907
        %v2695 = vunpack.c.h.b16 %v907
        %v2696 = vunpack.c.l.b16 %v908
        %v2697 = vunpack.c.h.b16 %v908
        %v2698 = vunpack.c.l.b16 %v909
        %v2699 = vunpack.c.h.b16 %v909
        %v2700 = vunpack.c.l.b16 %v910
        %v2701 = vunpack.c.h.b16 %v910
        %v2702 = vunpack.c.l.b16 %v911
        %v2703 = vunpack.c.h.b16 %v911
        %v2704 = vunpack.c.l.b16 %v912
        %v2705 = vunpack.c.h.b16 %v912
        %v2706 = vunpack.c.l.b16 %v913
        %v2707 = vunpack.c.h.b16 %v913
        %v2708 = vunpack.c.l.b16 %v914
        %v2709 = vunpack.c.h.b16 %v914
        %v2710 = vunpack.c.l.b16 %v915
        %v2711 = vunpack.c.h.b16 %v915
        %v2712 = vunpack.c.l.b16 %v916
        %v2713 = vunpack.c.h.b16 %v916
        %v2714 = vunpack.c.l.b16 %v917
        %v2715 = vunpack.c.h.b16 %v917
        %v2716 = vunpack.c.l.b16 %v918
        %v2717 = vunpack.c.h.b16 %v918
        %v2718 = vunpack.c.l.b16 %v919
        %v2719 = vunpack.c.h.b16 %v919
        %v2720 = vunpack.c.l.b16 %v920
        %v2721 = vunpack.c.h.b16 %v920
        %v2722 = vunpack.c.l.b16 %v921
        %v2723 = vunpack.c.h.b16 %v921
        %v2724 = vunpack.c.l.b16 %v922
        %v2725 = vunpack.c.h.b16 %v922
        %v2726 = vunpack.c.l.b16 %v923
        %v2727 = vunpack.c.h.b16 %v923
        %v2728 = vunpack.c.l.b16 %v924
        %v2729 = vunpack.c.h.b16 %v924
        %v2730 = vunpack.c.l.b16 %v925
        %v2731 = vunpack.c.h.b16 %v925
        %v2732 = vunpack.c.l.b16 %v926
        %v2733 = vunpack.c.h.b16 %v926
        %v2734 = vunpack.c.l.b16 %v927
        %v2735 = vunpack.c.h.b16 %v927
        %v2736 = vunpack.c.l.b16 %v928
        %v2737 = vunpack.c.h.b16 %v928
        %v2738 = vunpack.c.l.b16 %v929
        %v2739 = vunpack.c.h.b16 %v929
        %v2740 = vunpack.c.l.b16 %v930
        %v2741 = vunpack.c.h.b16 %v930
        %v2742 = vunpack.c.l.b16 %v931
        %v2743 = vunpack.c.h.b16 %v931
        %v2744 = vunpack.c.l.b16 %v932
        %v2745 = vunpack.c.h.b16 %v932
        %v2746 = vunpack.c.l.b16 %v933
        %v2747 = vunpack.c.h.b16 %v933
        %v2748 = vunpack.c.l.b16 %v934
        %v2749 = vunpack.c.h.b16 %v934
        %v2750 = vunpack.c.l.b16 %v935
        %v2751 = vunpack.c.h.b16 %v935
        %v2752 = vunpack.c.l.b16 %v936
        %v2753 = vunpack.c.h.b16 %v936
        %v2754 = vunpack.c.l.b16 %v937
        %v2755 = vunpack.c.h.b16 %v937
        %v2756 = vunpack.c.l.b16 %v938
        %v2757 = vunpack.c.h.b16 %v938
        %v2758 = vunpack.c.l.b16 %v939
        %v2759 = vunpack.c.h.b16 %v939
        %v2760 = vunpack.c.l.b16 %v940
        %v2761 = vunpack.c.h.b16 %v940
        %v2762 = vunpack.c.l.b16 %v941
        %v2763 = vunpack.c.h.b16 %v941
        %v2764 = vunpack.c.l.b16 %v942
        %v2765 = vunpack.c.h.b16 %v942
        %v2766 = vunpack.c.l.b16 %v943
        %v2767 = vunpack.c.h.b16 %v943
        %v2768 = vunpack.c.l.b16 %v944
        %v2769 = vunpack.c.h.b16 %v944
        %v2770 = vunpack.c.l.b16 %v945
        %v2771 = vunpack.c.h.b16 %v945
        %v2772 = vunpack.c.l.b16 %v946
        %v2773 = vunpack.c.h.b16 %v946
        %v2774 = vunpack.c.l.b16 %v947
        %v2775 = vunpack.c.h.b16 %v947
        %v2776 = vunpack.c.l.b16 %v948
        %v2777 = vunpack.c.h.b16 %v948
        %v2778 = vunpack.c.l.b16 %v949
        %v2779 = vunpack.c.h.b16 %v949
        %v2780 = vunpack.c.l.b16 %v950
        %v2781 = vunpack.c.h.b16 %v950
        %v2782 = vunpack.c.l.b16 %v951
        %v2783 = vunpack.c.h.b16 %v951
        %v2784 = vunpack.c.l.b16 %v952
        %v2785 = vunpack.c.h.b16 %v952
        %v2786 = vunpack.c.l.b16 %v953
        %v2787 = vunpack.c.h.b16 %v953
        %v2788 = vunpack.c.l.b16 %v954
        %v2789 = vunpack.c.h.b16 %v954
        %v2790 = vunpack.c.l.b16 %v955
        %v2791 = vunpack.c.h.b16 %v955
        %v2792 = vunpack.c.l.b16 %v956
        %v2793 = vunpack.c.h.b16 %v956
        %v2794 = vunpack.c.l.b16 %v957
        %v2795 = vunpack.c.h.b16 %v957
        %v2796 = vunpack.c.l.b16 %v958
        %v2797 = vunpack.c.h.b16 %v958
        %v2798 = vunpack.c.l.b16 %v959
        %v2799 = vunpack.c.h.b16 %v959
        %v2800 = vunpack.c.l.b16 %v960
        %v2801 = vunpack.c.h.b16 %v960
        %v2802 = vunpack.c.l.b16 %v961
        %v2803 = vunpack.c.h.b16 %v961
        %v2804 = vunpack.c.l.b16 %v962
        %v2805 = vunpack.c.h.b16 %v962
        %v2806 = vunpack.c.l.b16 %v963
        %v2807 = vunpack.c.h.b16 %v963
        %v2808 = vunpack.c.l.b16 %v964
        %v2809 = vunpack.c.h.b16 %v964
        %v2810 = vunpack.c.l.b16 %v965
        %v2811 = vunpack.c.h.b16 %v965
        %v2812 = vunpack.c.l.b16 %v966
        %v2813 = vunpack.c.h.b16 %v966
        %v2814 = vunpack.c.l.b16 %v967
        %v2815 = vunpack.c.h.b16 %v967
        %v2816 = vunpack.c.l.b16 %v968
        %v2817 = vunpack.c.h.b16 %v968
        %v2818 = vunpack.c.l.b16 %v969
        %v2819 = vunpack.c.h.b16 %v969
        %v2820 = vunpack.c.l.b16 %v970
        %v2821 = vunpack.c.h.b16 %v970
        %v2822 = vunpack.c.l.b16 %v971
        %v2823 = vunpack.c.h.b16 %v971
        %v2824 = vunpack.c.l.b16 %v972
        %v2825 = vunpack.c.h.b16 %v972
        %v2826 = vunpack.c.l.b16 %v973
        %v2827 = vunpack.c.h.b16 %v973
        %v2828 = vunpack.c.l.b16 %v974
        %v2829 = vunpack.c.h.b16 %v974
        %v2830 = vunpack.c.l.b16 %v975
        %v2831 = vunpack.c.h.b16 %v975
        %v2832 = vunpack.c.l.b16 %v976
        %v2833 = vunpack.c.h.b16 %v976
        %v2834 = vunpack.c.l.b16 %v977
        %v2835 = vunpack.c.h.b16 %v977
        %v2836 = vunpack.c.l.b16 %v978
        %v2837 = vunpack.c.h.b16 %v978
        %v2838 = vunpack.c.l.b16 %v979
        %v2839 = vunpack.c.h.b16 %v979
        %v2840 = vunpack.c.l.b16 %v980
        %v2841 = vunpack.c.h.b16 %v980
        %v2842 = vunpack.c.l.b16 %v981
        %v2843 = vunpack.c.h.b16 %v981
        %v2844 = vunpack.c.l.b16 %v982
        %v2845 = vunpack.c.h.b16 %v982
        %v2846 = vunpack.c.l.b16 %v983
        %v2847 = vunpack.c.h.b16 %v983
        %v2848 = vunpack.c.l.b16 %v984
        %v2849 = vunpack.c.h.b16 %v984
        %v2850 = vunpack.c.l.b16 %v985
        %v2851 = vunpack.c.h.b16 %v985
        %v2852 = vunpack.c.l.b16 %v986
        %v2853 = vunpack.c.h.b16 %v986
        %v2854 = vunpack.c.l.b16 %v987
        %v2855 = vunpack.c.h.b16 %v987
        %v2856 = vunpack.c.l.b16 %v988
        %v2857 = vunpack.c.h.b16 %v988
        %v2858 = vunpack.c.l.b16 %v989
        %v2859 = vunpack.c.h.b16 %v989
        %v2860 = vunpack.c.l.b16 %v990
        %v2861 = vunpack.c.h.b16 %v990
        %v2862 = vunpack.c.l.b16 %v991
        %v2863 = vunpack.c.h.b16 %v991
        %v2864 = vunpack.c.l.b16 %v992
        %v2865 = vunpack.c.h.b16 %v992
        %v2866 = vunpack.c.l.b16 %v993
        %v2867 = vunpack.c.h.b16 %v993
        %v2868 = vunpack.c.l.b16 %v994
        %v2869 = vunpack.c.h.b16 %v994
        %v2870 = vunpack.c.l.b16 %v995
        %v2871 = vunpack.c.h.b16 %v995
        %v2872 = vunpack.c.l.b16 %v996
        %v2873 = vunpack.c.h.b16 %v996
        %v2874 = vunpack.c.l.b16 %v997
        %v2875 = vunpack.c.h.b16 %v997
        %v2876 = vunpack.c.l.b16 %v998
        %v2877 = vunpack.c.h.b16 %v998
        %v2878 = vunpack.c.l.b16 %v999
        %v2879 = vunpack.c.h.b16 %v999
        %v2880 = vunpack.c.l.b16 %v1000
        %v2881 = vunpack.c.h.b16 %v1000
        %v2882 = vunpack.c.l.b16 %v1001
        %v2883 = vunpack.c.h.b16 %v1001
        %v2884 = vunpack.c.l.b16 %v1002
        %v2885 = vunpack.c.h.b16 %v1002
        %v2886 = vunpack.c.l.b16 %v1003
        %v2887 = vunpack.c.h.b16 %v1003
        %v2888 = vunpack.c.l.b16 %v1004
        %v2889 = vunpack.c.h.b16 %v1004
        %v2890 = vunpack.c.l.b16 %v1005
        %v2891 = vunpack.c.h.b16 %v1005
        %v2892 = vunpack.c.l.b16 %v1006
        %v2893 = vunpack.c.h.b16 %v1006
        %v2894 = vunpack.c.l.b16 %v1007
        %v2895 = vunpack.c.h.b16 %v1007
        %v2896 = vunpack.c.l.b16 %v1008
        %v2897 = vunpack.c.h.b16 %v1008
        %v2898 = vunpack.c.l.b16 %v1009
        %v2899 = vunpack.c.h.b16 %v1009
        %v2900 = vunpack.c.l.b16 %v1010
        %v2901 = vunpack.c.h.b16 %v1010
        %v2902 = vunpack.c.l.b16 %v1011
        %v2903 = vunpack.c.h.b16 %v1011
        %v2904 = vunpack.c.l.b16 %v1012
        %v2905 = vunpack.c.h.b16 %v1012
        %v2906 = vunpack.c.l.b16 %v1013
        %v2907 = vunpack.c.h.b16 %v1013
        %v2908 = vunpack.c.l.b16 %v1014
        %v2909 = vunpack.c.h.b16 %v1014
        %v2910 = vunpack.c.l.b16 %v1015
        %v2911 = vunpack.c.h.b16 %v1015
        %v2912 = vunpack.c.l.b16 %v1016
        %v2913 = vunpack.c.h.b16 %v1016
        %v2914 = vunpack.c.l.b16 %v1017
        %v2915 = vunpack.c.h.b16 %v1017
        %v2916 = vunpack.c.l.b16 %v1018
        %v2917 = vunpack.c.h.b16 %v1018
        %v2918 = vunpack.c.l.b16 %v1019
        %v2919 = vunpack.c.h.b16 %v1019
        %v2920 = vunpack.c.l.b16 %v1020
        %v2921 = vunpack.c.h.b16 %v1020
        %v2922 = vunpack.c.l.b16 %v1021
        %v2923 = vunpack.c.h.b16 %v1021
        %v2924 = vunpack.c.l.b16 %v1022
        %v2925 = vunpack.c.h.b16 %v1022
        %v2926 = vunpack.c.l.b16 %v1023
        %v2927 = vunpack.c.h.b16 %v1023
        %v2928 = vunpack.c.l.b16 %v1024
        %v2929 = vunpack.c.h.b16 %v1024
        %v2930 = vunpack.c.l.b16 %v1025
        %v2931 = vunpack.c.h.b16 %v1025
        %v2932 = vunpack.c.l.b16 %v1026
        %v2933 = vunpack.c.h.b16 %v1026
        %v2934 = vunpack.c.l.b16 %v1027
        %v2935 = vunpack.c.h.b16 %v1027
        %v2936 = vunpack.c.l.b16 %v1028
        %v2937 = vunpack.c.h.b16 %v1028
        %v2938 = vunpack.c.l.b16 %v1029
        %v2939 = vunpack.c.h.b16 %v1029
        %v2940 = vunpack.c.l.b16 %v1030
        %v2941 = vunpack.c.h.b16 %v1030
        %v2942 = vunpack.c.l.b16 %v1031
        %v2943 = vunpack.c.h.b16 %v1031
        %v2944 = vunpack.c.l.b16 %v1032
        %v2945 = vunpack.c.h.b16 %v1032
        %v2946 = vunpack.c.l.b16 %v1033
        %v2947 = vunpack.c.h.b16 %v1033
        %v2948 = vunpack.c.l.b16 %v1034
        %v2949 = vunpack.c.h.b16 %v1034
        %v2950 = vunpack.c.l.b16 %v1035
        %v2951 = vunpack.c.h.b16 %v1035
        %v2952 = vunpack.c.l.b16 %v1036
        %v2953 = vunpack.c.h.b16 %v1036
        %v2954 = vunpack.c.l.b16 %v1037
        %v2955 = vunpack.c.h.b16 %v1037
        %v2956 = vunpack.c.l.b16 %v1038
        %v2957 = vunpack.c.h.b16 %v1038
        %v2958 = vunpack.c.l.b16 %v1039
        %v2959 = vunpack.c.h.b16 %v1039
        %v2960 = vunpack.c.l.b16 %v1040
        %v2961 = vunpack.c.h.b16 %v1040
        %v2962 = vunpack.c.l.b16 %v1041
        %v2963 = vunpack.c.h.b16 %v1041
        %v2964 = vunpack.c.l.b16 %v1042
        %v2965 = vunpack.c.h.b16 %v1042
        %v2966 = vunpack.c.l.b16 %v1043
        %v2967 = vunpack.c.h.b16 %v1043
        %v2968 = vunpack.c.l.b16 %v1044
        %v2969 = vunpack.c.h.b16 %v1044
        %v2970 = vunpack.c.l.b16 %v1045
        %v2971 = vunpack.c.h.b16 %v1045
        %v2972 = vunpack.c.l.b16 %v1046
        %v2973 = vunpack.c.h.b16 %v1046
        %v2974 = vunpack.c.l.b16 %v1047
        %v2975 = vunpack.c.h.b16 %v1047
        %v2976 = vunpack.c.l.b16 %v1048
        %v2977 = vunpack.c.h.b16 %v1048
        %v2978 = vunpack.c.l.b16 %v1049
        %v2979 = vunpack.c.h.b16 %v1049
        %v2980 = vunpack.c.l.b16 %v1050
        %v2981 = vunpack.c.h.b16 %v1050
        %v2982 = vunpack.c.l.b16 %v1051
        %v2983 = vunpack.c.h.b16 %v1051
        %v2984 = vunpack.c.l.b16 %v1052
        %v2985 = vunpack.c.h.b16 %v1052
        %v2986 = vunpack.c.l.b16 %v1053
        %v2987 = vunpack.c.h.b16 %v1053
        %v2988 = vunpack.c.l.b16 %v1054
        %v2989 = vunpack.c.h.b16 %v1054
        %v2990 = vunpack.c.l.b16 %v1055
        %v2991 = vunpack.c.h.b16 %v1055
        %v2992 = vunpack.c.l.b16 %v1056
        %v2993 = vunpack.c.h.b16 %v1056
        %v2994 = vunpack.c.l.b16 %v1057
        %v2995 = vunpack.c.h.b16 %v1057
        %v2996 = vunpack.c.l.b16 %v1058
        %v2997 = vunpack.c.h.b16 %v1058
        %v2998 = vunpack.c.l.b16 %v1059
        %v2999 = vunpack.c.h.b16 %v1059
        %v3000 = vunpack.c.l.b16 %v1060
        %v3001 = vunpack.c.h.b16 %v1060
        %v3002 = vunpack.c.l.b16 %v1061
        %v3003 = vunpack.c.h.b16 %v1061
        %v3004 = vunpack.c.l.b16 %v1062
        %v3005 = vunpack.c.h.b16 %v1062
        %v3006 = vunpack.c.l.b16 %v1063
        %v3007 = vunpack.c.h.b16 %v1063
        %v3008 = vunpack.c.l.b16 %v1064
        %v3009 = vunpack.c.h.b16 %v1064
        %v3010 = vunpack.c.l.b16 %v1065
        %v3011 = vunpack.c.h.b16 %v1065
        %v3012 = vunpack.c.l.b16 %v1066
        %v3013 = vunpack.c.h.b16 %v1066
        %v3014 = vunpack.c.l.b16 %v1067
        %v3015 = vunpack.c.h.b16 %v1067
        %v3016 = vunpack.c.l.b16 %v1068
        %v3017 = vunpack.c.h.b16 %v1068
        %v3018 = vunpack.c.l.b16 %v1069
        %v3019 = vunpack.c.h.b16 %v1069
        %v3020 = vunpack.c.l.b16 %v1070
        %v3021 = vunpack.c.h.b16 %v1070
        %v3022 = vunpack.c.l.b16 %v1071
        %v3023 = vunpack.c.h.b16 %v1071
        %v3024 = vunpack.c.l.b16 %v1072
        %v3025 = vunpack.c.h.b16 %v1072
        %v3026 = vunpack.c.l.b16 %v1073
        %v3027 = vunpack.c.h.b16 %v1073
        %v3028 = vunpack.c.l.b16 %v1074
        %v3029 = vunpack.c.h.b16 %v1074
        %v3030 = vunpack.c.l.b16 %v1075
        %v3031 = vunpack.c.h.b16 %v1075
        %v3032 = vunpack.c.l.b16 %v1076
        %v3033 = vunpack.c.h.b16 %v1076
        %v3034 = vunpack.c.l.b16 %v1077
        %v3035 = vunpack.c.h.b16 %v1077
        %v3036 = vunpack.c.l.b16 %v1078
        %v3037 = vunpack.c.h.b16 %v1078
        %v3038 = vunpack.c.l.b16 %v1079
        %v3039 = vunpack.c.h.b16 %v1079
        %v3040 = vunpack.c.l.b16 %v1080
        %v3041 = vunpack.c.h.b16 %v1080
        %v3042 = vunpack.c.l.b16 %v1081
        %v3043 = vunpack.c.h.b16 %v1081
        %v3044 = vunpack.c.l.b16 %v1082
        %v3045 = vunpack.c.h.b16 %v1082
        %v3046 = vunpack.c.l.b16 %v1083
        %v3047 = vunpack.c.h.b16 %v1083
        %v3048 = vunpack.c.l.b16 %v1084
        %v3049 = vunpack.c.h.b16 %v1084
        %v3050 = vunpack.c.l.b16 %v1085
        %v3051 = vunpack.c.h.b16 %v1085
        %v3052 = vunpack.c.l.b16 %v1086
        %v3053 = vunpack.c.h.b16 %v1086
        %v3054 = vunpack.c.l.b16 %v1087
        %v3055 = vunpack.c.h.b16 %v1087
        %v3056 = vunpack.c.l.b16 %v1088
        %v3057 = vunpack.c.h.b16 %v1088
        %v3058 = vunpack.c.l.b16 %v1089
        %v3059 = vunpack.c.h.b16 %v1089
        %v3060 = vunpack.c.l.b16 %v1090
        %v3061 = vunpack.c.h.b16 %v1090
        %v3062 = vunpack.c.l.b16 %v1091
        %v3063 = vunpack.c.h.b16 %v1091
        %v3064 = vunpack.c.l.b16 %v1092
        %v3065 = vunpack.c.h.b16 %v1092
        %v3066 = vunpack.c.l.b16 %v1093
        %v3067 = vunpack.c.h.b16 %v1093
        %v3068 = vunpack.c.l.b16 %v1094
        %v3069 = vunpack.c.h.b16 %v1094
        %v3070 = vunpack.c.l.b16 %v1095
        %v3071 = vunpack.c.h.b16 %v1095
        %v3072 = vunpack.c.l.b16 %v1096
        %v3073 = vunpack.c.h.b16 %v1096
        %v3074 = vunpack.c.l.b16 %v1097
        %v3075 = vunpack.c.h.b16 %v1097
        %v3076 = vunpack.c.l.b16 %v1098
        %v3077 = vunpack.c.h.b16 %v1098
        %v3078 = vunpack.c.l.b16 %v1099
        %v3079 = vunpack.c.h.b16 %v1099
        %v3080 = vunpack.c.l.b16 %v1100
        %v3081 = vunpack.c.h.b16 %v1100
        %v3082 = vunpack.c.l.b16 %v1101
        %v3083 = vunpack.c.h.b16 %v1101
        %v3084 = vunpack.c.l.b16 %v1102
        %v3085 = vunpack.c.h.b16 %v1102
        %v3086 = vunpack.c.l.b16 %v1103
        %v3087 = vunpack.c.h.b16 %v1103
        %v3088 = vunpack.c.l.b16 %v1104
        %v3089 = vunpack.c.h.b16 %v1104
        %v3090 = vunpack.c.l.b16 %v1105
        %v3091 = vunpack.c.h.b16 %v1105
        %v3092 = vunpack.c.l.b16 %v1106
        %v3093 = vunpack.c.h.b16 %v1106
        %v3094 = vunpack.c.l.b16 %v1107
        %v3095 = vunpack.c.h.b16 %v1107
        %v3096 = vunpack.c.l.b16 %v1108
        %v3097 = vunpack.c.h.b16 %v1108
        %v3098 = vunpack.c.l.b16 %v1109
        %v3099 = vunpack.c.h.b16 %v1109
        %v3100 = vunpack.c.l.b16 %v1110
        %v3101 = vunpack.c.h.b16 %v1110
        %v3102 = vunpack.c.l.b16 %v1111
        %v3103 = vunpack.c.h.b16 %v1111
        %v3104 = vunpack.c.l.b16 %v1112
        %v3105 = vunpack.c.h.b16 %v1112
        %v3106 = vunpack.c.l.b16 %v1113
        %v3107 = vunpack.c.h.b16 %v1113
        %v3108 = vunpack.c.l.b16 %v1114
        %v3109 = vunpack.c.h.b16 %v1114
        %v3110 = vunpack.c.l.b16 %v1115
        %v3111 = vunpack.c.h.b16 %v1115
        %v3112 = vunpack.c.l.b16 %v1116
        %v3113 = vunpack.c.h.b16 %v1116
        %v3114 = vunpack.c.l.b16 %v1117
        %v3115 = vunpack.c.h.b16 %v1117
        %v3116 = vunpack.c.l.b16 %v1118
        %v3117 = vunpack.c.h.b16 %v1118
        %v3118 = vunpack.c.l.b16 %v1119
        %v3119 = vunpack.c.h.b16 %v1119
        %v3120 = vunpack.c.l.b16 %v1120
        %v3121 = vunpack.c.h.b16 %v1120
        %v3122 = vunpack.c.l.b16 %v1121
        %v3123 = vunpack.c.h.b16 %v1121
        %v3124 = vunpack.c.l.b16 %v1122
        %v3125 = vunpack.c.h.b16 %v1122
        %v3126 = vunpack.c.l.b16 %v1123
        %v3127 = vunpack.c.h.b16 %v1123
        %v3128 = vunpack.c.l.b16 %v1124
        %v3129 = vunpack.c.h.b16 %v1124
        %v3130 = vunpack.c.l.b16 %v1125
        %v3131 = vunpack.c.h.b16 %v1125
        %v3132 = vunpack.c.l.b16 %v1126
        %v3133 = vunpack.c.h.b16 %v1126
        %v3134 = vunpack.c.l.b16 %v1127
        %v3135 = vunpack.c.h.b16 %v1127
        %v3136 = vunpack.c.l.b16 %v1128
        %v3137 = vunpack.c.h.b16 %v1128
        %v3138 = vunpack.c.l.b16 %v1129
        %v3139 = vunpack.c.h.b16 %v1129
        %v3140 = vunpack.c.l.b16 %v1130
        %v3141 = vunpack.c.h.b16 %v1130
        %v3142 = vunpack.c.l.b16 %v1131
        %v3143 = vunpack.c.h.b16 %v1131
        %v3144 = vunpack.c.l.b16 %v1132
        %v3145 = vunpack.c.h.b16 %v1132
        %v3146 = vunpack.c.l.b16 %v1133
        %v3147 = vunpack.c.h.b16 %v1133
        %v3148 = vunpack.c.l.b16 %v1134
        %v3149 = vunpack.c.h.b16 %v1134
        %v3150 = vunpack.c.l.b16 %v1135
        %v3151 = vunpack.c.h.b16 %v1135
        %v3152 = vpack.c.b16 %v2132, %v2128
        %v3153 = vpack.c.b16 %v2133, %v2129
        %v3154 = vpack.c.b16 %v2134, %v2130
        %v3155 = vpack.c.b16 %v2135, %v2131
        %v3156 = vpack.c.b16 %v2140, %v2136
        %v3157 = vpack.c.b16 %v2141, %v2137
        %v3158 = vpack.c.b16 %v2142, %v2138
        %v3159 = vpack.c.b16 %v2143, %v2139
        %v3160 = vpack.c.b16 %v2148, %v2144
        %v3161 = vpack.c.b16 %v2149, %v2145
        %v3162 = vpack.c.b16 %v2150, %v2146
        %v3163 = vpack.c.b16 %v2151, %v2147
        %v3164 = vpack.c.b16 %v2156, %v2152
        %v3165 = vpack.c.b16 %v2157, %v2153
        %v3166 = vpack.c.b16 %v2158, %v2154
        %v3167 = vpack.c.b16 %v2159, %v2155
        %v3168 = vpack.c.b16 %v2164, %v2160
        %v3169 = vpack.c.b16 %v2165, %v2161
        %v3170 = vpack.c.b16 %v2166, %v2162
        %v3171 = vpack.c.b16 %v2167, %v2163
        %v3172 = vpack.c.b16 %v2172, %v2168
        %v3173 = vpack.c.b16 %v2173, %v2169
        %v3174 = vpack.c.b16 %v2174, %v2170
        %v3175 = vpack.c.b16 %v2175, %v2171
        %v3176 = vpack.c.b16 %v2180, %v2176
        %v3177 = vpack.c.b16 %v2181, %v2177
        %v3178 = vpack.c.b16 %v2182, %v2178
        %v3179 = vpack.c.b16 %v2183, %v2179
        %v3180 = vpack.c.b16 %v2188, %v2184
        %v3181 = vpack.c.b16 %v2189, %v2185
        %v3182 = vpack.c.b16 %v2190, %v2186
        %v3183 = vpack.c.b16 %v2191, %v2187
        %v3184 = vpack.c.b16 %v2196, %v2192
        %v3185 = vpack.c.b16 %v2197, %v2193
        %v3186 = vpack.c.b16 %v2198, %v2194
        %v3187 = vpack.c.b16 %v2199, %v2195
        %v3188 = vpack.c.b16 %v2204, %v2200
        %v3189 = vpack.c.b16 %v2205, %v2201
        %v3190 = vpack.c.b16 %v2206, %v2202
        %v3191 = vpack.c.b16 %v2207, %v2203
        %v3192 = vpack.c.b16 %v2212, %v2208
        %v3193 = vpack.c.b16 %v2213, %v2209
        %v3194 = vpack.c.b16 %v2214, %v2210
        %v3195 = vpack.c.b16 %v2215, %v2211
        %v3196 = vpack.c.b16 %v2220, %v2216
        %v3197 = vpack.c.b16 %v2221, %v2217
        %v3198 = vpack.c.b16 %v2222, %v2218
        %v3199 = vpack.c.b16 %v2223, %v2219
        %v3200 = vpack.c.b16 %v2228, %v2224
        %v3201 = vpack.c.b16 %v2229, %v2225
        %v3202 = vpack.c.b16 %v2230, %v2226
        %v3203 = vpack.c.b16 %v2231, %v2227
        %v3204 = vpack.c.b16 %v2236, %v2232
        %v3205 = vpack.c.b16 %v2237, %v2233
        %v3206 = vpack.c.b16 %v2238, %v2234
        %v3207 = vpack.c.b16 %v2239, %v2235
        %v3208 = vpack.c.b16 %v2244, %v2240
        %v3209 = vpack.c.b16 %v2245, %v2241
        %v3210 = vpack.c.b16 %v2246, %v2242
        %v3211 = vpack.c.b16 %v2247, %v2243
        %v3212 = vpack.c.b16 %v2252, %v2248
        %v3213 = vpack.c.b16 %v2253, %v2249
        %v3214 = vpack.c.b16 %v2254, %v2250
        %v3215 = vpack.c.b16 %v2255, %v2251
        %v3216 = vpack.c.b16 %v2260, %v2256
        %v3217 = vpack.c.b16 %v2261, %v2257
        %v3218 = vpack.c.b16 %v2262, %v2258
        %v3219 = vpack.c.b16 %v2263, %v2259
        %v3220 = vpack.c.b16 %v2268, %v2264
        %v3221 = vpack.c.b16 %v2269, %v2265
        %v3222 = vpack.c.b16 %v2270, %v2266
        %v3223 = vpack.c.b16 %v2271, %v2267
        %v3224 = vpack.c.b16 %v2276, %v2272
        %v3225 = vpack.c.b16 %v2277, %v2273
        %v3226 = vpack.c.b16 %v2278, %v2274
        %v3227 = vpack.c.b16 %v2279, %v2275
        %v3228 = vpack.c.b16 %v2284, %v2280
        %v3229 = vpack.c.b16 %v2285, %v2281
        %v3230 = vpack.c.b16 %v2286, %v2282
        %v3231 = vpack.c.b16 %v2287, %v2283
        %v3232 = vpack.c.b16 %v2292, %v2288
        %v3233 = vpack.c.b16 %v2293, %v2289
        %v3234 = vpack.c.b16 %v2294, %v2290
        %v3235 = vpack.c.b16 %v2295, %v2291
        %v3236 = vpack.c.b16 %v2300, %v2296
        %v3237 = vpack.c.b16 %v2301, %v2297
        %v3238 = vpack.c.b16 %v2302, %v2298
        %v3239 = vpack.c.b16 %v2303, %v2299
        %v3240 = vpack.c.b16 %v2308, %v2304
        %v3241 = vpack.c.b16 %v2309, %v2305
        %v3242 = vpack.c.b16 %v2310, %v2306
        %v3243 = vpack.c.b16 %v2311, %v2307
        %v3244 = vpack.c.b16 %v2316, %v2312
        %v3245 = vpack.c.b16 %v2317, %v2313
        %v3246 = vpack.c.b16 %v2318, %v2314
        %v3247 = vpack.c.b16 %v2319, %v2315
        %v3248 = vpack.c.b16 %v2324, %v2320
        %v3249 = vpack.c.b16 %v2325, %v2321
        %v3250 = vpack.c.b16 %v2326, %v2322
        %v3251 = vpack.c.b16 %v2327, %v2323
        %v3252 = vpack.c.b16 %v2332, %v2328
        %v3253 = vpack.c.b16 %v2333, %v2329
        %v3254 = vpack.c.b16 %v2334, %v2330
        %v3255 = vpack.c.b16 %v2335, %v2331
        %v3256 = vpack.c.b16 %v2340, %v2336
        %v3257 = vpack.c.b16 %v2341, %v2337
        %v3258 = vpack.c.b16 %v2342, %v2338
        %v3259 = vpack.c.b16 %v2343, %v2339
        %v3260 = vpack.c.b16 %v2348, %v2344
        %v3261 = vpack.c.b16 %v2349, %v2345
        %v3262 = vpack.c.b16 %v2350, %v2346
        %v3263 = vpack.c.b16 %v2351, %v2347
        %v3264 = vpack.c.b16 %v2356, %v2352
        %v3265 = vpack.c.b16 %v2357, %v2353
        %v3266 = vpack.c.b16 %v2358, %v2354
        %v3267 = vpack.c.b16 %v2359, %v2355
        %v3268 = vpack.c.b16 %v2364, %v2360
        %v3269 = vpack.c.b16 %v2365, %v2361
        %v3270 = vpack.c.b16 %v2366, %v2362
        %v3271 = vpack.c.b16 %v2367, %v2363
        %v3272 = vpack.c.b16 %v2372, %v2368
        %v3273 = vpack.c.b16 %v2373, %v2369
        %v3274 = vpack.c.b16 %v2374, %v2370
        %v3275 = vpack.c.b16 %v2375, %v2371
        %v3276 = vpack.c.b16 %v2380, %v2376
        %v3277 = vpack.c.b16 %v2381, %v2377
        %v3278 = vpack.c.b16 %v2382, %v2378
        %v3279 = vpack.c.b16 %v2383, %v2379
        %v3280 = vpack.c.b16 %v2388, %v2384
        %v3281 = vpack.c.b16 %v2389, %v2385
        %v3282 = vpack.c.b16 %v2390, %v2386
        %v3283 = vpack.c.b16 %v2391, %v2387
        %v3284 = vpack.c.b16 %v2396, %v2392
        %v3285 = vpack.c.b16 %v2397, %v2393
        %v3286 = vpack.c.b16 %v2398, %v2394
        %v3287 = vpack.c.b16 %v2399, %v2395
        %v3288 = vpack.c.b16 %v2404, %v2400
        %v3289 = vpack.c.b16 %v2405, %v2401
        %v3290 = vpack.c.b16 %v2406, %v2402
        %v3291 = vpack.c.b16 %v2407, %v2403
        %v3292 = vpack.c.b16 %v2412, %v2408
        %v3293 = vpack.c.b16 %v2413, %v2409
        %v3294 = vpack.c.b16 %v2414, %v2410
        %v3295 = vpack.c.b16 %v2415, %v2411
        %v3296 = vpack.c.b16 %v2420, %v2416
        %v3297 = vpack.c.b16 %v2421, %v2417
        %v3298 = vpack.c.b16 %v2422, %v2418
        %v3299 = vpack.c.b16 %v2423, %v2419
        %v3300 = vpack.c.b16 %v2428, %v2424
        %v3301 = vpack.c.b16 %v2429, %v2425
        %v3302 = vpack.c.b16 %v2430, %v2426
        %v3303 = vpack.c.b16 %v2431, %v2427
        %v3304 = vpack.c.b16 %v2436, %v2432
        %v3305 = vpack.c.b16 %v2437, %v2433
        %v3306 = vpack.c.b16 %v2438, %v2434
        %v3307 = vpack.c.b16 %v2439, %v2435
        %v3308 = vpack.c.b16 %v2444, %v2440
        %v3309 = vpack.c.b16 %v2445, %v2441
        %v3310 = vpack.c.b16 %v2446, %v2442
        %v3311 = vpack.c.b16 %v2447, %v2443
        %v3312 = vpack.c.b16 %v2452, %v2448
        %v3313 = vpack.c.b16 %v2453, %v2449
        %v3314 = vpack.c.b16 %v2454, %v2450
        %v3315 = vpack.c.b16 %v2455, %v2451
        %v3316 = vpack.c.b16 %v2460, %v2456
        %v3317 = vpack.c.b16 %v2461, %v2457
        %v3318 = vpack.c.b16 %v2462, %v2458
        %v3319 = vpack.c.b16 %v2463, %v2459
        %v3320 = vpack.c.b16 %v2468, %v2464
        %v3321 = vpack.c.b16 %v2469, %v2465
        %v3322 = vpack.c.b16 %v2470, %v2466
        %v3323 = vpack.c.b16 %v2471, %v2467
        %v3324 = vpack.c.b16 %v2476, %v2472
        %v3325 = vpack.c.b16 %v2477, %v2473
        %v3326 = vpack.c.b16 %v2478, %v2474
        %v3327 = vpack.c.b16 %v2479, %v2475
        %v3328 = vpack.c.b16 %v2484, %v2480
        %v3329 = vpack.c.b16 %v2485, %v2481
        %v3330 = vpack.c.b16 %v2486, %v2482
        %v3331 = vpack.c.b16 %v2487, %v2483
        %v3332 = vpack.c.b16 %v2492, %v2488
        %v3333 = vpack.c.b16 %v2493, %v2489
        %v3334 = vpack.c.b16 %v2494, %v2490
        %v3335 = vpack.c.b16 %v2495, %v2491
        %v3336 = vpack.c.b16 %v2500, %v2496
        %v3337 = vpack.c.b16 %v2501, %v2497
        %v3338 = vpack.c.b16 %v2502, %v2498
        %v3339 = vpack.c.b16 %v2503, %v2499
        %v3340 = vpack.c.b16 %v2508, %v2504
        %v3341 = vpack.c.b16 %v2509, %v2505
        %v3342 = vpack.c.b16 %v2510, %v2506
        %v3343 = vpack.c.b16 %v2511, %v2507
        %v3344 = vpack.c.b16 %v2516, %v2512
        %v3345 = vpack.c.b16 %v2517, %v2513
        %v3346 = vpack.c.b16 %v2518, %v2514
        %v3347 = vpack.c.b16 %v2519, %v2515
        %v3348 = vpack.c.b16 %v2524, %v2520
        %v3349 = vpack.c.b16 %v2525, %v2521
        %v3350 = vpack.c.b16 %v2526, %v2522
        %v3351 = vpack.c.b16 %v2527, %v2523
        %v3352 = vpack.c.b16 %v2532, %v2528
        %v3353 = vpack.c.b16 %v2533, %v2529
        %v3354 = vpack.c.b16 %v2534, %v2530
        %v3355 = vpack.c.b16 %v2535, %v2531
        %v3356 = vpack.c.b16 %v2540, %v2536
        %v3357 = vpack.c.b16 %v2541, %v2537
        %v3358 = vpack.c.b16 %v2542, %v2538
        %v3359 = vpack.c.b16 %v2543, %v2539
        %v3360 = vpack.c.b16 %v2548, %v2544
        %v3361 = vpack.c.b16 %v2549, %v2545
        %v3362 = vpack.c.b16 %v2550, %v2546
        %v3363 = vpack.c.b16 %v2551, %v2547
        %v3364 = vpack.c.b16 %v2556, %v2552
        %v3365 = vpack.c.b16 %v2557, %v2553
        %v3366 = vpack.c.b16 %v2558, %v2554
        %v3367 = vpack.c.b16 %v2559, %v2555
        %v3368 = vpack.c.b16 %v2564, %v2560
        %v3369 = vpack.c.b16 %v2565, %v2561
        %v3370 = vpack.c.b16 %v2566, %v2562
        %v3371 = vpack.c.b16 %v2567, %v2563
        %v3372 = vpack.c.b16 %v2572, %v2568
        %v3373 = vpack.c.b16 %v2573, %v2569
        %v3374 = vpack.c.b16 %v2574, %v2570
        %v3375 = vpack.c.b16 %v2575, %v2571
        %v3376 = vpack.c.b16 %v2580, %v2576
        %v3377 = vpack.c.b16 %v2581, %v2577
        %v3378 = vpack.c.b16 %v2582, %v2578
        %v3379 = vpack.c.b16 %v2583, %v2579
        %v3380 = vpack.c.b16 %v2588, %v2584
        %v3381 = vpack.c.b16 %v2589, %v2585
        %v3382 = vpack.c.b16 %v2590, %v2586
        %v3383 = vpack.c.b16 %v2591, %v2587
        %v3384 = vpack.c.b16 %v2596, %v2592
        %v3385 = vpack.c.b16 %v2597, %v2593
        %v3386 = vpack.c.b16 %v2598, %v2594
        %v3387 = vpack.c.b16 %v2599, %v2595
        %v3388 = vpack.c.b16 %v2604, %v2600
        %v3389 = vpack.c.b16 %v2605, %v2601
        %v3390 = vpack.c.b16 %v2606, %v2602
        %v3391 = vpack.c.b16 %v2607, %v2603
        %v3392 = vpack.c.b16 %v2612, %v2608
        %v3393 = vpack.c.b16 %v2613, %v2609
        %v3394 = vpack.c.b16 %v2614, %v2610
        %v3395 = vpack.c.b16 %v2615, %v2611
        %v3396 = vpack.c.b16 %v2620, %v2616
        %v3397 = vpack.c.b16 %v2621, %v2617
        %v3398 = vpack.c.b16 %v2622, %v2618
        %v3399 = vpack.c.b16 %v2623, %v2619
        %v3400 = vpack.c.b16 %v2628, %v2624
        %v3401 = vpack.c.b16 %v2629, %v2625
        %v3402 = vpack.c.b16 %v2630, %v2626
        %v3403 = vpack.c.b16 %v2631, %v2627
        %v3404 = vpack.c.b16 %v2636, %v2632
        %v3405 = vpack.c.b16 %v2637, %v2633
        %v3406 = vpack.c.b16 %v2638, %v2634
        %v3407 = vpack.c.b16 %v2639, %v2635
        %v3408 = vpack.c.b16 %v2644, %v2640
        %v3409 = vpack.c.b16 %v2645, %v2641
        %v3410 = vpack.c.b16 %v2646, %v2642
        %v3411 = vpack.c.b16 %v2647, %v2643
        %v3412 = vpack.c.b16 %v2652, %v2648
        %v3413 = vpack.c.b16 %v2653, %v2649
        %v3414 = vpack.c.b16 %v2654, %v2650
        %v3415 = vpack.c.b16 %v2655, %v2651
        %v3416 = vpack.c.b16 %v2660, %v2656
        %v3417 = vpack.c.b16 %v2661, %v2657
        %v3418 = vpack.c.b16 %v2662, %v2658
        %v3419 = vpack.c.b16 %v2663, %v2659
        %v3420 = vpack.c.b16 %v2668, %v2664
        %v3421 = vpack.c.b16 %v2669, %v2665
        %v3422 = vpack.c.b16 %v2670, %v2666
        %v3423 = vpack.c.b16 %v2671, %v2667
        %v3424 = vpack.c.b16 %v2676, %v2672
        %v3425 = vpack.c.b16 %v2677, %v2673
        %v3426 = vpack.c.b16 %v2678, %v2674
        %v3427 = vpack.c.b16 %v2679, %v2675
        %v3428 = vpack.c.b16 %v2684, %v2680
        %v3429 = vpack.c.b16 %v2685, %v2681
        %v3430 = vpack.c.b16 %v2686, %v2682
        %v3431 = vpack.c.b16 %v2687, %v2683
        %v3432 = vpack.c.b16 %v2692, %v2688
        %v3433 = vpack.c.b16 %v2693, %v2689
        %v3434 = vpack.c.b16 %v2694, %v2690
        %v3435 = vpack.c.b16 %v2695, %v2691
        %v3436 = vpack.c.b16 %v2700, %v2696
        %v3437 = vpack.c.b16 %v2701, %v2697
        %v3438 = vpack.c.b16 %v2702, %v2698
        %v3439 = vpack.c.b16 %v2703, %v2699
        %v3440 = vpack.c.b16 %v2708, %v2704
        %v3441 = vpack.c.b16 %v2709, %v2705
        %v3442 = vpack.c.b16 %v2710, %v2706
        %v3443 = vpack.c.b16 %v2711, %v2707
        %v3444 = vpack.c.b16 %v2716, %v2712
        %v3445 = vpack.c.b16 %v2717, %v2713
        %v3446 = vpack.c.b16 %v2718, %v2714
        %v3447 = vpack.c.b16 %v2719, %v2715
        %v3448 = vpack.c.b16 %v2724, %v2720
        %v3449 = vpack.c.b16 %v2725, %v2721
        %v3450 = vpack.c.b16 %v2726, %v2722
        %v3451 = vpack.c.b16 %v2727, %v2723
        %v3452 = vpack.c.b16 %v2732, %v2728
        %v3453 = vpack.c.b16 %v2733, %v2729
        %v3454 = vpack.c.b16 %v2734, %v2730
        %v3455 = vpack.c.b16 %v2735, %v2731
        %v3456 = vpack.c.b16 %v2740, %v2736
        %v3457 = vpack.c.b16 %v2741, %v2737
        %v3458 = vpack.c.b16 %v2742, %v2738
        %v3459 = vpack.c.b16 %v2743, %v2739
        %v3460 = vpack.c.b16 %v2748, %v2744
        %v3461 = vpack.c.b16 %v2749, %v2745
        %v3462 = vpack.c.b16 %v2750, %v2746
        %v3463 = vpack.c.b16 %v2751, %v2747
        %v3464 = vpack.c.b16 %v2756, %v2752
        %v3465 = vpack.c.b16 %v2757, %v2753
        %v3466 = vpack.c.b16 %v2758, %v2754
        %v3467 = vpack.c.b16 %v2759, %v2755
        %v3468 = vpack.c.b16 %v2764, %v2760
        %v3469 = vpack.c.b16 %v2765, %v2761
        %v3470 = vpack.c.b16 %v2766, %v2762
        %v3471 = vpack.c.b16 %v2767, %v2763
        %v3472 = vpack.c.b16 %v2772, %v2768
        %v3473 = vpack.c.b16 %v2773, %v2769
        %v3474 = vpack.c.b16 %v2774, %v2770
        %v3475 = vpack.c.b16 %v2775, %v2771
        %v3476 = vpack.c.b16 %v2780, %v2776
        %v3477 = vpack.c.b16 %v2781, %v2777
        %v3478 = vpack.c.b16 %v2782, %v2778
        %v3479 = vpack.c.b16 %v2783, %v2779
        %v3480 = vpack.c.b16 %v2788, %v2784
        %v3481 = vpack.c.b16 %v2789, %v2785
        %v3482 = vpack.c.b16 %v2790, %v2786
        %v3483 = vpack.c.b16 %v2791, %v2787
        %v3484 = vpack.c.b16 %v2796, %v2792
        %v3485 = vpack.c.b16 %v2797, %v2793
        %v3486 = vpack.c.b16 %v2798, %v2794
        %v3487 = vpack.c.b16 %v2799, %v2795
        %v3488 = vpack.c.b16 %v2804, %v2800
        %v3489 = vpack.c.b16 %v2805, %v2801
        %v3490 = vpack.c.b16 %v2806, %v2802
        %v3491 = vpack.c.b16 %v2807, %v2803
        %v3492 = vpack.c.b16 %v2812, %v2808
        %v3493 = vpack.c.b16 %v2813, %v2809
        %v3494 = vpack.c.b16 %v2814, %v2810
        %v3495 = vpack.c.b16 %v2815, %v2811
        %v3496 = vpack.c.b16 %v2820, %v2816
        %v3497 = vpack.c.b16 %v2821, %v2817
        %v3498 = vpack.c.b16 %v2822, %v2818
        %v3499 = vpack.c.b16 %v2823, %v2819
        %v3500 = vpack.c.b16 %v2828, %v2824
        %v3501 = vpack.c.b16 %v2829, %v2825
        %v3502 = vpack.c.b16 %v2830, %v2826
        %v3503 = vpack.c.b16 %v2831, %v2827
        %v3504 = vpack.c.b16 %v2836, %v2832
        %v3505 = vpack.c.b16 %v2837, %v2833
        %v3506 = vpack.c.b16 %v2838, %v2834
        %v3507 = vpack.c.b16 %v2839, %v2835
        %v3508 = vpack.c.b16 %v2844, %v2840
        %v3509 = vpack.c.b16 %v2845, %v2841
        %v3510 = vpack.c.b16 %v2846, %v2842
        %v3511 = vpack.c.b16 %v2847, %v2843
        %v3512 = vpack.c.b16 %v2852, %v2848
        %v3513 = vpack.c.b16 %v2853, %v2849
        %v3514 = vpack.c.b16 %v2854, %v2850
        %v3515 = vpack.c.b16 %v2855, %v2851
        %v3516 = vpack.c.b16 %v2860, %v2856
        %v3517 = vpack.c.b16 %v2861, %v2857
        %v3518 = vpack.c.b16 %v2862, %v2858
        %v3519 = vpack.c.b16 %v2863, %v2859
        %v3520 = vpack.c.b16 %v2868, %v2864
        %v3521 = vpack.c.b16 %v2869, %v2865
        %v3522 = vpack.c.b16 %v2870, %v2866
        %v3523 = vpack.c.b16 %v2871, %v2867
        %v3524 = vpack.c.b16 %v2876, %v2872
        %v3525 = vpack.c.b16 %v2877, %v2873
        %v3526 = vpack.c.b16 %v2878, %v2874
        %v3527 = vpack.c.b16 %v2879, %v2875
        %v3528 = vpack.c.b16 %v2884, %v2880
        %v3529 = vpack.c.b16 %v2885, %v2881
        %v3530 = vpack.c.b16 %v2886, %v2882
        %v3531 = vpack.c.b16 %v2887, %v2883
        %v3532 = vpack.c.b16 %v2892, %v2888
        %v3533 = vpack.c.b16 %v2893, %v2889
        %v3534 = vpack.c.b16 %v2894, %v2890
        %v3535 = vpack.c.b16 %v2895, %v2891
        %v3536 = vpack.c.b16 %v2900, %v2896
        %v3537 = vpack.c.b16 %v2901, %v2897
        %v3538 = vpack.c.b16 %v2902, %v2898
        %v3539 = vpack.c.b16 %v2903, %v2899
        %v3540 = vpack.c.b16 %v2908, %v2904
        %v3541 = vpack.c.b16 %v2909, %v2905
        %v3542 = vpack.c.b16 %v2910, %v2906
        %v3543 = vpack.c.b16 %v2911, %v2907
        %v3544 = vpack.c.b16 %v2916, %v2912
        %v3545 = vpack.c.b16 %v2917, %v2913
        %v3546 = vpack.c.b16 %v2918, %v2914
        %v3547 = vpack.c.b16 %v2919, %v2915
        %v3548 = vpack.c.b16 %v2924, %v2920
        %v3549 = vpack.c.b16 %v2925, %v2921
        %v3550 = vpack.c.b16 %v2926, %v2922
        %v3551 = vpack.c.b16 %v2927, %v2923
        %v3552 = vpack.c.b16 %v2932, %v2928
        %v3553 = vpack.c.b16 %v2933, %v2929
        %v3554 = vpack.c.b16 %v2934, %v2930
        %v3555 = vpack.c.b16 %v2935, %v2931
        %v3556 = vpack.c.b16 %v2940, %v2936
        %v3557 = vpack.c.b16 %v2941, %v2937
        %v3558 = vpack.c.b16 %v2942, %v2938
        %v3559 = vpack.c.b16 %v2943, %v2939
        %v3560 = vpack.c.b16 %v2948, %v2944
        %v3561 = vpack.c.b16 %v2949, %v2945
        %v3562 = vpack.c.b16 %v2950, %v2946
        %v3563 = vpack.c.b16 %v2951, %v2947
        %v3564 = vpack.c.b16 %v2956, %v2952
        %v3565 = vpack.c.b16 %v2957, %v2953
        %v3566 = vpack.c.b16 %v2958, %v2954
        %v3567 = vpack.c.b16 %v2959, %v2955
        %v3568 = vpack.c.b16 %v2964, %v2960
        %v3569 = vpack.c.b16 %v2965, %v2961
        %v3570 = vpack.c.b16 %v2966, %v2962
        %v3571 = vpack.c.b16 %v2967, %v2963
        %v3572 = vpack.c.b16 %v2972, %v2968
        %v3573 = vpack.c.b16 %v2973, %v2969
        %v3574 = vpack.c.b16 %v2974, %v2970
        %v3575 = vpack.c.b16 %v2975, %v2971
        %v3576 = vpack.c.b16 %v2980, %v2976
        %v3577 = vpack.c.b16 %v2981, %v2977
        %v3578 = vpack.c.b16 %v2982, %v2978
        %v3579 = vpack.c.b16 %v2983, %v2979
        %v3580 = vpack.c.b16 %v2988, %v2984
        %v3581 = vpack.c.b16 %v2989, %v2985
        %v3582 = vpack.c.b16 %v2990, %v2986
        %v3583 = vpack.c.b16 %v2991, %v2987
        %v3584 = vpack.c.b16 %v2996, %v2992
        %v3585 = vpack.c.b16 %v2997, %v2993
        %v3586 = vpack.c.b16 %v2998, %v2994
        %v3587 = vpack.c.b16 %v2999, %v2995
        %v3588 = vpack.c.b16 %v3004, %v3000
        %v3589 = vpack.c.b16 %v3005, %v3001
        %v3590 = vpack.c.b16 %v3006, %v3002
        %v3591 = vpack.c.b16 %v3007, %v3003
        %v3592 = vpack.c.b16 %v3012, %v3008
        %v3593 = vpack.c.b16 %v3013, %v3009
        %v3594 = vpack.c.b16 %v3014, %v3010
        %v3595 = vpack.c.b16 %v3015, %v3011
        %v3596 = vpack.c.b16 %v3020, %v3016
        %v3597 = vpack.c.b16 %v3021, %v3017
        %v3598 = vpack.c.b16 %v3022, %v3018
        %v3599 = vpack.c.b16 %v3023, %v3019
        %v3600 = vpack.c.b16 %v3028, %v3024
        %v3601 = vpack.c.b16 %v3029, %v3025
        %v3602 = vpack.c.b16 %v3030, %v3026
        %v3603 = vpack.c.b16 %v3031, %v3027
        %v3604 = vpack.c.b16 %v3036, %v3032
        %v3605 = vpack.c.b16 %v3037, %v3033
        %v3606 = vpack.c.b16 %v3038, %v3034
        %v3607 = vpack.c.b16 %v3039, %v3035
        %v3608 = vpack.c.b16 %v3044, %v3040
        %v3609 = vpack.c.b16 %v3045, %v3041
        %v3610 = vpack.c.b16 %v3046, %v3042
        %v3611 = vpack.c.b16 %v3047, %v3043
        %v3612 = vpack.c.b16 %v3052, %v3048
        %v3613 = vpack.c.b16 %v3053, %v3049
        %v3614 = vpack.c.b16 %v3054, %v3050
        %v3615 = vpack.c.b16 %v3055, %v3051
        %v3616 = vpack.c.b16 %v3060, %v3056
        %v3617 = vpack.c.b16 %v3061, %v3057
        %v3618 = vpack.c.b16 %v3062, %v3058
        %v3619 = vpack.c.b16 %v3063, %v3059
        %v3620 = vpack.c.b16 %v3068, %v3064
        %v3621 = vpack.c.b16 %v3069, %v3065
        %v3622 = vpack.c.b16 %v3070, %v3066
        %v3623 = vpack.c.b16 %v3071, %v3067
        %v3624 = vpack.c.b16 %v3076, %v3072
        %v3625 = vpack.c.b16 %v3077, %v3073
        %v3626 = vpack.c.b16 %v3078, %v3074
        %v3627 = vpack.c.b16 %v3079, %v3075
        %v3628 = vpack.c.b16 %v3084, %v3080
        %v3629 = vpack.c.b16 %v3085, %v3081
        %v3630 = vpack.c.b16 %v3086, %v3082
        %v3631 = vpack.c.b16 %v3087, %v3083
        %v3632 = vpack.c.b16 %v3092, %v3088
        %v3633 = vpack.c.b16 %v3093, %v3089
        %v3634 = vpack.c.b16 %v3094, %v3090
        %v3635 = vpack.c.b16 %v3095, %v3091
        %v3636 = vpack.c.b16 %v3100, %v3096
        %v3637 = vpack.c.b16 %v3101, %v3097
        %v3638 = vpack.c.b16 %v3102, %v3098
        %v3639 = vpack.c.b16 %v3103, %v3099
        %v3640 = vpack.c.b16 %v3108, %v3104
        %v3641 = vpack.c.b16 %v3109, %v3105
        %v3642 = vpack.c.b16 %v3110, %v3106
        %v3643 = vpack.c.b16 %v3111, %v3107
        %v3644 = vpack.c.b16 %v3116, %v3112
        %v3645 = vpack.c.b16 %v3117, %v3113
        %v3646 = vpack.c.b16 %v3118, %v3114
        %v3647 = vpack.c.b16 %v3119, %v3115
        %v3648 = vpack.c.b16 %v3124, %v3120
        %v3649 = vpack.c.b16 %v3125, %v3121
        %v3650 = vpack.c.b16 %v3126, %v3122
        %v3651 = vpack.c.b16 %v3127, %v3123
        %v3652 = vpack.c.b16 %v3132, %v3128
        %v3653 = vpack.c.b16 %v3133, %v3129
        %v3654 = vpack.c.b16 %v3134, %v3130
        %v3655 = vpack.c.b16 %v3135, %v3131
        %v3656 = vpack.c.b16 %v3140, %v3136
        %v3657 = vpack.c.b16 %v3141, %v3137
        %v3658 = vpack.c.b16 %v3142, %v3138
        %v3659 = vpack.c.b16 %v3143, %v3139
        %v3660 = vpack.c.b16 %v3148, %v3144
        %v3661 = vpack.c.b16 %v3149, %v3145
        %v3662 = vpack.c.b16 %v3150, %v3146
        %v3663 = vpack.c.b16 %v3151, %v3147
        %4176 = vmatprep.subr.bf16.mxu0 %v3153
        %4177 = vmatpush1.bf16.msra.mxu0 %v3152
        %4178 = vmatprep.subr.bf16.mxu0 %v3157
        %4179 = vmatpush1.bf16.msra.mxu0 %v3156
        %4180 = vmatprep.subr.bf16.mxu0 %v3161
        %4181 = vmatpush1.bf16.msra.mxu0 %v3160
        %4182 = vmatprep.subr.bf16.mxu0 %v3165
        %4183 = vmatpush1.bf16.msra.mxu0 %v3164
        %4184 = vmatprep.subr.bf16.mxu0 %v3169
        %4185 = vmatpush1.bf16.msra.mxu0 %v3168
        %4186 = vmatprep.subr.bf16.mxu0 %v3173
        %4187 = vmatpush1.bf16.msra.mxu0 %v3172
        %4188 = vmatprep.subr.bf16.mxu0 %v3177
        %4189 = vmatpush1.bf16.msra.mxu0 %v3176
        %4190 = vmatprep.subr.bf16.mxu0 %v3181
        %4191 = vmatpush1.bf16.msra.mxu0 %v3180
        %4192 = vmatprep.subr.bf16.mxu0 %v3185
        %4193 = vmatpush1.bf16.msra.mxu0 %v3184
        %4194 = vmatprep.subr.bf16.mxu0 %v3189
        %4195 = vmatpush1.bf16.msra.mxu0 %v3188
        %4196 = vmatprep.subr.bf16.mxu0 %v3193
        %4197 = vmatpush1.bf16.msra.mxu0 %v3192
        %4198 = vmatprep.subr.bf16.mxu0 %v3197
        %4199 = vmatpush1.bf16.msra.mxu0 %v3196
        %4200 = vmatprep.subr.bf16.mxu0 %v3201
        %4201 = vmatpush1.bf16.msra.mxu0 %v3200
        %4202 = vmatprep.subr.bf16.mxu0 %v3205
        %4203 = vmatpush1.bf16.msra.mxu0 %v3204
        %4204 = vmatprep.subr.bf16.mxu0 %v3209
        %4205 = vmatpush1.bf16.msra.mxu0 %v3208
        %4206 = vmatprep.subr.bf16.mxu0 %v3213
        %4207 = vmatpush1.bf16.msra.mxu0 %v3212
        %4208 = vmatprep.mubr.bf16.mxu0 %v1425
        %4209 = vmatmul.mubr.bf16.gmra.mrb[0].mxu0 %v1424
        %v4210 = vpop.f32.mrb[0].mxu0
        %v4211 = vadd.f32 0.0, %v4210
        %v4212 = vpop.f32.mrb[0].mxu0
        %v4213 = vadd.f32 0.0, %v4212
        %v4214 = vpop.f32.mrb[0].mxu0
        %v4215 = vadd.f32 0.0, %v4214
        %v4216 = vpop.f32.mrb[0].mxu0
        %v4217 = vadd.f32 0.0, %v4216
        %4218 = vmatprep.mubr.bf16.mxu0 %v1441
        %4219 = vmatmul.mubr.bf16.gmra.mrb[0].mxu0 %v1440
        %v4220 = vpop.f32.mrb[0].mxu0
        %v4221 = vadd.f32 0.0, %v4220
        %v4222 = vpop.f32.mrb[0].mxu0
        %v4223 = vadd.f32 0.0, %v4222
        %v4224 = vpop.f32.mrb[0].mxu0
        %v4225 = vadd.f32 0.0, %v4224
        %v4226 = vpop.f32.mrb[0].mxu0
        %v4227 = vadd.f32 0.0, %v4226
        %4228 = vmatprep.mubr.bf16.mxu0 %v1457
        %4229 = vmatmul.mubr.bf16.gmra.mrb[0].mxu0 %v1456
        %v4230 = vpop.f32.mrb[0].mxu0
        %v4231 = vadd.f32 0.0, %v4230
        %v4232 = vpop.f32.mrb[0].mxu0
        %v4233 = vadd.f32 0.0, %v4232
        %v4234 = vpop.f32.mrb[0].mxu0
        %v4235 = vadd.f32 0.0, %v4234
        %v4236 = vpop.f32.mrb[0].mxu0
        %v4237 = vadd.f32 0.0, %v4236
        %4238 = vmatprep.mubr.bf16.mxu0 %v1473
        %4239 = vmatmul.mubr.bf16.gmra.mrb[0].mxu0 %v1472
        %v4240 = vpop.f32.mrb[0].mxu0
        %v4241 = vadd.f32 0.0, %v4240
        %v4242 = vpop.f32.mrb[0].mxu0
        %v4243 = vadd.f32 0.0, %v4242
        %v4244 = vpop.f32.mrb[0].mxu0
        %v4245 = vadd.f32 0.0, %v4244
        %v4246 = vpop.f32.mrb[0].mxu0
        %v4247 = vadd.f32 0.0, %v4246
        %4248 = vmatprep.mubr.bf16.mxu0 %v1489
        %4249 = vmatmul.mubr.bf16.gmra.mrb[0].mxu0 %v1488
        %v4250 = vpop.f32.mrb[0].mxu0
        %v4251 = vadd.f32 0.0, %v4250
        %v4252 = vpop.f32.mrb[0].mxu0
        %v4253 = vadd.f32 0.0, %v4252
        %v4254 = vpop.f32.mrb[0].mxu0
        %v4255 = vadd.f32 0.0, %v4254
        %v4256 = vpop.f32.mrb[0].mxu0
        %v4257 = vadd.f32 0.0, %v4256
        %4258 = vmatprep.mubr.bf16.mxu0 %v1505
        %4259 = vmatmul.mubr.bf16.gmra.mrb[0].mxu0 %v1504
        %v4260 = vpop.f32.mrb[0].mxu0
        %v4261 = vadd.f32 0.0, %v4260
        %v4262 = vpop.f32.mrb[0].mxu0
        %v4263 = vadd.f32 0.0, %v4262
        %v4264 = vpop.f32.mrb[0].mxu0
        %v4265 = vadd.f32 0.0, %v4264
        %v4266 = vpop.f32.mrb[0].mxu0
        %v4267 = vadd.f32 0.0, %v4266
        %4268 = vdwg.mxu0
        %4269 = vmatprep.subr.bf16.mxu0 %v3217
        %4270 = vmatpush1.bf16.msra.mxu0 %v3216
        %4271 = vmatprep.subr.bf16.mxu0 %v3221
        %4272 = vmatpush1.bf16.msra.mxu0 %v3220
        %4273 = vmatprep.subr.bf16.mxu0 %v3225
        %4274 = vmatpush1.bf16.msra.mxu0 %v3224
        %4275 = vmatprep.subr.bf16.mxu0 %v3229
        %4276 = vmatpush1.bf16.msra.mxu0 %v3228
        %4277 = vmatprep.subr.bf16.mxu0 %v3233
        %4278 = vmatpush1.bf16.msra.mxu0 %v3232
        %4279 = vmatprep.subr.bf16.mxu0 %v3237
        %4280 = vmatpush1.bf16.msra.mxu0 %v3236
        %4281 = vmatprep.subr.bf16.mxu0 %v3241
        %4282 = vmatpush1.bf16.msra.mxu0 %v3240
        %4283 = vmatprep.subr.bf16.mxu0 %v3245
        %4284 = vmatpush1.bf16.msra.mxu0 %v3244
        %4285 = vmatprep.subr.bf16.mxu0 %v3249
        %4286 = vmatpush1.bf16.msra.mxu0 %v3248
        %4287 = vmatprep.subr.bf16.mxu0 %v3253
        %4288 = vmatpush1.bf16.msra.mxu0 %v3252
        %4289 = vmatprep.subr.bf16.mxu0 %v3257
        %4290 = vmatpush1.bf16.msra.mxu0 %v3256
        %4291 = vmatprep.subr.bf16.mxu0 %v3261
        %4292 = vmatpush1.bf16.msra.mxu0 %v3260
        %4293 = vmatprep.subr.bf16.mxu0 %v3265
        %4294 = vmatpush1.bf16.msra.mxu0 %v3264
        %4295 = vmatprep.subr.bf16.mxu0 %v3269
        %4296 = vmatpush1.bf16.msra.mxu0 %v3268
        %4297 = vmatprep.subr.bf16.mxu0 %v3273
        %4298 = vmatpush1.bf16.msra.mxu0 %v3272
        %4299 = vmatprep.subr.bf16.mxu0 %v3277
        %4300 = vmatpush1.bf16.msra.mxu0 %v3276
        %4301 = vmatprep.mubr.bf16.mxu0 %v1427
        %4302 = vmatmul.mubr.bf16.gmra.mrb[0].mxu0 %v1426
        %v4303 = vpop.f32.mrb[0].mxu0
        %v4304 = vadd.f32 %v4211, %v4303
        %v4305 = vpop.f32.mrb[0].mxu0
        %v4306 = vadd.f32 %v4213, %v4305
        %v4307 = vpop.f32.mrb[0].mxu0
        %v4308 = vadd.f32 %v4215, %v4307
        %v4309 = vpop.f32.mrb[0].mxu0
        %v4310 = vadd.f32 %v4217, %v4309
        %4311 = vmatprep.mubr.bf16.mxu0 %v1443
        %4312 = vmatmul.mubr.bf16.gmra.mrb[0].mxu0 %v1442
        %v4313 = vpop.f32.mrb[0].mxu0
        %v4314 = vadd.f32 %v4221, %v4313
        %v4315 = vpop.f32.mrb[0].mxu0
        %v4316 = vadd.f32 %v4223, %v4315
        %v4317 = vpop.f32.mrb[0].mxu0
        %v4318 = vadd.f32 %v4225, %v4317
        %v4319 = vpop.f32.mrb[0].mxu0
        %v4320 = vadd.f32 %v4227, %v4319
        %4321 = vmatprep.mubr.bf16.mxu0 %v1459
        %4322 = vmatmul.mubr.bf16.gmra.mrb[0].mxu0 %v1458
        %v4323 = vpop.f32.mrb[0].mxu0
        %v4324 = vadd.f32 %v4231, %v4323
        %v4325 = vpop.f32.mrb[0].mxu0
        %v4326 = vadd.f32 %v4233, %v4325
        %v4327 = vpop.f32.mrb[0].mxu0
        %v4328 = vadd.f32 %v4235, %v4327
        %v4329 = vpop.f32.mrb[0].mxu0
        %v4330 = vadd.f32 %v4237, %v4329
        %4331 = vmatprep.mubr.bf16.mxu0 %v1475
        %4332 = vmatmul.mubr.bf16.gmra.mrb[0].mxu0 %v1474
        %v4333 = vpop.f32.mrb[0].mxu0
        %v4334 = vadd.f32 %v4241, %v4333
        %v4335 = vpop.f32.mrb[0].mxu0
        %v4336 = vadd.f32 %v4243, %v4335
        %v4337 = vpop.f32.mrb[0].mxu0
        %v4338 = vadd.f32 %v4245, %v4337
        %v4339 = vpop.f32.mrb[0].mxu0
        %v4340 = vadd.f32 %v4247, %v4339
        %4341 = vmatprep.mubr.bf16.mxu0 %v1491
        %4342 = vmatmul.mubr.bf16.gmra.mrb[0].mxu0 %v1490
        %v4343 = vpop.f32.mrb[0].mxu0
        %v4344 = vadd.f32 %v4251, %v4343
        %v4345 = vpop.f32.mrb[0].mxu0
        %v4346 = vadd.f32 %v4253, %v4345
        %v4347 = vpop.f32.mrb[0].mxu0
        %v4348 = vadd.f32 %v4255, %v4347
        %v4349 = vpop.f32.mrb[0].mxu0
        %v4350 = vadd.f32 %v4257, %v4349
        %4351 = vmatprep.mubr.bf16.mxu0 %v1507
        %4352 = vmatmul.mubr.bf16.gmra.mrb[0].mxu0 %v1506
        %v4353 = vpop.f32.mrb[0].mxu0
        %v4354 = vadd.f32 %v4261, %v4353
        %v4355 = vpop.f32.mrb[0].mxu0
        %v4356 = vadd.f32 %v4263, %v4355
        %v4357 = vpop.f32.mrb[0].mxu0
        %v4358 = vadd.f32 %v4265, %v4357
        %v4359 = vpop.f32.mrb[0].mxu0
        %v4360 = vadd.f32 %v4267, %v4359
        %4361 = vdwg.mxu0
        %4362 = vmatprep.subr.bf16.mxu0 %v3281
        %4363 = vmatpush1.bf16.msra.mxu0 %v3280
        %4364 = vmatprep.subr.bf16.mxu0 %v3285
        %4365 = vmatpush1.bf16.msra.mxu0 %v3284
        %4366 = vmatprep.subr.bf16.mxu0 %v3289
        %4367 = vmatpush1.bf16.msra.mxu0 %v3288
        %4368 = vmatprep.subr.bf16.mxu0 %v3293
        %4369 = vmatpush1.bf16.msra.mxu0 %v3292
        %4370 = vmatprep.subr.bf16.mxu0 %v3297
        %4371 = vmatpush1.bf16.msra.mxu0 %v3296
        %4372 = vmatprep.subr.bf16.mxu0 %v3301
        %4373 = vmatpush1.bf16.msra.mxu0 %v3300
        %4374 = vmatprep.subr.bf16.mxu0 %v3305
        %4375 = vmatpush1.bf16.msra.mxu0 %v3304
        %4376 = vmatprep.subr.bf16.mxu0 %v3309
        %4377 = vmatpush1.bf16.msra.mxu0 %v3308
        %4378 = vmatprep.subr.bf16.mxu0 %v3313
        %4379 = vmatpush1.bf16.msra.mxu0 %v3312
        %4380 = vmatprep.subr.bf16.mxu0 %v3317
        %4381 = vmatpush1.bf16.msra.mxu0 %v3316
        %4382 = vmatprep.subr.bf16.mxu0 %v3321
        %4383 = vmatpush1.bf16.msra.mxu0 %v3320
        %4384 = vmatprep.subr.bf16.mxu0 %v3325
        %4385 = vmatpush1.bf16.msra.mxu0 %v3324
        %4386 = vmatprep.subr.bf16.mxu0 %v3329
        %4387 = vmatpush1.bf16.msra.mxu0 %v3328
        %4388 = vmatprep.subr.bf16.mxu0 %v3333
        %4389 = vmatpush1.bf16.msra.mxu0 %v3332
        %4390 = vmatprep.subr.bf16.mxu0 %v3337
        %4391 = vmatpush1.bf16.msra.mxu0 %v3336
        %4392 = vmatprep.subr.bf16.mxu0 %v3341
        %4393 = vmatpush1.bf16.msra.mxu0 %v3340
        %4394 = vmatprep.mubr.bf16.mxu0 %v1429
        %4395 = vmatmul.mubr.bf16.gmra.mrb[0].mxu0 %v1428
        %v4396 = vpop.f32.mrb[0].mxu0
        %v4397 = vadd.f32 %v4304, %v4396
        %v4398 = vpop.f32.mrb[0].mxu0
        %v4399 = vadd.f32 %v4306, %v4398
        %v4400 = vpop.f32.mrb[0].mxu0
        %v4401 = vadd.f32 %v4308, %v4400
        %v4402 = vpop.f32.mrb[0].mxu0
        %v4403 = vadd.f32 %v4310, %v4402
        %4404 = vmatprep.mubr.bf16.mxu0 %v1445
        %4405 = vmatmul.mubr.bf16.gmra.mrb[0].mxu0 %v1444
        %v4406 = vpop.f32.mrb[0].mxu0
        %v4407 = vadd.f32 %v4314, %v4406
        %v4408 = vpop.f32.mrb[0].mxu0
        %v4409 = vadd.f32 %v4316, %v4408
        %v4410 = vpop.f32.mrb[0].mxu0
        %v4411 = vadd.f32 %v4318, %v4410
        %v4412 = vpop.f32.mrb[0].mxu0
        %v4413 = vadd.f32 %v4320, %v4412
        %4414 = vmatprep.mubr.bf16.mxu0 %v1461
        %4415 = vmatmul.mubr.bf16.gmra.mrb[0].mxu0 %v1460
        %v4416 = vpop.f32.mrb[0].mxu0
        %v4417 = vadd.f32 %v4324, %v4416
        %v4418 = vpop.f32.mrb[0].mxu0
        %v4419 = vadd.f32 %v4326, %v4418
        %v4420 = vpop.f32.mrb[0].mxu0
        %v4421 = vadd.f32 %v4328, %v4420
        %v4422 = vpop.f32.mrb[0].mxu0
        %v4423 = vadd.f32 %v4330, %v4422
        %4424 = vmatprep.mubr.bf16.mxu0 %v1477
        %4425 = vmatmul.mubr.bf16.gmra.mrb[0].mxu0 %v1476
        %v4426 = vpop.f32.mrb[0].mxu0
        %v4427 = vadd.f32 %v4334, %v4426
        %v4428 = vpop.f32.mrb[0].mxu0
        %v4429 = vadd.f32 %v4336, %v4428
        %v4430 = vpop.f32.mrb[0].mxu0
        %v4431 = vadd.f32 %v4338, %v4430
        %v4432 = vpop.f32.mrb[0].mxu0
        %v4433 = vadd.f32 %v4340, %v4432
        %4434 = vmatprep.mubr.bf16.mxu0 %v1493
        %4435 = vmatmul.mubr.bf16.gmra.mrb[0].mxu0 %v1492
        %v4436 = vpop.f32.mrb[0].mxu0
        %v4437 = vadd.f32 %v4344, %v4436
        %v4438 = vpop.f32.mrb[0].mxu0
        %v4439 = vadd.f32 %v4346, %v4438
        %v4440 = vpop.f32.mrb[0].mxu0
        %v4441 = vadd.f32 %v4348, %v4440
        %v4442 = vpop.f32.mrb[0].mxu0
        %v4443 = vadd.f32 %v4350, %v4442
        %4444 = vmatprep.mubr.bf16.mxu0 %v1509
        %4445 = vmatmul.mubr.bf16.gmra.mrb[0].mxu0 %v1508
        %v4446 = vpop.f32.mrb[0].mxu0
        %v4447 = vadd.f32 %v4354, %v4446
        %v4448 = vpop.f32.mrb[0].mxu0
        %v4449 = vadd.f32 %v4356, %v4448
        %v4450 = vpop.f32.mrb[0].mxu0
        %v4451 = vadd.f32 %v4358, %v4450
        %v4452 = vpop.f32.mrb[0].mxu0
        %v4453 = vadd.f32 %v4360, %v4452
        %4454 = vdwg.mxu0
        %4455 = vmatprep.subr.bf16.mxu0 %v3345
        %4456 = vmatpush1.bf16.msra.mxu0 %v3344
        %4457 = vmatprep.subr.bf16.mxu0 %v3349
        %4458 = vmatpush1.bf16.msra.mxu0 %v3348
        %4459 = vmatprep.subr.bf16.mxu0 %v3353
        %4460 = vmatpush1.bf16.msra.mxu0 %v3352
        %4461 = vmatprep.subr.bf16.mxu0 %v3357
        %4462 = vmatpush1.bf16.msra.mxu0 %v3356
        %4463 = vmatprep.subr.bf16.mxu0 %v3361
        %4464 = vmatpush1.bf16.msra.mxu0 %v3360
        %4465 = vmatprep.subr.bf16.mxu0 %v3365
        %4466 = vmatpush1.bf16.msra.mxu0 %v3364
        %4467 = vmatprep.subr.bf16.mxu0 %v3369
        %4468 = vmatpush1.bf16.msra.mxu0 %v3368
        %4469 = vmatprep.subr.bf16.mxu0 %v3373
        %4470 = vmatpush1.bf16.msra.mxu0 %v3372
        %4471 = vmatprep.subr.bf16.mxu0 %v3377
        %4472 = vmatpush1.bf16.msra.mxu0 %v3376
        %4473 = vmatprep.subr.bf16.mxu0 %v3381
        %4474 = vmatpush1.bf16.msra.mxu0 %v3380
        %4475 = vmatprep.subr.bf16.mxu0 %v3385
        %4476 = vmatpush1.bf16.msra.mxu0 %v3384
        %4477 = vmatprep.subr.bf16.mxu0 %v3389
        %4478 = vmatpush1.bf16.msra.mxu0 %v3388
        %4479 = vmatprep.subr.bf16.mxu0 %v3393
        %4480 = vmatpush1.bf16.msra.mxu0 %v3392
        %4481 = vmatprep.subr.bf16.mxu0 %v3397
        %4482 = vmatpush1.bf16.msra.mxu0 %v3396
        %4483 = vmatprep.subr.bf16.mxu0 %v3401
        %4484 = vmatpush1.bf16.msra.mxu0 %v3400
        %4485 = vmatprep.subr.bf16.mxu0 %v3405
        %4486 = vmatpush1.bf16.msra.mxu0 %v3404
        %4487 = vmatprep.mubr.bf16.mxu0 %v1431
        %4488 = vmatmul.mubr.bf16.gmra.mrb[0].mxu0 %v1430
        %v4489 = vpop.f32.mrb[0].mxu0
        %v4490 = vadd.f32 %v4397, %v4489
        %v4491 = vpop.f32.mrb[0].mxu0
        %v4492 = vadd.f32 %v4399, %v4491
        %v4493 = vpop.f32.mrb[0].mxu0
        %v4494 = vadd.f32 %v4401, %v4493
        %v4495 = vpop.f32.mrb[0].mxu0
        %v4496 = vadd.f32 %v4403, %v4495
        %4497 = vmatprep.mubr.bf16.mxu0 %v1447
        %4498 = vmatmul.mubr.bf16.gmra.mrb[0].mxu0 %v1446
        %v4499 = vpop.f32.mrb[0].mxu0
        %v4500 = vadd.f32 %v4407, %v4499
        %v4501 = vpop.f32.mrb[0].mxu0
        %v4502 = vadd.f32 %v4409, %v4501
        %v4503 = vpop.f32.mrb[0].mxu0
        %v4504 = vadd.f32 %v4411, %v4503
        %v4505 = vpop.f32.mrb[0].mxu0
        %v4506 = vadd.f32 %v4413, %v4505
        %4507 = vmatprep.mubr.bf16.mxu0 %v1463
        %4508 = vmatmul.mubr.bf16.gmra.mrb[0].mxu0 %v1462
        %v4509 = vpop.f32.mrb[0].mxu0
        %v4510 = vadd.f32 %v4417, %v4509
        %v4511 = vpop.f32.mrb[0].mxu0
        %v4512 = vadd.f32 %v4419, %v4511
        %v4513 = vpop.f32.mrb[0].mxu0
        %v4514 = vadd.f32 %v4421, %v4513
        %v4515 = vpop.f32.mrb[0].mxu0
        %v4516 = vadd.f32 %v4423, %v4515
        %4517 = vmatprep.mubr.bf16.mxu0 %v1479
        %4518 = vmatmul.mubr.bf16.gmra.mrb[0].mxu0 %v1478
        %v4519 = vpop.f32.mrb[0].mxu0
        %v4520 = vadd.f32 %v4427, %v4519
        %v4521 = vpop.f32.mrb[0].mxu0
        %v4522 = vadd.f32 %v4429, %v4521
        %v4523 = vpop.f32.mrb[0].mxu0
        %v4524 = vadd.f32 %v4431, %v4523
        %v4525 = vpop.f32.mrb[0].mxu0
        %v4526 = vadd.f32 %v4433, %v4525
        %4527 = vmatprep.mubr.bf16.mxu0 %v1495
        %4528 = vmatmul.mubr.bf16.gmra.mrb[0].mxu0 %v1494
        %v4529 = vpop.f32.mrb[0].mxu0
        %v4530 = vadd.f32 %v4437, %v4529
        %v4531 = vpop.f32.mrb[0].mxu0
        %v4532 = vadd.f32 %v4439, %v4531
        %v4533 = vpop.f32.mrb[0].mxu0
        %v4534 = vadd.f32 %v4441, %v4533
        %v4535 = vpop.f32.mrb[0].mxu0
        %v4536 = vadd.f32 %v4443, %v4535
        %4537 = vmatprep.mubr.bf16.mxu0 %v1511
        %4538 = vmatmul.mubr.bf16.gmra.mrb[0].mxu0 %v1510
        %v4539 = vpop.f32.mrb[0].mxu0
        %v4540 = vadd.f32 %v4447, %v4539
        %v4541 = vpop.f32.mrb[0].mxu0
        %v4542 = vadd.f32 %v4449, %v4541
        %v4543 = vpop.f32.mrb[0].mxu0
        %v4544 = vadd.f32 %v4451, %v4543
        %v4545 = vpop.f32.mrb[0].mxu0
        %v4546 = vadd.f32 %v4453, %v4545
        %4547 = vdwg.mxu0
        %4548 = vmatprep.subr.bf16.mxu0 %v3409
        %4549 = vmatpush1.bf16.msra.mxu0 %v3408
        %4550 = vmatprep.subr.bf16.mxu0 %v3413
        %4551 = vmatpush1.bf16.msra.mxu0 %v3412
        %4552 = vmatprep.subr.bf16.mxu0 %v3417
        %4553 = vmatpush1.bf16.msra.mxu0 %v3416
        %4554 = vmatprep.subr.bf16.mxu0 %v3421
        %4555 = vmatpush1.bf16.msra.mxu0 %v3420
        %4556 = vmatprep.subr.bf16.mxu0 %v3425
        %4557 = vmatpush1.bf16.msra.mxu0 %v3424
        %4558 = vmatprep.subr.bf16.mxu0 %v3429
        %4559 = vmatpush1.bf16.msra.mxu0 %v3428
        %4560 = vmatprep.subr.bf16.mxu0 %v3433
        %4561 = vmatpush1.bf16.msra.mxu0 %v3432
        %4562 = vmatprep.subr.bf16.mxu0 %v3437
        %4563 = vmatpush1.bf16.msra.mxu0 %v3436
        %4564 = vmatprep.subr.bf16.mxu0 %v3441
        %4565 = vmatpush1.bf16.msra.mxu0 %v3440
        %4566 = vmatprep.subr.bf16.mxu0 %v3445
        %4567 = vmatpush1.bf16.msra.mxu0 %v3444
        %4568 = vmatprep.subr.bf16.mxu0 %v3449
        %4569 = vmatpush1.bf16.msra.mxu0 %v3448
        %4570 = vmatprep.subr.bf16.mxu0 %v3453
        %4571 = vmatpush1.bf16.msra.mxu0 %v3452
        %4572 = vmatprep.subr.bf16.mxu0 %v3457
        %4573 = vmatpush1.bf16.msra.mxu0 %v3456
        %4574 = vmatprep.subr.bf16.mxu0 %v3461
        %4575 = vmatpush1.bf16.msra.mxu0 %v3460
        %4576 = vmatprep.subr.bf16.mxu0 %v3465
        %4577 = vmatpush1.bf16.msra.mxu0 %v3464
        %4578 = vmatprep.subr.bf16.mxu0 %v3469
        %4579 = vmatpush1.bf16.msra.mxu0 %v3468
        %4580 = vmatprep.mubr.bf16.mxu0 %v1433
        %4581 = vmatmul.mubr.bf16.gmra.mrb[0].mxu0 %v1432
        %v4582 = vpop.f32.mrb[0].mxu0
        %v4583 = vadd.f32 %v4490, %v4582
        %v4584 = vpop.f32.mrb[0].mxu0
        %v4585 = vadd.f32 %v4492, %v4584
        %v4586 = vpop.f32.mrb[0].mxu0
        %v4587 = vadd.f32 %v4494, %v4586
        %v4588 = vpop.f32.mrb[0].mxu0
        %v4589 = vadd.f32 %v4496, %v4588
        %4590 = vmatprep.mubr.bf16.mxu0 %v1449
        %4591 = vmatmul.mubr.bf16.gmra.mrb[0].mxu0 %v1448
        %v4592 = vpop.f32.mrb[0].mxu0
        %v4593 = vadd.f32 %v4500, %v4592
        %v4594 = vpop.f32.mrb[0].mxu0
        %v4595 = vadd.f32 %v4502, %v4594
        %v4596 = vpop.f32.mrb[0].mxu0
        %v4597 = vadd.f32 %v4504, %v4596
        %v4598 = vpop.f32.mrb[0].mxu0
        %v4599 = vadd.f32 %v4506, %v4598
        %4600 = vmatprep.mubr.bf16.mxu0 %v1465
        %4601 = vmatmul.mubr.bf16.gmra.mrb[0].mxu0 %v1464
        %v4602 = vpop.f32.mrb[0].mxu0
        %v4603 = vadd.f32 %v4510, %v4602
        %v4604 = vpop.f32.mrb[0].mxu0
        %v4605 = vadd.f32 %v4512, %v4604
        %v4606 = vpop.f32.mrb[0].mxu0
        %v4607 = vadd.f32 %v4514, %v4606
        %v4608 = vpop.f32.mrb[0].mxu0
        %v4609 = vadd.f32 %v4516, %v4608
        %4610 = vmatprep.mubr.bf16.mxu0 %v1481
        %4611 = vmatmul.mubr.bf16.gmra.mrb[0].mxu0 %v1480
        %v4612 = vpop.f32.mrb[0].mxu0
        %v4613 = vadd.f32 %v4520, %v4612
        %v4614 = vpop.f32.mrb[0].mxu0
        %v4615 = vadd.f32 %v4522, %v4614
        %v4616 = vpop.f32.mrb[0].mxu0
        %v4617 = vadd.f32 %v4524, %v4616
        %v4618 = vpop.f32.mrb[0].mxu0
        %v4619 = vadd.f32 %v4526, %v4618
        %4620 = vmatprep.mubr.bf16.mxu0 %v1497
        %4621 = vmatmul.mubr.bf16.gmra.mrb[0].mxu0 %v1496
        %v4622 = vpop.f32.mrb[0].mxu0
        %v4623 = vadd.f32 %v4530, %v4622
        %v4624 = vpop.f32.mrb[0].mxu0
        %v4625 = vadd.f32 %v4532, %v4624
        %v4626 = vpop.f32.mrb[0].mxu0
        %v4627 = vadd.f32 %v4534, %v4626
        %v4628 = vpop.f32.mrb[0].mxu0
        %v4629 = vadd.f32 %v4536, %v4628
        %4630 = vmatprep.mubr.bf16.mxu0 %v1513
        %4631 = vmatmul.mubr.bf16.gmra.mrb[0].mxu0 %v1512
        %v4632 = vpop.f32.mrb[0].mxu0
        %v4633 = vadd.f32 %v4540, %v4632
        %v4634 = vpop.f32.mrb[0].mxu0
        %v4635 = vadd.f32 %v4542, %v4634
        %v4636 = vpop.f32.mrb[0].mxu0
        %v4637 = vadd.f32 %v4544, %v4636
        %v4638 = vpop.f32.mrb[0].mxu0
        %v4639 = vadd.f32 %v4546, %v4638
        %4640 = vdwg.mxu0
        %4641 = vmatprep.subr.bf16.mxu0 %v3473
        %4642 = vmatpush1.bf16.msra.mxu0 %v3472
        %4643 = vmatprep.subr.bf16.mxu0 %v3477
        %4644 = vmatpush1.bf16.msra.mxu0 %v3476
        %4645 = vmatprep.subr.bf16.mxu0 %v3481
        %4646 = vmatpush1.bf16.msra.mxu0 %v3480
        %4647 = vmatprep.subr.bf16.mxu0 %v3485
        %4648 = vmatpush1.bf16.msra.mxu0 %v3484
        %4649 = vmatprep.subr.bf16.mxu0 %v3489
        %4650 = vmatpush1.bf16.msra.mxu0 %v3488
        %4651 = vmatprep.subr.bf16.mxu0 %v3493
        %4652 = vmatpush1.bf16.msra.mxu0 %v3492
        %4653 = vmatprep.subr.bf16.mxu0 %v3497
        %4654 = vmatpush1.bf16.msra.mxu0 %v3496
        %4655 = vmatprep.subr.bf16.mxu0 %v3501
        %4656 = vmatpush1.bf16.msra.mxu0 %v3500
        %4657 = vmatprep.subr.bf16.mxu0 %v3505
        %4658 = vmatpush1.bf16.msra.mxu0 %v3504
        %4659 = vmatprep.subr.bf16.mxu0 %v3509
        %4660 = vmatpush1.bf16.msra.mxu0 %v3508
        %4661 = vmatprep.subr.bf16.mxu0 %v3513
        %4662 = vmatpush1.bf16.msra.mxu0 %v3512
        %4663 = vmatprep.subr.bf16.mxu0 %v3517
        %4664 = vmatpush1.bf16.msra.mxu0 %v3516
        %4665 = vmatprep.subr.bf16.mxu0 %v3521
        %4666 = vmatpush1.bf16.msra.mxu0 %v3520
        %4667 = vmatprep.subr.bf16.mxu0 %v3525
        %4668 = vmatpush1.bf16.msra.mxu0 %v3524
        %4669 = vmatprep.subr.bf16.mxu0 %v3529
        %4670 = vmatpush1.bf16.msra.mxu0 %v3528
        %4671 = vmatprep.subr.bf16.mxu0 %v3533
        %4672 = vmatpush1.bf16.msra.mxu0 %v3532
        %4673 = vmatprep.mubr.bf16.mxu0 %v1435
        %4674 = vmatmul.mubr.bf16.gmra.mrb[0].mxu0 %v1434
        %v4675 = vpop.f32.mrb[0].mxu0
        %v4676 = vadd.f32 %v4583, %v4675
        %v4677 = vpop.f32.mrb[0].mxu0
        %v4678 = vadd.f32 %v4585, %v4677
        %v4679 = vpop.f32.mrb[0].mxu0
        %v4680 = vadd.f32 %v4587, %v4679
        %v4681 = vpop.f32.mrb[0].mxu0
        %v4682 = vadd.f32 %v4589, %v4681
        %4683 = vmatprep.mubr.bf16.mxu0 %v1451
        %4684 = vmatmul.mubr.bf16.gmra.mrb[0].mxu0 %v1450
        %v4685 = vpop.f32.mrb[0].mxu0
        %v4686 = vadd.f32 %v4593, %v4685
        %v4687 = vpop.f32.mrb[0].mxu0
        %v4688 = vadd.f32 %v4595, %v4687
        %v4689 = vpop.f32.mrb[0].mxu0
        %v4690 = vadd.f32 %v4597, %v4689
        %v4691 = vpop.f32.mrb[0].mxu0
        %v4692 = vadd.f32 %v4599, %v4691
        %4693 = vmatprep.mubr.bf16.mxu0 %v1467
        %4694 = vmatmul.mubr.bf16.gmra.mrb[0].mxu0 %v1466
        %v4695 = vpop.f32.mrb[0].mxu0
        %v4696 = vadd.f32 %v4603, %v4695
        %v4697 = vpop.f32.mrb[0].mxu0
        %v4698 = vadd.f32 %v4605, %v4697
        %v4699 = vpop.f32.mrb[0].mxu0
        %v4700 = vadd.f32 %v4607, %v4699
        %v4701 = vpop.f32.mrb[0].mxu0
        %v4702 = vadd.f32 %v4609, %v4701
        %4703 = vmatprep.mubr.bf16.mxu0 %v1483
        %4704 = vmatmul.mubr.bf16.gmra.mrb[0].mxu0 %v1482
        %v4705 = vpop.f32.mrb[0].mxu0
        %v4706 = vadd.f32 %v4613, %v4705
        %v4707 = vpop.f32.mrb[0].mxu0
        %v4708 = vadd.f32 %v4615, %v4707
        %v4709 = vpop.f32.mrb[0].mxu0
        %v4710 = vadd.f32 %v4617, %v4709
        %v4711 = vpop.f32.mrb[0].mxu0
        %v4712 = vadd.f32 %v4619, %v4711
        %4713 = vmatprep.mubr.bf16.mxu0 %v1499
        %4714 = vmatmul.mubr.bf16.gmra.mrb[0].mxu0 %v1498
        %v4715 = vpop.f32.mrb[0].mxu0
        %v4716 = vadd.f32 %v4623, %v4715
        %v4717 = vpop.f32.mrb[0].mxu0
        %v4718 = vadd.f32 %v4625, %v4717
        %v4719 = vpop.f32.mrb[0].mxu0
        %v4720 = vadd.f32 %v4627, %v4719
        %v4721 = vpop.f32.mrb[0].mxu0
        %v4722 = vadd.f32 %v4629, %v4721
        %4723 = vmatprep.mubr.bf16.mxu0 %v1515
        %4724 = vmatmul.mubr.bf16.gmra.mrb[0].mxu0 %v1514
        %v4725 = vpop.f32.mrb[0].mxu0
        %v4726 = vadd.f32 %v4633, %v4725
        %v4727 = vpop.f32.mrb[0].mxu0
        %v4728 = vadd.f32 %v4635, %v4727
        %v4729 = vpop.f32.mrb[0].mxu0
        %v4730 = vadd.f32 %v4637, %v4729
        %v4731 = vpop.f32.mrb[0].mxu0
        %v4732 = vadd.f32 %v4639, %v4731
        %4733 = vdwg.mxu0
        %4734 = vmatprep.subr.bf16.mxu0 %v3537
        %4735 = vmatpush1.bf16.msra.mxu0 %v3536
        %4736 = vmatprep.subr.bf16.mxu0 %v3541
        %4737 = vmatpush1.bf16.msra.mxu0 %v3540
        %4738 = vmatprep.subr.bf16.mxu0 %v3545
        %4739 = vmatpush1.bf16.msra.mxu0 %v3544
        %4740 = vmatprep.subr.bf16.mxu0 %v3549
        %4741 = vmatpush1.bf16.msra.mxu0 %v3548
        %4742 = vmatprep.subr.bf16.mxu0 %v3553
        %4743 = vmatpush1.bf16.msra.mxu0 %v3552
        %4744 = vmatprep.subr.bf16.mxu0 %v3557
        %4745 = vmatpush1.bf16.msra.mxu0 %v3556
        %4746 = vmatprep.subr.bf16.mxu0 %v3561
        %4747 = vmatpush1.bf16.msra.mxu0 %v3560
        %4748 = vmatprep.subr.bf16.mxu0 %v3565
        %4749 = vmatpush1.bf16.msra.mxu0 %v3564
        %4750 = vmatprep.subr.bf16.mxu0 %v3569
        %4751 = vmatpush1.bf16.msra.mxu0 %v3568
        %4752 = vmatprep.subr.bf16.mxu0 %v3573
        %4753 = vmatpush1.bf16.msra.mxu0 %v3572
        %4754 = vmatprep.subr.bf16.mxu0 %v3577
        %4755 = vmatpush1.bf16.msra.mxu0 %v3576
        %4756 = vmatprep.subr.bf16.mxu0 %v3581
        %4757 = vmatpush1.bf16.msra.mxu0 %v3580
        %4758 = vmatprep.subr.bf16.mxu0 %v3585
        %4759 = vmatpush1.bf16.msra.mxu0 %v3584
        %4760 = vmatprep.subr.bf16.mxu0 %v3589
        %4761 = vmatpush1.bf16.msra.mxu0 %v3588
        %4762 = vmatprep.subr.bf16.mxu0 %v3593
        %4763 = vmatpush1.bf16.msra.mxu0 %v3592
        %4764 = vmatprep.subr.bf16.mxu0 %v3597
        %4765 = vmatpush1.bf16.msra.mxu0 %v3596
        %4766 = vmatprep.mubr.bf16.mxu0 %v1437
        %4767 = vmatmul.mubr.bf16.gmra.mrb[0].mxu0 %v1436
        %v4768 = vpop.f32.mrb[0].mxu0
        %v4769 = vadd.f32 %v4676, %v4768
        %v4770 = vpop.f32.mrb[0].mxu0
        %v4771 = vadd.f32 %v4678, %v4770
        %v4772 = vpop.f32.mrb[0].mxu0
        %v4773 = vadd.f32 %v4680, %v4772
        %v4774 = vpop.f32.mrb[0].mxu0
        %v4775 = vadd.f32 %v4682, %v4774
        %4776 = vmatprep.mubr.bf16.mxu0 %v1453
        %4777 = vmatmul.mubr.bf16.gmra.mrb[0].mxu0 %v1452
        %v4778 = vpop.f32.mrb[0].mxu0
        %v4779 = vadd.f32 %v4686, %v4778
        %v4780 = vpop.f32.mrb[0].mxu0
        %v4781 = vadd.f32 %v4688, %v4780
        %v4782 = vpop.f32.mrb[0].mxu0
        %v4783 = vadd.f32 %v4690, %v4782
        %v4784 = vpop.f32.mrb[0].mxu0
        %v4785 = vadd.f32 %v4692, %v4784
        %4786 = vmatprep.mubr.bf16.mxu0 %v1469
        %4787 = vmatmul.mubr.bf16.gmra.mrb[0].mxu0 %v1468
        %v4788 = vpop.f32.mrb[0].mxu0
        %v4789 = vadd.f32 %v4696, %v4788
        %v4790 = vpop.f32.mrb[0].mxu0
        %v4791 = vadd.f32 %v4698, %v4790
        %v4792 = vpop.f32.mrb[0].mxu0
        %v4793 = vadd.f32 %v4700, %v4792
        %v4794 = vpop.f32.mrb[0].mxu0
        %v4795 = vadd.f32 %v4702, %v4794
        %4796 = vmatprep.mubr.bf16.mxu0 %v1485
        %4797 = vmatmul.mubr.bf16.gmra.mrb[0].mxu0 %v1484
        %v4798 = vpop.f32.mrb[0].mxu0
        %v4799 = vadd.f32 %v4706, %v4798
        %v4800 = vpop.f32.mrb[0].mxu0
        %v4801 = vadd.f32 %v4708, %v4800
        %v4802 = vpop.f32.mrb[0].mxu0
        %v4803 = vadd.f32 %v4710, %v4802
        %v4804 = vpop.f32.mrb[0].mxu0
        %v4805 = vadd.f32 %v4712, %v4804
        %4806 = vmatprep.mubr.bf16.mxu0 %v1501
        %4807 = vmatmul.mubr.bf16.gmra.mrb[0].mxu0 %v1500
        %v4808 = vpop.f32.mrb[0].mxu0
        %v4809 = vadd.f32 %v4716, %v4808
        %v4810 = vpop.f32.mrb[0].mxu0
        %v4811 = vadd.f32 %v4718, %v4810
        %v4812 = vpop.f32.mrb[0].mxu0
        %v4813 = vadd.f32 %v4720, %v4812
        %v4814 = vpop.f32.mrb[0].mxu0
        %v4815 = vadd.f32 %v4722, %v4814
        %4816 = vmatprep.mubr.bf16.mxu0 %v1517
        %4817 = vmatmul.mubr.bf16.gmra.mrb[0].mxu0 %v1516
        %v4818 = vpop.f32.mrb[0].mxu0
        %v4819 = vadd.f32 %v4726, %v4818
        %v4820 = vpop.f32.mrb[0].mxu0
        %v4821 = vadd.f32 %v4728, %v4820
        %v4822 = vpop.f32.mrb[0].mxu0
        %v4823 = vadd.f32 %v4730, %v4822
        %v4824 = vpop.f32.mrb[0].mxu0
        %v4825 = vadd.f32 %v4732, %v4824
        %4826 = vdwg.mxu0
        %4827 = vmatprep.subr.bf16.mxu0 %v3601
        %4828 = vmatpush1.bf16.msra.mxu0 %v3600
        %4829 = vmatprep.subr.bf16.mxu0 %v3605
        %4830 = vmatpush1.bf16.msra.mxu0 %v3604
        %4831 = vmatprep.subr.bf16.mxu0 %v3609
        %4832 = vmatpush1.bf16.msra.mxu0 %v3608
        %4833 = vmatprep.subr.bf16.mxu0 %v3613
        %4834 = vmatpush1.bf16.msra.mxu0 %v3612
        %4835 = vmatprep.subr.bf16.mxu0 %v3617
        %4836 = vmatpush1.bf16.msra.mxu0 %v3616
        %4837 = vmatprep.subr.bf16.mxu0 %v3621
        %4838 = vmatpush1.bf16.msra.mxu0 %v3620
        %4839 = vmatprep.subr.bf16.mxu0 %v3625
        %4840 = vmatpush1.bf16.msra.mxu0 %v3624
        %4841 = vmatprep.subr.bf16.mxu0 %v3629
        %4842 = vmatpush1.bf16.msra.mxu0 %v3628
        %4843 = vmatprep.subr.bf16.mxu0 %v3633
        %4844 = vmatpush1.bf16.msra.mxu0 %v3632
        %4845 = vmatprep.subr.bf16.mxu0 %v3637
        %4846 = vmatpush1.bf16.msra.mxu0 %v3636
        %4847 = vmatprep.subr.bf16.mxu0 %v3641
        %4848 = vmatpush1.bf16.msra.mxu0 %v3640
        %4849 = vmatprep.subr.bf16.mxu0 %v3645
        %4850 = vmatpush1.bf16.msra.mxu0 %v3644
        %4851 = vmatprep.subr.bf16.mxu0 %v3649
        %4852 = vmatpush1.bf16.msra.mxu0 %v3648
        %4853 = vmatprep.subr.bf16.mxu0 %v3653
        %4854 = vmatpush1.bf16.msra.mxu0 %v3652
        %4855 = vmatprep.subr.bf16.mxu0 %v3657
        %4856 = vmatpush1.bf16.msra.mxu0 %v3656
        %4857 = vmatprep.subr.bf16.mxu0 %v3661
        %4858 = vmatpush1.bf16.msra.mxu0 %v3660
        %4859 = vmatprep.mubr.bf16.mxu0 %v1439
        %4860 = vmatmul.mubr.bf16.gmra.mrb[0].mxu0 %v1438
        %v4861 = vpop.f32.mrb[0].mxu0
        %v4862 = vadd.f32 %v4769, %v4861
        %v4863 = vpop.f32.mrb[0].mxu0
        %v4864 = vadd.f32 %v4771, %v4863
        %v4865 = vpop.f32.mrb[0].mxu0
        %v4866 = vadd.f32 %v4773, %v4865
        %v4867 = vpop.f32.mrb[0].mxu0
        %v4868 = vadd.f32 %v4775, %v4867
        %4869 = vmatprep.mubr.bf16.mxu0 %v1455
        %4870 = vmatmul.mubr.bf16.gmra.mrb[0].mxu0 %v1454
        %v4871 = vpop.f32.mrb[0].mxu0
        %v4872 = vadd.f32 %v4779, %v4871
        %v4873 = vpop.f32.mrb[0].mxu0
        %v4874 = vadd.f32 %v4781, %v4873
        %v4875 = vpop.f32.mrb[0].mxu0
        %v4876 = vadd.f32 %v4783, %v4875
        %v4877 = vpop.f32.mrb[0].mxu0
        %v4878 = vadd.f32 %v4785, %v4877
        %4879 = vmatprep.mubr.bf16.mxu0 %v1471
        %4880 = vmatmul.mubr.bf16.gmra.mrb[0].mxu0 %v1470
        %v4881 = vpop.f32.mrb[0].mxu0
        %v4882 = vadd.f32 %v4789, %v4881
        %v4883 = vpop.f32.mrb[0].mxu0
        %v4884 = vadd.f32 %v4791, %v4883
        %v4885 = vpop.f32.mrb[0].mxu0
        %v4886 = vadd.f32 %v4793, %v4885
        %v4887 = vpop.f32.mrb[0].mxu0
        %v4888 = vadd.f32 %v4795, %v4887
        %4889 = vmatprep.mubr.bf16.mxu0 %v1487
        %4890 = vmatmul.mubr.bf16.gmra.mrb[0].mxu0 %v1486
        %v4891 = vpop.f32.mrb[0].mxu0
        %v4892 = vadd.f32 %v4799, %v4891
        %v4893 = vpop.f32.mrb[0].mxu0
        %v4894 = vadd.f32 %v4801, %v4893
        %v4895 = vpop.f32.mrb[0].mxu0
        %v4896 = vadd.f32 %v4803, %v4895
        %v4897 = vpop.f32.mrb[0].mxu0
        %v4898 = vadd.f32 %v4805, %v4897
        %4899 = vmatprep.mubr.bf16.mxu0 %v1503
        %4900 = vmatmul.mubr.bf16.gmra.mrb[0].mxu0 %v1502
        %v4901 = vpop.f32.mrb[0].mxu0
        %v4902 = vadd.f32 %v4809, %v4901
        %v4903 = vpop.f32.mrb[0].mxu0
        %v4904 = vadd.f32 %v4811, %v4903
        %v4905 = vpop.f32.mrb[0].mxu0
        %v4906 = vadd.f32 %v4813, %v4905
        %v4907 = vpop.f32.mrb[0].mxu0
        %v4908 = vadd.f32 %v4815, %v4907
        %4909 = vmatprep.mubr.bf16.mxu0 %v1519
        %4910 = vmatmul.mubr.bf16.gmra.mrb[0].mxu0 %v1518
        %v4911 = vpop.f32.mrb[0].mxu0
        %v4912 = vadd.f32 %v4819, %v4911
        %v4913 = vpop.f32.mrb[0].mxu0
        %v4914 = vadd.f32 %v4821, %v4913
        %v4915 = vpop.f32.mrb[0].mxu0
        %v4916 = vadd.f32 %v4823, %v4915
        %v4917 = vpop.f32.mrb[0].mxu0
        %v4918 = vadd.f32 %v4825, %v4917
        %4919 = vdwg.mxu0
        %4920 = vmatprep.subr.bf16.mxu0 %v3155
        %4921 = vmatpush1.bf16.msra.mxu0 %v3154
        %4922 = vmatprep.subr.bf16.mxu0 %v3159
        %4923 = vmatpush1.bf16.msra.mxu0 %v3158
        %4924 = vmatprep.subr.bf16.mxu0 %v3163
        %4925 = vmatpush1.bf16.msra.mxu0 %v3162
        %4926 = vmatprep.subr.bf16.mxu0 %v3167
        %4927 = vmatpush1.bf16.msra.mxu0 %v3166
        %4928 = vmatprep.subr.bf16.mxu0 %v3171
        %4929 = vmatpush1.bf16.msra.mxu0 %v3170
        %4930 = vmatprep.subr.bf16.mxu0 %v3175
        %4931 = vmatpush1.bf16.msra.mxu0 %v3174
        %4932 = vmatprep.subr.bf16.mxu0 %v3179
        %4933 = vmatpush1.bf16.msra.mxu0 %v3178
        %4934 = vmatprep.subr.bf16.mxu0 %v3183
        %4935 = vmatpush1.bf16.msra.mxu0 %v3182
        %4936 = vmatprep.subr.bf16.mxu0 %v3187
        %4937 = vmatpush1.bf16.msra.mxu0 %v3186
        %4938 = vmatprep.subr.bf16.mxu0 %v3191
        %4939 = vmatpush1.bf16.msra.mxu0 %v3190
        %4940 = vmatprep.subr.bf16.mxu0 %v3195
        %4941 = vmatpush1.bf16.msra.mxu0 %v3194
        %4942 = vmatprep.subr.bf16.mxu0 %v3199
        %4943 = vmatpush1.bf16.msra.mxu0 %v3198
        %4944 = vmatprep.subr.bf16.mxu0 %v3203
        %4945 = vmatpush1.bf16.msra.mxu0 %v3202
        %4946 = vmatprep.subr.bf16.mxu0 %v3207
        %4947 = vmatpush1.bf16.msra.mxu0 %v3206
        %4948 = vmatprep.subr.bf16.mxu0 %v3211
        %4949 = vmatpush1.bf16.msra.mxu0 %v3210
        %4950 = vmatprep.subr.bf16.mxu0 %v3215
        %4951 = vmatpush1.bf16.msra.mxu0 %v3214
        %4952 = vmatprep.mubr.bf16.mxu0 %v1425
        %4953 = vmatmul.mubr.bf16.gmra.mrb[0].mxu0 %v1424
        %v4954 = vpop.f32.mrb[0].mxu0
        %v4955 = vadd.f32 0.0, %v4954
        %v4956 = vpop.f32.mrb[0].mxu0
        %v4957 = vadd.f32 0.0, %v4956
        %v4958 = vpop.f32.mrb[0].mxu0
        %v4959 = vadd.f32 0.0, %v4958
        %v4960 = vpop.f32.mrb[0].mxu0
        %v4961 = vadd.f32 0.0, %v4960
        %4962 = vmatprep.mubr.bf16.mxu0 %v1441
        %4963 = vmatmul.mubr.bf16.gmra.mrb[0].mxu0 %v1440
        %v4964 = vpop.f32.mrb[0].mxu0
        %v4965 = vadd.f32 0.0, %v4964
        %v4966 = vpop.f32.mrb[0].mxu0
        %v4967 = vadd.f32 0.0, %v4966
        %v4968 = vpop.f32.mrb[0].mxu0
        %v4969 = vadd.f32 0.0, %v4968
        %v4970 = vpop.f32.mrb[0].mxu0
        %v4971 = vadd.f32 0.0, %v4970
        %4972 = vmatprep.mubr.bf16.mxu0 %v1457
        %4973 = vmatmul.mubr.bf16.gmra.mrb[0].mxu0 %v1456
        %v4974 = vpop.f32.mrb[0].mxu0
        %v4975 = vadd.f32 0.0, %v4974
        %v4976 = vpop.f32.mrb[0].mxu0
        %v4977 = vadd.f32 0.0, %v4976
        %v4978 = vpop.f32.mrb[0].mxu0
        %v4979 = vadd.f32 0.0, %v4978
        %v4980 = vpop.f32.mrb[0].mxu0
        %v4981 = vadd.f32 0.0, %v4980
        %4982 = vmatprep.mubr.bf16.mxu0 %v1473
        %4983 = vmatmul.mubr.bf16.gmra.mrb[0].mxu0 %v1472
        %v4984 = vpop.f32.mrb[0].mxu0
        %v4985 = vadd.f32 0.0, %v4984
        %v4986 = vpop.f32.mrb[0].mxu0
        %v4987 = vadd.f32 0.0, %v4986
        %v4988 = vpop.f32.mrb[0].mxu0
        %v4989 = vadd.f32 0.0, %v4988
        %v4990 = vpop.f32.mrb[0].mxu0
        %v4991 = vadd.f32 0.0, %v4990
        %4992 = vmatprep.mubr.bf16.mxu0 %v1489
        %4993 = vmatmul.mubr.bf16.gmra.mrb[0].mxu0 %v1488
        %v4994 = vpop.f32.mrb[0].mxu0
        %v4995 = vadd.f32 0.0, %v4994
        %v4996 = vpop.f32.mrb[0].mxu0
        %v4997 = vadd.f32 0.0, %v4996
        %v4998 = vpop.f32.mrb[0].mxu0
        %v4999 = vadd.f32 0.0, %v4998
        %v5000 = vpop.f32.mrb[0].mxu0
        %v5001 = vadd.f32 0.0, %v5000
        %5002 = vmatprep.mubr.bf16.mxu0 %v1505
        %5003 = vmatmul.mubr.bf16.gmra.mrb[0].mxu0 %v1504
        %v5004 = vpop.f32.mrb[0].mxu0
        %v5005 = vadd.f32 0.0, %v5004
        %v5006 = vpop.f32.mrb[0].mxu0
        %v5007 = vadd.f32 0.0, %v5006
        %v5008 = vpop.f32.mrb[0].mxu0
        %v5009 = vadd.f32 0.0, %v5008
        %v5010 = vpop.f32.mrb[0].mxu0
        %v5011 = vadd.f32 0.0, %v5010
        %5012 = vdwg.mxu0
        %5013 = vmatprep.subr.bf16.mxu0 %v3219
        %5014 = vmatpush1.bf16.msra.mxu0 %v3218
        %5015 = vmatprep.subr.bf16.mxu0 %v3223
        %5016 = vmatpush1.bf16.msra.mxu0 %v3222
        %5017 = vmatprep.subr.bf16.mxu0 %v3227
        %5018 = vmatpush1.bf16.msra.mxu0 %v3226
        %5019 = vmatprep.subr.bf16.mxu0 %v3231
        %5020 = vmatpush1.bf16.msra.mxu0 %v3230
        %5021 = vmatprep.subr.bf16.mxu0 %v3235
        %5022 = vmatpush1.bf16.msra.mxu0 %v3234
        %5023 = vmatprep.subr.bf16.mxu0 %v3239
        %5024 = vmatpush1.bf16.msra.mxu0 %v3238
        %5025 = vmatprep.subr.bf16.mxu0 %v3243
        %5026 = vmatpush1.bf16.msra.mxu0 %v3242
        %5027 = vmatprep.subr.bf16.mxu0 %v3247
        %5028 = vmatpush1.bf16.msra.mxu0 %v3246
        %5029 = vmatprep.subr.bf16.mxu0 %v3251
        %5030 = vmatpush1.bf16.msra.mxu0 %v3250
        %5031 = vmatprep.subr.bf16.mxu0 %v3255
        %5032 = vmatpush1.bf16.msra.mxu0 %v3254
        %5033 = vmatprep.subr.bf16.mxu0 %v3259
        %5034 = vmatpush1.bf16.msra.mxu0 %v3258
        %5035 = vmatprep.subr.bf16.mxu0 %v3263
        %5036 = vmatpush1.bf16.msra.mxu0 %v3262
        %5037 = vmatprep.subr.bf16.mxu0 %v3267
        %5038 = vmatpush1.bf16.msra.mxu0 %v3266
        %5039 = vmatprep.subr.bf16.mxu0 %v3271
        %5040 = vmatpush1.bf16.msra.mxu0 %v3270
        %5041 = vmatprep.subr.bf16.mxu0 %v3275
        %5042 = vmatpush1.bf16.msra.mxu0 %v3274
        %5043 = vmatprep.subr.bf16.mxu0 %v3279
        %5044 = vmatpush1.bf16.msra.mxu0 %v3278
        %5045 = vmatprep.mubr.bf16.mxu0 %v1427
        %5046 = vmatmul.mubr.bf16.gmra.mrb[0].mxu0 %v1426
        %v5047 = vpop.f32.mrb[0].mxu0
        %v5048 = vadd.f32 %v4955, %v5047
        %v5049 = vpop.f32.mrb[0].mxu0
        %v5050 = vadd.f32 %v4957, %v5049
        %v5051 = vpop.f32.mrb[0].mxu0
        %v5052 = vadd.f32 %v4959, %v5051
        %v5053 = vpop.f32.mrb[0].mxu0
        %v5054 = vadd.f32 %v4961, %v5053
        %5055 = vmatprep.mubr.bf16.mxu0 %v1443
        %5056 = vmatmul.mubr.bf16.gmra.mrb[0].mxu0 %v1442
        %v5057 = vpop.f32.mrb[0].mxu0
        %v5058 = vadd.f32 %v4965, %v5057
        %v5059 = vpop.f32.mrb[0].mxu0
        %v5060 = vadd.f32 %v4967, %v5059
        %v5061 = vpop.f32.mrb[0].mxu0
        %v5062 = vadd.f32 %v4969, %v5061
        %v5063 = vpop.f32.mrb[0].mxu0
        %v5064 = vadd.f32 %v4971, %v5063
        %5065 = vmatprep.mubr.bf16.mxu0 %v1459
        %5066 = vmatmul.mubr.bf16.gmra.mrb[0].mxu0 %v1458
        %v5067 = vpop.f32.mrb[0].mxu0
        %v5068 = vadd.f32 %v4975, %v5067
        %v5069 = vpop.f32.mrb[0].mxu0
        %v5070 = vadd.f32 %v4977, %v5069
        %v5071 = vpop.f32.mrb[0].mxu0
        %v5072 = vadd.f32 %v4979, %v5071
        %v5073 = vpop.f32.mrb[0].mxu0
        %v5074 = vadd.f32 %v4981, %v5073
        %5075 = vmatprep.mubr.bf16.mxu0 %v1475
        %5076 = vmatmul.mubr.bf16.gmra.mrb[0].mxu0 %v1474
        %v5077 = vpop.f32.mrb[0].mxu0
        %v5078 = vadd.f32 %v4985, %v5077
        %v5079 = vpop.f32.mrb[0].mxu0
        %v5080 = vadd.f32 %v4987, %v5079
        %v5081 = vpop.f32.mrb[0].mxu0
        %v5082 = vadd.f32 %v4989, %v5081
        %v5083 = vpop.f32.mrb[0].mxu0
        %v5084 = vadd.f32 %v4991, %v5083
        %5085 = vmatprep.mubr.bf16.mxu0 %v1491
        %5086 = vmatmul.mubr.bf16.gmra.mrb[0].mxu0 %v1490
        %v5087 = vpop.f32.mrb[0].mxu0
        %v5088 = vadd.f32 %v4995, %v5087
        %v5089 = vpop.f32.mrb[0].mxu0
        %v5090 = vadd.f32 %v4997, %v5089
        %v5091 = vpop.f32.mrb[0].mxu0
        %v5092 = vadd.f32 %v4999, %v5091
        %v5093 = vpop.f32.mrb[0].mxu0
        %v5094 = vadd.f32 %v5001, %v5093
        %5095 = vmatprep.mubr.bf16.mxu0 %v1507
        %5096 = vmatmul.mubr.bf16.gmra.mrb[0].mxu0 %v1506
        %v5097 = vpop.f32.mrb[0].mxu0
        %v5098 = vadd.f32 %v5005, %v5097
        %v5099 = vpop.f32.mrb[0].mxu0
        %v5100 = vadd.f32 %v5007, %v5099
        %v5101 = vpop.f32.mrb[0].mxu0
        %v5102 = vadd.f32 %v5009, %v5101
        %v5103 = vpop.f32.mrb[0].mxu0
        %v5104 = vadd.f32 %v5011, %v5103
        %5105 = vdwg.mxu0
        %5106 = vmatprep.subr.bf16.mxu0 %v3283
        %5107 = vmatpush1.bf16.msra.mxu0 %v3282
        %5108 = vmatprep.subr.bf16.mxu0 %v3287
        %5109 = vmatpush1.bf16.msra.mxu0 %v3286
        %5110 = vmatprep.subr.bf16.mxu0 %v3291
        %5111 = vmatpush1.bf16.msra.mxu0 %v3290
        %5112 = vmatprep.subr.bf16.mxu0 %v3295
        %5113 = vmatpush1.bf16.msra.mxu0 %v3294
        %5114 = vmatprep.subr.bf16.mxu0 %v3299
        %5115 = vmatpush1.bf16.msra.mxu0 %v3298
        %5116 = vmatprep.subr.bf16.mxu0 %v3303
        %5117 = vmatpush1.bf16.msra.mxu0 %v3302
        %5118 = vmatprep.subr.bf16.mxu0 %v3307
        %5119 = vmatpush1.bf16.msra.mxu0 %v3306
        %5120 = vmatprep.subr.bf16.mxu0 %v3311
        %5121 = vmatpush1.bf16.msra.mxu0 %v3310
        %5122 = vmatprep.subr.bf16.mxu0 %v3315
        %5123 = vmatpush1.bf16.msra.mxu0 %v3314
        %5124 = vmatprep.subr.bf16.mxu0 %v3319
        %5125 = vmatpush1.bf16.msra.mxu0 %v3318
        %5126 = vmatprep.subr.bf16.mxu0 %v3323
        %5127 = vmatpush1.bf16.msra.mxu0 %v3322
        %5128 = vmatprep.subr.bf16.mxu0 %v3327
        %5129 = vmatpush1.bf16.msra.mxu0 %v3326
        %5130 = vmatprep.subr.bf16.mxu0 %v3331
        %5131 = vmatpush1.bf16.msra.mxu0 %v3330
        %5132 = vmatprep.subr.bf16.mxu0 %v3335
        %5133 = vmatpush1.bf16.msra.mxu0 %v3334
        %5134 = vmatprep.subr.bf16.mxu0 %v3339
        %5135 = vmatpush1.bf16.msra.mxu0 %v3338
        %5136 = vmatprep.subr.bf16.mxu0 %v3343
        %5137 = vmatpush1.bf16.msra.mxu0 %v3342
        %5138 = vmatprep.mubr.bf16.mxu0 %v1429
        %5139 = vmatmul.mubr.bf16.gmra.mrb[0].mxu0 %v1428
        %v5140 = vpop.f32.mrb[0].mxu0
        %v5141 = vadd.f32 %v5048, %v5140
        %v5142 = vpop.f32.mrb[0].mxu0
        %v5143 = vadd.f32 %v5050, %v5142
        %v5144 = vpop.f32.mrb[0].mxu0
        %v5145 = vadd.f32 %v5052, %v5144
        %v5146 = vpop.f32.mrb[0].mxu0
        %v5147 = vadd.f32 %v5054, %v5146
        %5148 = vmatprep.mubr.bf16.mxu0 %v1445
        %5149 = vmatmul.mubr.bf16.gmra.mrb[0].mxu0 %v1444
        %v5150 = vpop.f32.mrb[0].mxu0
        %v5151 = vadd.f32 %v5058, %v5150
        %v5152 = vpop.f32.mrb[0].mxu0
        %v5153 = vadd.f32 %v5060, %v5152
        %v5154 = vpop.f32.mrb[0].mxu0
        %v5155 = vadd.f32 %v5062, %v5154
        %v5156 = vpop.f32.mrb[0].mxu0
        %v5157 = vadd.f32 %v5064, %v5156
        %5158 = vmatprep.mubr.bf16.mxu0 %v1461
        %5159 = vmatmul.mubr.bf16.gmra.mrb[0].mxu0 %v1460
        %v5160 = vpop.f32.mrb[0].mxu0
        %v5161 = vadd.f32 %v5068, %v5160
        %v5162 = vpop.f32.mrb[0].mxu0
        %v5163 = vadd.f32 %v5070, %v5162
        %v5164 = vpop.f32.mrb[0].mxu0
        %v5165 = vadd.f32 %v5072, %v5164
        %v5166 = vpop.f32.mrb[0].mxu0
        %v5167 = vadd.f32 %v5074, %v5166
        %5168 = vmatprep.mubr.bf16.mxu0 %v1477
        %5169 = vmatmul.mubr.bf16.gmra.mrb[0].mxu0 %v1476
        %v5170 = vpop.f32.mrb[0].mxu0
        %v5171 = vadd.f32 %v5078, %v5170
        %v5172 = vpop.f32.mrb[0].mxu0
        %v5173 = vadd.f32 %v5080, %v5172
        %v5174 = vpop.f32.mrb[0].mxu0
        %v5175 = vadd.f32 %v5082, %v5174
        %v5176 = vpop.f32.mrb[0].mxu0
        %v5177 = vadd.f32 %v5084, %v5176
        %5178 = vmatprep.mubr.bf16.mxu0 %v1493
        %5179 = vmatmul.mubr.bf16.gmra.mrb[0].mxu0 %v1492
        %v5180 = vpop.f32.mrb[0].mxu0
        %v5181 = vadd.f32 %v5088, %v5180
        %v5182 = vpop.f32.mrb[0].mxu0
        %v5183 = vadd.f32 %v5090, %v5182
        %v5184 = vpop.f32.mrb[0].mxu0
        %v5185 = vadd.f32 %v5092, %v5184
        %v5186 = vpop.f32.mrb[0].mxu0
        %v5187 = vadd.f32 %v5094, %v5186
        %5188 = vmatprep.mubr.bf16.mxu0 %v1509
        %5189 = vmatmul.mubr.bf16.gmra.mrb[0].mxu0 %v1508
        %v5190 = vpop.f32.mrb[0].mxu0
        %v5191 = vadd.f32 %v5098, %v5190
        %v5192 = vpop.f32.mrb[0].mxu0
        %v5193 = vadd.f32 %v5100, %v5192
        %v5194 = vpop.f32.mrb[0].mxu0
        %v5195 = vadd.f32 %v5102, %v5194
        %v5196 = vpop.f32.mrb[0].mxu0
        %v5197 = vadd.f32 %v5104, %v5196
        %5198 = vdwg.mxu0
        %5199 = vmatprep.subr.bf16.mxu0 %v3347
        %5200 = vmatpush1.bf16.msra.mxu0 %v3346
        %5201 = vmatprep.subr.bf16.mxu0 %v3351
        %5202 = vmatpush1.bf16.msra.mxu0 %v3350
        %5203 = vmatprep.subr.bf16.mxu0 %v3355
        %5204 = vmatpush1.bf16.msra.mxu0 %v3354
        %5205 = vmatprep.subr.bf16.mxu0 %v3359
        %5206 = vmatpush1.bf16.msra.mxu0 %v3358
        %5207 = vmatprep.subr.bf16.mxu0 %v3363
        %5208 = vmatpush1.bf16.msra.mxu0 %v3362
        %5209 = vmatprep.subr.bf16.mxu0 %v3367
        %5210 = vmatpush1.bf16.msra.mxu0 %v3366
        %5211 = vmatprep.subr.bf16.mxu0 %v3371
        %5212 = vmatpush1.bf16.msra.mxu0 %v3370
        %5213 = vmatprep.subr.bf16.mxu0 %v3375
        %5214 = vmatpush1.bf16.msra.mxu0 %v3374
        %5215 = vmatprep.subr.bf16.mxu0 %v3379
        %5216 = vmatpush1.bf16.msra.mxu0 %v3378
        %5217 = vmatprep.subr.bf16.mxu0 %v3383
        %5218 = vmatpush1.bf16.msra.mxu0 %v3382
        %5219 = vmatprep.subr.bf16.mxu0 %v3387
        %5220 = vmatpush1.bf16.msra.mxu0 %v3386
        %5221 = vmatprep.subr.bf16.mxu0 %v3391
        %5222 = vmatpush1.bf16.msra.mxu0 %v3390
        %5223 = vmatprep.subr.bf16.mxu0 %v3395
        %5224 = vmatpush1.bf16.msra.mxu0 %v3394
        %5225 = vmatprep.subr.bf16.mxu0 %v3399
        %5226 = vmatpush1.bf16.msra.mxu0 %v3398
        %5227 = vmatprep.subr.bf16.mxu0 %v3403
        %5228 = vmatpush1.bf16.msra.mxu0 %v3402
        %5229 = vmatprep.subr.bf16.mxu0 %v3407
        %5230 = vmatpush1.bf16.msra.mxu0 %v3406
        %5231 = vmatprep.mubr.bf16.mxu0 %v1431
        %5232 = vmatmul.mubr.bf16.gmra.mrb[0].mxu0 %v1430
        %v5233 = vpop.f32.mrb[0].mxu0
        %v5234 = vadd.f32 %v5141, %v5233
        %v5235 = vpop.f32.mrb[0].mxu0
        %v5236 = vadd.f32 %v5143, %v5235
        %v5237 = vpop.f32.mrb[0].mxu0
        %v5238 = vadd.f32 %v5145, %v5237
        %v5239 = vpop.f32.mrb[0].mxu0
        %v5240 = vadd.f32 %v5147, %v5239
        %5241 = vmatprep.mubr.bf16.mxu0 %v1447
        %5242 = vmatmul.mubr.bf16.gmra.mrb[0].mxu0 %v1446
        %v5243 = vpop.f32.mrb[0].mxu0
        %v5244 = vadd.f32 %v5151, %v5243
        %v5245 = vpop.f32.mrb[0].mxu0
        %v5246 = vadd.f32 %v5153, %v5245
        %v5247 = vpop.f32.mrb[0].mxu0
        %v5248 = vadd.f32 %v5155, %v5247
        %v5249 = vpop.f32.mrb[0].mxu0
        %v5250 = vadd.f32 %v5157, %v5249
        %5251 = vmatprep.mubr.bf16.mxu0 %v1463
        %5252 = vmatmul.mubr.bf16.gmra.mrb[0].mxu0 %v1462
        %v5253 = vpop.f32.mrb[0].mxu0
        %v5254 = vadd.f32 %v5161, %v5253
        %v5255 = vpop.f32.mrb[0].mxu0
        %v5256 = vadd.f32 %v5163, %v5255
        %v5257 = vpop.f32.mrb[0].mxu0
        %v5258 = vadd.f32 %v5165, %v5257
        %v5259 = vpop.f32.mrb[0].mxu0
        %v5260 = vadd.f32 %v5167, %v5259
        %5261 = vmatprep.mubr.bf16.mxu0 %v1479
        %5262 = vmatmul.mubr.bf16.gmra.mrb[0].mxu0 %v1478
        %v5263 = vpop.f32.mrb[0].mxu0
        %v5264 = vadd.f32 %v5171, %v5263
        %v5265 = vpop.f32.mrb[0].mxu0
        %v5266 = vadd.f32 %v5173, %v5265
        %v5267 = vpop.f32.mrb[0].mxu0
        %v5268 = vadd.f32 %v5175, %v5267
        %v5269 = vpop.f32.mrb[0].mxu0
        %v5270 = vadd.f32 %v5177, %v5269
        %5271 = vmatprep.mubr.bf16.mxu0 %v1495
        %5272 = vmatmul.mubr.bf16.gmra.mrb[0].mxu0 %v1494
        %v5273 = vpop.f32.mrb[0].mxu0
        %v5274 = vadd.f32 %v5181, %v5273
        %v5275 = vpop.f32.mrb[0].mxu0
        %v5276 = vadd.f32 %v5183, %v5275
        %v5277 = vpop.f32.mrb[0].mxu0
        %v5278 = vadd.f32 %v5185, %v5277
        %v5279 = vpop.f32.mrb[0].mxu0
        %v5280 = vadd.f32 %v5187, %v5279
        %5281 = vmatprep.mubr.bf16.mxu0 %v1511
        %5282 = vmatmul.mubr.bf16.gmra.mrb[0].mxu0 %v1510
        %v5283 = vpop.f32.mrb[0].mxu0
        %v5284 = vadd.f32 %v5191, %v5283
        %v5285 = vpop.f32.mrb[0].mxu0
        %v5286 = vadd.f32 %v5193, %v5285
        %v5287 = vpop.f32.mrb[0].mxu0
        %v5288 = vadd.f32 %v5195, %v5287
        %v5289 = vpop.f32.mrb[0].mxu0
        %v5290 = vadd.f32 %v5197, %v5289
        %5291 = vdwg.mxu0
        %5292 = vmatprep.subr.bf16.mxu0 %v3411
        %5293 = vmatpush1.bf16.msra.mxu0 %v3410
        %5294 = vmatprep.subr.bf16.mxu0 %v3415
        %5295 = vmatpush1.bf16.msra.mxu0 %v3414
        %5296 = vmatprep.subr.bf16.mxu0 %v3419
        %5297 = vmatpush1.bf16.msra.mxu0 %v3418
        %5298 = vmatprep.subr.bf16.mxu0 %v3423
        %5299 = vmatpush1.bf16.msra.mxu0 %v3422
        %5300 = vmatprep.subr.bf16.mxu0 %v3427
        %5301 = vmatpush1.bf16.msra.mxu0 %v3426
        %5302 = vmatprep.subr.bf16.mxu0 %v3431
        %5303 = vmatpush1.bf16.msra.mxu0 %v3430
        %5304 = vmatprep.subr.bf16.mxu0 %v3435
        %5305 = vmatpush1.bf16.msra.mxu0 %v3434
        %5306 = vmatprep.subr.bf16.mxu0 %v3439
        %5307 = vmatpush1.bf16.msra.mxu0 %v3438
        %5308 = vmatprep.subr.bf16.mxu0 %v3443
        %5309 = vmatpush1.bf16.msra.mxu0 %v3442
        %5310 = vmatprep.subr.bf16.mxu0 %v3447
        %5311 = vmatpush1.bf16.msra.mxu0 %v3446
        %5312 = vmatprep.subr.bf16.mxu0 %v3451
        %5313 = vmatpush1.bf16.msra.mxu0 %v3450
        %5314 = vmatprep.subr.bf16.mxu0 %v3455
        %5315 = vmatpush1.bf16.msra.mxu0 %v3454
        %5316 = vmatprep.subr.bf16.mxu0 %v3459
        %5317 = vmatpush1.bf16.msra.mxu0 %v3458
        %5318 = vmatprep.subr.bf16.mxu0 %v3463
        %5319 = vmatpush1.bf16.msra.mxu0 %v3462
        %5320 = vmatprep.subr.bf16.mxu0 %v3467
        %5321 = vmatpush1.bf16.msra.mxu0 %v3466
        %5322 = vmatprep.subr.bf16.mxu0 %v3471
        %5323 = vmatpush1.bf16.msra.mxu0 %v3470
        %5324 = vmatprep.mubr.bf16.mxu0 %v1433
        %5325 = vmatmul.mubr.bf16.gmra.mrb[0].mxu0 %v1432
        %v5326 = vpop.f32.mrb[0].mxu0
        %v5327 = vadd.f32 %v5234, %v5326
        %v5328 = vpop.f32.mrb[0].mxu0
        %v5329 = vadd.f32 %v5236, %v5328
        %v5330 = vpop.f32.mrb[0].mxu0
        %v5331 = vadd.f32 %v5238, %v5330
        %v5332 = vpop.f32.mrb[0].mxu0
        %v5333 = vadd.f32 %v5240, %v5332
        %5334 = vmatprep.mubr.bf16.mxu0 %v1449
        %5335 = vmatmul.mubr.bf16.gmra.mrb[0].mxu0 %v1448
        %v5336 = vpop.f32.mrb[0].mxu0
        %v5337 = vadd.f32 %v5244, %v5336
        %v5338 = vpop.f32.mrb[0].mxu0
        %v5339 = vadd.f32 %v5246, %v5338
        %v5340 = vpop.f32.mrb[0].mxu0
        %v5341 = vadd.f32 %v5248, %v5340
        %v5342 = vpop.f32.mrb[0].mxu0
        %v5343 = vadd.f32 %v5250, %v5342
        %5344 = vmatprep.mubr.bf16.mxu0 %v1465
        %5345 = vmatmul.mubr.bf16.gmra.mrb[0].mxu0 %v1464
        %v5346 = vpop.f32.mrb[0].mxu0
        %v5347 = vadd.f32 %v5254, %v5346
        %v5348 = vpop.f32.mrb[0].mxu0
        %v5349 = vadd.f32 %v5256, %v5348
        %v5350 = vpop.f32.mrb[0].mxu0
        %v5351 = vadd.f32 %v5258, %v5350
        %v5352 = vpop.f32.mrb[0].mxu0
        %v5353 = vadd.f32 %v5260, %v5352
        %5354 = vmatprep.mubr.bf16.mxu0 %v1481
        %5355 = vmatmul.mubr.bf16.gmra.mrb[0].mxu0 %v1480
        %v5356 = vpop.f32.mrb[0].mxu0
        %v5357 = vadd.f32 %v5264, %v5356
        %v5358 = vpop.f32.mrb[0].mxu0
        %v5359 = vadd.f32 %v5266, %v5358
        %v5360 = vpop.f32.mrb[0].mxu0
        %v5361 = vadd.f32 %v5268, %v5360
        %v5362 = vpop.f32.mrb[0].mxu0
        %v5363 = vadd.f32 %v5270, %v5362
        %5364 = vmatprep.mubr.bf16.mxu0 %v1497
        %5365 = vmatmul.mubr.bf16.gmra.mrb[0].mxu0 %v1496
        %v5366 = vpop.f32.mrb[0].mxu0
        %v5367 = vadd.f32 %v5274, %v5366
        %v5368 = vpop.f32.mrb[0].mxu0
        %v5369 = vadd.f32 %v5276, %v5368
        %v5370 = vpop.f32.mrb[0].mxu0
        %v5371 = vadd.f32 %v5278, %v5370
        %v5372 = vpop.f32.mrb[0].mxu0
        %v5373 = vadd.f32 %v5280, %v5372
        %5374 = vmatprep.mubr.bf16.mxu0 %v1513
        %5375 = vmatmul.mubr.bf16.gmra.mrb[0].mxu0 %v1512
        %v5376 = vpop.f32.mrb[0].mxu0
        %v5377 = vadd.f32 %v5284, %v5376
        %v5378 = vpop.f32.mrb[0].mxu0
        %v5379 = vadd.f32 %v5286, %v5378
        %v5380 = vpop.f32.mrb[0].mxu0
        %v5381 = vadd.f32 %v5288, %v5380
        %v5382 = vpop.f32.mrb[0].mxu0
        %v5383 = vadd.f32 %v5290, %v5382
        %5384 = vdwg.mxu0
        %5385 = vmatprep.subr.bf16.mxu0 %v3475
        %5386 = vmatpush1.bf16.msra.mxu0 %v3474
        %5387 = vmatprep.subr.bf16.mxu0 %v3479
        %5388 = vmatpush1.bf16.msra.mxu0 %v3478
        %5389 = vmatprep.subr.bf16.mxu0 %v3483
        %5390 = vmatpush1.bf16.msra.mxu0 %v3482
        %5391 = vmatprep.subr.bf16.mxu0 %v3487
        %5392 = vmatpush1.bf16.msra.mxu0 %v3486
        %5393 = vmatprep.subr.bf16.mxu0 %v3491
        %5394 = vmatpush1.bf16.msra.mxu0 %v3490
        %5395 = vmatprep.subr.bf16.mxu0 %v3495
        %5396 = vmatpush1.bf16.msra.mxu0 %v3494
        %5397 = vmatprep.subr.bf16.mxu0 %v3499
        %5398 = vmatpush1.bf16.msra.mxu0 %v3498
        %5399 = vmatprep.subr.bf16.mxu0 %v3503
        %5400 = vmatpush1.bf16.msra.mxu0 %v3502
        %5401 = vmatprep.subr.bf16.mxu0 %v3507
        %5402 = vmatpush1.bf16.msra.mxu0 %v3506
        %5403 = vmatprep.subr.bf16.mxu0 %v3511
        %5404 = vmatpush1.bf16.msra.mxu0 %v3510
        %5405 = vmatprep.subr.bf16.mxu0 %v3515
        %5406 = vmatpush1.bf16.msra.mxu0 %v3514
        %5407 = vmatprep.subr.bf16.mxu0 %v3519
        %5408 = vmatpush1.bf16.msra.mxu0 %v3518
        %5409 = vmatprep.subr.bf16.mxu0 %v3523
        %5410 = vmatpush1.bf16.msra.mxu0 %v3522
        %5411 = vmatprep.subr.bf16.mxu0 %v3527
        %5412 = vmatpush1.bf16.msra.mxu0 %v3526
        %5413 = vmatprep.subr.bf16.mxu0 %v3531
        %5414 = vmatpush1.bf16.msra.mxu0 %v3530
        %5415 = vmatprep.subr.bf16.mxu0 %v3535
        %5416 = vmatpush1.bf16.msra.mxu0 %v3534
        %5417 = vmatprep.mubr.bf16.mxu0 %v1435
        %5418 = vmatmul.mubr.bf16.gmra.mrb[0].mxu0 %v1434
        %v5419 = vpop.f32.mrb[0].mxu0
        %v5420 = vadd.f32 %v5327, %v5419
        %v5421 = vpop.f32.mrb[0].mxu0
        %v5422 = vadd.f32 %v5329, %v5421
        %v5423 = vpop.f32.mrb[0].mxu0
        %v5424 = vadd.f32 %v5331, %v5423
        %v5425 = vpop.f32.mrb[0].mxu0
        %v5426 = vadd.f32 %v5333, %v5425
        %5427 = vmatprep.mubr.bf16.mxu0 %v1451
        %5428 = vmatmul.mubr.bf16.gmra.mrb[0].mxu0 %v1450
        %v5429 = vpop.f32.mrb[0].mxu0
        %v5430 = vadd.f32 %v5337, %v5429
        %v5431 = vpop.f32.mrb[0].mxu0
        %v5432 = vadd.f32 %v5339, %v5431
        %v5433 = vpop.f32.mrb[0].mxu0
        %v5434 = vadd.f32 %v5341, %v5433
        %v5435 = vpop.f32.mrb[0].mxu0
        %v5436 = vadd.f32 %v5343, %v5435
        %5437 = vmatprep.mubr.bf16.mxu0 %v1467
        %5438 = vmatmul.mubr.bf16.gmra.mrb[0].mxu0 %v1466
        %v5439 = vpop.f32.mrb[0].mxu0
        %v5440 = vadd.f32 %v5347, %v5439
        %v5441 = vpop.f32.mrb[0].mxu0
        %v5442 = vadd.f32 %v5349, %v5441
        %v5443 = vpop.f32.mrb[0].mxu0
        %v5444 = vadd.f32 %v5351, %v5443
        %v5445 = vpop.f32.mrb[0].mxu0
        %v5446 = vadd.f32 %v5353, %v5445
        %5447 = vmatprep.mubr.bf16.mxu0 %v1483
        %5448 = vmatmul.mubr.bf16.gmra.mrb[0].mxu0 %v1482
        %v5449 = vpop.f32.mrb[0].mxu0
        %v5450 = vadd.f32 %v5357, %v5449
        %v5451 = vpop.f32.mrb[0].mxu0
        %v5452 = vadd.f32 %v5359, %v5451
        %v5453 = vpop.f32.mrb[0].mxu0
        %v5454 = vadd.f32 %v5361, %v5453
        %v5455 = vpop.f32.mrb[0].mxu0
        %v5456 = vadd.f32 %v5363, %v5455
        %5457 = vmatprep.mubr.bf16.mxu0 %v1499
        %5458 = vmatmul.mubr.bf16.gmra.mrb[0].mxu0 %v1498
        %v5459 = vpop.f32.mrb[0].mxu0
        %v5460 = vadd.f32 %v5367, %v5459
        %v5461 = vpop.f32.mrb[0].mxu0
        %v5462 = vadd.f32 %v5369, %v5461
        %v5463 = vpop.f32.mrb[0].mxu0
        %v5464 = vadd.f32 %v5371, %v5463
        %v5465 = vpop.f32.mrb[0].mxu0
        %v5466 = vadd.f32 %v5373, %v5465
        %5467 = vmatprep.mubr.bf16.mxu0 %v1515
        %5468 = vmatmul.mubr.bf16.gmra.mrb[0].mxu0 %v1514
        %v5469 = vpop.f32.mrb[0].mxu0
        %v5470 = vadd.f32 %v5377, %v5469
        %v5471 = vpop.f32.mrb[0].mxu0
        %v5472 = vadd.f32 %v5379, %v5471
        %v5473 = vpop.f32.mrb[0].mxu0
        %v5474 = vadd.f32 %v5381, %v5473
        %v5475 = vpop.f32.mrb[0].mxu0
        %v5476 = vadd.f32 %v5383, %v5475
        %5477 = vdwg.mxu0
        %5478 = vmatprep.subr.bf16.mxu0 %v3539
        %5479 = vmatpush1.bf16.msra.mxu0 %v3538
        %5480 = vmatprep.subr.bf16.mxu0 %v3543
        %5481 = vmatpush1.bf16.msra.mxu0 %v3542
        %5482 = vmatprep.subr.bf16.mxu0 %v3547
        %5483 = vmatpush1.bf16.msra.mxu0 %v3546
        %5484 = vmatprep.subr.bf16.mxu0 %v3551
        %5485 = vmatpush1.bf16.msra.mxu0 %v3550
        %5486 = vmatprep.subr.bf16.mxu0 %v3555
        %5487 = vmatpush1.bf16.msra.mxu0 %v3554
        %5488 = vmatprep.subr.bf16.mxu0 %v3559
        %5489 = vmatpush1.bf16.msra.mxu0 %v3558
        %5490 = vmatprep.subr.bf16.mxu0 %v3563
        %5491 = vmatpush1.bf16.msra.mxu0 %v3562
        %5492 = vmatprep.subr.bf16.mxu0 %v3567
        %5493 = vmatpush1.bf16.msra.mxu0 %v3566
        %5494 = vmatprep.subr.bf16.mxu0 %v3571
        %5495 = vmatpush1.bf16.msra.mxu0 %v3570
        %5496 = vmatprep.subr.bf16.mxu0 %v3575
        %5497 = vmatpush1.bf16.msra.mxu0 %v3574
        %5498 = vmatprep.subr.bf16.mxu0 %v3579
        %5499 = vmatpush1.bf16.msra.mxu0 %v3578
        %5500 = vmatprep.subr.bf16.mxu0 %v3583
        %5501 = vmatpush1.bf16.msra.mxu0 %v3582
        %5502 = vmatprep.subr.bf16.mxu0 %v3587
        %5503 = vmatpush1.bf16.msra.mxu0 %v3586
        %5504 = vmatprep.subr.bf16.mxu0 %v3591
        %5505 = vmatpush1.bf16.msra.mxu0 %v3590
        %5506 = vmatprep.subr.bf16.mxu0 %v3595
        %5507 = vmatpush1.bf16.msra.mxu0 %v3594
        %5508 = vmatprep.subr.bf16.mxu0 %v3599
        %5509 = vmatpush1.bf16.msra.mxu0 %v3598
        %5510 = vmatprep.mubr.bf16.mxu0 %v1437
        %5511 = vmatmul.mubr.bf16.gmra.mrb[0].mxu0 %v1436
        %v5512 = vpop.f32.mrb[0].mxu0
        %v5513 = vadd.f32 %v5420, %v5512
        %v5514 = vpop.f32.mrb[0].mxu0
        %v5515 = vadd.f32 %v5422, %v5514
        %v5516 = vpop.f32.mrb[0].mxu0
        %v5517 = vadd.f32 %v5424, %v5516
        %v5518 = vpop.f32.mrb[0].mxu0
        %v5519 = vadd.f32 %v5426, %v5518
        %5520 = vmatprep.mubr.bf16.mxu0 %v1453
        %5521 = vmatmul.mubr.bf16.gmra.mrb[0].mxu0 %v1452
        %v5522 = vpop.f32.mrb[0].mxu0
        %v5523 = vadd.f32 %v5430, %v5522
        %v5524 = vpop.f32.mrb[0].mxu0
        %v5525 = vadd.f32 %v5432, %v5524
        %v5526 = vpop.f32.mrb[0].mxu0
        %v5527 = vadd.f32 %v5434, %v5526
        %v5528 = vpop.f32.mrb[0].mxu0
        %v5529 = vadd.f32 %v5436, %v5528
        %5530 = vmatprep.mubr.bf16.mxu0 %v1469
        %5531 = vmatmul.mubr.bf16.gmra.mrb[0].mxu0 %v1468
        %v5532 = vpop.f32.mrb[0].mxu0
        %v5533 = vadd.f32 %v5440, %v5532
        %v5534 = vpop.f32.mrb[0].mxu0
        %v5535 = vadd.f32 %v5442, %v5534
        %v5536 = vpop.f32.mrb[0].mxu0
        %v5537 = vadd.f32 %v5444, %v5536
        %v5538 = vpop.f32.mrb[0].mxu0
        %v5539 = vadd.f32 %v5446, %v5538
        %5540 = vmatprep.mubr.bf16.mxu0 %v1485
        %5541 = vmatmul.mubr.bf16.gmra.mrb[0].mxu0 %v1484
        %v5542 = vpop.f32.mrb[0].mxu0
        %v5543 = vadd.f32 %v5450, %v5542
        %v5544 = vpop.f32.mrb[0].mxu0
        %v5545 = vadd.f32 %v5452, %v5544
        %v5546 = vpop.f32.mrb[0].mxu0
        %v5547 = vadd.f32 %v5454, %v5546
        %v5548 = vpop.f32.mrb[0].mxu0
        %v5549 = vadd.f32 %v5456, %v5548
        %5550 = vmatprep.mubr.bf16.mxu0 %v1501
        %5551 = vmatmul.mubr.bf16.gmra.mrb[0].mxu0 %v1500
        %v5552 = vpop.f32.mrb[0].mxu0
        %v5553 = vadd.f32 %v5460, %v5552
        %v5554 = vpop.f32.mrb[0].mxu0
        %v5555 = vadd.f32 %v5462, %v5554
        %v5556 = vpop.f32.mrb[0].mxu0
        %v5557 = vadd.f32 %v5464, %v5556
        %v5558 = vpop.f32.mrb[0].mxu0
        %v5559 = vadd.f32 %v5466, %v5558
        %5560 = vmatprep.mubr.bf16.mxu0 %v1517
        %5561 = vmatmul.mubr.bf16.gmra.mrb[0].mxu0 %v1516
        %v5562 = vpop.f32.mrb[0].mxu0
        %v5563 = vadd.f32 %v5470, %v5562
        %v5564 = vpop.f32.mrb[0].mxu0
        %v5565 = vadd.f32 %v5472, %v5564
        %v5566 = vpop.f32.mrb[0].mxu0
        %v5567 = vadd.f32 %v5474, %v5566
        %v5568 = vpop.f32.mrb[0].mxu0
        %v5569 = vadd.f32 %v5476, %v5568
        %5570 = vdwg.mxu0
        %5571 = vmatprep.subr.bf16.mxu0 %v3603
        %5572 = vmatpush1.bf16.msra.mxu0 %v3602
        %5573 = vmatprep.subr.bf16.mxu0 %v3607
        %5574 = vmatpush1.bf16.msra.mxu0 %v3606
        %5575 = vmatprep.subr.bf16.mxu0 %v3611
        %5576 = vmatpush1.bf16.msra.mxu0 %v3610
        %5577 = vmatprep.subr.bf16.mxu0 %v3615
        %5578 = vmatpush1.bf16.msra.mxu0 %v3614
        %5579 = vmatprep.subr.bf16.mxu0 %v3619
        %5580 = vmatpush1.bf16.msra.mxu0 %v3618
        %5581 = vmatprep.subr.bf16.mxu0 %v3623
        %5582 = vmatpush1.bf16.msra.mxu0 %v3622
        %5583 = vmatprep.subr.bf16.mxu0 %v3627
        %5584 = vmatpush1.bf16.msra.mxu0 %v3626
        %5585 = vmatprep.subr.bf16.mxu0 %v3631
        %5586 = vmatpush1.bf16.msra.mxu0 %v3630
        %5587 = vmatprep.subr.bf16.mxu0 %v3635
        %5588 = vmatpush1.bf16.msra.mxu0 %v3634
        %5589 = vmatprep.subr.bf16.mxu0 %v3639
        %5590 = vmatpush1.bf16.msra.mxu0 %v3638
        %5591 = vmatprep.subr.bf16.mxu0 %v3643
        %5592 = vmatpush1.bf16.msra.mxu0 %v3642
        %5593 = vmatprep.subr.bf16.mxu0 %v3647
        %5594 = vmatpush1.bf16.msra.mxu0 %v3646
        %5595 = vmatprep.subr.bf16.mxu0 %v3651
        %5596 = vmatpush1.bf16.msra.mxu0 %v3650
        %5597 = vmatprep.subr.bf16.mxu0 %v3655
        %5598 = vmatpush1.bf16.msra.mxu0 %v3654
        %5599 = vmatprep.subr.bf16.mxu0 %v3659
        %5600 = vmatpush1.bf16.msra.mxu0 %v3658
        %5601 = vmatprep.subr.bf16.mxu0 %v3663
        %5602 = vmatpush1.bf16.msra.mxu0 %v3662
        %5603 = vmatprep.mubr.bf16.mxu0 %v1439
        %5604 = vmatmul.mubr.bf16.gmra.mrb[0].mxu0 %v1438
        %v5605 = vpop.f32.mrb[0].mxu0
        %v5606 = vadd.f32 %v5513, %v5605
        %v5607 = vpop.f32.mrb[0].mxu0
        %v5608 = vadd.f32 %v5515, %v5607
        %v5609 = vpop.f32.mrb[0].mxu0
        %v5610 = vadd.f32 %v5517, %v5609
        %v5611 = vpop.f32.mrb[0].mxu0
        %v5612 = vadd.f32 %v5519, %v5611
        %5613 = vmatprep.mubr.bf16.mxu0 %v1455
        %5614 = vmatmul.mubr.bf16.gmra.mrb[0].mxu0 %v1454
        %v5615 = vpop.f32.mrb[0].mxu0
        %v5616 = vadd.f32 %v5523, %v5615
        %v5617 = vpop.f32.mrb[0].mxu0
        %v5618 = vadd.f32 %v5525, %v5617
        %v5619 = vpop.f32.mrb[0].mxu0
        %v5620 = vadd.f32 %v5527, %v5619
        %v5621 = vpop.f32.mrb[0].mxu0
        %v5622 = vadd.f32 %v5529, %v5621
        %5623 = vmatprep.mubr.bf16.mxu0 %v1471
        %5624 = vmatmul.mubr.bf16.gmra.mrb[0].mxu0 %v1470
        %v5625 = vpop.f32.mrb[0].mxu0
        %v5626 = vadd.f32 %v5533, %v5625
        %v5627 = vpop.f32.mrb[0].mxu0
        %v5628 = vadd.f32 %v5535, %v5627
        %v5629 = vpop.f32.mrb[0].mxu0
        %v5630 = vadd.f32 %v5537, %v5629
        %v5631 = vpop.f32.mrb[0].mxu0
        %v5632 = vadd.f32 %v5539, %v5631
        %5633 = vmatprep.mubr.bf16.mxu0 %v1487
        %5634 = vmatmul.mubr.bf16.gmra.mrb[0].mxu0 %v1486
        %v5635 = vpop.f32.mrb[0].mxu0
        %v5636 = vadd.f32 %v5543, %v5635
        %v5637 = vpop.f32.mrb[0].mxu0
        %v5638 = vadd.f32 %v5545, %v5637
        %v5639 = vpop.f32.mrb[0].mxu0
        %v5640 = vadd.f32 %v5547, %v5639
        %v5641 = vpop.f32.mrb[0].mxu0
        %v5642 = vadd.f32 %v5549, %v5641
        %5643 = vmatprep.mubr.bf16.mxu0 %v1503
        %5644 = vmatmul.mubr.bf16.gmra.mrb[0].mxu0 %v1502
        %v5645 = vpop.f32.mrb[0].mxu0
        %v5646 = vadd.f32 %v5553, %v5645
        %v5647 = vpop.f32.mrb[0].mxu0
        %v5648 = vadd.f32 %v5555, %v5647
        %v5649 = vpop.f32.mrb[0].mxu0
        %v5650 = vadd.f32 %v5557, %v5649
        %v5651 = vpop.f32.mrb[0].mxu0
        %v5652 = vadd.f32 %v5559, %v5651
        %5653 = vmatprep.mubr.bf16.mxu0 %v1519
        %5654 = vmatmul.mubr.bf16.gmra.mrb[0].mxu0 %v1518
        %v5655 = vpop.f32.mrb[0].mxu0
        %v5656 = vadd.f32 %v5563, %v5655
        %v5657 = vpop.f32.mrb[0].mxu0
        %v5658 = vadd.f32 %v5565, %v5657
        %v5659 = vpop.f32.mrb[0].mxu0
        %v5660 = vadd.f32 %v5567, %v5659
        %v5661 = vpop.f32.mrb[0].mxu0
        %v5662 = vadd.f32 %v5569, %v5661
        %5663 = vdwg.mxu0
        %v5664 = vadd.f32 %v480, %v4862
        %v5665 = vadd.f32 %v481, %v4864
        %v5666 = vadd.f32 %v482, %v5606
        %v5667 = vadd.f32 %v483, %v5608
        %v5668 = vadd.f32 %v484, %v4866
        %v5669 = vadd.f32 %v485, %v4868
        %v5670 = vadd.f32 %v486, %v5610
        %v5671 = vadd.f32 %v487, %v5612
        %v5672 = vadd.f32 %v488, %v4872
        %v5673 = vadd.f32 %v489, %v4874
        %v5674 = vadd.f32 %v490, %v5616
        %v5675 = vadd.f32 %v491, %v5618
        %v5676 = vadd.f32 %v492, %v4876
        %v5677 = vadd.f32 %v493, %v4878
        %v5678 = vadd.f32 %v494, %v5620
        %v5679 = vadd.f32 %v495, %v5622
        %v5680 = vadd.f32 %v496, %v4882
        %v5681 = vadd.f32 %v497, %v4884
        %v5682 = vadd.f32 %v498, %v5626
        %v5683 = vadd.f32 %v499, %v5628
        %v5684 = vadd.f32 %v500, %v4886
        %v5685 = vadd.f32 %v501, %v4888
        %v5686 = vadd.f32 %v502, %v5630
        %v5687 = vadd.f32 %v503, %v5632
        %v5688 = vadd.f32 %v504, %v4892
        %v5689 = vadd.f32 %v505, %v4894
        %v5690 = vadd.f32 %v506, %v5636
        %v5691 = vadd.f32 %v507, %v5638
        %v5692 = vadd.f32 %v508, %v4896
        %v5693 = vadd.f32 %v509, %v4898
        %v5694 = vadd.f32 %v510, %v5640
        %v5695 = vadd.f32 %v511, %v5642
        %v5696 = vadd.f32 %v512, %v4902
        %v5697 = vadd.f32 %v513, %v4904
        %v5698 = vadd.f32 %v514, %v5646
        %v5699 = vadd.f32 %v515, %v5648
        %v5700 = vadd.f32 %v516, %v4906
        %v5701 = vadd.f32 %v517, %v4908
        %v5702 = vadd.f32 %v518, %v5650
        %v5703 = vadd.f32 %v519, %v5652
        %v5704 = vadd.f32 %v520, %v4912
        %v5705 = vadd.f32 %v521, %v4914
        %v5706 = vadd.f32 %v522, %v5656
        %v5707 = vadd.f32 %v523, %v5658
        %v5708 = vadd.f32 %v524, %v4916
        %v5709 = vadd.f32 %v525, %v4918
        %v5710 = vadd.f32 %v526, %v5660
        %v5711 = vadd.f32 %v527, %v5662
        %5712 = vst [vmem:[#allocation2] sm:$0xff] %v5664
        %5713 = vst [vmem:[#allocation2 + $0x8] sm:$0xff] %v5665
        %5714 = vst [vmem:[#allocation2 + $0x10] sm:$0xff] %v5666
        %5715 = vst [vmem:[#allocation2 + $0x18] sm:$0xff] %v5667
        %5716 = vst [vmem:[#allocation2 + $0x20] sm:$0xff] %v5668
        %5717 = vst [vmem:[#allocation2 + $0x28] sm:$0xff] %v5669
        %5718 = vst [vmem:[#allocation2 + $0x30] sm:$0xff] %v5670
        %5719 = vst [vmem:[#allocation2 + $0x38] sm:$0xff] %v5671
        %5720 = vst [vmem:[#allocation2 + $0x40] sm:$0xff] %v5672
        %5721 = vst [vmem:[#allocation2 + $0x48] sm:$0xff] %v5673
        %5722 = vst [vmem:[#allocation2 + $0x50] sm:$0xff] %v5674
        %5723 = vst [vmem:[#allocation2 + $0x58] sm:$0xff] %v5675
        %5724 = vst [vmem:[#allocation2 + $0x60] sm:$0xff] %v5676
        %5725 = vst [vmem:[#allocation2 + $0x68] sm:$0xff] %v5677
        %5726 = vst [vmem:[#allocation2 + $0x70] sm:$0xff] %v5678
        %5727 = vst [vmem:[#allocation2 + $0x78] sm:$0xff] %v5679
        %5728 = vst [vmem:[#allocation2 + $0x80] sm:$0xff] %v5680
        %5729 = vst [vmem:[#allocation2 + $0x88] sm:$0xff] %v5681
        %5730 = vst [vmem:[#allocation2 + $0x90] sm:$0xff] %v5682
        %5731 = vst [vmem:[#allocation2 + $0x98] sm:$0xff] %v5683
        %5732 = vst [vmem:[#allocation2 + $0xa0] sm:$0xff] %v5684
        %5733 = vst [vmem:[#allocation2 + $0xa8] sm:$0xff] %v5685
        %5734 = vst [vmem:[#allocation2 + $0xb0] sm:$0xff] %v5686
        %5735 = vst [vmem:[#allocation2 + $0xb8] sm:$0xff] %v5687
        %5736 = vst [vmem:[#allocation2 + $0xc0] sm:$0xff] %v5688
        %5737 = vst [vmem:[#allocation2 + $0xc8] sm:$0xff] %v5689
        %5738 = vst [vmem:[#allocation2 + $0xd0] sm:$0xff] %v5690
        %5739 = vst [vmem:[#allocation2 + $0xd8] sm:$0xff] %v5691
        %5740 = vst [vmem:[#allocation2 + $0xe0] sm:$0xff] %v5692
        %5741 = vst [vmem:[#allocation2 + $0xe8] sm:$0xff] %v5693
        %5742 = vst [vmem:[#allocation2 + $0xf0] sm:$0xff] %v5694
        %5743 = vst [vmem:[#allocation2 + $0xf8] sm:$0xff] %v5695
        %5744 = vst [vmem:[#allocation2 + $0x100] sm:$0xff] %v5696
        %5745 = vst [vmem:[#allocation2 + $0x108] sm:$0xff] %v5697
        %5746 = vst [vmem:[#allocation2 + $0x110] sm:$0xff] %v5698
        %5747 = vst [vmem:[#allocation2 + $0x118] sm:$0xff] %v5699
        %5748 = vst [vmem:[#allocation2 + $0x120] sm:$0xff] %v5700
        %5749 = vst [vmem:[#allocation2 + $0x128] sm:$0xff] %v5701
        %5750 = vst [vmem:[#allocation2 + $0x130] sm:$0xff] %v5702
        %5751 = vst [vmem:[#allocation2 + $0x138] sm:$0xff] %v5703
        %5752 = vst [vmem:[#allocation2 + $0x140] sm:$0xff] %v5704
        %5753 = vst [vmem:[#allocation2 + $0x148] sm:$0xff] %v5705
        %5754 = vst [vmem:[#allocation2 + $0x150] sm:$0xff] %v5706
        %5755 = vst [vmem:[#allocation2 + $0x158] sm:$0xff] %v5707
        %5756 = vst [vmem:[#allocation2 + $0x160] sm:$0xff] %v5708
        %5757 = vst [vmem:[#allocation2 + $0x168] sm:$0xff] %v5709
        %5758 = vst [vmem:[#allocation2 + $0x170] sm:$0xff] %v5710
        %5759 = vst [vmem:[#allocation2 + $0x178] sm:$0xff] %v5711
        %p5760 = scmp.eq.s32.totalorder %s19, 3
        // Predicated region
        $region60: #{_forward_impl.5} parent=50 // pred_check
          %p5761 = pneg %p5760
        $region61: #{_forward_impl.5} parent=50 // pred_check_branch
          %5763 = sbr.rel (%p5761) target = $region63
        $region62: #{_forward_impl.5} parent=50 // pred_region
          %v5764 = vld [vmem:[#allocation2] sm:$0xff]
          %v5765 = vld [vmem:[#allocation2 + $0x8] sm:$0xff]
          %v5766 = vld [vmem:[#allocation2 + $0x10] sm:$0xff]
          %v5767 = vld [vmem:[#allocation2 + $0x18] sm:$0xff]
          %v5768 = vld [vmem:[#allocation2 + $0x20] sm:$0xff]
          %v5769 = vld [vmem:[#allocation2 + $0x28] sm:$0xff]
          %v5770 = vld [vmem:[#allocation2 + $0x30] sm:$0xff]
          %v5771 = vld [vmem:[#allocation2 + $0x38] sm:$0xff]
          %v5772 = vld [vmem:[#allocation2 + $0x40] sm:$0xff]
          %v5773 = vld [vmem:[#allocation2 + $0x48] sm:$0xff]
          %v5774 = vld [vmem:[#allocation2 + $0x50] sm:$0xff]
          %v5775 = vld [vmem:[#allocation2 + $0x58] sm:$0xff]
          %v5776 = vld [vmem:[#allocation2 + $0x60] sm:$0xff]
          %v5777 = vld [vmem:[#allocation2 + $0x68] sm:$0xff]
          %v5778 = vld [vmem:[#allocation2 + $0x70] sm:$0xff]
          %v5779 = vld [vmem:[#allocation2 + $0x78] sm:$0xff]
          %v5780 = vld [vmem:[#allocation2 + $0x80] sm:$0xff]
          %v5781 = vld [vmem:[#allocation2 + $0x88] sm:$0xff]
          %v5782 = vld [vmem:[#allocation2 + $0x90] sm:$0xff]
          %v5783 = vld [vmem:[#allocation2 + $0x98] sm:$0xff]
          %v5784 = vld [vmem:[#allocation2 + $0xa0] sm:$0xff]
          %v5785 = vld [vmem:[#allocation2 + $0xa8] sm:$0xff]
          %v5786 = vld [vmem:[#allocation2 + $0xb0] sm:$0xff]
          %v5787 = vld [vmem:[#allocation2 + $0xb8] sm:$0xff]
          %v5788 = vld [vmem:[#allocation2 + $0xc0] sm:$0xff]
          %v5789 = vld [vmem:[#allocation2 + $0xc8] sm:$0xff]
          %v5790 = vld [vmem:[#allocation2 + $0xd0] sm:$0xff]
          %v5791 = vld [vmem:[#allocation2 + $0xd8] sm:$0xff]
          %v5792 = vld [vmem:[#allocation2 + $0xe0] sm:$0xff]
          %v5793 = vld [vmem:[#allocation2 + $0xe8] sm:$0xff]
          %v5794 = vld [vmem:[#allocation2 + $0xf0] sm:$0xff]
          %v5795 = vld [vmem:[#allocation2 + $0xf8] sm:$0xff]
          %v5796 = vld [vmem:[#allocation2 + $0x100] sm:$0xff]
          %v5797 = vld [vmem:[#allocation2 + $0x108] sm:$0xff]
          %v5798 = vld [vmem:[#allocation2 + $0x110] sm:$0xff]
          %v5799 = vld [vmem:[#allocation2 + $0x118] sm:$0xff]
          %v5800 = vld [vmem:[#allocation2 + $0x120] sm:$0xff]
          %v5801 = vld [vmem:[#allocation2 + $0x128] sm:$0xff]
          %v5802 = vld [vmem:[#allocation2 + $0x130] sm:$0xff]
          %v5803 = vld [vmem:[#allocation2 + $0x138] sm:$0xff]
          %v5804 = vld [vmem:[#allocation2 + $0x140] sm:$0xff]
          %v5805 = vld [vmem:[#allocation2 + $0x148] sm:$0xff]
          %v5806 = vld [vmem:[#allocation2 + $0x150] sm:$0xff]
          %v5807 = vld [vmem:[#allocation2 + $0x158] sm:$0xff]
          %v5808 = vld [vmem:[#allocation2 + $0x160] sm:$0xff]
          %v5809 = vld [vmem:[#allocation2 + $0x168] sm:$0xff]
          %v5810 = vld [vmem:[#allocation2 + $0x170] sm:$0xff]
          %v5811 = vld [vmem:[#allocation2 + $0x178] sm:$0xff]
          %v5812 = vld [vmem:[%s2] sm:$0xf]
          %v5814 = vlaneseq
          %v5815 = vshrl.u32 %v5814, 7
          %v5816 = vsub.s32 0, %v5815
          %v5817 = vrot.slane %v5812, %v5816
          %v5818 = vlaneseq
          %v5819 = vshrl.u32 %v5818, 7
          %v5820 = vsub.s32 1, %v5819
          %v5821 = vrot.slane %v5812, %v5820
          %v5822 = vlaneseq
          %v5823 = vshrl.u32 %v5822, 7
          %v5824 = vsub.s32 2, %v5823
          %v5825 = vrot.slane %v5812, %v5824
          %v5826 = vlaneseq
          %v5827 = vshrl.u32 %v5826, 7
          %v5828 = vsub.s32 3, %v5827
          %v5829 = vrot.slane %v5812, %v5828
          %v5834 = vadd.f32 %v5764, %v5817
          %v5835 = vadd.f32 %v5765, %v5821
          %v5836 = vadd.f32 %v5766, %v5825
          %v5837 = vadd.f32 %v5767, %v5829
          %v5838 = vadd.f32 %v5768, %v5817
          %v5839 = vadd.f32 %v5769, %v5821
          %v5840 = vadd.f32 %v5770, %v5825
          %v5841 = vadd.f32 %v5771, %v5829
          %v5842 = vadd.f32 %v5772, %v5817
          %v5843 = vadd.f32 %v5773, %v5821
          %v5844 = vadd.f32 %v5774, %v5825
          %v5845 = vadd.f32 %v5775, %v5829
          %v5846 = vadd.f32 %v5776, %v5817
          %v5847 = vadd.f32 %v5777, %v5821
          %v5848 = vadd.f32 %v5778, %v5825
          %v5849 = vadd.f32 %v5779, %v5829
          %v5850 = vadd.f32 %v5780, %v5817
          %v5851 = vadd.f32 %v5781, %v5821
          %v5852 = vadd.f32 %v5782, %v5825
          %v5853 = vadd.f32 %v5783, %v5829
          %v5854 = vadd.f32 %v5784, %v5817
          %v5855 = vadd.f32 %v5785, %v5821
          %v5856 = vadd.f32 %v5786, %v5825
          %v5857 = vadd.f32 %v5787, %v5829
          %v5858 = vadd.f32 %v5788, %v5817
          %v5859 = vadd.f32 %v5789, %v5821
          %v5860 = vadd.f32 %v5790, %v5825
          %v5861 = vadd.f32 %v5791, %v5829
          %v5862 = vadd.f32 %v5792, %v5817
          %v5863 = vadd.f32 %v5793, %v5821
          %v5864 = vadd.f32 %v5794, %v5825
          %v5865 = vadd.f32 %v5795, %v5829
          %v5866 = vadd.f32 %v5796, %v5817
          %v5867 = vadd.f32 %v5797, %v5821
          %v5868 = vadd.f32 %v5798, %v5825
          %v5869 = vadd.f32 %v5799, %v5829
          %v5870 = vadd.f32 %v5800, %v5817
          %v5871 = vadd.f32 %v5801, %v5821
          %v5872 = vadd.f32 %v5802, %v5825
          %v5873 = vadd.f32 %v5803, %v5829
          %v5874 = vadd.f32 %v5804, %v5817
          %v5875 = vadd.f32 %v5805, %v5821
          %v5876 = vadd.f32 %v5806, %v5825
          %v5877 = vadd.f32 %v5807, %v5829
          %v5878 = vadd.f32 %v5808, %v5817
          %v5879 = vadd.f32 %v5809, %v5821
          %v5880 = vadd.f32 %v5810, %v5825
          %v5881 = vadd.f32 %v5811, %v5829
          %v5882 = vmax.f32 %v5834, 0.0
          %v5883 = vmax.f32 %v5835, 0.0
          %v5884 = vmax.f32 %v5836, 0.0
          %v5885 = vmax.f32 %v5837, 0.0
          %v5886 = vmax.f32 %v5838, 0.0
          %v5887 = vmax.f32 %v5839, 0.0
          %v5888 = vmax.f32 %v5840, 0.0
          %v5889 = vmax.f32 %v5841, 0.0
          %v5890 = vmax.f32 %v5842, 0.0
          %v5891 = vmax.f32 %v5843, 0.0
          %v5892 = vmax.f32 %v5844, 0.0
          %v5893 = vmax.f32 %v5845, 0.0
          %v5894 = vmax.f32 %v5846, 0.0
          %v5895 = vmax.f32 %v5847, 0.0
          %v5896 = vmax.f32 %v5848, 0.0
          %v5897 = vmax.f32 %v5849, 0.0
          %v5898 = vmax.f32 %v5850, 0.0
          %v5899 = vmax.f32 %v5851, 0.0
          %v5900 = vmax.f32 %v5852, 0.0
          %v5901 = vmax.f32 %v5853, 0.0
          %v5902 = vmax.f32 %v5854, 0.0
          %v5903 = vmax.f32 %v5855, 0.0
          %v5904 = vmax.f32 %v5856, 0.0
          %v5905 = vmax.f32 %v5857, 0.0
          %v5906 = vmax.f32 %v5858, 0.0
          %v5907 = vmax.f32 %v5859, 0.0
          %v5908 = vmax.f32 %v5860, 0.0
          %v5909 = vmax.f32 %v5861, 0.0
          %v5910 = vmax.f32 %v5862, 0.0
          %v5911 = vmax.f32 %v5863, 0.0
          %v5912 = vmax.f32 %v5864, 0.0
          %v5913 = vmax.f32 %v5865, 0.0
          %v5914 = vmax.f32 %v5866, 0.0
          %v5915 = vmax.f32 %v5867, 0.0
          %v5916 = vmax.f32 %v5868, 0.0
          %v5917 = vmax.f32 %v5869, 0.0
          %v5918 = vmax.f32 %v5870, 0.0
          %v5919 = vmax.f32 %v5871, 0.0
          %v5920 = vmax.f32 %v5872, 0.0
          %v5921 = vmax.f32 %v5873, 0.0
          %v5922 = vmax.f32 %v5874, 0.0
          %v5923 = vmax.f32 %v5875, 0.0
          %v5924 = vmax.f32 %v5876, 0.0
          %v5925 = vmax.f32 %v5877, 0.0
          %v5926 = vmax.f32 %v5878, 0.0
          %v5927 = vmax.f32 %v5879, 0.0
          %v5928 = vmax.f32 %v5880, 0.0
          %v5929 = vmax.f32 %v5881, 0.0
          %v5930 = vpack.c.bf16 %v5886, %v5882
          %v5931 = vpack.c.bf16 %v5887, %v5883
          %v5932 = vpack.c.bf16 %v5888, %v5884
          %v5933 = vpack.c.bf16 %v5889, %v5885
          %v5934 = vpack.c.bf16 %v5894, %v5890
          %v5935 = vpack.c.bf16 %v5895, %v5891
          %v5936 = vpack.c.bf16 %v5896, %v5892
          %v5937 = vpack.c.bf16 %v5897, %v5893
          %v5938 = vpack.c.bf16 %v5902, %v5898
          %v5939 = vpack.c.bf16 %v5903, %v5899
          %v5940 = vpack.c.bf16 %v5904, %v5900
          %v5941 = vpack.c.bf16 %v5905, %v5901
          %v5942 = vpack.c.bf16 %v5910, %v5906
          %v5943 = vpack.c.bf16 %v5911, %v5907
          %v5944 = vpack.c.bf16 %v5912, %v5908
          %v5945 = vpack.c.bf16 %v5913, %v5909
          %v5946 = vpack.c.bf16 %v5918, %v5914
          %v5947 = vpack.c.bf16 %v5919, %v5915
          %v5948 = vpack.c.bf16 %v5920, %v5916
          %v5949 = vpack.c.bf16 %v5921, %v5917
          %v5950 = vpack.c.bf16 %v5926, %v5922
          %v5951 = vpack.c.bf16 %v5927, %v5923
          %v5952 = vpack.c.bf16 %v5928, %v5924
          %v5953 = vpack.c.bf16 %v5929, %v5925
          %v5978 = vunpack.c.l.b16 %v5930
          %v5979 = vunpack.c.l.b16 %v5931
          %v5980 = vunpack.c.l.b16 %v5932
          %v5981 = vunpack.c.l.b16 %v5933
          %v5982 = vunpack.c.h.b16 %v5930
          %v5983 = vunpack.c.h.b16 %v5931
          %v5984 = vunpack.c.h.b16 %v5932
          %v5985 = vunpack.c.h.b16 %v5933
          %v5986 = vunpack.c.l.b16 %v5934
          %v5987 = vunpack.c.l.b16 %v5935
          %v5988 = vunpack.c.l.b16 %v5936
          %v5989 = vunpack.c.l.b16 %v5937
          %v5990 = vunpack.c.h.b16 %v5934
          %v5991 = vunpack.c.h.b16 %v5935
          %v5992 = vunpack.c.h.b16 %v5936
          %v5993 = vunpack.c.h.b16 %v5937
          %v5994 = vunpack.c.l.b16 %v5938
          %v5995 = vunpack.c.l.b16 %v5939
          %v5996 = vunpack.c.l.b16 %v5940
          %v5997 = vunpack.c.l.b16 %v5941
          %v5998 = vunpack.c.h.b16 %v5938
          %v5999 = vunpack.c.h.b16 %v5939
          %v6000 = vunpack.c.h.b16 %v5940
          %v6001 = vunpack.c.h.b16 %v5941
          %v6002 = vunpack.c.l.b16 %v5942
          %v6003 = vunpack.c.l.b16 %v5943
          %v6004 = vunpack.c.l.b16 %v5944
          %v6005 = vunpack.c.l.b16 %v5945
          %v6006 = vunpack.c.h.b16 %v5942
          %v6007 = vunpack.c.h.b16 %v5943
          %v6008 = vunpack.c.h.b16 %v5944
          %v6009 = vunpack.c.h.b16 %v5945
          %v6010 = vunpack.c.l.b16 %v5946
          %v6011 = vunpack.c.l.b16 %v5947
          %v6012 = vunpack.c.l.b16 %v5948
          %v6013 = vunpack.c.l.b16 %v5949
          %v6014 = vunpack.c.h.b16 %v5946
          %v6015 = vunpack.c.h.b16 %v5947
          %v6016 = vunpack.c.h.b16 %v5948
          %v6017 = vunpack.c.h.b16 %v5949
          %v6018 = vunpack.c.l.b16 %v5950
          %v6019 = vunpack.c.l.b16 %v5951
          %v6020 = vunpack.c.l.b16 %v5952
          %v6021 = vunpack.c.l.b16 %v5953
          %v6022 = vunpack.c.h.b16 %v5950
          %v6023 = vunpack.c.h.b16 %v5951
          %v6024 = vunpack.c.h.b16 %v5952
          %v6025 = vunpack.c.h.b16 %v5953
          %v6026 = vpack.c.b16 %v5979, %v5978
          %v6027 = vpack.c.b16 %v5981, %v5980
          %v6028 = vpack.c.b16 %v5983, %v5982
          %v6029 = vpack.c.b16 %v5985, %v5984
          %v6030 = vpack.c.b16 %v5987, %v5986
          %v6031 = vpack.c.b16 %v5989, %v5988
          %v6032 = vpack.c.b16 %v5991, %v5990
          %v6033 = vpack.c.b16 %v5993, %v5992
          %v6034 = vpack.c.b16 %v5995, %v5994
          %v6035 = vpack.c.b16 %v5997, %v5996
          %v6036 = vpack.c.b16 %v5999, %v5998
          %v6037 = vpack.c.b16 %v6001, %v6000
          %v6038 = vpack.c.b16 %v6003, %v6002
          %v6039 = vpack.c.b16 %v6005, %v6004
          %v6040 = vpack.c.b16 %v6007, %v6006
          %v6041 = vpack.c.b16 %v6009, %v6008
          %v6042 = vpack.c.b16 %v6011, %v6010
          %v6043 = vpack.c.b16 %v6013, %v6012
          %v6044 = vpack.c.b16 %v6015, %v6014
          %v6045 = vpack.c.b16 %v6017, %v6016
          %v6046 = vpack.c.b16 %v6019, %v6018
          %v6047 = vpack.c.b16 %v6021, %v6020
          %v6048 = vpack.c.b16 %v6023, %v6022
          %v6049 = vpack.c.b16 %v6025, %v6024
          %6074 = vst [vmem:[%s426] sm:$0xff] %v6026
          %6075 = vst [vmem:[%s426 + $0x8] sm:$0xff] %v6027
          %6076 = vst [vmem:[%s426 + $0x10] sm:$0xff] %v6028
          %6077 = vst [vmem:[%s426 + $0x18] sm:$0xff] %v6029
          %6078 = vst [vmem:[%s426 + $0x20] sm:$0xff] %v6030
          %6079 = vst [vmem:[%s426 + $0x28] sm:$0xff] %v6031
          %6080 = vst [vmem:[%s426 + $0x30] sm:$0xff] %v6032
          %6081 = vst [vmem:[%s426 + $0x38] sm:$0xff] %v6033
          %6082 = vst [vmem:[%s426 + $0x40] sm:$0xff] %v6034
          %6083 = vst [vmem:[%s426 + $0x48] sm:$0xff] %v6035
          %6084 = vst [vmem:[%s426 + $0x50] sm:$0xff] %v6036
          %6085 = vst [vmem:[%s426 + $0x58] sm:$0xff] %v6037
          %6086 = vst [vmem:[%s426 + $0x60] sm:$0xff] %v6038
          %6087 = vst [vmem:[%s426 + $0x68] sm:$0xff] %v6039
          %6088 = vst [vmem:[%s426 + $0x70] sm:$0xff] %v6040
          %6089 = vst [vmem:[%s426 + $0x78] sm:$0xff] %v6041
          %6090 = vst [vmem:[%s426 + $0x80] sm:$0xff] %v6042
          %6091 = vst [vmem:[%s426 + $0x88] sm:$0xff] %v6043
          %6092 = vst [vmem:[%s426 + $0x90] sm:$0xff] %v6044
          %6093 = vst [vmem:[%s426 + $0x98] sm:$0xff] %v6045
          %6094 = vst [vmem:[%s426 + $0xa0] sm:$0xff] %v6046
          %6095 = vst [vmem:[%s426 + $0xa8] sm:$0xff] %v6047
          %6096 = vst [vmem:[%s426 + $0xb0] sm:$0xff] %v6048
          %6097 = vst [vmem:[%s426 + $0xb8] sm:$0xff] %v6049
        $region63: #{_forward_impl.5} parent=50 // pred_fallthru
          _
        %s6098 = smul.u32 12, %s18
        %p6099 = scmp.lt.s32.totalorder %s6098, 11
        %s6100 = scalar_select %p6099, %s6098, 11
        %s6101 = smul.addr %s6100, 4
        %s6102 = smul.addr %s6101, 4
        %s6103 = scalar_lea.vmem %s3, %s6102
        // Predicated region
        $region64: #{_forward_impl.5} parent=50 // pred_check
          %p6104 = pneg %p119
        $region65: #{_forward_impl.5} parent=50 // pred_check_branch
          %6106 = sbr.rel (%p6104) target = $region67
        $region66: #{_forward_impl.5} parent=50 // pred_region
          %s6107 = smul.u32 12, %s18
        $region67: #{_forward_impl.5} parent=50 // pred_fallthru
          _
        // Predicated region
        $region68: #{_forward_impl.5} parent=50 // pred_check
          %p6108 = pneg %p119
        $region69: #{_forward_impl.5} parent=50 // pred_check_branch
          %6110 = sbr.rel (%p6108) target = $region71
        $region70: #{_forward_impl.5} parent=50 // pred_region
          %s6111 = smul.u32 12, %s18
          %p6112 = scmp.lt.s32.totalorder %s6111, 11
          %s6113 = scalar_select %p6112, %s6111, 11
          %s6114 = smul.addr %s6113, 4
          %s6115 = smul.addr %s6114, 4
          %s6116 = scalar_lea.vmem %s3, %s6115
        $region71: #{_forward_impl.5} parent=50 // pred_fallthru
          _
      $region51: #{_forward_impl.5} parent=5 // pred_fallthru
        _
      %p6117 = scmp.le.s32.totalorder 2, %s9
      // Predicated region
      $region72: #{_forward_impl.5} parent=5 // pred_check
        %p6118 = pneg %p6117
      $region73: #{_forward_impl.5} parent=5 // pred_check_branch
        %6120 = sbr.rel (%p6118) target = $region75
      $region74: #{_forward_impl.5} parent=5 // pred_region
        %s6121 = ssub.s32 %s9, 2
      $region75: #{_forward_impl.5} parent=5 // pred_fallthru
        _
    $region6: #{_forward_impl.5} parent=1 // loop_footer
      %s13 = sadd.s32 1, %s9
    $region7: #{_forward_impl.5} parent=1 // loop_footer_branch
      %8 = sbr.rel target = $region3
    $region8: #{_forward_impl.5} parent=1 // loop_exit
      _

// kernel: _forward_impl.6
$region0: #{_forward_impl.6}
  #allocation0 [shape = 'u32[]', space=smem, size = 0x4, offset = 0x4, fixed_abs, tag = 'smem constant byte address 0x4 - core index']
  #allocation1 [shape = 'u32[144,128]{1,0:T(1,128)}', space=vmem, size = 0x12000, scoped, tag = 'internal scratch']
  #allocation2 [shape = 'f32[24,256]{1,0:T(8,128)}', space=vmem, size = 0x6000, scoped, tag = 'scratch operand']
  %s0 = inlined_call_operand.vmem [shape: bf16[24,8192], index: 0, kind: input, shape index: {}]
  %s1 = inlined_call_operand.vmem [shape: bf16[8192,256], index: 1, kind: input, shape index: {}]
  %s2 = inlined_call_operand.vmem [shape: f32[1,256], index: 2, kind: input, shape index: {}]
  %s3 = inlined_call_operand.vmem [shape: bf16[24,256], index: 3, kind: output, shape index: {}]
  %s4 = sld [smem:[#allocation0]]
  $region76: #{_forward_impl.6} parent=0
    _
  %s6 = ssub.s32 1, %s4
  %s7 = scalar_select 0, %s6, %s4
  $region1: #{_forward_impl.6} parent=0
    #allocation3 [shape = 'u8[196608]{0}', space=vmem, size = 0x30000, scoped, tag = 'input window, operand 0']
    loop: start=0, step=1, limit=6
    $region2: #{_forward_impl.6} parent=1 // loop_pre_header
      _
    $region3: #{_forward_impl.6} parent=1 // loop_header
      %s9 = sphi 0, %s13
      %p10 = scmp.ge.s32.totalorder %s9, 6
      %s16 = sphi 0, %s28
      %s17 = sphi 0, %s24
      %s18 = sphi 0, %s16
      %s19 = sphi 0, %s17
      %s20 = sphi 0, %s18
      %s21 = sphi 0, %s19
      %s33 = sphi 0, %s35
      %s36 = sphi 0, %s33
      %s37 = sphi 0, %s36
      %s53 = sphi 0, %s37
      %s59 = sphi 0, %s61
      %s62 = sphi 0, %s59
      %s63 = sphi 0, %s62
      %s79 = sphi 0, %s63
      %s83 = sphi 0, %s83
      %s85 = sphi 0, %s83
      %s86 = sphi 0, %s85
      %s100 = sphi 0, %s86
      %s106 = sphi 0, %s108
      %s109 = sphi 0, %s106
      %s110 = sphi 0, %s109
      %s126 = sphi 0, %s110
    $region4: #{_forward_impl.6} parent=1 // loop_header_branch
      %12 = sbr.rel (%p10) target = $region8
    $region5: #{_forward_impl.6} parent=1 // loop_body
      %s14 = ssub.s32 %s9, 1
      %s15 = ssub.s32 %s9, 2
      %s22 = sadd.s32 1, %s17
      %p23 = scmp.ge.s32.totalorder %s22, 4
      %s24 = scalar_select %p23, 0, %s22
      %s25 = sadd.s32 1, %s16
      %s26 = scalar_select %p23, %s25, %s16
      %p27 = scmp.ge.s32.totalorder %s26, 1
      %s28 = scalar_select %p27, 0, %s26
      %s29 = ssub.s32 %s16, %s28
      %s30 = ssub.s32 %s17, %s24
      %s31 = sor.u32 %s29, %s30
      %p32 = scmp.eq.s32.totalorder %s31, 0
      %s34 = sadd.s32 %s33, 1
      %s35 = scalar_select %p32, %s33, %s34
      %p38 = pneg %p32
      %p39 = scmp.eq.s32.totalorder %s9, 3
      %p40 = por %p38, %p39
      %p41 = scmp.ne.s32.totalorder %s33, %s36
      %p42 = scmp.eq.s32.totalorder %s9, 0
      %p43 = por %p41, %p42
      %p44 = scmp.ne.s32.totalorder %s33, %s36
      %p45 = scmp.eq.s32.totalorder %s14, 3
      %p46 = por %p44, %p45
      %p47 = scmp.ne.s32.totalorder %s36, %s37
      %p48 = scmp.eq.s32.totalorder %s14, 0
      %p49 = por %p47, %p48
      %p50 = scmp.ne.s32.totalorder %s36, %s37
      %p51 = scmp.eq.s32.totalorder %s15, 3
      %p52 = por %p50, %p51
      %p54 = scmp.ne.s32.totalorder %s37, %s53
      %p55 = scmp.eq.s32.totalorder %s15, 0
      %p56 = por %p54, %p55
      %s57 = ssub.s32 %s17, %s24
      %p58 = scmp.eq.s32.totalorder %s57, 0
      %s60 = sadd.s32 %s59, 1
      %s61 = scalar_select %p58, %s59, %s60
      %p64 = pneg %p58
      %p65 = scmp.eq.s32.totalorder %s9, 3
      %p66 = por %p64, %p65
      %p67 = scmp.ne.s32.totalorder %s59, %s62
      %p68 = scmp.eq.s32.totalorder %s9, 0
      %p69 = por %p67, %p68
      %p70 = scmp.ne.s32.totalorder %s59, %s62
      %p71 = scmp.eq.s32.totalorder %s14, 3
      %p72 = por %p70, %p71
      %p73 = scmp.ne.s32.totalorder %s62, %s63
      %p74 = scmp.eq.s32.totalorder %s14, 0
      %p75 = por %p73, %p74
      %p76 = scmp.ne.s32.totalorder %s62, %s63
      %p77 = scmp.eq.s32.totalorder %s15, 3
      %p78 = por %p76, %p77
      %p80 = scmp.ne.s32.totalorder %s63, %s79
      %p81 = scmp.eq.s32.totalorder %s15, 0
      %p82 = por %p80, %p81
      %s84 = sadd.s32 %s83, 1
      %p87 = scmp.eq.s32.totalorder %s9, 3
      %p88 = scmp.ne.s32.totalorder %s83, %s85
      %p89 = scmp.eq.s32.totalorder %s9, 0
      %p90 = por %p88, %p89
      %p91 = scmp.ne.s32.totalorder %s83, %s85
      %p92 = scmp.eq.s32.totalorder %s14, 3
      %p93 = por %p91, %p92
      %p94 = scmp.ne.s32.totalorder %s85, %s86
      %p95 = scmp.eq.s32.totalorder %s14, 0
      %p96 = por %p94, %p95
      %p97 = scmp.ne.s32.totalorder %s85, %s86
      %p98 = scmp.eq.s32.totalorder %s15, 3
      %p99 = por %p97, %p98
      %p101 = scmp.ne.s32.totalorder %s86, %s100
      %p102 = scmp.eq.s32.totalorder %s15, 0
      %p103 = por %p101, %p102
      %s104 = ssub.s32 %s16, %s28
      %p105 = scmp.eq.s32.totalorder %s104, 0
      %s107 = sadd.s32 %s106, 1
      %s108 = scalar_select %p105, %s106, %s107
      %p111 = pneg %p105
      %p112 = scmp.eq.s32.totalorder %s9, 3
      %p113 = por %p111, %p112
      %p114 = scmp.ne.s32.totalorder %s106, %s109
      %p115 = scmp.eq.s32.totalorder %s9, 0
      %p116 = por %p114, %p115
      %p117 = scmp.ne.s32.totalorder %s106, %s109
      %p118 = scmp.eq.s32.totalorder %s14, 3
      %p119 = por %p117, %p118
      %p120 = scmp.ne.s32.totalorder %s109, %s110
      %p121 = scmp.eq.s32.totalorder %s14, 0
      %p122 = por %p120, %p121
      %p123 = scmp.ne.s32.totalorder %s109, %s110
      %p124 = scmp.eq.s32.totalorder %s15, 3
      %p125 = por %p123, %p124
      %p127 = scmp.ne.s32.totalorder %s110, %s126
      %p128 = scmp.eq.s32.totalorder %s15, 0
      %p129 = por %p127, %p128
      %p130 = scmp.le.s32.totalorder 1, %s9
      %p131 = scmp.lt.s32.totalorder %s9, 5
      %p132 = pnand %p130, %p131
      %p133 = pneg %p132
      // Predicated region
      $region9: #{_forward_impl.6} parent=5 // pred_check
        _
      $region10: #{_forward_impl.6} parent=5 // pred_check_branch
        %135 = sbr.rel (%p132) target = $region12
      $region11: #{_forward_impl.6} parent=5 // pred_region
        %s136 = ssub.s32 %s9, 1
        // Predicated region
        $region13: #{_forward_impl.6} parent=11 // pred_check
          %p137 = pneg %p96
        $region14: #{_forward_impl.6} parent=11 // pred_check_branch
          %139 = sbr.rel (%p137) target = $region16
        $region15: #{_forward_impl.6} parent=11 // pred_region
          _
        $region16: #{_forward_impl.6} parent=11 // pred_fallthru
          _
      $region12: #{_forward_impl.6} parent=5 // pred_fallthru
        _
      %p140 = scmp.lt.s32.totalorder %s9, 4
      // Predicated region
      $region17: #{_forward_impl.6} parent=5 // pred_check
        %p141 = pneg %p140
      $region18: #{_forward_impl.6} parent=5 // pred_check_branch
        %143 = sbr.rel (%p141) target = $region20
      $region19: #{_forward_impl.6} parent=5 // pred_region
        // Predicated region
        $region21: #{_forward_impl.6} parent=19 // pred_check
          %p144 = pneg %p43
        $region22: #{_forward_impl.6} parent=19 // pred_check_branch
          %146 = sbr.rel (%p144) target = $region24
        $region23: #{_forward_impl.6} parent=19 // pred_region
          %s147 = sand.u32 %s33, 1
          %s148 = sand.u32 %s33, 1
          %s149 = smul.addr %s148, 192
          %s150 = scalar_lea.vmem [#allocation3], %s149
          %s151 = smul.u32 3, %s16
          %s152 = smul.u32 16, %s17
          %s153 = smul.addr %s151, 64
          %s154 = sadd.s32 %s152, %s153
          %s155 = smul.addr %s154, 4
          %s156 = scalar_lea.vmem %s0, %s155
          // Predicated region
          $region25: #{_forward_impl.6} parent=23 // pred_check
            _
          $region26: #{_forward_impl.6} parent=23 // pred_check_branch
            %158 = sbr.rel (0) target = $region28
          $region27: #{_forward_impl.6} parent=23 // pred_region
            // Predicated region
            $region29: #{_forward_impl.6} parent=27 // pred_check
              _
            $region30: #{_forward_impl.6} parent=27 // pred_check_branch
              %160 = sbr.rel (0) target = $region32
            $region31: #{_forward_impl.6} parent=27 // pred_region
              loop: start=0, step=1, limit=1
              $region33: #{_forward_impl.6} parent=31 // loop_pre_header
                _
              $region34: #{_forward_impl.6} parent=31 // loop_header
                %s162 = sphi 0, %s166
                %p163 = scmp.ge.s32.totalorder %s162, 1
                %s167 = sphi %s156, %s156
                %s168 = sphi %s150, %s150
              $region35: #{_forward_impl.6} parent=31 // loop_header_branch
                %165 = sbr.rel (%p163) target = $region39
              $region36: #{_forward_impl.6} parent=31 // loop_body
                %v169 = vld [vmem:[%s167] sm:$0xff]
                %170 = vst [vmem:[%s168] sm:$0xff] %v169
                %v171 = vld [vmem:[%s167 + $0x8] sm:$0xff]
                %172 = vst [vmem:[%s168 + $0x8] sm:$0xff] %v171
                %v173 = vld [vmem:[%s167 + $0x10] sm:$0xff]
                %174 = vst [vmem:[%s168 + $0x10] sm:$0xff] %v173
                %v175 = vld [vmem:[%s167 + $0x18] sm:$0xff]
                %176 = vst [vmem:[%s168 + $0x18] sm:$0xff] %v175
                %v177 = vld [vmem:[%s167 + $0x20] sm:$0xff]
                %178 = vst [vmem:[%s168 + $0x20] sm:$0xff] %v177
                %v179 = vld [vmem:[%s167 + $0x28] sm:$0xff]
                %180 = vst [vmem:[%s168 + $0x28] sm:$0xff] %v179
                %v181 = vld [vmem:[%s167 + $0x30] sm:$0xff]
                %182 = vst [vmem:[%s168 + $0x30] sm:$0xff] %v181
                %v183 = vld [vmem:[%s167 + $0x38] sm:$0xff]
                %184 = vst [vmem:[%s168 + $0x38] sm:$0xff] %v183
                %v185 = vld [vmem:[%s167 + $0x100] sm:$0xff]
                %186 = vst [vmem:[%s168 + $0x40] sm:$0xff] %v185
                %v187 = vld [vmem:[%s167 + $0x108] sm:$0xff]
                %188 = vst [vmem:[%s168 + $0x48] sm:$0xff] %v187
                %v189 = vld [vmem:[%s167 + $0x110] sm:$0xff]
                %190 = vst [vmem:[%s168 + $0x50] sm:$0xff] %v189
                %v191 = vld [vmem:[%s167 + $0x118] sm:$0xff]
                %192 = vst [vmem:[%s168 + $0x58] sm:$0xff] %v191
                %v193 = vld [vmem:[%s167 + $0x120] sm:$0xff]
                %194 = vst [vmem:[%s168 + $0x60] sm:$0xff] %v193
                %v195 = vld [vmem:[%s167 + $0x128] sm:$0xff]
                %196 = vst [vmem:[%s168 + $0x68] sm:$0xff] %v195
                %v197 = vld [vmem:[%s167 + $0x130] sm:$0xff]
                %198 = vst [vmem:[%s168 + $0x70] sm:$0xff] %v197
                %v199 = vld [vmem:[%s167 + $0x138] sm:$0xff]
                %200 = vst [vmem:[%s168 + $0x78] sm:$0xff] %v199
                %v201 = vld [vmem:[%s167 + $0x200] sm:$0xff]
                %202 = vst [vmem:[%s168 + $0x80] sm:$0xff] %v201
                %v203 = vld [vmem:[%s167 + $0x208] sm:$0xff]
                %204 = vst [vmem:[%s168 + $0x88] sm:$0xff] %v203
                %v205 = vld [vmem:[%s167 + $0x210] sm:$0xff]
                %206 = vst [vmem:[%s168 + $0x90] sm:$0xff] %v205
                %v207 = vld [vmem:[%s167 + $0x218] sm:$0xff]
                %208 = vst [vmem:[%s168 + $0x98] sm:$0xff] %v207
                %v209 = vld [vmem:[%s167 + $0x220] sm:$0xff]
                %210 = vst [vmem:[%s168 + $0xa0] sm:$0xff] %v209
                %v211 = vld [vmem:[%s167 + $0x228] sm:$0xff]
                %212 = vst [vmem:[%s168 + $0xa8] sm:$0xff] %v211
                %v213 = vld [vmem:[%s167 + $0x230] sm:$0xff]
                %214 = vst [vmem:[%s168 + $0xb0] sm:$0xff] %v213
                %v215 = vld [vmem:[%s167 + $0x238] sm:$0xff]
                %216 = vst [vmem:[%s168 + $0xb8] sm:$0xff] %v215
              $region37: #{_forward_impl.6} parent=31 // loop_footer
                %s166 = sadd.s32 1, %s162
              $region38: #{_forward_impl.6} parent=31 // loop_footer_branch
                %161 = sbr.rel target = $region34
              $region39: #{_forward_impl.6} parent=31 // loop_exit
                _
            $region32: #{_forward_impl.6} parent=27 // pred_fallthru
              _
            // Predicated region
            $region40: #{_forward_impl.6} parent=27 // pred_check
              _
            $region41: #{_forward_impl.6} parent=27 // pred_check_branch
              %218 = sbr.rel target = $region43
            $region42: #{_forward_impl.6} parent=27 // pred_region
              _
            $region43: #{_forward_impl.6} parent=27 // pred_fallthru
              _
          $region28: #{_forward_impl.6} parent=23 // pred_fallthru
            _
          %219 = vnop
        $region24: #{_forward_impl.6} parent=19 // pred_fallthru
          _
        // Predicated region
        $region44: #{_forward_impl.6} parent=19 // pred_check
          %p220 = pneg %p69
        $region45: #{_forward_impl.6} parent=19 // pred_check_branch
          %222 = sbr.rel (%p220) target = $region47
        $region46: #{_forward_impl.6} parent=19 // pred_region
          %s223 = smul.u32 256, %s17
          %p224 = scmp.lt.s32.totalorder %s223, 1023
          %s225 = scalar_select %p224, %s223, 1023
          %s226 = smul.addr %s225, 2
          %s227 = smul.addr %s226, 4
          %s228 = scalar_lea.vmem %s1, %s227
          %s229 = smul.u32 256, %s17
        $region47: #{_forward_impl.6} parent=19 // pred_fallthru
          _
      $region20: #{_forward_impl.6} parent=5 // pred_fallthru
        _
      %p230 = scmp.le.s32.totalorder 1, %s9
      %p231 = scmp.lt.s32.totalorder %s9, 5
      %p232 = pnand %p230, %p231
      %p233 = pneg %p232
      // Predicated region
      $region48: #{_forward_impl.6} parent=5 // pred_check
        _
      $region49: #{_forward_impl.6} parent=5 // pred_check_branch
        %235 = sbr.rel (%p232) target = $region51
      $region50: #{_forward_impl.6} parent=5 // pred_region
        %s236 = ssub.s32 %s9, 1
        %s237 = sand.u32 %s36, 1
        %s238 = sand.u32 %s36, 1
        %s239 = smul.addr %s238, 192
        %s240 = scalar_lea.vmem [#allocation3], %s239
        // Predicated region
        $region52: #{_forward_impl.6} parent=50 // pred_check
          %p241 = pneg %p49
        $region53: #{_forward_impl.6} parent=50 // pred_check_branch
          %243 = sbr.rel (%p241) target = $region55
        $region54: #{_forward_impl.6} parent=50 // pred_region
          _
        $region55: #{_forward_impl.6} parent=50 // pred_fallthru
          _
        %s244 = sand.u32 %s36, 1
        %s245 = sand.u32 %s36, 1
        %s246 = smul.addr %s245, 192
        %s247 = scalar_lea.vmem [#allocation3], %s246
        %p248 = pneg %p49
        %p249 = pneg %p46
        %s250 = smul.u32 256, %s19
        %p251 = scmp.lt.s32.totalorder %s250, 1023
        %s252 = scalar_select %p251, %s250, 1023
        %s253 = smul.addr %s252, 2
        %s254 = smul.addr %s253, 4
        %s255 = scalar_lea.vmem %s1, %s254
        %p256 = pneg %p75
        %p257 = pneg %p72
        %p258 = pneg %p96
        %p259 = pneg %p93
        %p260 = pneg %p122
        %p261 = pneg %p119
        %s262 = smul.u32 3, %s18
        %p263 = scmp.lt.s32.totalorder %s262, 2
        %s264 = scalar_select %p263, %s262, 2
        %s265 = smul.addr %s264, 2
        %s266 = smul.addr %s265, 4
        %s267 = scalar_lea.vmem %s3, %s266
        %s268 = smul.u32 3, %s18
        %s269 = smul.u32 16, %s19
        %s270 = smul.u32 256, %s19
        %p271 = scmp.lt.s32.totalorder %s270, 1023
        %s272 = scalar_select %p271, %s270, 1023
        %s273 = smul.addr %s272, 2
        %s274 = smul.addr %s273, 4
        %s275 = scalar_lea.vmem %s1, %s274
        %s276 = smul.u32 256, %s19
        %s277 = smul.u32 3, %s18
        %p278 = scmp.lt.s32.totalorder %s277, 2
        %s279 = scalar_select %p278, %s277, 2
        %s280 = smul.addr %s279, 2
        %s281 = smul.addr %s280, 4
        %s282 = scalar_lea.vmem %s3, %s281
        %s283 = smul.u32 3, %s18
        %p284 = scmp.eq.s32.totalorder %s19, 0
        // Predicated region
        $region56: #{_forward_impl.6} parent=50 // pred_check
          %p285 = pneg %p284
        $region57: #{_forward_impl.6} parent=50 // pred_check_branch
          %287 = sbr.rel (%p285) target = $region59
        $region58: #{_forward_impl.6} parent=50 // pred_region
          %288 = vst [vmem:[#allocation2] sm:$0xff] 0.0
          %289 = vst [vmem:[#allocation2 + $0x8] sm:$0xff] 0.0
          %290 = vst [vmem:[#allocation2 + $0x10] sm:$0xff] 0.0
          %291 = vst [vmem:[#allocation2 + $0x18] sm:$0xff] 0.0
          %292 = vst [vmem:[#allocation2 + $0x20] sm:$0xff] 0.0
          %293 = vst [vmem:[#allocation2 + $0x28] sm:$0xff] 0.0
        $region59: #{_forward_impl.6} parent=50 // pred_fallthru
          _
        %v294 = vld [vmem:[#allocation2] sm:$0xff]
        %v295 = vld [vmem:[#allocation2 + $0x8] sm:$0xff]
        %v296 = vld [vmem:[#allocation2 + $0x10] sm:$0xff]
        %v297 = vld [vmem:[#allocation2 + $0x18] sm:$0xff]
        %v298 = vld [vmem:[#allocation2 + $0x20] sm:$0xff]
        %v299 = vld [vmem:[#allocation2 + $0x28] sm:$0xff]
        %v300 = vld [vmem:[%s240] sm:$0xff]
        %v301 = vld [vmem:[%s240 + $0x8] sm:$0xff]
        %v302 = vld [vmem:[%s240 + $0x10] sm:$0xff]
        %v303 = vld [vmem:[%s240 + $0x18] sm:$0xff]
        %v304 = vld [vmem:[%s240 + $0x20] sm:$0xff]
        %v305 = vld [vmem:[%s240 + $0x28] sm:$0xff]
        %v306 = vld [vmem:[%s240 + $0x30] sm:$0xff]
        %v307 = vld [vmem:[%s240 + $0x38] sm:$0xff]
        %v308 = vld [vmem:[%s240 + $0x40] sm:$0xff]
        %v309 = vld [vmem:[%s240 + $0x48] sm:$0xff]
        %v310 = vld [vmem:[%s240 + $0x50] sm:$0xff]
        %v311 = vld [vmem:[%s240 + $0x58] sm:$0xff]
        %v312 = vld [vmem:[%s240 + $0x60] sm:$0xff]
        %v313 = vld [vmem:[%s240 + $0x68] sm:$0xff]
        %v314 = vld [vmem:[%s240 + $0x70] sm:$0xff]
        %v315 = vld [vmem:[%s240 + $0x78] sm:$0xff]
        %v316 = vld [vmem:[%s240 + $0x80] sm:$0xff]
        %v317 = vld [vmem:[%s240 + $0x88] sm:$0xff]
        %v318 = vld [vmem:[%s240 + $0x90] sm:$0xff]
        %v319 = vld [vmem:[%s240 + $0x98] sm:$0xff]
        %v320 = vld [vmem:[%s240 + $0xa0] sm:$0xff]
        %v321 = vld [vmem:[%s240 + $0xa8] sm:$0xff]
        %v322 = vld [vmem:[%s240 + $0xb0] sm:$0xff]
        %v323 = vld [vmem:[%s240 + $0xb8] sm:$0xff]
        %v324 = vld [vmem:[%s275] sm:$0xff]
        %v325 = vld [vmem:[%s275 + $0x8] sm:$0xff]
        %v326 = vld [vmem:[%s275 + $0x10] sm:$0xff]
        %v327 = vld [vmem:[%s275 + $0x18] sm:$0xff]
        %v328 = vld [vmem:[%s275 + $0x20] sm:$0xff]
        %v329 = vld [vmem:[%s275 + $0x28] sm:$0xff]
        %v330 = vld [vmem:[%s275 + $0x30] sm:$0xff]
        %v331 = vld [vmem:[%s275 + $0x38] sm:$0xff]
        %v332 = vld [vmem:[%s275 + $0x40] sm:$0xff]
        %v333 = vld [vmem:[%s275 + $0x48] sm:$0xff]
        %v334 = vld [vmem:[%s275 + $0x50] sm:$0xff]
        %v335 = vld [vmem:[%s275 + $0x58] sm:$0xff]
        %v336 = vld [vmem:[%s275 + $0x60] sm:$0xff]
        %v337 = vld [vmem:[%s275 + $0x68] sm:$0xff]
        %v338 = vld [vmem:[%s275 + $0x70] sm:$0xff]
        %v339 = vld [vmem:[%s275 + $0x78] sm:$0xff]
        %v340 = vld [vmem:[%s275 + $0x80] sm:$0xff]
        %v341 = vld [vmem:[%s275 + $0x88] sm:$0xff]
        %v342 = vld [vmem:[%s275 + $0x90] sm:$0xff]
        %v343 = vld [vmem:[%s275 + $0x98] sm:$0xff]
        %v344 = vld [vmem:[%s275 + $0xa0] sm:$0xff]
        %v345 = vld [vmem:[%s275 + $0xa8] sm:$0xff]
        %v346 = vld [vmem:[%s275 + $0xb0] sm:$0xff]
        %v347 = vld [vmem:[%s275 + $0xb8] sm:$0xff]
        %v348 = vld [vmem:[%s275 + $0xc0] sm:$0xff]
        %v349 = vld [vmem:[%s275 + $0xc8] sm:$0xff]
        %v350 = vld [vmem:[%s275 + $0xd0] sm:$0xff]
        %v351 = vld [vmem:[%s275 + $0xd8] sm:$0xff]
        %v352 = vld [vmem:[%s275 + $0xe0] sm:$0xff]
        %v353 = vld [vmem:[%s275 + $0xe8] sm:$0xff]
        %v354 = vld [vmem:[%s275 + $0xf0] sm:$0xff]
        %v355 = vld [vmem:[%s275 + $0xf8] sm:$0xff]
        %v356 = vld [vmem:[%s275 + $0x100] sm:$0xff]
        %v357 = vld [vmem:[%s275 + $0x108] sm:$0xff]
        %v358 = vld [vmem:[%s275 + $0x110] sm:$0xff]
        %v359 = vld [vmem:[%s275 + $0x118] sm:$0xff]
        %v360 = vld [vmem:[%s275 + $0x120] sm:$0xff]
        %v361 = vld [vmem:[%s275 + $0x128] sm:$0xff]
        %v362 = vld [vmem:[%s275 + $0x130] sm:$0xff]
        %v363 = vld [vmem:[%s275 + $0x138] sm:$0xff]
        %v364 = vld [vmem:[%s275 + $0x140] sm:$0xff]
        %v365 = vld [vmem:[%s275 + $0x148] sm:$0xff]
        %v366 = vld [vmem:[%s275 + $0x150] sm:$0xff]
        %v367 = vld [vmem:[%s275 + $0x158] sm:$0xff]
        %v368 = vld [vmem:[%s275 + $0x160] sm:$0xff]
        %v369 = vld [vmem:[%s275 + $0x168] sm:$0xff]
        %v370 = vld [vmem:[%s275 + $0x170] sm:$0xff]
        %v371 = vld [vmem:[%s275 + $0x178] sm:$0xff]
        %v372 = vld [vmem:[%s275 + $0x180] sm:$0xff]
        %v373 = vld [vmem:[%s275 + $0x188] sm:$0xff]
        %v374 = vld [vmem:[%s275 + $0x190] sm:$0xff]
        %v375 = vld [vmem:[%s275 + $0x198] sm:$0xff]
        %v376 = vld [vmem:[%s275 + $0x1a0] sm:$0xff]
        %v377 = vld [vmem:[%s275 + $0x1a8] sm:$0xff]
        %v378 = vld [vmem:[%s275 + $0x1b0] sm:$0xff]
        %v379 = vld [vmem:[%s275 + $0x1b8] sm:$0xff]
        %v380 = vld [vmem:[%s275 + $0x1c0] sm:$0xff]
        %v381 = vld [vmem:[%s275 + $0x1c8] sm:$0xff]
        %v382 = vld [vmem:[%s275 + $0x1d0] sm:$0xff]
        %v383 = vld [vmem:[%s275 + $0x1d8] sm:$0xff]
        %v384 = vld [vmem:[%s275 + $0x1e0] sm:$0xff]
        %v385 = vld [vmem:[%s275 + $0x1e8] sm:$0xff]
        %v386 = vld [vmem:[%s275 + $0x1f0] sm:$0xff]
        %v387 = vld [vmem:[%s275 + $0x1f8] sm:$0xff]
        %v388 = vld [vmem:[%s275 + $0x200] sm:$0xff]
        %v389 = vld [vmem:[%s275 + $0x208] sm:$0xff]
        %v390 = vld [vmem:[%s275 + $0x210] sm:$0xff]
        %v391 = vld [vmem:[%s275 + $0x218] sm:$0xff]
        %v392 = vld [vmem:[%s275 + $0x220] sm:$0xff]
        %v393 = vld [vmem:[%s275 + $0x228] sm:$0xff]
        %v394 = vld [vmem:[%s275 + $0x230] sm:$0xff]
        %v395 = vld [vmem:[%s275 + $0x238] sm:$0xff]
        %v396 = vld [vmem:[%s275 + $0x240] sm:$0xff]
        %v397 = vld [vmem:[%s275 + $0x248] sm:$0xff]
        %v398 = vld [vmem:[%s275 + $0x250] sm:$0xff]
        %v399 = vld [vmem:[%s275 + $0x258] sm:$0xff]
        %v400 = vld [vmem:[%s275 + $0x260] sm:$0xff]
        %v401 = vld [vmem:[%s275 + $0x268] sm:$0xff]
        %v402 = vld [vmem:[%s275 + $0x270] sm:$0xff]
        %v403 = vld [vmem:[%s275 + $0x278] sm:$0xff]
        %v404 = vld [vmem:[%s275 + $0x280] sm:$0xff]
        %v405 = vld [vmem:[%s275 + $0x288] sm:$0xff]
        %v406 = vld [vmem:[%s275 + $0x290] sm:$0xff]
        %v407 = vld [vmem:[%s275 + $0x298] sm:$0xff]
        %v408 = vld [vmem:[%s275 + $0x2a0] sm:$0xff]
        %v409 = vld [vmem:[%s275 + $0x2a8] sm:$0xff]
        %v410 = vld [vmem:[%s275 + $0x2b0] sm:$0xff]
        %v411 = vld [vmem:[%s275 + $0x2b8] sm:$0xff]
        %v412 = vld [vmem:[%s275 + $0x2c0] sm:$0xff]
        %v413 = vld [vmem:[%s275 + $0x2c8] sm:$0xff]
        %v414 = vld [vmem:[%s275 + $0x2d0] sm:$0xff]
        %v415 = vld [vmem:[%s275 + $0x2d8] sm:$0xff]
        %v416 = vld [vmem:[%s275 + $0x2e0] sm:$0xff]
        %v417 = vld [vmem:[%s275 + $0x2e8] sm:$0xff]
        %v418 = vld [vmem:[%s275 + $0x2f0] sm:$0xff]
        %v419 = vld [vmem:[%s275 + $0x2f8] sm:$0xff]
        %v420 = vld [vmem:[%s275 + $0x300] sm:$0xff]
        %v421 = vld [vmem:[%s275 + $0x308] sm:$0xff]
        %v422 = vld [vmem:[%s275 + $0x310] sm:$0xff]
        %v423 = vld [vmem:[%s275 + $0x318] sm:$0xff]
        %v424 = vld [vmem:[%s275 + $0x320] sm:$0xff]
        %v425 = vld [vmem:[%s275 + $0x328] sm:$0xff]
        %v426 = vld [vmem:[%s275 + $0x330] sm:$0xff]
        %v427 = vld [vmem:[%s275 + $0x338] sm:$0xff]
        %v428 = vld [vmem:[%s275 + $0x340] sm:$0xff]
        %v429 = vld [vmem:[%s275 + $0x348] sm:$0xff]
        %v430 = vld [vmem:[%s275 + $0x350] sm:$0xff]
        %v431 = vld [vmem:[%s275 + $0x358] sm:$0xff]
        %v432 = vld [vmem:[%s275 + $0x360] sm:$0xff]
        %v433 = vld [vmem:[%s275 + $0x368] sm:$0xff]
        %v434 = vld [vmem:[%s275 + $0x370] sm:$0xff]
        %v435 = vld [vmem:[%s275 + $0x378] sm:$0xff]
        %v436 = vld [vmem:[%s275 + $0x380] sm:$0xff]
        %v437 = vld [vmem:[%s275 + $0x388] sm:$0xff]
        %v438 = vld [vmem:[%s275 + $0x390] sm:$0xff]
        %v439 = vld [vmem:[%s275 + $0x398] sm:$0xff]
        %v440 = vld [vmem:[%s275 + $0x3a0] sm:$0xff]
        %v441 = vld [vmem:[%s275 + $0x3a8] sm:$0xff]
        %v442 = vld [vmem:[%s275 + $0x3b0] sm:$0xff]
        %v443 = vld [vmem:[%s275 + $0x3b8] sm:$0xff]
        %v444 = vld [vmem:[%s275 + $0x3c0] sm:$0xff]
        %v445 = vld [vmem:[%s275 + $0x3c8] sm:$0xff]
        %v446 = vld [vmem:[%s275 + $0x3d0] sm:$0xff]
        %v447 = vld [vmem:[%s275 + $0x3d8] sm:$0xff]
        %v448 = vld [vmem:[%s275 + $0x3e0] sm:$0xff]
        %v449 = vld [vmem:[%s275 + $0x3e8] sm:$0xff]
        %v450 = vld [vmem:[%s275 + $0x3f0] sm:$0xff]
        %v451 = vld [vmem:[%s275 + $0x3f8] sm:$0xff]
        %v452 = vld [vmem:[%s275 + $0x400] sm:$0xff]
        %v453 = vld [vmem:[%s275 + $0x408] sm:$0xff]
        %v454 = vld [vmem:[%s275 + $0x410] sm:$0xff]
        %v455 = vld [vmem:[%s275 + $0x418] sm:$0xff]
        %v456 = vld [vmem:[%s275 + $0x420] sm:$0xff]
        %v457 = vld [vmem:[%s275 + $0x428] sm:$0xff]
        %v458 = vld [vmem:[%s275 + $0x430] sm:$0xff]
        %v459 = vld [vmem:[%s275 + $0x438] sm:$0xff]
        %v460 = vld [vmem:[%s275 + $0x440] sm:$0xff]
        %v461 = vld [vmem:[%s275 + $0x448] sm:$0xff]
        %v462 = vld [vmem:[%s275 + $0x450] sm:$0xff]
        %v463 = vld [vmem:[%s275 + $0x458] sm:$0xff]
        %v464 = vld [vmem:[%s275 + $0x460] sm:$0xff]
        %v465 = vld [vmem:[%s275 + $0x468] sm:$0xff]
        %v466 = vld [vmem:[%s275 + $0x470] sm:$0xff]
        %v467 = vld [vmem:[%s275 + $0x478] sm:$0xff]
        %v468 = vld [vmem:[%s275 + $0x480] sm:$0xff]
        %v469 = vld [vmem:[%s275 + $0x488] sm:$0xff]
        %v470 = vld [vmem:[%s275 + $0x490] sm:$0xff]
        %v471 = vld [vmem:[%s275 + $0x498] sm:$0xff]
        %v472 = vld [vmem:[%s275 + $0x4a0] sm:$0xff]
        %v473 = vld [vmem:[%s275 + $0x4a8] sm:$0xff]
        %v474 = vld [vmem:[%s275 + $0x4b0] sm:$0xff]
        %v475 = vld [vmem:[%s275 + $0x4b8] sm:$0xff]
        %v476 = vld [vmem:[%s275 + $0x4c0] sm:$0xff]
        %v477 = vld [vmem:[%s275 + $0x4c8] sm:$0xff]
        %v478 = vld [vmem:[%s275 + $0x4d0] sm:$0xff]
        %v479 = vld [vmem:[%s275 + $0x4d8] sm:$0xff]
        %v480 = vld [vmem:[%s275 + $0x4e0] sm:$0xff]
        %v481 = vld [vmem:[%s275 + $0x4e8] sm:$0xff]
        %v482 = vld [vmem:[%s275 + $0x4f0] sm:$0xff]
        %v483 = vld [vmem:[%s275 + $0x4f8] sm:$0xff]
        %v484 = vld [vmem:[%s275 + $0x500] sm:$0xff]
        %v485 = vld [vmem:[%s275 + $0x508] sm:$0xff]
        %v486 = vld [vmem:[%s275 + $0x510] sm:$0xff]
        %v487 = vld [vmem:[%s275 + $0x518] sm:$0xff]
        %v488 = vld [vmem:[%s275 + $0x520] sm:$0xff]
        %v489 = vld [vmem:[%s275 + $0x528] sm:$0xff]
        %v490 = vld [vmem:[%s275 + $0x530] sm:$0xff]
        %v491 = vld [vmem:[%s275 + $0x538] sm:$0xff]
        %v492 = vld [vmem:[%s275 + $0x540] sm:$0xff]
        %v493 = vld [vmem:[%s275 + $0x548] sm:$0xff]
        %v494 = vld [vmem:[%s275 + $0x550] sm:$0xff]
        %v495 = vld [vmem:[%s275 + $0x558] sm:$0xff]
        %v496 = vld [vmem:[%s275 + $0x560] sm:$0xff]
        %v497 = vld [vmem:[%s275 + $0x568] sm:$0xff]
        %v498 = vld [vmem:[%s275 + $0x570] sm:$0xff]
        %v499 = vld [vmem:[%s275 + $0x578] sm:$0xff]
        %v500 = vld [vmem:[%s275 + $0x580] sm:$0xff]
        %v501 = vld [vmem:[%s275 + $0x588] sm:$0xff]
        %v502 = vld [vmem:[%s275 + $0x590] sm:$0xff]
        %v503 = vld [vmem:[%s275 + $0x598] sm:$0xff]
        %v504 = vld [vmem:[%s275 + $0x5a0] sm:$0xff]
        %v505 = vld [vmem:[%s275 + $0x5a8] sm:$0xff]
        %v506 = vld [vmem:[%s275 + $0x5b0] sm:$0xff]
        %v507 = vld [vmem:[%s275 + $0x5b8] sm:$0xff]
        %v508 = vld [vmem:[%s275 + $0x5c0] sm:$0xff]
        %v509 = vld [vmem:[%s275 + $0x5c8] sm:$0xff]
        %v510 = vld [vmem:[%s275 + $0x5d0] sm:$0xff]
        %v511 = vld [vmem:[%s275 + $0x5d8] sm:$0xff]
        %v512 = vld [vmem:[%s275 + $0x5e0] sm:$0xff]
        %v513 = vld [vmem:[%s275 + $0x5e8] sm:$0xff]
        %v514 = vld [vmem:[%s275 + $0x5f0] sm:$0xff]
        %v515 = vld [vmem:[%s275 + $0x5f8] sm:$0xff]
        %v516 = vld [vmem:[%s275 + $0x600] sm:$0xff]
        %v517 = vld [vmem:[%s275 + $0x608] sm:$0xff]
        %v518 = vld [vmem:[%s275 + $0x610] sm:$0xff]
        %v519 = vld [vmem:[%s275 + $0x618] sm:$0xff]
        %v520 = vld [vmem:[%s275 + $0x620] sm:$0xff]
        %v521 = vld [vmem:[%s275 + $0x628] sm:$0xff]
        %v522 = vld [vmem:[%s275 + $0x630] sm:$0xff]
        %v523 = vld [vmem:[%s275 + $0x638] sm:$0xff]
        %v524 = vld [vmem:[%s275 + $0x640] sm:$0xff]
        %v525 = vld [vmem:[%s275 + $0x648] sm:$0xff]
        %v526 = vld [vmem:[%s275 + $0x650] sm:$0xff]
        %v527 = vld [vmem:[%s275 + $0x658] sm:$0xff]
        %v528 = vld [vmem:[%s275 + $0x660] sm:$0xff]
        %v529 = vld [vmem:[%s275 + $0x668] sm:$0xff]
        %v530 = vld [vmem:[%s275 + $0x670] sm:$0xff]
        %v531 = vld [vmem:[%s275 + $0x678] sm:$0xff]
        %v532 = vld [vmem:[%s275 + $0x680] sm:$0xff]
        %v533 = vld [vmem:[%s275 + $0x688] sm:$0xff]
        %v534 = vld [vmem:[%s275 + $0x690] sm:$0xff]
        %v535 = vld [vmem:[%s275 + $0x698] sm:$0xff]
        %v536 = vld [vmem:[%s275 + $0x6a0] sm:$0xff]
        %v537 = vld [vmem:[%s275 + $0x6a8] sm:$0xff]
        %v538 = vld [vmem:[%s275 + $0x6b0] sm:$0xff]
        %v539 = vld [vmem:[%s275 + $0x6b8] sm:$0xff]
        %v540 = vld [vmem:[%s275 + $0x6c0] sm:$0xff]
        %v541 = vld [vmem:[%s275 + $0x6c8] sm:$0xff]
        %v542 = vld [vmem:[%s275 + $0x6d0] sm:$0xff]
        %v543 = vld [vmem:[%s275 + $0x6d8] sm:$0xff]
        %v544 = vld [vmem:[%s275 + $0x6e0] sm:$0xff]
        %v545 = vld [vmem:[%s275 + $0x6e8] sm:$0xff]
        %v546 = vld [vmem:[%s275 + $0x6f0] sm:$0xff]
        %v547 = vld [vmem:[%s275 + $0x6f8] sm:$0xff]
        %v548 = vld [vmem:[%s275 + $0x700] sm:$0xff]
        %v549 = vld [vmem:[%s275 + $0x708] sm:$0xff]
        %v550 = vld [vmem:[%s275 + $0x710] sm:$0xff]
        %v551 = vld [vmem:[%s275 + $0x718] sm:$0xff]
        %v552 = vld [vmem:[%s275 + $0x720] sm:$0xff]
        %v553 = vld [vmem:[%s275 + $0x728] sm:$0xff]
        %v554 = vld [vmem:[%s275 + $0x730] sm:$0xff]
        %v555 = vld [vmem:[%s275 + $0x738] sm:$0xff]
        %v556 = vld [vmem:[%s275 + $0x740] sm:$0xff]
        %v557 = vld [vmem:[%s275 + $0x748] sm:$0xff]
        %v558 = vld [vmem:[%s275 + $0x750] sm:$0xff]
        %v559 = vld [vmem:[%s275 + $0x758] sm:$0xff]
        %v560 = vld [vmem:[%s275 + $0x760] sm:$0xff]
        %v561 = vld [vmem:[%s275 + $0x768] sm:$0xff]
        %v562 = vld [vmem:[%s275 + $0x770] sm:$0xff]
        %v563 = vld [vmem:[%s275 + $0x778] sm:$0xff]
        %v564 = vld [vmem:[%s275 + $0x780] sm:$0xff]
        %v565 = vld [vmem:[%s275 + $0x788] sm:$0xff]
        %v566 = vld [vmem:[%s275 + $0x790] sm:$0xff]
        %v567 = vld [vmem:[%s275 + $0x798] sm:$0xff]
        %v568 = vld [vmem:[%s275 + $0x7a0] sm:$0xff]
        %v569 = vld [vmem:[%s275 + $0x7a8] sm:$0xff]
        %v570 = vld [vmem:[%s275 + $0x7b0] sm:$0xff]
        %v571 = vld [vmem:[%s275 + $0x7b8] sm:$0xff]
        %v572 = vld [vmem:[%s275 + $0x7c0] sm:$0xff]
        %v573 = vld [vmem:[%s275 + $0x7c8] sm:$0xff]
        %v574 = vld [vmem:[%s275 + $0x7d0] sm:$0xff]
        %v575 = vld [vmem:[%s275 + $0x7d8] sm:$0xff]
        %v576 = vld [vmem:[%s275 + $0x7e0] sm:$0xff]
        %v577 = vld [vmem:[%s275 + $0x7e8] sm:$0xff]
        %v578 = vld [vmem:[%s275 + $0x7f0] sm:$0xff]
        %v579 = vld [vmem:[%s275 + $0x7f8] sm:$0xff]
        %v604 = vunpack.c.l.b16 %v300
        %v605 = vunpack.c.h.b16 %v300
        %v606 = vunpack.c.l.b16 %v301
        %v607 = vunpack.c.h.b16 %v301
        %v608 = vunpack.c.l.b16 %v302
        %v609 = vunpack.c.h.b16 %v302
        %v610 = vunpack.c.l.b16 %v303
        %v611 = vunpack.c.h.b16 %v303
        %v612 = vunpack.c.l.b16 %v304
        %v613 = vunpack.c.h.b16 %v304
        %v614 = vunpack.c.l.b16 %v305
        %v615 = vunpack.c.h.b16 %v305
        %v616 = vunpack.c.l.b16 %v306
        %v617 = vunpack.c.h.b16 %v306
        %v618 = vunpack.c.l.b16 %v307
        %v619 = vunpack.c.h.b16 %v307
        %v620 = vunpack.c.l.b16 %v308
        %v621 = vunpack.c.h.b16 %v308
        %v622 = vunpack.c.l.b16 %v309
        %v623 = vunpack.c.h.b16 %v309
        %v624 = vunpack.c.l.b16 %v310
        %v625 = vunpack.c.h.b16 %v310
        %v626 = vunpack.c.l.b16 %v311
        %v627 = vunpack.c.h.b16 %v311
        %v628 = vunpack.c.l.b16 %v312
        %v629 = vunpack.c.h.b16 %v312
        %v630 = vunpack.c.l.b16 %v313
        %v631 = vunpack.c.h.b16 %v313
        %v632 = vunpack.c.l.b16 %v314
        %v633 = vunpack.c.h.b16 %v314
        %v634 = vunpack.c.l.b16 %v315
        %v635 = vunpack.c.h.b16 %v315
        %v636 = vunpack.c.l.b16 %v316
        %v637 = vunpack.c.h.b16 %v316
        %v638 = vunpack.c.l.b16 %v317
        %v639 = vunpack.c.h.b16 %v317
        %v640 = vunpack.c.l.b16 %v318
        %v641 = vunpack.c.h.b16 %v318
        %v642 = vunpack.c.l.b16 %v319
        %v643 = vunpack.c.h.b16 %v319
        %v644 = vunpack.c.l.b16 %v320
        %v645 = vunpack.c.h.b16 %v320
        %v646 = vunpack.c.l.b16 %v321
        %v647 = vunpack.c.h.b16 %v321
        %v648 = vunpack.c.l.b16 %v322
        %v649 = vunpack.c.h.b16 %v322
        %v650 = vunpack.c.l.b16 %v323
        %v651 = vunpack.c.h.b16 %v323
        %v652 = vpack.c.b16 %v620, %v604
        %v653 = vpack.c.b16 %v621, %v605
        %v654 = vpack.c.b16 %v622, %v606
        %v655 = vpack.c.b16 %v623, %v607
        %v656 = vpack.c.b16 %v624, %v608
        %v657 = vpack.c.b16 %v625, %v609
        %v658 = vpack.c.b16 %v626, %v610
        %v659 = vpack.c.b16 %v627, %v611
        %v660 = vpack.c.b16 %v628, %v612
        %v661 = vpack.c.b16 %v629, %v613
        %v662 = vpack.c.b16 %v630, %v614
        %v663 = vpack.c.b16 %v631, %v615
        %v664 = vpack.c.b16 %v632, %v616
        %v665 = vpack.c.b16 %v633, %v617
        %v666 = vpack.c.b16 %v634, %v618
        %v667 = vpack.c.b16 %v635, %v619
        %v668 = vpack.c.b16 %v636, %v636
        %v669 = vpack.c.b16 %v637, %v637
        %v670 = vpack.c.b16 %v638, %v638
        %v671 = vpack.c.b16 %v639, %v639
        %v672 = vpack.c.b16 %v640, %v640
        %v673 = vpack.c.b16 %v641, %v641
        %v674 = vpack.c.b16 %v642, %v642
        %v675 = vpack.c.b16 %v643, %v643
        %v676 = vpack.c.b16 %v644, %v644
        %v677 = vpack.c.b16 %v645, %v645
        %v678 = vpack.c.b16 %v646, %v646
        %v679 = vpack.c.b16 %v647, %v647
        %v680 = vpack.c.b16 %v648, %v648
        %v681 = vpack.c.b16 %v649, %v649
        %v682 = vpack.c.b16 %v650, %v650
        %v683 = vpack.c.b16 %v651, %v651
        %v972 = vunpack.c.l.b16 %v324
        %v973 = vunpack.c.h.b16 %v324
        %v974 = vunpack.c.l.b16 %v325
        %v975 = vunpack.c.h.b16 %v325
        %v976 = vunpack.c.l.b16 %v326
        %v977 = vunpack.c.h.b16 %v326
        %v978 = vunpack.c.l.b16 %v327
        %v979 = vunpack.c.h.b16 %v327
        %v980 = vunpack.c.l.b16 %v328
        %v981 = vunpack.c.h.b16 %v328
        %v982 = vunpack.c.l.b16 %v329
        %v983 = vunpack.c.h.b16 %v329
        %v984 = vunpack.c.l.b16 %v330
        %v985 = vunpack.c.h.b16 %v330
        %v986 = vunpack.c.l.b16 %v331
        %v987 = vunpack.c.h.b16 %v331
        %v988 = vunpack.c.l.b16 %v332
        %v989 = vunpack.c.h.b16 %v332
        %v990 = vunpack.c.l.b16 %v333
        %v991 = vunpack.c.h.b16 %v333
        %v992 = vunpack.c.l.b16 %v334
        %v993 = vunpack.c.h.b16 %v334
        %v994 = vunpack.c.l.b16 %v335
        %v995 = vunpack.c.h.b16 %v335
        %v996 = vunpack.c.l.b16 %v336
        %v997 = vunpack.c.h.b16 %v336
        %v998 = vunpack.c.l.b16 %v337
        %v999 = vunpack.c.h.b16 %v337
        %v1000 = vunpack.c.l.b16 %v338
        %v1001 = vunpack.c.h.b16 %v338
        %v1002 = vunpack.c.l.b16 %v339
        %v1003 = vunpack.c.h.b16 %v339
        %v1004 = vunpack.c.l.b16 %v340
        %v1005 = vunpack.c.h.b16 %v340
        %v1006 = vunpack.c.l.b16 %v341
        %v1007 = vunpack.c.h.b16 %v341
        %v1008 = vunpack.c.l.b16 %v342
        %v1009 = vunpack.c.h.b16 %v342
        %v1010 = vunpack.c.l.b16 %v343
        %v1011 = vunpack.c.h.b16 %v343
        %v1012 = vunpack.c.l.b16 %v344
        %v1013 = vunpack.c.h.b16 %v344
        %v1014 = vunpack.c.l.b16 %v345
        %v1015 = vunpack.c.h.b16 %v345
        %v1016 = vunpack.c.l.b16 %v346
        %v1017 = vunpack.c.h.b16 %v346
        %v1018 = vunpack.c.l.b16 %v347
        %v1019 = vunpack.c.h.b16 %v347
        %v1020 = vunpack.c.l.b16 %v348
        %v1021 = vunpack.c.h.b16 %v348
        %v1022 = vunpack.c.l.b16 %v349
        %v1023 = vunpack.c.h.b16 %v349
        %v1024 = vunpack.c.l.b16 %v350
        %v1025 = vunpack.c.h.b16 %v350
        %v1026 = vunpack.c.l.b16 %v351
        %v1027 = vunpack.c.h.b16 %v351
        %v1028 = vunpack.c.l.b16 %v352
        %v1029 = vunpack.c.h.b16 %v352
        %v1030 = vunpack.c.l.b16 %v353
        %v1031 = vunpack.c.h.b16 %v353
        %v1032 = vunpack.c.l.b16 %v354
        %v1033 = vunpack.c.h.b16 %v354
        %v1034 = vunpack.c.l.b16 %v355
        %v1035 = vunpack.c.h.b16 %v355
        %v1036 = vunpack.c.l.b16 %v356
        %v1037 = vunpack.c.h.b16 %v356
        %v1038 = vunpack.c.l.b16 %v357
        %v1039 = vunpack.c.h.b16 %v357
        %v1040 = vunpack.c.l.b16 %v358
        %v1041 = vunpack.c.h.b16 %v358
        %v1042 = vunpack.c.l.b16 %v359
        %v1043 = vunpack.c.h.b16 %v359
        %v1044 = vunpack.c.l.b16 %v360
        %v1045 = vunpack.c.h.b16 %v360
        %v1046 = vunpack.c.l.b16 %v361
        %v1047 = vunpack.c.h.b16 %v361
        %v1048 = vunpack.c.l.b16 %v362
        %v1049 = vunpack.c.h.b16 %v362
        %v1050 = vunpack.c.l.b16 %v363
        %v1051 = vunpack.c.h.b16 %v363
        %v1052 = vunpack.c.l.b16 %v364
        %v1053 = vunpack.c.h.b16 %v364
        %v1054 = vunpack.c.l.b16 %v365
        %v1055 = vunpack.c.h.b16 %v365
        %v1056 = vunpack.c.l.b16 %v366
        %v1057 = vunpack.c.h.b16 %v366
        %v1058 = vunpack.c.l.b16 %v367
        %v1059 = vunpack.c.h.b16 %v367
        %v1060 = vunpack.c.l.b16 %v368
        %v1061 = vunpack.c.h.b16 %v368
        %v1062 = vunpack.c.l.b16 %v369
        %v1063 = vunpack.c.h.b16 %v369
        %v1064 = vunpack.c.l.b16 %v370
        %v1065 = vunpack.c.h.b16 %v370
        %v1066 = vunpack.c.l.b16 %v371
        %v1067 = vunpack.c.h.b16 %v371
        %v1068 = vunpack.c.l.b16 %v372
        %v1069 = vunpack.c.h.b16 %v372
        %v1070 = vunpack.c.l.b16 %v373
        %v1071 = vunpack.c.h.b16 %v373
        %v1072 = vunpack.c.l.b16 %v374
        %v1073 = vunpack.c.h.b16 %v374
        %v1074 = vunpack.c.l.b16 %v375
        %v1075 = vunpack.c.h.b16 %v375
        %v1076 = vunpack.c.l.b16 %v376
        %v1077 = vunpack.c.h.b16 %v376
        %v1078 = vunpack.c.l.b16 %v377
        %v1079 = vunpack.c.h.b16 %v377
        %v1080 = vunpack.c.l.b16 %v378
        %v1081 = vunpack.c.h.b16 %v378
        %v1082 = vunpack.c.l.b16 %v379
        %v1083 = vunpack.c.h.b16 %v379
        %v1084 = vunpack.c.l.b16 %v380
        %v1085 = vunpack.c.h.b16 %v380
        %v1086 = vunpack.c.l.b16 %v381
        %v1087 = vunpack.c.h.b16 %v381
        %v1088 = vunpack.c.l.b16 %v382
        %v1089 = vunpack.c.h.b16 %v382
        %v1090 = vunpack.c.l.b16 %v383
        %v1091 = vunpack.c.h.b16 %v383
        %v1092 = vunpack.c.l.b16 %v384
        %v1093 = vunpack.c.h.b16 %v384
        %v1094 = vunpack.c.l.b16 %v385
        %v1095 = vunpack.c.h.b16 %v385
        %v1096 = vunpack.c.l.b16 %v386
        %v1097 = vunpack.c.h.b16 %v386
        %v1098 = vunpack.c.l.b16 %v387
        %v1099 = vunpack.c.h.b16 %v387
        %v1100 = vunpack.c.l.b16 %v388
        %v1101 = vunpack.c.h.b16 %v388
        %v1102 = vunpack.c.l.b16 %v389
        %v1103 = vunpack.c.h.b16 %v389
        %v1104 = vunpack.c.l.b16 %v390
        %v1105 = vunpack.c.h.b16 %v390
        %v1106 = vunpack.c.l.b16 %v391
        %v1107 = vunpack.c.h.b16 %v391
        %v1108 = vunpack.c.l.b16 %v392
        %v1109 = vunpack.c.h.b16 %v392
        %v1110 = vunpack.c.l.b16 %v393
        %v1111 = vunpack.c.h.b16 %v393
        %v1112 = vunpack.c.l.b16 %v394
        %v1113 = vunpack.c.h.b16 %v394
        %v1114 = vunpack.c.l.b16 %v395
        %v1115 = vunpack.c.h.b16 %v395
        %v1116 = vunpack.c.l.b16 %v396
        %v1117 = vunpack.c.h.b16 %v396
        %v1118 = vunpack.c.l.b16 %v397
        %v1119 = vunpack.c.h.b16 %v397
        %v1120 = vunpack.c.l.b16 %v398
        %v1121 = vunpack.c.h.b16 %v398
        %v1122 = vunpack.c.l.b16 %v399
        %v1123 = vunpack.c.h.b16 %v399
        %v1124 = vunpack.c.l.b16 %v400
        %v1125 = vunpack.c.h.b16 %v400
        %v1126 = vunpack.c.l.b16 %v401
        %v1127 = vunpack.c.h.b16 %v401
        %v1128 = vunpack.c.l.b16 %v402
        %v1129 = vunpack.c.h.b16 %v402
        %v1130 = vunpack.c.l.b16 %v403
        %v1131 = vunpack.c.h.b16 %v403
        %v1132 = vunpack.c.l.b16 %v404
        %v1133 = vunpack.c.h.b16 %v404
        %v1134 = vunpack.c.l.b16 %v405
        %v1135 = vunpack.c.h.b16 %v405
        %v1136 = vunpack.c.l.b16 %v406
        %v1137 = vunpack.c.h.b16 %v406
        %v1138 = vunpack.c.l.b16 %v407
        %v1139 = vunpack.c.h.b16 %v407
        %v1140 = vunpack.c.l.b16 %v408
        %v1141 = vunpack.c.h.b16 %v408
        %v1142 = vunpack.c.l.b16 %v409
        %v1143 = vunpack.c.h.b16 %v409
        %v1144 = vunpack.c.l.b16 %v410
        %v1145 = vunpack.c.h.b16 %v410
        %v1146 = vunpack.c.l.b16 %v411
        %v1147 = vunpack.c.h.b16 %v411
        %v1148 = vunpack.c.l.b16 %v412
        %v1149 = vunpack.c.h.b16 %v412
        %v1150 = vunpack.c.l.b16 %v413
        %v1151 = vunpack.c.h.b16 %v413
        %v1152 = vunpack.c.l.b16 %v414
        %v1153 = vunpack.c.h.b16 %v414
        %v1154 = vunpack.c.l.b16 %v415
        %v1155 = vunpack.c.h.b16 %v415
        %v1156 = vunpack.c.l.b16 %v416
        %v1157 = vunpack.c.h.b16 %v416
        %v1158 = vunpack.c.l.b16 %v417
        %v1159 = vunpack.c.h.b16 %v417
        %v1160 = vunpack.c.l.b16 %v418
        %v1161 = vunpack.c.h.b16 %v418
        %v1162 = vunpack.c.l.b16 %v419
        %v1163 = vunpack.c.h.b16 %v419
        %v1164 = vunpack.c.l.b16 %v420
        %v1165 = vunpack.c.h.b16 %v420
        %v1166 = vunpack.c.l.b16 %v421
        %v1167 = vunpack.c.h.b16 %v421
        %v1168 = vunpack.c.l.b16 %v422
        %v1169 = vunpack.c.h.b16 %v422
        %v1170 = vunpack.c.l.b16 %v423
        %v1171 = vunpack.c.h.b16 %v423
        %v1172 = vunpack.c.l.b16 %v424
        %v1173 = vunpack.c.h.b16 %v424
        %v1174 = vunpack.c.l.b16 %v425
        %v1175 = vunpack.c.h.b16 %v425
        %v1176 = vunpack.c.l.b16 %v426
        %v1177 = vunpack.c.h.b16 %v426
        %v1178 = vunpack.c.l.b16 %v427
        %v1179 = vunpack.c.h.b16 %v427
        %v1180 = vunpack.c.l.b16 %v428
        %v1181 = vunpack.c.h.b16 %v428
        %v1182 = vunpack.c.l.b16 %v429
        %v1183 = vunpack.c.h.b16 %v429
        %v1184 = vunpack.c.l.b16 %v430
        %v1185 = vunpack.c.h.b16 %v430
        %v1186 = vunpack.c.l.b16 %v431
        %v1187 = vunpack.c.h.b16 %v431
        %v1188 = vunpack.c.l.b16 %v432
        %v1189 = vunpack.c.h.b16 %v432
        %v1190 = vunpack.c.l.b16 %v433
        %v1191 = vunpack.c.h.b16 %v433
        %v1192 = vunpack.c.l.b16 %v434
        %v1193 = vunpack.c.h.b16 %v434
        %v1194 = vunpack.c.l.b16 %v435
        %v1195 = vunpack.c.h.b16 %v435
        %v1196 = vunpack.c.l.b16 %v436
        %v1197 = vunpack.c.h.b16 %v436
        %v1198 = vunpack.c.l.b16 %v437
        %v1199 = vunpack.c.h.b16 %v437
        %v1200 = vunpack.c.l.b16 %v438
        %v1201 = vunpack.c.h.b16 %v438
        %v1202 = vunpack.c.l.b16 %v439
        %v1203 = vunpack.c.h.b16 %v439
        %v1204 = vunpack.c.l.b16 %v440
        %v1205 = vunpack.c.h.b16 %v440
        %v1206 = vunpack.c.l.b16 %v441
        %v1207 = vunpack.c.h.b16 %v441
        %v1208 = vunpack.c.l.b16 %v442
        %v1209 = vunpack.c.h.b16 %v442
        %v1210 = vunpack.c.l.b16 %v443
        %v1211 = vunpack.c.h.b16 %v443
        %v1212 = vunpack.c.l.b16 %v444
        %v1213 = vunpack.c.h.b16 %v444
        %v1214 = vunpack.c.l.b16 %v445
        %v1215 = vunpack.c.h.b16 %v445
        %v1216 = vunpack.c.l.b16 %v446
        %v1217 = vunpack.c.h.b16 %v446
        %v1218 = vunpack.c.l.b16 %v447
        %v1219 = vunpack.c.h.b16 %v447
        %v1220 = vunpack.c.l.b16 %v448
        %v1221 = vunpack.c.h.b16 %v448
        %v1222 = vunpack.c.l.b16 %v449
        %v1223 = vunpack.c.h.b16 %v449
        %v1224 = vunpack.c.l.b16 %v450
        %v1225 = vunpack.c.h.b16 %v450
        %v1226 = vunpack.c.l.b16 %v451
        %v1227 = vunpack.c.h.b16 %v451
        %v1228 = vunpack.c.l.b16 %v452
        %v1229 = vunpack.c.h.b16 %v452
        %v1230 = vunpack.c.l.b16 %v453
        %v1231 = vunpack.c.h.b16 %v453
        %v1232 = vunpack.c.l.b16 %v454
        %v1233 = vunpack.c.h.b16 %v454
        %v1234 = vunpack.c.l.b16 %v455
        %v1235 = vunpack.c.h.b16 %v455
        %v1236 = vunpack.c.l.b16 %v456
        %v1237 = vunpack.c.h.b16 %v456
        %v1238 = vunpack.c.l.b16 %v457
        %v1239 = vunpack.c.h.b16 %v457
        %v1240 = vunpack.c.l.b16 %v458
        %v1241 = vunpack.c.h.b16 %v458
        %v1242 = vunpack.c.l.b16 %v459
        %v1243 = vunpack.c.h.b16 %v459
        %v1244 = vunpack.c.l.b16 %v460
        %v1245 = vunpack.c.h.b16 %v460
        %v1246 = vunpack.c.l.b16 %v461
        %v1247 = vunpack.c.h.b16 %v461
        %v1248 = vunpack.c.l.b16 %v462
        %v1249 = vunpack.c.h.b16 %v462
        %v1250 = vunpack.c.l.b16 %v463
        %v1251 = vunpack.c.h.b16 %v463
        %v1252 = vunpack.c.l.b16 %v464
        %v1253 = vunpack.c.h.b16 %v464
        %v1254 = vunpack.c.l.b16 %v465
        %v1255 = vunpack.c.h.b16 %v465
        %v1256 = vunpack.c.l.b16 %v466
        %v1257 = vunpack.c.h.b16 %v466
        %v1258 = vunpack.c.l.b16 %v467
        %v1259 = vunpack.c.h.b16 %v467
        %v1260 = vunpack.c.l.b16 %v468
        %v1261 = vunpack.c.h.b16 %v468
        %v1262 = vunpack.c.l.b16 %v469
        %v1263 = vunpack.c.h.b16 %v469
        %v1264 = vunpack.c.l.b16 %v470
        %v1265 = vunpack.c.h.b16 %v470
        %v1266 = vunpack.c.l.b16 %v471
        %v1267 = vunpack.c.h.b16 %v471
        %v1268 = vunpack.c.l.b16 %v472
        %v1269 = vunpack.c.h.b16 %v472
        %v1270 = vunpack.c.l.b16 %v473
        %v1271 = vunpack.c.h.b16 %v473
        %v1272 = vunpack.c.l.b16 %v474
        %v1273 = vunpack.c.h.b16 %v474
        %v1274 = vunpack.c.l.b16 %v475
        %v1275 = vunpack.c.h.b16 %v475
        %v1276 = vunpack.c.l.b16 %v476
        %v1277 = vunpack.c.h.b16 %v476
        %v1278 = vunpack.c.l.b16 %v477
        %v1279 = vunpack.c.h.b16 %v477
        %v1280 = vunpack.c.l.b16 %v478
        %v1281 = vunpack.c.h.b16 %v478
        %v1282 = vunpack.c.l.b16 %v479
        %v1283 = vunpack.c.h.b16 %v479
        %v1284 = vunpack.c.l.b16 %v480
        %v1285 = vunpack.c.h.b16 %v480
        %v1286 = vunpack.c.l.b16 %v481
        %v1287 = vunpack.c.h.b16 %v481
        %v1288 = vunpack.c.l.b16 %v482
        %v1289 = vunpack.c.h.b16 %v482
        %v1290 = vunpack.c.l.b16 %v483
        %v1291 = vunpack.c.h.b16 %v483
        %v1292 = vunpack.c.l.b16 %v484
        %v1293 = vunpack.c.h.b16 %v484
        %v1294 = vunpack.c.l.b16 %v485
        %v1295 = vunpack.c.h.b16 %v485
        %v1296 = vunpack.c.l.b16 %v486
        %v1297 = vunpack.c.h.b16 %v486
        %v1298 = vunpack.c.l.b16 %v487
        %v1299 = vunpack.c.h.b16 %v487
        %v1300 = vunpack.c.l.b16 %v488
        %v1301 = vunpack.c.h.b16 %v488
        %v1302 = vunpack.c.l.b16 %v489
        %v1303 = vunpack.c.h.b16 %v489
        %v1304 = vunpack.c.l.b16 %v490
        %v1305 = vunpack.c.h.b16 %v490
        %v1306 = vunpack.c.l.b16 %v491
        %v1307 = vunpack.c.h.b16 %v491
        %v1308 = vunpack.c.l.b16 %v492
        %v1309 = vunpack.c.h.b16 %v492
        %v1310 = vunpack.c.l.b16 %v493
        %v1311 = vunpack.c.h.b16 %v493
        %v1312 = vunpack.c.l.b16 %v494
        %v1313 = vunpack.c.h.b16 %v494
        %v1314 = vunpack.c.l.b16 %v495
        %v1315 = vunpack.c.h.b16 %v495
        %v1316 = vunpack.c.l.b16 %v496
        %v1317 = vunpack.c.h.b16 %v496
        %v1318 = vunpack.c.l.b16 %v497
        %v1319 = vunpack.c.h.b16 %v497
        %v1320 = vunpack.c.l.b16 %v498
        %v1321 = vunpack.c.h.b16 %v498
        %v1322 = vunpack.c.l.b16 %v499
        %v1323 = vunpack.c.h.b16 %v499
        %v1324 = vunpack.c.l.b16 %v500
        %v1325 = vunpack.c.h.b16 %v500
        %v1326 = vunpack.c.l.b16 %v501
        %v1327 = vunpack.c.h.b16 %v501
        %v1328 = vunpack.c.l.b16 %v502
        %v1329 = vunpack.c.h.b16 %v502
        %v1330 = vunpack.c.l.b16 %v503
        %v1331 = vunpack.c.h.b16 %v503
        %v1332 = vunpack.c.l.b16 %v504
        %v1333 = vunpack.c.h.b16 %v504
        %v1334 = vunpack.c.l.b16 %v505
        %v1335 = vunpack.c.h.b16 %v505
        %v1336 = vunpack.c.l.b16 %v506
        %v1337 = vunpack.c.h.b16 %v506
        %v1338 = vunpack.c.l.b16 %v507
        %v1339 = vunpack.c.h.b16 %v507
        %v1340 = vunpack.c.l.b16 %v508
        %v1341 = vunpack.c.h.b16 %v508
        %v1342 = vunpack.c.l.b16 %v509
        %v1343 = vunpack.c.h.b16 %v509
        %v1344 = vunpack.c.l.b16 %v510
        %v1345 = vunpack.c.h.b16 %v510
        %v1346 = vunpack.c.l.b16 %v511
        %v1347 = vunpack.c.h.b16 %v511
        %v1348 = vunpack.c.l.b16 %v512
        %v1349 = vunpack.c.h.b16 %v512
        %v1350 = vunpack.c.l.b16 %v513
        %v1351 = vunpack.c.h.b16 %v513
        %v1352 = vunpack.c.l.b16 %v514
        %v1353 = vunpack.c.h.b16 %v514
        %v1354 = vunpack.c.l.b16 %v515
        %v1355 = vunpack.c.h.b16 %v515
        %v1356 = vunpack.c.l.b16 %v516
        %v1357 = vunpack.c.h.b16 %v516
        %v1358 = vunpack.c.l.b16 %v517
        %v1359 = vunpack.c.h.b16 %v517
        %v1360 = vunpack.c.l.b16 %v518
        %v1361 = vunpack.c.h.b16 %v518
        %v1362 = vunpack.c.l.b16 %v519
        %v1363 = vunpack.c.h.b16 %v519
        %v1364 = vunpack.c.l.b16 %v520
        %v1365 = vunpack.c.h.b16 %v520
        %v1366 = vunpack.c.l.b16 %v521
        %v1367 = vunpack.c.h.b16 %v521
        %v1368 = vunpack.c.l.b16 %v522
        %v1369 = vunpack.c.h.b16 %v522
        %v1370 = vunpack.c.l.b16 %v523
        %v1371 = vunpack.c.h.b16 %v523
        %v1372 = vunpack.c.l.b16 %v524
        %v1373 = vunpack.c.h.b16 %v524
        %v1374 = vunpack.c.l.b16 %v525
        %v1375 = vunpack.c.h.b16 %v525
        %v1376 = vunpack.c.l.b16 %v526
        %v1377 = vunpack.c.h.b16 %v526
        %v1378 = vunpack.c.l.b16 %v527
        %v1379 = vunpack.c.h.b16 %v527
        %v1380 = vunpack.c.l.b16 %v528
        %v1381 = vunpack.c.h.b16 %v528
        %v1382 = vunpack.c.l.b16 %v529
        %v1383 = vunpack.c.h.b16 %v529
        %v1384 = vunpack.c.l.b16 %v530
        %v1385 = vunpack.c.h.b16 %v530
        %v1386 = vunpack.c.l.b16 %v531
        %v1387 = vunpack.c.h.b16 %v531
        %v1388 = vunpack.c.l.b16 %v532
        %v1389 = vunpack.c.h.b16 %v532
        %v1390 = vunpack.c.l.b16 %v533
        %v1391 = vunpack.c.h.b16 %v533
        %v1392 = vunpack.c.l.b16 %v534
        %v1393 = vunpack.c.h.b16 %v534
        %v1394 = vunpack.c.l.b16 %v535
        %v1395 = vunpack.c.h.b16 %v535
        %v1396 = vunpack.c.l.b16 %v536
        %v1397 = vunpack.c.h.b16 %v536
        %v1398 = vunpack.c.l.b16 %v537
        %v1399 = vunpack.c.h.b16 %v537
        %v1400 = vunpack.c.l.b16 %v538
        %v1401 = vunpack.c.h.b16 %v538
        %v1402 = vunpack.c.l.b16 %v539
        %v1403 = vunpack.c.h.b16 %v539
        %v1404 = vunpack.c.l.b16 %v540
        %v1405 = vunpack.c.h.b16 %v540
        %v1406 = vunpack.c.l.b16 %v541
        %v1407 = vunpack.c.h.b16 %v541
        %v1408 = vunpack.c.l.b16 %v542
        %v1409 = vunpack.c.h.b16 %v542
        %v1410 = vunpack.c.l.b16 %v543
        %v1411 = vunpack.c.h.b16 %v543
        %v1412 = vunpack.c.l.b16 %v544
        %v1413 = vunpack.c.h.b16 %v544
        %v1414 = vunpack.c.l.b16 %v545
        %v1415 = vunpack.c.h.b16 %v545
        %v1416 = vunpack.c.l.b16 %v546
        %v1417 = vunpack.c.h.b16 %v546
        %v1418 = vunpack.c.l.b16 %v547
        %v1419 = vunpack.c.h.b16 %v547
        %v1420 = vunpack.c.l.b16 %v548
        %v1421 = vunpack.c.h.b16 %v548
        %v1422 = vunpack.c.l.b16 %v549
        %v1423 = vunpack.c.h.b16 %v549
        %v1424 = vunpack.c.l.b16 %v550
        %v1425 = vunpack.c.h.b16 %v550
        %v1426 = vunpack.c.l.b16 %v551
        %v1427 = vunpack.c.h.b16 %v551
        %v1428 = vunpack.c.l.b16 %v552
        %v1429 = vunpack.c.h.b16 %v552
        %v1430 = vunpack.c.l.b16 %v553
        %v1431 = vunpack.c.h.b16 %v553
        %v1432 = vunpack.c.l.b16 %v554
        %v1433 = vunpack.c.h.b16 %v554
        %v1434 = vunpack.c.l.b16 %v555
        %v1435 = vunpack.c.h.b16 %v555
        %v1436 = vunpack.c.l.b16 %v556
        %v1437 = vunpack.c.h.b16 %v556
        %v1438 = vunpack.c.l.b16 %v557
        %v1439 = vunpack.c.h.b16 %v557
        %v1440 = vunpack.c.l.b16 %v558
        %v1441 = vunpack.c.h.b16 %v558
        %v1442 = vunpack.c.l.b16 %v559
        %v1443 = vunpack.c.h.b16 %v559
        %v1444 = vunpack.c.l.b16 %v560
        %v1445 = vunpack.c.h.b16 %v560
        %v1446 = vunpack.c.l.b16 %v561
        %v1447 = vunpack.c.h.b16 %v561
        %v1448 = vunpack.c.l.b16 %v562
        %v1449 = vunpack.c.h.b16 %v562
        %v1450 = vunpack.c.l.b16 %v563
        %v1451 = vunpack.c.h.b16 %v563
        %v1452 = vunpack.c.l.b16 %v564
        %v1453 = vunpack.c.h.b16 %v564
        %v1454 = vunpack.c.l.b16 %v565
        %v1455 = vunpack.c.h.b16 %v565
        %v1456 = vunpack.c.l.b16 %v566
        %v1457 = vunpack.c.h.b16 %v566
        %v1458 = vunpack.c.l.b16 %v567
        %v1459 = vunpack.c.h.b16 %v567
        %v1460 = vunpack.c.l.b16 %v568
        %v1461 = vunpack.c.h.b16 %v568
        %v1462 = vunpack.c.l.b16 %v569
        %v1463 = vunpack.c.h.b16 %v569
        %v1464 = vunpack.c.l.b16 %v570
        %v1465 = vunpack.c.h.b16 %v570
        %v1466 = vunpack.c.l.b16 %v571
        %v1467 = vunpack.c.h.b16 %v571
        %v1468 = vunpack.c.l.b16 %v572
        %v1469 = vunpack.c.h.b16 %v572
        %v1470 = vunpack.c.l.b16 %v573
        %v1471 = vunpack.c.h.b16 %v573
        %v1472 = vunpack.c.l.b16 %v574
        %v1473 = vunpack.c.h.b16 %v574
        %v1474 = vunpack.c.l.b16 %v575
        %v1475 = vunpack.c.h.b16 %v575
        %v1476 = vunpack.c.l.b16 %v576
        %v1477 = vunpack.c.h.b16 %v576
        %v1478 = vunpack.c.l.b16 %v577
        %v1479 = vunpack.c.h.b16 %v577
        %v1480 = vunpack.c.l.b16 %v578
        %v1481 = vunpack.c.h.b16 %v578
        %v1482 = vunpack.c.l.b16 %v579
        %v1483 = vunpack.c.h.b16 %v579
        %v1484 = vpack.c.b16 %v974, %v972
        %v1485 = vpack.c.b16 %v975, %v973
        %v1486 = vpack.c.b16 %v978, %v976
        %v1487 = vpack.c.b16 %v979, %v977
        %v1488 = vpack.c.b16 %v982, %v980
        %v1489 = vpack.c.b16 %v983, %v981
        %v1490 = vpack.c.b16 %v986, %v984
        %v1491 = vpack.c.b16 %v987, %v985
        %v1492 = vpack.c.b16 %v990, %v988
        %v1493 = vpack.c.b16 %v991, %v989
        %v1494 = vpack.c.b16 %v994, %v992
        %v1495 = vpack.c.b16 %v995, %v993
        %v1496 = vpack.c.b16 %v998, %v996
        %v1497 = vpack.c.b16 %v999, %v997
        %v1498 = vpack.c.b16 %v1002, %v1000
        %v1499 = vpack.c.b16 %v1003, %v1001
        %v1500 = vpack.c.b16 %v1006, %v1004
        %v1501 = vpack.c.b16 %v1007, %v1005
        %v1502 = vpack.c.b16 %v1010, %v1008
        %v1503 = vpack.c.b16 %v1011, %v1009
        %v1504 = vpack.c.b16 %v1014, %v1012
        %v1505 = vpack.c.b16 %v1015, %v1013
        %v1506 = vpack.c.b16 %v1018, %v1016
        %v1507 = vpack.c.b16 %v1019, %v1017
        %v1508 = vpack.c.b16 %v1022, %v1020
        %v1509 = vpack.c.b16 %v1023, %v1021
        %v1510 = vpack.c.b16 %v1026, %v1024
        %v1511 = vpack.c.b16 %v1027, %v1025
        %v1512 = vpack.c.b16 %v1030, %v1028
        %v1513 = vpack.c.b16 %v1031, %v1029
        %v1514 = vpack.c.b16 %v1034, %v1032
        %v1515 = vpack.c.b16 %v1035, %v1033
        %v1516 = vpack.c.b16 %v1038, %v1036
        %v1517 = vpack.c.b16 %v1039, %v1037
        %v1518 = vpack.c.b16 %v1042, %v1040
        %v1519 = vpack.c.b16 %v1043, %v1041
        %v1520 = vpack.c.b16 %v1046, %v1044
        %v1521 = vpack.c.b16 %v1047, %v1045
        %v1522 = vpack.c.b16 %v1050, %v1048
        %v1523 = vpack.c.b16 %v1051, %v1049
        %v1524 = vpack.c.b16 %v1054, %v1052
        %v1525 = vpack.c.b16 %v1055, %v1053
        %v1526 = vpack.c.b16 %v1058, %v1056
        %v1527 = vpack.c.b16 %v1059, %v1057
        %v1528 = vpack.c.b16 %v1062, %v1060
        %v1529 = vpack.c.b16 %v1063, %v1061
        %v1530 = vpack.c.b16 %v1066, %v1064
        %v1531 = vpack.c.b16 %v1067, %v1065
        %v1532 = vpack.c.b16 %v1070, %v1068
        %v1533 = vpack.c.b16 %v1071, %v1069
        %v1534 = vpack.c.b16 %v1074, %v1072
        %v1535 = vpack.c.b16 %v1075, %v1073
        %v1536 = vpack.c.b16 %v1078, %v1076
        %v1537 = vpack.c.b16 %v1079, %v1077
        %v1538 = vpack.c.b16 %v1082, %v1080
        %v1539 = vpack.c.b16 %v1083, %v1081
        %v1540 = vpack.c.b16 %v1086, %v1084
        %v1541 = vpack.c.b16 %v1087, %v1085
        %v1542 = vpack.c.b16 %v1090, %v1088
        %v1543 = vpack.c.b16 %v1091, %v1089
        %v1544 = vpack.c.b16 %v1094, %v1092
        %v1545 = vpack.c.b16 %v1095, %v1093
        %v1546 = vpack.c.b16 %v1098, %v1096
        %v1547 = vpack.c.b16 %v1099, %v1097
        %v1548 = vpack.c.b16 %v1102, %v1100
        %v1549 = vpack.c.b16 %v1103, %v1101
        %v1550 = vpack.c.b16 %v1106, %v1104
        %v1551 = vpack.c.b16 %v1107, %v1105
        %v1552 = vpack.c.b16 %v1110, %v1108
        %v1553 = vpack.c.b16 %v1111, %v1109
        %v1554 = vpack.c.b16 %v1114, %v1112
        %v1555 = vpack.c.b16 %v1115, %v1113
        %v1556 = vpack.c.b16 %v1118, %v1116
        %v1557 = vpack.c.b16 %v1119, %v1117
        %v1558 = vpack.c.b16 %v1122, %v1120
        %v1559 = vpack.c.b16 %v1123, %v1121
        %v1560 = vpack.c.b16 %v1126, %v1124
        %v1561 = vpack.c.b16 %v1127, %v1125
        %v1562 = vpack.c.b16 %v1130, %v1128
        %v1563 = vpack.c.b16 %v1131, %v1129
        %v1564 = vpack.c.b16 %v1134, %v1132
        %v1565 = vpack.c.b16 %v1135, %v1133
        %v1566 = vpack.c.b16 %v1138, %v1136
        %v1567 = vpack.c.b16 %v1139, %v1137
        %v1568 = vpack.c.b16 %v1142, %v1140
        %v1569 = vpack.c.b16 %v1143, %v1141
        %v1570 = vpack.c.b16 %v1146, %v1144
        %v1571 = vpack.c.b16 %v1147, %v1145
        %v1572 = vpack.c.b16 %v1150, %v1148
        %v1573 = vpack.c.b16 %v1151, %v1149
        %v1574 = vpack.c.b16 %v1154, %v1152
        %v1575 = vpack.c.b16 %v1155, %v1153
        %v1576 = vpack.c.b16 %v1158, %v1156
        %v1577 = vpack.c.b16 %v1159, %v1157
        %v1578 = vpack.c.b16 %v1162, %v1160
        %v1579 = vpack.c.b16 %v1163, %v1161
        %v1580 = vpack.c.b16 %v1166, %v1164
        %v1581 = vpack.c.b16 %v1167, %v1165
        %v1582 = vpack.c.b16 %v1170, %v1168
        %v1583 = vpack.c.b16 %v1171, %v1169
        %v1584 = vpack.c.b16 %v1174, %v1172
        %v1585 = vpack.c.b16 %v1175, %v1173
        %v1586 = vpack.c.b16 %v1178, %v1176
        %v1587 = vpack.c.b16 %v1179, %v1177
        %v1588 = vpack.c.b16 %v1182, %v1180
        %v1589 = vpack.c.b16 %v1183, %v1181
        %v1590 = vpack.c.b16 %v1186, %v1184
        %v1591 = vpack.c.b16 %v1187, %v1185
        %v1592 = vpack.c.b16 %v1190, %v1188
        %v1593 = vpack.c.b16 %v1191, %v1189
        %v1594 = vpack.c.b16 %v1194, %v1192
        %v1595 = vpack.c.b16 %v1195, %v1193
        %v1596 = vpack.c.b16 %v1198, %v1196
        %v1597 = vpack.c.b16 %v1199, %v1197
        %v1598 = vpack.c.b16 %v1202, %v1200
        %v1599 = vpack.c.b16 %v1203, %v1201
        %v1600 = vpack.c.b16 %v1206, %v1204
        %v1601 = vpack.c.b16 %v1207, %v1205
        %v1602 = vpack.c.b16 %v1210, %v1208
        %v1603 = vpack.c.b16 %v1211, %v1209
        %v1604 = vpack.c.b16 %v1214, %v1212
        %v1605 = vpack.c.b16 %v1215, %v1213
        %v1606 = vpack.c.b16 %v1218, %v1216
        %v1607 = vpack.c.b16 %v1219, %v1217
        %v1608 = vpack.c.b16 %v1222, %v1220
        %v1609 = vpack.c.b16 %v1223, %v1221
        %v1610 = vpack.c.b16 %v1226, %v1224
        %v1611 = vpack.c.b16 %v1227, %v1225
        %v1612 = vpack.c.b16 %v1230, %v1228
        %v1613 = vpack.c.b16 %v1231, %v1229
        %v1614 = vpack.c.b16 %v1234, %v1232
        %v1615 = vpack.c.b16 %v1235, %v1233
        %v1616 = vpack.c.b16 %v1238, %v1236
        %v1617 = vpack.c.b16 %v1239, %v1237
        %v1618 = vpack.c.b16 %v1242, %v1240
        %v1619 = vpack.c.b16 %v1243, %v1241
        %v1620 = vpack.c.b16 %v1246, %v1244
        %v1621 = vpack.c.b16 %v1247, %v1245
        %v1622 = vpack.c.b16 %v1250, %v1248
        %v1623 = vpack.c.b16 %v1251, %v1249
        %v1624 = vpack.c.b16 %v1254, %v1252
        %v1625 = vpack.c.b16 %v1255, %v1253
        %v1626 = vpack.c.b16 %v1258, %v1256
        %v1627 = vpack.c.b16 %v1259, %v1257
        %v1628 = vpack.c.b16 %v1262, %v1260
        %v1629 = vpack.c.b16 %v1263, %v1261
        %v1630 = vpack.c.b16 %v1266, %v1264
        %v1631 = vpack.c.b16 %v1267, %v1265
        %v1632 = vpack.c.b16 %v1270, %v1268
        %v1633 = vpack.c.b16 %v1271, %v1269
        %v1634 = vpack.c.b16 %v1274, %v1272
        %v1635 = vpack.c.b16 %v1275, %v1273
        %v1636 = vpack.c.b16 %v1278, %v1276
        %v1637 = vpack.c.b16 %v1279, %v1277
        %v1638 = vpack.c.b16 %v1282, %v1280
        %v1639 = vpack.c.b16 %v1283, %v1281
        %v1640 = vpack.c.b16 %v1286, %v1284
        %v1641 = vpack.c.b16 %v1287, %v1285
        %v1642 = vpack.c.b16 %v1290, %v1288
        %v1643 = vpack.c.b16 %v1291, %v1289
        %v1644 = vpack.c.b16 %v1294, %v1292
        %v1645 = vpack.c.b16 %v1295, %v1293
        %v1646 = vpack.c.b16 %v1298, %v1296
        %v1647 = vpack.c.b16 %v1299, %v1297
        %v1648 = vpack.c.b16 %v1302, %v1300
        %v1649 = vpack.c.b16 %v1303, %v1301
        %v1650 = vpack.c.b16 %v1306, %v1304
        %v1651 = vpack.c.b16 %v1307, %v1305
        %v1652 = vpack.c.b16 %v1310, %v1308
        %v1653 = vpack.c.b16 %v1311, %v1309
        %v1654 = vpack.c.b16 %v1314, %v1312
        %v1655 = vpack.c.b16 %v1315, %v1313
        %v1656 = vpack.c.b16 %v1318, %v1316
        %v1657 = vpack.c.b16 %v1319, %v1317
        %v1658 = vpack.c.b16 %v1322, %v1320
        %v1659 = vpack.c.b16 %v1323, %v1321
        %v1660 = vpack.c.b16 %v1326, %v1324
        %v1661 = vpack.c.b16 %v1327, %v1325
        %v1662 = vpack.c.b16 %v1330, %v1328
        %v1663 = vpack.c.b16 %v1331, %v1329
        %v1664 = vpack.c.b16 %v1334, %v1332
        %v1665 = vpack.c.b16 %v1335, %v1333
        %v1666 = vpack.c.b16 %v1338, %v1336
        %v1667 = vpack.c.b16 %v1339, %v1337
        %v1668 = vpack.c.b16 %v1342, %v1340
        %v1669 = vpack.c.b16 %v1343, %v1341
        %v1670 = vpack.c.b16 %v1346, %v1344
        %v1671 = vpack.c.b16 %v1347, %v1345
        %v1672 = vpack.c.b16 %v1350, %v1348
        %v1673 = vpack.c.b16 %v1351, %v1349
        %v1674 = vpack.c.b16 %v1354, %v1352
        %v1675 = vpack.c.b16 %v1355, %v1353
        %v1676 = vpack.c.b16 %v1358, %v1356
        %v1677 = vpack.c.b16 %v1359, %v1357
        %v1678 = vpack.c.b16 %v1362, %v1360
        %v1679 = vpack.c.b16 %v1363, %v1361
        %v1680 = vpack.c.b16 %v1366, %v1364
        %v1681 = vpack.c.b16 %v1367, %v1365
        %v1682 = vpack.c.b16 %v1370, %v1368
        %v1683 = vpack.c.b16 %v1371, %v1369
        %v1684 = vpack.c.b16 %v1374, %v1372
        %v1685 = vpack.c.b16 %v1375, %v1373
        %v1686 = vpack.c.b16 %v1378, %v1376
        %v1687 = vpack.c.b16 %v1379, %v1377
        %v1688 = vpack.c.b16 %v1382, %v1380
        %v1689 = vpack.c.b16 %v1383, %v1381
        %v1690 = vpack.c.b16 %v1386, %v1384
        %v1691 = vpack.c.b16 %v1387, %v1385
        %v1692 = vpack.c.b16 %v1390, %v1388
        %v1693 = vpack.c.b16 %v1391, %v1389
        %v1694 = vpack.c.b16 %v1394, %v1392
        %v1695 = vpack.c.b16 %v1395, %v1393
        %v1696 = vpack.c.b16 %v1398, %v1396
        %v1697 = vpack.c.b16 %v1399, %v1397
        %v1698 = vpack.c.b16 %v1402, %v1400
        %v1699 = vpack.c.b16 %v1403, %v1401
        %v1700 = vpack.c.b16 %v1406, %v1404
        %v1701 = vpack.c.b16 %v1407, %v1405
        %v1702 = vpack.c.b16 %v1410, %v1408
        %v1703 = vpack.c.b16 %v1411, %v1409
        %v1704 = vpack.c.b16 %v1414, %v1412
        %v1705 = vpack.c.b16 %v1415, %v1413
        %v1706 = vpack.c.b16 %v1418, %v1416
        %v1707 = vpack.c.b16 %v1419, %v1417
        %v1708 = vpack.c.b16 %v1422, %v1420
        %v1709 = vpack.c.b16 %v1423, %v1421
        %v1710 = vpack.c.b16 %v1426, %v1424
        %v1711 = vpack.c.b16 %v1427, %v1425
        %v1712 = vpack.c.b16 %v1430, %v1428
        %v1713 = vpack.c.b16 %v1431, %v1429
        %v1714 = vpack.c.b16 %v1434, %v1432
        %v1715 = vpack.c.b16 %v1435, %v1433
        %v1716 = vpack.c.b16 %v1438, %v1436
        %v1717 = vpack.c.b16 %v1439, %v1437
        %v1718 = vpack.c.b16 %v1442, %v1440
        %v1719 = vpack.c.b16 %v1443, %v1441
        %v1720 = vpack.c.b16 %v1446, %v1444
        %v1721 = vpack.c.b16 %v1447, %v1445
        %v1722 = vpack.c.b16 %v1450, %v1448
        %v1723 = vpack.c.b16 %v1451, %v1449
        %v1724 = vpack.c.b16 %v1454, %v1452
        %v1725 = vpack.c.b16 %v1455, %v1453
        %v1726 = vpack.c.b16 %v1458, %v1456
        %v1727 = vpack.c.b16 %v1459, %v1457
        %v1728 = vpack.c.b16 %v1462, %v1460
        %v1729 = vpack.c.b16 %v1463, %v1461
        %v1730 = vpack.c.b16 %v1466, %v1464
        %v1731 = vpack.c.b16 %v1467, %v1465
        %v1732 = vpack.c.b16 %v1470, %v1468
        %v1733 = vpack.c.b16 %v1471, %v1469
        %v1734 = vpack.c.b16 %v1474, %v1472
        %v1735 = vpack.c.b16 %v1475, %v1473
        %v1736 = vpack.c.b16 %v1478, %v1476
        %v1737 = vpack.c.b16 %v1479, %v1477
        %v1738 = vpack.c.b16 %v1482, %v1480
        %v1739 = vpack.c.b16 %v1483, %v1481
        %1996 = vmatprep.subr.bf16.mxu0 %v1485
        %1997 = vmatpush1.bf16.msra.mxu0 %v1484
        %1998 = vmatprep.subr.bf16.mxu0 %v1487
        %1999 = vmatpush1.bf16.msra.mxu0 %v1486
        %2000 = vmatprep.subr.bf16.mxu0 %v1489
        %2001 = vmatpush1.bf16.msra.mxu0 %v1488
        %2002 = vmatprep.subr.bf16.mxu0 %v1491
        %2003 = vmatpush1.bf16.msra.mxu0 %v1490
        %2004 = vmatprep.subr.bf16.mxu0 %v1493
        %2005 = vmatpush1.bf16.msra.mxu0 %v1492
        %2006 = vmatprep.subr.bf16.mxu0 %v1495
        %2007 = vmatpush1.bf16.msra.mxu0 %v1494
        %2008 = vmatprep.subr.bf16.mxu0 %v1497
        %2009 = vmatpush1.bf16.msra.mxu0 %v1496
        %2010 = vmatprep.subr.bf16.mxu0 %v1499
        %2011 = vmatpush1.bf16.msra.mxu0 %v1498
        %2012 = vmatprep.subr.bf16.mxu0 %v1501
        %2013 = vmatpush1.bf16.msra.mxu0 %v1500
        %2014 = vmatprep.subr.bf16.mxu0 %v1503
        %2015 = vmatpush1.bf16.msra.mxu0 %v1502
        %2016 = vmatprep.subr.bf16.mxu0 %v1505
        %2017 = vmatpush1.bf16.msra.mxu0 %v1504
        %2018 = vmatprep.subr.bf16.mxu0 %v1507
        %2019 = vmatpush1.bf16.msra.mxu0 %v1506
        %2020 = vmatprep.subr.bf16.mxu0 %v1509
        %2021 = vmatpush1.bf16.msra.mxu0 %v1508
        %2022 = vmatprep.subr.bf16.mxu0 %v1511
        %2023 = vmatpush1.bf16.msra.mxu0 %v1510
        %2024 = vmatprep.subr.bf16.mxu0 %v1513
        %2025 = vmatpush1.bf16.msra.mxu0 %v1512
        %2026 = vmatprep.subr.bf16.mxu0 %v1515
        %2027 = vmatpush1.bf16.msra.mxu0 %v1514
        %2028 = vmatprep.mubr.bf16.mxu0 %v653
        %2029 = vmatmul.mubr.bf16.gmra.mrb[0].mxu0 %v652
        %v2030 = vpop.f32.mrb[0].mxu0
        %v2031 = vadd.f32 0.0, %v2030
        %v2032 = vpop.f32.mrb[0].mxu0
        %v2033 = vadd.f32 0.0, %v2032
        %v2034 = vpop.f32.mrb[0].mxu0
        %v2035 = vadd.f32 0.0, %v2034
        %v2036 = vpop.f32.mrb[0].mxu0
        %v2037 = vadd.f32 0.0, %v2036
        %2038 = vmatprep.mubr.bf16.mxu0 %v669
        %2039 = vmatmul.mubr.bf16.gmra.mrb[0].mxu0 %v668
        %v2040 = vpop.f32.mrb[0].mxu0
        %v2041 = vadd.f32 0.0, %v2040
        %v2042 = vpop.f32.mrb[0].mxu0
        %v2043 = vadd.f32 0.0, %v2042
        %v2044 = vpop.f32.mrb[0].mxu0
        %v2045 = vpop.f32.mrb[0].mxu0
        %2046 = vdwg.mxu0
        %2047 = vmatprep.subr.bf16.mxu0 %v1517
        %2048 = vmatpush1.bf16.msra.mxu0 %v1516
        %2049 = vmatprep.subr.bf16.mxu0 %v1519
        %2050 = vmatpush1.bf16.msra.mxu0 %v1518
        %2051 = vmatprep.subr.bf16.mxu0 %v1521
        %2052 = vmatpush1.bf16.msra.mxu0 %v1520
        %2053 = vmatprep.subr.bf16.mxu0 %v1523
        %2054 = vmatpush1.bf16.msra.mxu0 %v1522
        %2055 = vmatprep.subr.bf16.mxu0 %v1525
        %2056 = vmatpush1.bf16.msra.mxu0 %v1524
        %2057 = vmatprep.subr.bf16.mxu0 %v1527
        %2058 = vmatpush1.bf16.msra.mxu0 %v1526
        %2059 = vmatprep.subr.bf16.mxu0 %v1529
        %2060 = vmatpush1.bf16.msra.mxu0 %v1528
        %2061 = vmatprep.subr.bf16.mxu0 %v1531
        %2062 = vmatpush1.bf16.msra.mxu0 %v1530
        %2063 = vmatprep.subr.bf16.mxu0 %v1533
        %2064 = vmatpush1.bf16.msra.mxu0 %v1532
        %2065 = vmatprep.subr.bf16.mxu0 %v1535
        %2066 = vmatpush1.bf16.msra.mxu0 %v1534
        %2067 = vmatprep.subr.bf16.mxu0 %v1537
        %2068 = vmatpush1.bf16.msra.mxu0 %v1536
        %2069 = vmatprep.subr.bf16.mxu0 %v1539
        %2070 = vmatpush1.bf16.msra.mxu0 %v1538
        %2071 = vmatprep.subr.bf16.mxu0 %v1541
        %2072 = vmatpush1.bf16.msra.mxu0 %v1540
        %2073 = vmatprep.subr.bf16.mxu0 %v1543
        %2074 = vmatpush1.bf16.msra.mxu0 %v1542
        %2075 = vmatprep.subr.bf16.mxu0 %v1545
        %2076 = vmatpush1.bf16.msra.mxu0 %v1544
        %2077 = vmatprep.subr.bf16.mxu0 %v1547
        %2078 = vmatpush1.bf16.msra.mxu0 %v1546
        %2079 = vmatprep.mubr.bf16.mxu0 %v655
        %2080 = vmatmul.mubr.bf16.gmra.mrb[0].mxu0 %v654
        %v2081 = vpop.f32.mrb[0].mxu0
        %v2082 = vadd.f32 %v2031, %v2081
        %v2083 = vpop.f32.mrb[0].mxu0
        %v2084 = vadd.f32 %v2033, %v2083
        %v2085 = vpop.f32.mrb[0].mxu0
        %v2086 = vadd.f32 %v2035, %v2085
        %v2087 = vpop.f32.mrb[0].mxu0
        %v2088 = vadd.f32 %v2037, %v2087
        %2089 = vmatprep.mubr.bf16.mxu0 %v671
        %2090 = vmatmul.mubr.bf16.gmra.mrb[0].mxu0 %v670
        %v2091 = vpop.f32.mrb[0].mxu0
        %v2092 = vadd.f32 %v2041, %v2091
        %v2093 = vpop.f32.mrb[0].mxu0
        %v2094 = vadd.f32 %v2043, %v2093
        %v2095 = vpop.f32.mrb[0].mxu0
        %v2096 = vpop.f32.mrb[0].mxu0
        %2097 = vdwg.mxu0
        %2098 = vmatprep.subr.bf16.mxu0 %v1549
        %2099 = vmatpush1.bf16.msra.mxu0 %v1548
        %2100 = vmatprep.subr.bf16.mxu0 %v1551
        %2101 = vmatpush1.bf16.msra.mxu0 %v1550
        %2102 = vmatprep.subr.bf16.mxu0 %v1553
        %2103 = vmatpush1.bf16.msra.mxu0 %v1552
        %2104 = vmatprep.subr.bf16.mxu0 %v1555
        %2105 = vmatpush1.bf16.msra.mxu0 %v1554
        %2106 = vmatprep.subr.bf16.mxu0 %v1557
        %2107 = vmatpush1.bf16.msra.mxu0 %v1556
        %2108 = vmatprep.subr.bf16.mxu0 %v1559
        %2109 = vmatpush1.bf16.msra.mxu0 %v1558
        %2110 = vmatprep.subr.bf16.mxu0 %v1561
        %2111 = vmatpush1.bf16.msra.mxu0 %v1560
        %2112 = vmatprep.subr.bf16.mxu0 %v1563
        %2113 = vmatpush1.bf16.msra.mxu0 %v1562
        %2114 = vmatprep.subr.bf16.mxu0 %v1565
        %2115 = vmatpush1.bf16.msra.mxu0 %v1564
        %2116 = vmatprep.subr.bf16.mxu0 %v1567
        %2117 = vmatpush1.bf16.msra.mxu0 %v1566
        %2118 = vmatprep.subr.bf16.mxu0 %v1569
        %2119 = vmatpush1.bf16.msra.mxu0 %v1568
        %2120 = vmatprep.subr.bf16.mxu0 %v1571
        %2121 = vmatpush1.bf16.msra.mxu0 %v1570
        %2122 = vmatprep.subr.bf16.mxu0 %v1573
        %2123 = vmatpush1.bf16.msra.mxu0 %v1572
        %2124 = vmatprep.subr.bf16.mxu0 %v1575
        %2125 = vmatpush1.bf16.msra.mxu0 %v1574
        %2126 = vmatprep.subr.bf16.mxu0 %v1577
        %2127 = vmatpush1.bf16.msra.mxu0 %v1576
        %2128 = vmatprep.subr.bf16.mxu0 %v1579
        %2129 = vmatpush1.bf16.msra.mxu0 %v1578
        %2130 = vmatprep.mubr.bf16.mxu0 %v657
        %2131 = vmatmul.mubr.bf16.gmra.mrb[0].mxu0 %v656
        %v2132 = vpop.f32.mrb[0].mxu0
        %v2133 = vadd.f32 %v2082, %v2132
        %v2134 = vpop.f32.mrb[0].mxu0
        %v2135 = vadd.f32 %v2084, %v2134
        %v2136 = vpop.f32.mrb[0].mxu0
        %v2137 = vadd.f32 %v2086, %v2136
        %v2138 = vpop.f32.mrb[0].mxu0
        %v2139 = vadd.f32 %v2088, %v2138
        %2140 = vmatprep.mubr.bf16.mxu0 %v673
        %2141 = vmatmul.mubr.bf16.gmra.mrb[0].mxu0 %v672
        %v2142 = vpop.f32.mrb[0].mxu0
        %v2143 = vadd.f32 %v2092, %v2142
        %v2144 = vpop.f32.mrb[0].mxu0
        %v2145 = vadd.f32 %v2094, %v2144
        %v2146 = vpop.f32.mrb[0].mxu0
        %v2147 = vpop.f32.mrb[0].mxu0
        %2148 = vdwg.mxu0
        %2149 = vmatprep.subr.bf16.mxu0 %v1581
        %2150 = vmatpush1.bf16.msra.mxu0 %v1580
        %2151 = vmatprep.subr.bf16.mxu0 %v1583
        %2152 = vmatpush1.bf16.msra.mxu0 %v1582
        %2153 = vmatprep.subr.bf16.mxu0 %v1585
        %2154 = vmatpush1.bf16.msra.mxu0 %v1584
        %2155 = vmatprep.subr.bf16.mxu0 %v1587
        %2156 = vmatpush1.bf16.msra.mxu0 %v1586
        %2157 = vmatprep.subr.bf16.mxu0 %v1589
        %2158 = vmatpush1.bf16.msra.mxu0 %v1588
        %2159 = vmatprep.subr.bf16.mxu0 %v1591
        %2160 = vmatpush1.bf16.msra.mxu0 %v1590
        %2161 = vmatprep.subr.bf16.mxu0 %v1593
        %2162 = vmatpush1.bf16.msra.mxu0 %v1592
        %2163 = vmatprep.subr.bf16.mxu0 %v1595
        %2164 = vmatpush1.bf16.msra.mxu0 %v1594
        %2165 = vmatprep.subr.bf16.mxu0 %v1597
        %2166 = vmatpush1.bf16.msra.mxu0 %v1596
        %2167 = vmatprep.subr.bf16.mxu0 %v1599
        %2168 = vmatpush1.bf16.msra.mxu0 %v1598
        %2169 = vmatprep.subr.bf16.mxu0 %v1601
        %2170 = vmatpush1.bf16.msra.mxu0 %v1600
        %2171 = vmatprep.subr.bf16.mxu0 %v1603
        %2172 = vmatpush1.bf16.msra.mxu0 %v1602
        %2173 = vmatprep.subr.bf16.mxu0 %v1605
        %2174 = vmatpush1.bf16.msra.mxu0 %v1604
        %2175 = vmatprep.subr.bf16.mxu0 %v1607
        %2176 = vmatpush1.bf16.msra.mxu0 %v1606
        %2177 = vmatprep.subr.bf16.mxu0 %v1609
        %2178 = vmatpush1.bf16.msra.mxu0 %v1608
        %2179 = vmatprep.subr.bf16.mxu0 %v1611
        %2180 = vmatpush1.bf16.msra.mxu0 %v1610
        %2181 = vmatprep.mubr.bf16.mxu0 %v659
        %2182 = vmatmul.mubr.bf16.gmra.mrb[0].mxu0 %v658
        %v2183 = vpop.f32.mrb[0].mxu0
        %v2184 = vadd.f32 %v2133, %v2183
        %v2185 = vpop.f32.mrb[0].mxu0
        %v2186 = vadd.f32 %v2135, %v2185
        %v2187 = vpop.f32.mrb[0].mxu0
        %v2188 = vadd.f32 %v2137, %v2187
        %v2189 = vpop.f32.mrb[0].mxu0
        %v2190 = vadd.f32 %v2139, %v2189
        %2191 = vmatprep.mubr.bf16.mxu0 %v675
        %2192 = vmatmul.mubr.bf16.gmra.mrb[0].mxu0 %v674
        %v2193 = vpop.f32.mrb[0].mxu0
        %v2194 = vadd.f32 %v2143, %v2193
        %v2195 = vpop.f32.mrb[0].mxu0
        %v2196 = vadd.f32 %v2145, %v2195
        %v2197 = vpop.f32.mrb[0].mxu0
        %v2198 = vpop.f32.mrb[0].mxu0
        %2199 = vdwg.mxu0
        %2200 = vmatprep.subr.bf16.mxu0 %v1613
        %2201 = vmatpush1.bf16.msra.mxu0 %v1612
        %2202 = vmatprep.subr.bf16.mxu0 %v1615
        %2203 = vmatpush1.bf16.msra.mxu0 %v1614
        %2204 = vmatprep.subr.bf16.mxu0 %v1617
        %2205 = vmatpush1.bf16.msra.mxu0 %v1616
        %2206 = vmatprep.subr.bf16.mxu0 %v1619
        %2207 = vmatpush1.bf16.msra.mxu0 %v1618
        %2208 = vmatprep.subr.bf16.mxu0 %v1621
        %2209 = vmatpush1.bf16.msra.mxu0 %v1620
        %2210 = vmatprep.subr.bf16.mxu0 %v1623
        %2211 = vmatpush1.bf16.msra.mxu0 %v1622
        %2212 = vmatprep.subr.bf16.mxu0 %v1625
        %2213 = vmatpush1.bf16.msra.mxu0 %v1624
        %2214 = vmatprep.subr.bf16.mxu0 %v1627
        %2215 = vmatpush1.bf16.msra.mxu0 %v1626
        %2216 = vmatprep.subr.bf16.mxu0 %v1629
        %2217 = vmatpush1.bf16.msra.mxu0 %v1628
        %2218 = vmatprep.subr.bf16.mxu0 %v1631
        %2219 = vmatpush1.bf16.msra.mxu0 %v1630
        %2220 = vmatprep.subr.bf16.mxu0 %v1633
        %2221 = vmatpush1.bf16.msra.mxu0 %v1632
        %2222 = vmatprep.subr.bf16.mxu0 %v1635
        %2223 = vmatpush1.bf16.msra.mxu0 %v1634
        %2224 = vmatprep.subr.bf16.mxu0 %v1637
        %2225 = vmatpush1.bf16.msra.mxu0 %v1636
        %2226 = vmatprep.subr.bf16.mxu0 %v1639
        %2227 = vmatpush1.bf16.msra.mxu0 %v1638
        %2228 = vmatprep.subr.bf16.mxu0 %v1641
        %2229 = vmatpush1.bf16.msra.mxu0 %v1640
        %2230 = vmatprep.subr.bf16.mxu0 %v1643
        %2231 = vmatpush1.bf16.msra.mxu0 %v1642
        %2232 = vmatprep.mubr.bf16.mxu0 %v661
        %2233 = vmatmul.mubr.bf16.gmra.mrb[0].mxu0 %v660
        %v2234 = vpop.f32.mrb[0].mxu0
        %v2235 = vadd.f32 %v2184, %v2234
        %v2236 = vpop.f32.mrb[0].mxu0
        %v2237 = vadd.f32 %v2186, %v2236
        %v2238 = vpop.f32.mrb[0].mxu0
        %v2239 = vadd.f32 %v2188, %v2238
        %v2240 = vpop.f32.mrb[0].mxu0
        %v2241 = vadd.f32 %v2190, %v2240
        %2242 = vmatprep.mubr.bf16.mxu0 %v677
        %2243 = vmatmul.mubr.bf16.gmra.mrb[0].mxu0 %v676
        %v2244 = vpop.f32.mrb[0].mxu0
        %v2245 = vadd.f32 %v2194, %v2244
        %v2246 = vpop.f32.mrb[0].mxu0
        %v2247 = vadd.f32 %v2196, %v2246
        %v2248 = vpop.f32.mrb[0].mxu0
        %v2249 = vpop.f32.mrb[0].mxu0
        %2250 = vdwg.mxu0
        %2251 = vmatprep.subr.bf16.mxu0 %v1645
        %2252 = vmatpush1.bf16.msra.mxu0 %v1644
        %2253 = vmatprep.subr.bf16.mxu0 %v1647
        %2254 = vmatpush1.bf16.msra.mxu0 %v1646
        %2255 = vmatprep.subr.bf16.mxu0 %v1649
        %2256 = vmatpush1.bf16.msra.mxu0 %v1648
        %2257 = vmatprep.subr.bf16.mxu0 %v1651
        %2258 = vmatpush1.bf16.msra.mxu0 %v1650
        %2259 = vmatprep.subr.bf16.mxu0 %v1653
        %2260 = vmatpush1.bf16.msra.mxu0 %v1652
        %2261 = vmatprep.subr.bf16.mxu0 %v1655
        %2262 = vmatpush1.bf16.msra.mxu0 %v1654
        %2263 = vmatprep.subr.bf16.mxu0 %v1657
        %2264 = vmatpush1.bf16.msra.mxu0 %v1656
        %2265 = vmatprep.subr.bf16.mxu0 %v1659
        %2266 = vmatpush1.bf16.msra.mxu0 %v1658
        %2267 = vmatprep.subr.bf16.mxu0 %v1661
        %2268 = vmatpush1.bf16.msra.mxu0 %v1660
        %2269 = vmatprep.subr.bf16.mxu0 %v1663
        %2270 = vmatpush1.bf16.msra.mxu0 %v1662
        %2271 = vmatprep.subr.bf16.mxu0 %v1665
        %2272 = vmatpush1.bf16.msra.mxu0 %v1664
        %2273 = vmatprep.subr.bf16.mxu0 %v1667
        %2274 = vmatpush1.bf16.msra.mxu0 %v1666
        %2275 = vmatprep.subr.bf16.mxu0 %v1669
        %2276 = vmatpush1.bf16.msra.mxu0 %v1668
        %2277 = vmatprep.subr.bf16.mxu0 %v1671
        %2278 = vmatpush1.bf16.msra.mxu0 %v1670
        %2279 = vmatprep.subr.bf16.mxu0 %v1673
        %2280 = vmatpush1.bf16.msra.mxu0 %v1672
        %2281 = vmatprep.subr.bf16.mxu0 %v1675
        %2282 = vmatpush1.bf16.msra.mxu0 %v1674
        %2283 = vmatprep.mubr.bf16.mxu0 %v663
        %2284 = vmatmul.mubr.bf16.gmra.mrb[0].mxu0 %v662
        %v2285 = vpop.f32.mrb[0].mxu0
        %v2286 = vadd.f32 %v2235, %v2285
        %v2287 = vpop.f32.mrb[0].mxu0
        %v2288 = vadd.f32 %v2237, %v2287
        %v2289 = vpop.f32.mrb[0].mxu0
        %v2290 = vadd.f32 %v2239, %v2289
        %v2291 = vpop.f32.mrb[0].mxu0
        %v2292 = vadd.f32 %v2241, %v2291
        %2293 = vmatprep.mubr.bf16.mxu0 %v679
        %2294 = vmatmul.mubr.bf16.gmra.mrb[0].mxu0 %v678
        %v2295 = vpop.f32.mrb[0].mxu0
        %v2296 = vadd.f32 %v2245, %v2295
        %v2297 = vpop.f32.mrb[0].mxu0
        %v2298 = vadd.f32 %v2247, %v2297
        %v2299 = vpop.f32.mrb[0].mxu0
        %v2300 = vpop.f32.mrb[0].mxu0
        %2301 = vdwg.mxu0
        %2302 = vmatprep.subr.bf16.mxu0 %v1677
        %2303 = vmatpush1.bf16.msra.mxu0 %v1676
        %2304 = vmatprep.subr.bf16.mxu0 %v1679
        %2305 = vmatpush1.bf16.msra.mxu0 %v1678
        %2306 = vmatprep.subr.bf16.mxu0 %v1681
        %2307 = vmatpush1.bf16.msra.mxu0 %v1680
        %2308 = vmatprep.subr.bf16.mxu0 %v1683
        %2309 = vmatpush1.bf16.msra.mxu0 %v1682
        %2310 = vmatprep.subr.bf16.mxu0 %v1685
        %2311 = vmatpush1.bf16.msra.mxu0 %v1684
        %2312 = vmatprep.subr.bf16.mxu0 %v1687
        %2313 = vmatpush1.bf16.msra.mxu0 %v1686
        %2314 = vmatprep.subr.bf16.mxu0 %v1689
        %2315 = vmatpush1.bf16.msra.mxu0 %v1688
        %2316 = vmatprep.subr.bf16.mxu0 %v1691
        %2317 = vmatpush1.bf16.msra.mxu0 %v1690
        %2318 = vmatprep.subr.bf16.mxu0 %v1693
        %2319 = vmatpush1.bf16.msra.mxu0 %v1692
        %2320 = vmatprep.subr.bf16.mxu0 %v1695
        %2321 = vmatpush1.bf16.msra.mxu0 %v1694
        %2322 = vmatprep.subr.bf16.mxu0 %v1697
        %2323 = vmatpush1.bf16.msra.mxu0 %v1696
        %2324 = vmatprep.subr.bf16.mxu0 %v1699
        %2325 = vmatpush1.bf16.msra.mxu0 %v1698
        %2326 = vmatprep.subr.bf16.mxu0 %v1701
        %2327 = vmatpush1.bf16.msra.mxu0 %v1700
        %2328 = vmatprep.subr.bf16.mxu0 %v1703
        %2329 = vmatpush1.bf16.msra.mxu0 %v1702
        %2330 = vmatprep.subr.bf16.mxu0 %v1705
        %2331 = vmatpush1.bf16.msra.mxu0 %v1704
        %2332 = vmatprep.subr.bf16.mxu0 %v1707
        %2333 = vmatpush1.bf16.msra.mxu0 %v1706
        %2334 = vmatprep.mubr.bf16.mxu0 %v665
        %2335 = vmatmul.mubr.bf16.gmra.mrb[0].mxu0 %v664
        %v2336 = vpop.f32.mrb[0].mxu0
        %v2337 = vadd.f32 %v2286, %v2336
        %v2338 = vpop.f32.mrb[0].mxu0
        %v2339 = vadd.f32 %v2288, %v2338
        %v2340 = vpop.f32.mrb[0].mxu0
        %v2341 = vadd.f32 %v2290, %v2340
        %v2342 = vpop.f32.mrb[0].mxu0
        %v2343 = vadd.f32 %v2292, %v2342
        %2344 = vmatprep.mubr.bf16.mxu0 %v681
        %2345 = vmatmul.mubr.bf16.gmra.mrb[0].mxu0 %v680
        %v2346 = vpop.f32.mrb[0].mxu0
        %v2347 = vadd.f32 %v2296, %v2346
        %v2348 = vpop.f32.mrb[0].mxu0
        %v2349 = vadd.f32 %v2298, %v2348
        %v2350 = vpop.f32.mrb[0].mxu0
        %v2351 = vpop.f32.mrb[0].mxu0
        %2352 = vdwg.mxu0
        %2353 = vmatprep.subr.bf16.mxu0 %v1709
        %2354 = vmatpush1.bf16.msra.mxu0 %v1708
        %2355 = vmatprep.subr.bf16.mxu0 %v1711
        %2356 = vmatpush1.bf16.msra.mxu0 %v1710
        %2357 = vmatprep.subr.bf16.mxu0 %v1713
        %2358 = vmatpush1.bf16.msra.mxu0 %v1712
        %2359 = vmatprep.subr.bf16.mxu0 %v1715
        %2360 = vmatpush1.bf16.msra.mxu0 %v1714
        %2361 = vmatprep.subr.bf16.mxu0 %v1717
        %2362 = vmatpush1.bf16.msra.mxu0 %v1716
        %2363 = vmatprep.subr.bf16.mxu0 %v1719
        %2364 = vmatpush1.bf16.msra.mxu0 %v1718
        %2365 = vmatprep.subr.bf16.mxu0 %v1721
        %2366 = vmatpush1.bf16.msra.mxu0 %v1720
        %2367 = vmatprep.subr.bf16.mxu0 %v1723
        %2368 = vmatpush1.bf16.msra.mxu0 %v1722
        %2369 = vmatprep.subr.bf16.mxu0 %v1725
        %2370 = vmatpush1.bf16.msra.mxu0 %v1724
        %2371 = vmatprep.subr.bf16.mxu0 %v1727
        %2372 = vmatpush1.bf16.msra.mxu0 %v1726
        %2373 = vmatprep.subr.bf16.mxu0 %v1729
        %2374 = vmatpush1.bf16.msra.mxu0 %v1728
        %2375 = vmatprep.subr.bf16.mxu0 %v1731
        %2376 = vmatpush1.bf16.msra.mxu0 %v1730
        %2377 = vmatprep.subr.bf16.mxu0 %v1733
        %2378 = vmatpush1.bf16.msra.mxu0 %v1732
        %2379 = vmatprep.subr.bf16.mxu0 %v1735
        %2380 = vmatpush1.bf16.msra.mxu0 %v1734
        %2381 = vmatprep.subr.bf16.mxu0 %v1737
        %2382 = vmatpush1.bf16.msra.mxu0 %v1736
        %2383 = vmatprep.subr.bf16.mxu0 %v1739
        %2384 = vmatpush1.bf16.msra.mxu0 %v1738
        %2385 = vmatprep.mubr.bf16.mxu0 %v667
        %2386 = vmatmul.mubr.bf16.gmra.mrb[0].mxu0 %v666
        %v2387 = vpop.f32.mrb[0].mxu0
        %v2388 = vadd.f32 %v2337, %v2387
        %v2389 = vpop.f32.mrb[0].mxu0
        %v2390 = vadd.f32 %v2339, %v2389
        %v2391 = vpop.f32.mrb[0].mxu0
        %v2392 = vadd.f32 %v2341, %v2391
        %v2393 = vpop.f32.mrb[0].mxu0
        %v2394 = vadd.f32 %v2343, %v2393
        %2395 = vmatprep.mubr.bf16.mxu0 %v683
        %2396 = vmatmul.mubr.bf16.gmra.mrb[0].mxu0 %v682
        %v2397 = vpop.f32.mrb[0].mxu0
        %v2398 = vadd.f32 %v2347, %v2397
        %v2399 = vpop.f32.mrb[0].mxu0
        %v2400 = vadd.f32 %v2349, %v2399
        %v2401 = vpop.f32.mrb[0].mxu0
        %v2402 = vpop.f32.mrb[0].mxu0
        %2403 = vdwg.mxu0
        %v2404 = vadd.f32 %v294, %v2388
        %v2405 = vadd.f32 %v295, %v2390
        %v2406 = vadd.f32 %v296, %v2392
        %v2407 = vadd.f32 %v297, %v2394
        %v2408 = vadd.f32 %v298, %v2398
        %v2409 = vadd.f32 %v299, %v2400
        %2410 = vst [vmem:[#allocation2] sm:$0xff] %v2404
        %2411 = vst [vmem:[#allocation2 + $0x8] sm:$0xff] %v2405
        %2412 = vst [vmem:[#allocation2 + $0x10] sm:$0xff] %v2406
        %2413 = vst [vmem:[#allocation2 + $0x18] sm:$0xff] %v2407
        %2414 = vst [vmem:[#allocation2 + $0x20] sm:$0xff] %v2408
        %2415 = vst [vmem:[#allocation2 + $0x28] sm:$0xff] %v2409
        %p2416 = scmp.eq.s32.totalorder %s19, 3
        // Predicated region
        $region60: #{_forward_impl.6} parent=50 // pred_check
          %p2417 = pneg %p2416
        $region61: #{_forward_impl.6} parent=50 // pred_check_branch
          %2419 = sbr.rel (%p2417) target = $region63
        $region62: #{_forward_impl.6} parent=50 // pred_region
          %v2420 = vld [vmem:[#allocation2] sm:$0xff]
          %v2421 = vld [vmem:[#allocation2 + $0x8] sm:$0xff]
          %v2422 = vld [vmem:[#allocation2 + $0x10] sm:$0xff]
          %v2423 = vld [vmem:[#allocation2 + $0x18] sm:$0xff]
          %v2424 = vld [vmem:[#allocation2 + $0x20] sm:$0xff]
          %v2425 = vld [vmem:[#allocation2 + $0x28] sm:$0xff]
          %v2426 = vld [vmem:[%s2] sm:$0x3]
          %v2428 = vlaneseq
          %v2429 = vshrl.u32 %v2428, 7
          %v2430 = vsub.s32 0, %v2429
          %v2431 = vrot.slane %v2426, %v2430
          %v2432 = vlaneseq
          %v2433 = vshrl.u32 %v2432, 7
          %v2434 = vsub.s32 1, %v2433
          %v2435 = vrot.slane %v2426, %v2434
          %v2438 = vadd.f32 %v2420, %v2431
          %v2439 = vadd.f32 %v2421, %v2435
          %v2440 = vadd.f32 %v2422, %v2431
          %v2441 = vadd.f32 %v2423, %v2435
          %v2442 = vadd.f32 %v2424, %v2431
          %v2443 = vadd.f32 %v2425, %v2435
          %v2444 = vmax.f32 %v2438, 0.0
          %v2445 = vmax.f32 %v2439, 0.0
          %v2446 = vmax.f32 %v2440, 0.0
          %v2447 = vmax.f32 %v2441, 0.0
          %v2448 = vmax.f32 %v2442, 0.0
          %v2449 = vmax.f32 %v2443, 0.0
          %v2450 = vpack.c.bf16 %v2446, %v2444
          %v2451 = vpack.c.bf16 %v2447, %v2445
          %v2452 = vpack.c.bf16 %v2448, %v2448
          %v2453 = vpack.c.bf16 %v2449, %v2449
          %v2458 = vunpack.c.l.b16 %v2450
          %v2459 = vunpack.c.l.b16 %v2451
          %v2460 = vunpack.c.h.b16 %v2450
          %v2461 = vunpack.c.h.b16 %v2451
          %v2462 = vunpack.c.l.b16 %v2452
          %v2463 = vunpack.c.l.b16 %v2453
          %v2464 = vpack.c.b16 %v2459, %v2458
          %v2465 = vpack.c.b16 %v2461, %v2460
          %v2466 = vpack.c.b16 %v2463, %v2462
          %2470 = vst [vmem:[%s282] sm:$0xff] %v2464
          %2471 = vst [vmem:[%s282 + $0x8] sm:$0xff] %v2465
          %2472 = vst [vmem:[%s282 + $0x10] sm:$0xff] %v2466
        $region63: #{_forward_impl.6} parent=50 // pred_fallthru
          _
        %s2473 = smul.u32 3, %s18
        %p2474 = scmp.lt.s32.totalorder %s2473, 2
        %s2475 = scalar_select %p2474, %s2473, 2
        %s2476 = smul.addr %s2475, 2
        %s2477 = smul.addr %s2476, 4
        %s2478 = scalar_lea.vmem %s3, %s2477
        // Predicated region
        $region64: #{_forward_impl.6} parent=50 // pred_check
          %p2479 = pneg %p119
        $region65: #{_forward_impl.6} parent=50 // pred_check_branch
          %2481 = sbr.rel (%p2479) target = $region67
        $region66: #{_forward_impl.6} parent=50 // pred_region
          %s2482 = smul.u32 3, %s18
        $region67: #{_forward_impl.6} parent=50 // pred_fallthru
          _
        // Predicated region
        $region68: #{_forward_impl.6} parent=50 // pred_check
          %p2483 = pneg %p119
        $region69: #{_forward_impl.6} parent=50 // pred_check_branch
          %2485 = sbr.rel (%p2483) target = $region71
        $region70: #{_forward_impl.6} parent=50 // pred_region
          %s2486 = smul.u32 3, %s18
          %p2487 = scmp.lt.s32.totalorder %s2486, 2
          %s2488 = scalar_select %p2487, %s2486, 2
          %s2489 = smul.addr %s2488, 2
          %s2490 = smul.addr %s2489, 4
          %s2491 = scalar_lea.vmem %s3, %s2490
        $region71: #{_forward_impl.6} parent=50 // pred_fallthru
          _
      $region51: #{_forward_impl.6} parent=5 // pred_fallthru
        _
      %p2492 = scmp.le.s32.totalorder 2, %s9
      // Predicated region
      $region72: #{_forward_impl.6} parent=5 // pred_check
        %p2493 = pneg %p2492
      $region73: #{_forward_impl.6} parent=5 // pred_check_branch
        %2495 = sbr.rel (%p2493) target = $region75
      $region74: #{_forward_impl.6} parent=5 // pred_region
        %s2496 = ssub.s32 %s9, 2
      $region75: #{_forward_impl.6} parent=5 // pred_fallthru
        _
    $region6: #{_forward_impl.6} parent=1 // loop_footer
      %s13 = sadd.s32 1, %s9
    $region7: #{_forward_impl.6} parent=1 // loop_footer_branch
      %8 = sbr.rel target = $region3
    $region8: #{_forward_impl.6} parent=1 // loop_exit
      _

// kernel: _forward_impl.7
$region0: #{_forward_impl.7}
  #allocation0 [shape = 'u32[]', space=smem, size = 0x4, offset = 0x4, fixed_abs, tag = 'smem constant byte address 0x4 - core index']
  #allocation1 [shape = 'u32[144,128]{1,0:T(1,128)}', space=vmem, size = 0x12000, scoped, tag = 'internal scratch']
  #allocation2 [shape = 'f32[24,128]{1,0:T(8,128)}', space=vmem, size = 0x3000, scoped, tag = 'scratch operand']
  %s0 = inlined_call_operand.vmem [shape: bf16[24,2304], index: 0, kind: input, shape index: {}]
  %s1 = inlined_call_operand.vmem [shape: bf16[2304,128], index: 1, kind: input, shape index: {}]
  %s2 = inlined_call_operand.vmem [shape: f32[1,128], index: 2, kind: input, shape index: {}]
  %s3 = inlined_call_operand.vmem [shape: bf16[24,128], index: 3, kind: output, shape index: {}]
  %s4 = sld [smem:[#allocation0]]
  $region79: #{_forward_impl.7} parent=0
    _
  %s6 = ssub.s32 1, %s4
  %s7 = scalar_select 0, %s6, %s4
  $region1: #{_forward_impl.7} parent=0
    #allocation3 [shape = 'u8[110592]{0}', space=vmem, size = 0x1b000, scoped, tag = 'input window, operand 0']
    loop: start=0, step=1, limit=4
    $region2: #{_forward_impl.7} parent=1 // loop_pre_header
      _
    $region3: #{_forward_impl.7} parent=1 // loop_header
      %s9 = sphi 0, %s13
      %p10 = scmp.ge.s32.totalorder %s9, 4
      %s16 = sphi 0, %s28
      %s17 = sphi 0, %s24
      %s18 = sphi 0, %s16
      %s19 = sphi 0, %s17
      %s20 = sphi 0, %s18
      %s21 = sphi 0, %s19
      %s33 = sphi 0, %s35
      %s36 = sphi 0, %s33
      %s37 = sphi 0, %s36
      %s53 = sphi 0, %s37
      %s59 = sphi 0, %s61
      %s62 = sphi 0, %s59
      %s63 = sphi 0, %s62
      %s79 = sphi 0, %s63
      %s83 = sphi 0, %s83
      %s85 = sphi 0, %s83
      %s86 = sphi 0, %s85
      %s100 = sphi 0, %s86
      %s106 = sphi 0, %s108
      %s109 = sphi 0, %s106
      %s110 = sphi 0, %s109
      %s126 = sphi 0, %s110
    $region4: #{_forward_impl.7} parent=1 // loop_header_branch
      %12 = sbr.rel (%p10) target = $region8
    $region5: #{_forward_impl.7} parent=1 // loop_body
      %s14 = ssub.s32 %s9, 1
      %s15 = ssub.s32 %s9, 2
      %s22 = sadd.s32 1, %s17
      %p23 = scmp.ge.s32.totalorder %s22, 2
      %s24 = scalar_select %p23, 0, %s22
      %s25 = sadd.s32 1, %s16
      %s26 = scalar_select %p23, %s25, %s16
      %p27 = scmp.ge.s32.totalorder %s26, 1
      %s28 = scalar_select %p27, 0, %s26
      %s29 = ssub.s32 %s16, %s28
      %s30 = ssub.s32 %s17, %s24
      %s31 = sor.u32 %s29, %s30
      %p32 = scmp.eq.s32.totalorder %s31, 0
      %s34 = sadd.s32 %s33, 1
      %s35 = scalar_select %p32, %s33, %s34
      %p38 = pneg %p32
      %p39 = scmp.eq.s32.totalorder %s9, 1
      %p40 = por %p38, %p39
      %p41 = scmp.ne.s32.totalorder %s33, %s36
      %p42 = scmp.eq.s32.totalorder %s9, 0
      %p43 = por %p41, %p42
      %p44 = scmp.ne.s32.totalorder %s33, %s36
      %p45 = scmp.eq.s32.totalorder %s14, 1
      %p46 = por %p44, %p45
      %p47 = scmp.ne.s32.totalorder %s36, %s37
      %p48 = scmp.eq.s32.totalorder %s14, 0
      %p49 = por %p47, %p48
      %p50 = scmp.ne.s32.totalorder %s36, %s37
      %p51 = scmp.eq.s32.totalorder %s15, 1
      %p52 = por %p50, %p51
      %p54 = scmp.ne.s32.totalorder %s37, %s53
      %p55 = scmp.eq.s32.totalorder %s15, 0
      %p56 = por %p54, %p55
      %s57 = ssub.s32 %s17, %s24
      %p58 = scmp.eq.s32.totalorder %s57, 0
      %s60 = sadd.s32 %s59, 1
      %s61 = scalar_select %p58, %s59, %s60
      %p64 = pneg %p58
      %p65 = scmp.eq.s32.totalorder %s9, 1
      %p66 = por %p64, %p65
      %p67 = scmp.ne.s32.totalorder %s59, %s62
      %p68 = scmp.eq.s32.totalorder %s9, 0
      %p69 = por %p67, %p68
      %p70 = scmp.ne.s32.totalorder %s59, %s62
      %p71 = scmp.eq.s32.totalorder %s14, 1
      %p72 = por %p70, %p71
      %p73 = scmp.ne.s32.totalorder %s62, %s63
      %p74 = scmp.eq.s32.totalorder %s14, 0
      %p75 = por %p73, %p74
      %p76 = scmp.ne.s32.totalorder %s62, %s63
      %p77 = scmp.eq.s32.totalorder %s15, 1
      %p78 = por %p76, %p77
      %p80 = scmp.ne.s32.totalorder %s63, %s79
      %p81 = scmp.eq.s32.totalorder %s15, 0
      %p82 = por %p80, %p81
      %s84 = sadd.s32 %s83, 1
      %p87 = scmp.eq.s32.totalorder %s9, 1
      %p88 = scmp.ne.s32.totalorder %s83, %s85
      %p89 = scmp.eq.s32.totalorder %s9, 0
      %p90 = por %p88, %p89
      %p91 = scmp.ne.s32.totalorder %s83, %s85
      %p92 = scmp.eq.s32.totalorder %s14, 1
      %p93 = por %p91, %p92
      %p94 = scmp.ne.s32.totalorder %s85, %s86
      %p95 = scmp.eq.s32.totalorder %s14, 0
      %p96 = por %p94, %p95
      %p97 = scmp.ne.s32.totalorder %s85, %s86
      %p98 = scmp.eq.s32.totalorder %s15, 1
      %p99 = por %p97, %p98
      %p101 = scmp.ne.s32.totalorder %s86, %s100
      %p102 = scmp.eq.s32.totalorder %s15, 0
      %p103 = por %p101, %p102
      %s104 = ssub.s32 %s16, %s28
      %p105 = scmp.eq.s32.totalorder %s104, 0
      %s107 = sadd.s32 %s106, 1
      %s108 = scalar_select %p105, %s106, %s107
      %p111 = pneg %p105
      %p112 = scmp.eq.s32.totalorder %s9, 1
      %p113 = por %p111, %p112
      %p114 = scmp.ne.s32.totalorder %s106, %s109
      %p115 = scmp.eq.s32.totalorder %s9, 0
      %p116 = por %p114, %p115
      %p117 = scmp.ne.s32.totalorder %s106, %s109
      %p118 = scmp.eq.s32.totalorder %s14, 1
      %p119 = por %p117, %p118
      %p120 = scmp.ne.s32.totalorder %s109, %s110
      %p121 = scmp.eq.s32.totalorder %s14, 0
      %p122 = por %p120, %p121
      %p123 = scmp.ne.s32.totalorder %s109, %s110
      %p124 = scmp.eq.s32.totalorder %s15, 1
      %p125 = por %p123, %p124
      %p127 = scmp.ne.s32.totalorder %s110, %s126
      %p128 = scmp.eq.s32.totalorder %s15, 0
      %p129 = por %p127, %p128
      %p130 = scmp.le.s32.totalorder 1, %s9
      %p131 = scmp.lt.s32.totalorder %s9, 3
      %p132 = pnand %p130, %p131
      %p133 = pneg %p132
      // Predicated region
      $region9: #{_forward_impl.7} parent=5 // pred_check
        _
      $region10: #{_forward_impl.7} parent=5 // pred_check_branch
        %135 = sbr.rel (%p132) target = $region12
      $region11: #{_forward_impl.7} parent=5 // pred_region
        %s136 = ssub.s32 %s9, 1
        // Predicated region
        $region13: #{_forward_impl.7} parent=11 // pred_check
          %p137 = pneg %p96
        $region14: #{_forward_impl.7} parent=11 // pred_check_branch
          %139 = sbr.rel (%p137) target = $region16
        $region15: #{_forward_impl.7} parent=11 // pred_region
          _
        $region16: #{_forward_impl.7} parent=11 // pred_fallthru
          _
      $region12: #{_forward_impl.7} parent=5 // pred_fallthru
        _
      %p140 = scmp.lt.s32.totalorder %s9, 2
      // Predicated region
      $region17: #{_forward_impl.7} parent=5 // pred_check
        %p141 = pneg %p140
      $region18: #{_forward_impl.7} parent=5 // pred_check_branch
        %143 = sbr.rel (%p141) target = $region20
      $region19: #{_forward_impl.7} parent=5 // pred_region
        // Predicated region
        $region21: #{_forward_impl.7} parent=19 // pred_check
          %p144 = pneg %p43
        $region22: #{_forward_impl.7} parent=19 // pred_check_branch
          %146 = sbr.rel (%p144) target = $region24
        $region23: #{_forward_impl.7} parent=19 // pred_region
          %s147 = sand.u32 %s33, 1
          %s148 = sand.u32 %s33, 1
          %s149 = smul.addr %s148, 108
          %s150 = scalar_lea.vmem [#allocation3], %s149
          %s151 = smul.u32 3, %s16
          %s152 = smul.u32 9, %s17
          %s153 = smul.addr %s151, 18
          %s154 = sadd.s32 %s152, %s153
          %s155 = smul.addr %s154, 4
          %s156 = scalar_lea.vmem %s0, %s155
          // Predicated region
          $region25: #{_forward_impl.7} parent=23 // pred_check
            _
          $region26: #{_forward_impl.7} parent=23 // pred_check_branch
            %158 = sbr.rel (0) target = $region28
          $region27: #{_forward_impl.7} parent=23 // pred_region
            // Predicated region
            $region29: #{_forward_impl.7} parent=27 // pred_check
              _
            $region30: #{_forward_impl.7} parent=27 // pred_check_branch
              %160 = sbr.rel (0) target = $region32
            $region31: #{_forward_impl.7} parent=27 // pred_region
              %s161 = scalar_lea.vmem %s156, 32
              %s162 = scalar_lea.vmem %s150, 32 [#allocation3]
              loop: start=0, step=1, limit=1
              $region33: #{_forward_impl.7} parent=31 // loop_pre_header
                _
              $region34: #{_forward_impl.7} parent=31 // loop_header
                %s164 = sphi 0, %s168
                %p165 = scmp.ge.s32.totalorder %s164, 1
                %s169 = sphi %s156, %s156
                %s170 = sphi %s150, %s150
              $region35: #{_forward_impl.7} parent=31 // loop_header_branch
                %167 = sbr.rel (%p165) target = $region39
              $region36: #{_forward_impl.7} parent=31 // loop_body
                %v171 = vld [vmem:[%s169] sm:$0xff]
                %172 = vst [vmem:[%s170] sm:$0xff] %v171
                %v173 = vld [vmem:[%s169 + $0x8] sm:$0xff]
                %174 = vst [vmem:[%s170 + $0x8] sm:$0xff] %v173
                %v175 = vld [vmem:[%s169 + $0x10] sm:$0xff]
                %176 = vst [vmem:[%s170 + $0x10] sm:$0xff] %v175
                %v177 = vld [vmem:[%s169 + $0x18] sm:$0xff]
                %178 = vst [vmem:[%s170 + $0x18] sm:$0xff] %v177
                %v179 = vld [vmem:[%s169 + $0x48] sm:$0xff]
                %180 = vst [vmem:[%s170 + $0x24] sm:$0xff] %v179
                %v181 = vld [vmem:[%s169 + $0x50] sm:$0xff]
                %182 = vst [vmem:[%s170 + $0x2c] sm:$0xff] %v181
                %v183 = vld [vmem:[%s169 + $0x58] sm:$0xff]
                %184 = vst [vmem:[%s170 + $0x34] sm:$0xff] %v183
                %v185 = vld [vmem:[%s169 + $0x60] sm:$0xff]
                %186 = vst [vmem:[%s170 + $0x3c] sm:$0xff] %v185
                %v187 = vld [vmem:[%s169 + $0x90] sm:$0xff]
                %188 = vst [vmem:[%s170 + $0x48] sm:$0xff] %v187
                %v189 = vld [vmem:[%s169 + $0x98] sm:$0xff]
                %190 = vst [vmem:[%s170 + $0x50] sm:$0xff] %v189
                %v191 = vld [vmem:[%s169 + $0xa0] sm:$0xff]
                %192 = vst [vmem:[%s170 + $0x58] sm:$0xff] %v191
                %v193 = vld [vmem:[%s169 + $0xa8] sm:$0xff]
                %194 = vst [vmem:[%s170 + $0x60] sm:$0xff] %v193
              $region37: #{_forward_impl.7} parent=31 // loop_footer
                %s168 = sadd.s32 1, %s164
              $region38: #{_forward_impl.7} parent=31 // loop_footer_branch
                %163 = sbr.rel target = $region34
              $region39: #{_forward_impl.7} parent=31 // loop_exit
                _
              loop: start=0, step=1, limit=1
              $region40: #{_forward_impl.7} parent=31 // loop_pre_header
                _
              $region41: #{_forward_impl.7} parent=31 // loop_header
                %s197 = sphi 0, %s201
                %p198 = scmp.ge.s32.totalorder %s197, 1
                %s202 = sphi %s161, %s161
                %s203 = sphi %s162, %s162
              $region42: #{_forward_impl.7} parent=31 // loop_header_branch
                %200 = sbr.rel (%p198) target = $region46
              $region43: #{_forward_impl.7} parent=31 // loop_body
                %v204 = vld [vmem:[%s202] sm:$0xf]
                %205 = vst [vmem:[%s203] sm:$0xf] %v204
                %v206 = vld [vmem:[%s202 + $0x48] sm:$0xf]
                %207 = vst [vmem:[%s203 + $0x24] sm:$0xf] %v206
                %v208 = vld [vmem:[%s202 + $0x90] sm:$0xf]
                %209 = vst [vmem:[%s203 + $0x48] sm:$0xf] %v208
              $region44: #{_forward_impl.7} parent=31 // loop_footer
                %s201 = sadd.s32 1, %s197
              $region45: #{_forward_impl.7} parent=31 // loop_footer_branch
                %196 = sbr.rel target = $region41
              $region46: #{_forward_impl.7} parent=31 // loop_exit
                _
            $region32: #{_forward_impl.7} parent=27 // pred_fallthru
              _
          $region28: #{_forward_impl.7} parent=23 // pred_fallthru
            _
          %210 = vnop
        $region24: #{_forward_impl.7} parent=19 // pred_fallthru
          _
        // Predicated region
        $region47: #{_forward_impl.7} parent=19 // pred_check
          %p211 = pneg %p69
        $region48: #{_forward_impl.7} parent=19 // pred_check_branch
          %213 = sbr.rel (%p211) target = $region50
        $region49: #{_forward_impl.7} parent=19 // pred_region
          %s214 = smul.u32 144, %s17
          %p215 = scmp.lt.s32.totalorder %s214, 287
          %s216 = scalar_select %p215, %s214, 287
          %s217 = smul.addr %s216, 4
          %s218 = scalar_lea.vmem %s1, %s217
          %s219 = smul.u32 144, %s17
        $region50: #{_forward_impl.7} parent=19 // pred_fallthru
          _
      $region20: #{_forward_impl.7} parent=5 // pred_fallthru
        _
      %p220 = scmp.le.s32.totalorder 1, %s9
      %p221 = scmp.lt.s32.totalorder %s9, 3
      %p222 = pnand %p220, %p221
      %p223 = pneg %p222
      // Predicated region
      $region51: #{_forward_impl.7} parent=5 // pred_check
        _
      $region52: #{_forward_impl.7} parent=5 // pred_check_branch
        %225 = sbr.rel (%p222) target = $region54
      $region53: #{_forward_impl.7} parent=5 // pred_region
        %s226 = ssub.s32 %s9, 1
        %s227 = sand.u32 %s36, 1
        %s228 = sand.u32 %s36, 1
        %s229 = smul.addr %s228, 108
        %s230 = scalar_lea.vmem [#allocation3], %s229
        // Predicated region
        $region55: #{_forward_impl.7} parent=53 // pred_check
          %p231 = pneg %p49
        $region56: #{_forward_impl.7} parent=53 // pred_check_branch
          %233 = sbr.rel (%p231) target = $region58
        $region57: #{_forward_impl.7} parent=53 // pred_region
          _
        $region58: #{_forward_impl.7} parent=53 // pred_fallthru
          _
        %s234 = sand.u32 %s36, 1
        %s235 = sand.u32 %s36, 1
        %s236 = smul.addr %s235, 108
        %s237 = scalar_lea.vmem [#allocation3], %s236
        %p238 = pneg %p49
        %p239 = pneg %p46
        %s240 = smul.u32 144, %s19
        %p241 = scmp.lt.s32.totalorder %s240, 287
        %s242 = scalar_select %p241, %s240, 287
        %s243 = smul.addr %s242, 4
        %s244 = scalar_lea.vmem %s1, %s243
        %p245 = pneg %p75
        %p246 = pneg %p72
        %p247 = pneg %p96
        %p248 = pneg %p93
        %p249 = pneg %p122
        %p250 = pneg %p119
        %s251 = smul.u32 3, %s18
        %p252 = scmp.lt.s32.totalorder %s251, 2
        %s253 = scalar_select %p252, %s251, 2
        %s254 = smul.addr %s253, 4
        %s255 = scalar_lea.vmem %s3, %s254
        %s256 = smul.u32 3, %s18
        %s257 = smul.u32 9, %s19
        %s258 = smul.u32 144, %s19
        %p259 = scmp.lt.s32.totalorder %s258, 287
        %s260 = scalar_select %p259, %s258, 287
        %s261 = smul.addr %s260, 4
        %s262 = scalar_lea.vmem %s1, %s261
        %s263 = smul.u32 144, %s19
        %s264 = smul.u32 3, %s18
        %p265 = scmp.lt.s32.totalorder %s264, 2
        %s266 = scalar_select %p265, %s264, 2
        %s267 = smul.addr %s266, 4
        %s268 = scalar_lea.vmem %s3, %s267
        %s269 = smul.u32 3, %s18
        %p271 = scmp.eq.s32.totalorder %s19, 0
        // Predicated region
        $region59: #{_forward_impl.7} parent=53 // pred_check
          %p272 = pneg %p271
        $region60: #{_forward_impl.7} parent=53 // pred_check_branch
          %274 = sbr.rel (%p272) target = $region62
        $region61: #{_forward_impl.7} parent=53 // pred_region
          %275 = vst [vmem:[#allocation2] sm:$0xff] 0.0
          %276 = vst [vmem:[#allocation2 + $0x8] sm:$0xff] 0.0
          %277 = vst [vmem:[#allocation2 + $0x10] sm:$0xff] 0.0
        $region62: #{_forward_impl.7} parent=53 // pred_fallthru
          _
        %v278 = vld [vmem:[#allocation2] sm:$0xff]
        %v279 = vld [vmem:[#allocation2 + $0x8] sm:$0xff]
        %v280 = vld [vmem:[#allocation2 + $0x10] sm:$0xff]
        %v281 = vld [vmem:[%s230] sm:$0xff]
        %v282 = vld [vmem:[%s230 + $0x8] sm:$0xff]
        %v283 = vld [vmem:[%s230 + $0x10] sm:$0xff]
        %v284 = vld [vmem:[%s230 + $0x18] sm:$0xff]
        %v285 = vld [vmem:[%s230 + $0x20] sm:$0xf]
        %v286 = vld [vmem:[%s230 + $0x24] sm:$0xff]
        %v287 = vld [vmem:[%s230 + $0x2c] sm:$0xff]
        %v288 = vld [vmem:[%s230 + $0x34] sm:$0xff]
        %v289 = vld [vmem:[%s230 + $0x3c] sm:$0xff]
        %v290 = vld [vmem:[%s230 + $0x44] sm:$0xf]
        %v291 = vld [vmem:[%s230 + $0x48] sm:$0xff]
        %v292 = vld [vmem:[%s230 + $0x50] sm:$0xff]
        %v293 = vld [vmem:[%s230 + $0x58] sm:$0xff]
        %v294 = vld [vmem:[%s230 + $0x60] sm:$0xff]
        %v295 = vld [vmem:[%s230 + $0x68] sm:$0xf]
        %v296 = vld [vmem:[%s262] sm:$0xf]
        %v297 = vld [vmem:[%s262 + $0x4] sm:$0xf]
        %v298 = vld [vmem:[%s262 + $0x8] sm:$0xf]
        %v299 = vld [vmem:[%s262 + $0xc] sm:$0xf]
        %v300 = vld [vmem:[%s262 + $0x10] sm:$0xf]
        %v301 = vld [vmem:[%s262 + $0x14] sm:$0xf]
        %v302 = vld [vmem:[%s262 + $0x18] sm:$0xf]
        %v303 = vld [vmem:[%s262 + $0x1c] sm:$0xf]
        %v304 = vld [vmem:[%s262 + $0x20] sm:$0xf]
        %v305 = vld [vmem:[%s262 + $0x24] sm:$0xf]
        %v306 = vld [vmem:[%s262 + $0x28] sm:$0xf]
        %v307 = vld [vmem:[%s262 + $0x2c] sm:$0xf]
        %v308 = vld [vmem:[%s262 + $0x30] sm:$0xf]
        %v309 = vld [vmem:[%s262 + $0x34] sm:$0xf]
        %v310 = vld [vmem:[%s262 + $0x38] sm:$0xf]
        %v311 = vld [vmem:[%s262 + $0x3c] sm:$0xf]
        %v312 = vld [vmem:[%s262 + $0x40] sm:$0xf]
        %v313 = vld [vmem:[%s262 + $0x44] sm:$0xf]
        %v314 = vld [vmem:[%s262 + $0x48] sm:$0xf]
        %v315 = vld [vmem:[%s262 + $0x4c] sm:$0xf]
        %v316 = vld [vmem:[%s262 + $0x50] sm:$0xf]
        %v317 = vld [vmem:[%s262 + $0x54] sm:$0xf]
        %v318 = vld [vmem:[%s262 + $0x58] sm:$0xf]
        %v319 = vld [vmem:[%s262 + $0x5c] sm:$0xf]
        %v320 = vld [vmem:[%s262 + $0x60] sm:$0xf]
        %v321 = vld [vmem:[%s262 + $0x64] sm:$0xf]
        %v322 = vld [vmem:[%s262 + $0x68] sm:$0xf]
        %v323 = vld [vmem:[%s262 + $0x6c] sm:$0xf]
        %v324 = vld [vmem:[%s262 + $0x70] sm:$0xf]
        %v325 = vld [vmem:[%s262 + $0x74] sm:$0xf]
        %v326 = vld [vmem:[%s262 + $0x78] sm:$0xf]
        %v327 = vld [vmem:[%s262 + $0x7c] sm:$0xf]
        %v328 = vld [vmem:[%s262 + $0x80] sm:$0xf]
        %v329 = vld [vmem:[%s262 + $0x84] sm:$0xf]
        %v330 = vld [vmem:[%s262 + $0x88] sm:$0xf]
        %v331 = vld [vmem:[%s262 + $0x8c] sm:$0xf]
        %v332 = vld [vmem:[%s262 + $0x90] sm:$0xf]
        %v333 = vld [vmem:[%s262 + $0x94] sm:$0xf]
        %v334 = vld [vmem:[%s262 + $0x98] sm:$0xf]
        %v335 = vld [vmem:[%s262 + $0x9c] sm:$0xf]
        %v336 = vld [vmem:[%s262 + $0xa0] sm:$0xf]
        %v337 = vld [vmem:[%s262 + $0xa4] sm:$0xf]
        %v338 = vld [vmem:[%s262 + $0xa8] sm:$0xf]
        %v339 = vld [vmem:[%s262 + $0xac] sm:$0xf]
        %v340 = vld [vmem:[%s262 + $0xb0] sm:$0xf]
        %v341 = vld [vmem:[%s262 + $0xb4] sm:$0xf]
        %v342 = vld [vmem:[%s262 + $0xb8] sm:$0xf]
        %v343 = vld [vmem:[%s262 + $0xbc] sm:$0xf]
        %v344 = vld [vmem:[%s262 + $0xc0] sm:$0xf]
        %v345 = vld [vmem:[%s262 + $0xc4] sm:$0xf]
        %v346 = vld [vmem:[%s262 + $0xc8] sm:$0xf]
        %v347 = vld [vmem:[%s262 + $0xcc] sm:$0xf]
        %v348 = vld [vmem:[%s262 + $0xd0] sm:$0xf]
        %v349 = vld [vmem:[%s262 + $0xd4] sm:$0xf]
        %v350 = vld [vmem:[%s262 + $0xd8] sm:$0xf]
        %v351 = vld [vmem:[%s262 + $0xdc] sm:$0xf]
        %v352 = vld [vmem:[%s262 + $0xe0] sm:$0xf]
        %v353 = vld [vmem:[%s262 + $0xe4] sm:$0xf]
        %v354 = vld [vmem:[%s262 + $0xe8] sm:$0xf]
        %v355 = vld [vmem:[%s262 + $0xec] sm:$0xf]
        %v356 = vld [vmem:[%s262 + $0xf0] sm:$0xf]
        %v357 = vld [vmem:[%s262 + $0xf4] sm:$0xf]
        %v358 = vld [vmem:[%s262 + $0xf8] sm:$0xf]
        %v359 = vld [vmem:[%s262 + $0xfc] sm:$0xf]
        %v360 = vld [vmem:[%s262 + $0x100] sm:$0xf]
        %v361 = vld [vmem:[%s262 + $0x104] sm:$0xf]
        %v362 = vld [vmem:[%s262 + $0x108] sm:$0xf]
        %v363 = vld [vmem:[%s262 + $0x10c] sm:$0xf]
        %v364 = vld [vmem:[%s262 + $0x110] sm:$0xf]
        %v365 = vld [vmem:[%s262 + $0x114] sm:$0xf]
        %v366 = vld [vmem:[%s262 + $0x118] sm:$0xf]
        %v367 = vld [vmem:[%s262 + $0x11c] sm:$0xf]
        %v368 = vld [vmem:[%s262 + $0x120] sm:$0xf]
        %v369 = vld [vmem:[%s262 + $0x124] sm:$0xf]
        %v370 = vld [vmem:[%s262 + $0x128] sm:$0xf]
        %v371 = vld [vmem:[%s262 + $0x12c] sm:$0xf]
        %v372 = vld [vmem:[%s262 + $0x130] sm:$0xf]
        %v373 = vld [vmem:[%s262 + $0x134] sm:$0xf]
        %v374 = vld [vmem:[%s262 + $0x138] sm:$0xf]
        %v375 = vld [vmem:[%s262 + $0x13c] sm:$0xf]
        %v376 = vld [vmem:[%s262 + $0x140] sm:$0xf]
        %v377 = vld [vmem:[%s262 + $0x144] sm:$0xf]
        %v378 = vld [vmem:[%s262 + $0x148] sm:$0xf]
        %v379 = vld [vmem:[%s262 + $0x14c] sm:$0xf]
        %v380 = vld [vmem:[%s262 + $0x150] sm:$0xf]
        %v381 = vld [vmem:[%s262 + $0x154] sm:$0xf]
        %v382 = vld [vmem:[%s262 + $0x158] sm:$0xf]
        %v383 = vld [vmem:[%s262 + $0x15c] sm:$0xf]
        %v384 = vld [vmem:[%s262 + $0x160] sm:$0xf]
        %v385 = vld [vmem:[%s262 + $0x164] sm:$0xf]
        %v386 = vld [vmem:[%s262 + $0x168] sm:$0xf]
        %v387 = vld [vmem:[%s262 + $0x16c] sm:$0xf]
        %v388 = vld [vmem:[%s262 + $0x170] sm:$0xf]
        %v389 = vld [vmem:[%s262 + $0x174] sm:$0xf]
        %v390 = vld [vmem:[%s262 + $0x178] sm:$0xf]
        %v391 = vld [vmem:[%s262 + $0x17c] sm:$0xf]
        %v392 = vld [vmem:[%s262 + $0x180] sm:$0xf]
        %v393 = vld [vmem:[%s262 + $0x184] sm:$0xf]
        %v394 = vld [vmem:[%s262 + $0x188] sm:$0xf]
        %v395 = vld [vmem:[%s262 + $0x18c] sm:$0xf]
        %v396 = vld [vmem:[%s262 + $0x190] sm:$0xf]
        %v397 = vld [vmem:[%s262 + $0x194] sm:$0xf]
        %v398 = vld [vmem:[%s262 + $0x198] sm:$0xf]
        %v399 = vld [vmem:[%s262 + $0x19c] sm:$0xf]
        %v400 = vld [vmem:[%s262 + $0x1a0] sm:$0xf]
        %v401 = vld [vmem:[%s262 + $0x1a4] sm:$0xf]
        %v402 = vld [vmem:[%s262 + $0x1a8] sm:$0xf]
        %v403 = vld [vmem:[%s262 + $0x1ac] sm:$0xf]
        %v404 = vld [vmem:[%s262 + $0x1b0] sm:$0xf]
        %v405 = vld [vmem:[%s262 + $0x1b4] sm:$0xf]
        %v406 = vld [vmem:[%s262 + $0x1b8] sm:$0xf]
        %v407 = vld [vmem:[%s262 + $0x1bc] sm:$0xf]
        %v408 = vld [vmem:[%s262 + $0x1c0] sm:$0xf]
        %v409 = vld [vmem:[%s262 + $0x1c4] sm:$0xf]
        %v410 = vld [vmem:[%s262 + $0x1c8] sm:$0xf]
        %v411 = vld [vmem:[%s262 + $0x1cc] sm:$0xf]
        %v412 = vld [vmem:[%s262 + $0x1d0] sm:$0xf]
        %v413 = vld [vmem:[%s262 + $0x1d4] sm:$0xf]
        %v414 = vld [vmem:[%s262 + $0x1d8] sm:$0xf]
        %v415 = vld [vmem:[%s262 + $0x1dc] sm:$0xf]
        %v416 = vld [vmem:[%s262 + $0x1e0] sm:$0xf]
        %v417 = vld [vmem:[%s262 + $0x1e4] sm:$0xf]
        %v418 = vld [vmem:[%s262 + $0x1e8] sm:$0xf]
        %v419 = vld [vmem:[%s262 + $0x1ec] sm:$0xf]
        %v420 = vld [vmem:[%s262 + $0x1f0] sm:$0xf]
        %v421 = vld [vmem:[%s262 + $0x1f4] sm:$0xf]
        %v422 = vld [vmem:[%s262 + $0x1f8] sm:$0xf]
        %v423 = vld [vmem:[%s262 + $0x1fc] sm:$0xf]
        %v424 = vld [vmem:[%s262 + $0x200] sm:$0xf]
        %v425 = vld [vmem:[%s262 + $0x204] sm:$0xf]
        %v426 = vld [vmem:[%s262 + $0x208] sm:$0xf]
        %v427 = vld [vmem:[%s262 + $0x20c] sm:$0xf]
        %v428 = vld [vmem:[%s262 + $0x210] sm:$0xf]
        %v429 = vld [vmem:[%s262 + $0x214] sm:$0xf]
        %v430 = vld [vmem:[%s262 + $0x218] sm:$0xf]
        %v431 = vld [vmem:[%s262 + $0x21c] sm:$0xf]
        %v432 = vld [vmem:[%s262 + $0x220] sm:$0xf]
        %v433 = vld [vmem:[%s262 + $0x224] sm:$0xf]
        %v434 = vld [vmem:[%s262 + $0x228] sm:$0xf]
        %v435 = vld [vmem:[%s262 + $0x22c] sm:$0xf]
        %v436 = vld [vmem:[%s262 + $0x230] sm:$0xf]
        %v437 = vld [vmem:[%s262 + $0x234] sm:$0xf]
        %v438 = vld [vmem:[%s262 + $0x238] sm:$0xf]
        %v439 = vld [vmem:[%s262 + $0x23c] sm:$0xf]
        %v455 = vunpack.c.l.b16 %v281
        %v456 = vunpack.c.h.b16 %v281
        %v457 = vunpack.c.l.b16 %v282
        %v458 = vunpack.c.h.b16 %v282
        %v459 = vunpack.c.l.b16 %v283
        %v460 = vunpack.c.h.b16 %v283
        %v461 = vunpack.c.l.b16 %v284
        %v462 = vunpack.c.h.b16 %v284
        %v463 = vunpack.c.l.b16 %v285
        %v464 = vunpack.c.l.b16 %v286
        %v465 = vunpack.c.h.b16 %v286
        %v466 = vunpack.c.l.b16 %v287
        %v467 = vunpack.c.h.b16 %v287
        %v468 = vunpack.c.l.b16 %v288
        %v469 = vunpack.c.h.b16 %v288
        %v470 = vunpack.c.l.b16 %v289
        %v471 = vunpack.c.h.b16 %v289
        %v472 = vunpack.c.l.b16 %v290
        %v473 = vunpack.c.l.b16 %v291
        %v474 = vunpack.c.h.b16 %v291
        %v475 = vunpack.c.l.b16 %v292
        %v476 = vunpack.c.h.b16 %v292
        %v477 = vunpack.c.l.b16 %v293
        %v478 = vunpack.c.h.b16 %v293
        %v479 = vunpack.c.l.b16 %v294
        %v480 = vunpack.c.h.b16 %v294
        %v481 = vunpack.c.l.b16 %v295
        %v482 = vpack.c.b16 %v464, %v455
        %v483 = vpack.c.b16 %v465, %v456
        %v484 = vpack.c.b16 %v466, %v457
        %v485 = vpack.c.b16 %v467, %v458
        %v486 = vpack.c.b16 %v468, %v459
        %v487 = vpack.c.b16 %v469, %v460
        %v488 = vpack.c.b16 %v470, %v461
        %v489 = vpack.c.b16 %v471, %v462
        %v490 = vpack.c.b16 %v472, %v463
        %v491 = vpack.c.b16 %v473, %v473
        %v492 = vpack.c.b16 %v474, %v474
        %v493 = vpack.c.b16 %v475, %v475
        %v494 = vpack.c.b16 %v476, %v476
        %v495 = vpack.c.b16 %v477, %v477
        %v496 = vpack.c.b16 %v478, %v478
        %v497 = vpack.c.b16 %v479, %v479
        %v498 = vpack.c.b16 %v480, %v480
        %v499 = vpack.c.b16 %v481, %v481
        %v662 = vunpack.c.l.b16 %v296
        %v663 = vunpack.c.l.b16 %v297
        %v664 = vunpack.c.l.b16 %v298
        %v665 = vunpack.c.l.b16 %v299
        %v666 = vunpack.c.l.b16 %v300
        %v667 = vunpack.c.l.b16 %v301
        %v668 = vunpack.c.l.b16 %v302
        %v669 = vunpack.c.l.b16 %v303
        %v670 = vunpack.c.l.b16 %v304
        %v671 = vunpack.c.l.b16 %v305
        %v672 = vunpack.c.l.b16 %v306
        %v673 = vunpack.c.l.b16 %v307
        %v674 = vunpack.c.l.b16 %v308
        %v675 = vunpack.c.l.b16 %v309
        %v676 = vunpack.c.l.b16 %v310
        %v677 = vunpack.c.l.b16 %v311
        %v678 = vunpack.c.l.b16 %v312
        %v679 = vunpack.c.l.b16 %v313
        %v680 = vunpack.c.l.b16 %v314
        %v681 = vunpack.c.l.b16 %v315
        %v682 = vunpack.c.l.b16 %v316
        %v683 = vunpack.c.l.b16 %v317
        %v684 = vunpack.c.l.b16 %v318
        %v685 = vunpack.c.l.b16 %v319
        %v686 = vunpack.c.l.b16 %v320
        %v687 = vunpack.c.l.b16 %v321
        %v688 = vunpack.c.l.b16 %v322
        %v689 = vunpack.c.l.b16 %v323
        %v690 = vunpack.c.l.b16 %v324
        %v691 = vunpack.c.l.b16 %v325
        %v692 = vunpack.c.l.b16 %v326
        %v693 = vunpack.c.l.b16 %v327
        %v694 = vunpack.c.l.b16 %v328
        %v695 = vunpack.c.l.b16 %v329
        %v696 = vunpack.c.l.b16 %v330
        %v697 = vunpack.c.l.b16 %v331
        %v698 = vunpack.c.l.b16 %v332
        %v699 = vunpack.c.l.b16 %v333
        %v700 = vunpack.c.l.b16 %v334
        %v701 = vunpack.c.l.b16 %v335
        %v702 = vunpack.c.l.b16 %v336
        %v703 = vunpack.c.l.b16 %v337
        %v704 = vunpack.c.l.b16 %v338
        %v705 = vunpack.c.l.b16 %v339
        %v706 = vunpack.c.l.b16 %v340
        %v707 = vunpack.c.l.b16 %v341
        %v708 = vunpack.c.l.b16 %v342
        %v709 = vunpack.c.l.b16 %v343
        %v710 = vunpack.c.l.b16 %v344
        %v711 = vunpack.c.l.b16 %v345
        %v712 = vunpack.c.l.b16 %v346
        %v713 = vunpack.c.l.b16 %v347
        %v714 = vunpack.c.l.b16 %v348
        %v715 = vunpack.c.l.b16 %v349
        %v716 = vunpack.c.l.b16 %v350
        %v717 = vunpack.c.l.b16 %v351
        %v718 = vunpack.c.l.b16 %v352
        %v719 = vunpack.c.l.b16 %v353
        %v720 = vunpack.c.l.b16 %v354
        %v721 = vunpack.c.l.b16 %v355
        %v722 = vunpack.c.l.b16 %v356
        %v723 = vunpack.c.l.b16 %v357
        %v724 = vunpack.c.l.b16 %v358
        %v725 = vunpack.c.l.b16 %v359
        %v726 = vunpack.c.l.b16 %v360
        %v727 = vunpack.c.l.b16 %v361
        %v728 = vunpack.c.l.b16 %v362
        %v729 = vunpack.c.l.b16 %v363
        %v730 = vunpack.c.l.b16 %v364
        %v731 = vunpack.c.l.b16 %v365
        %v732 = vunpack.c.l.b16 %v366
        %v733 = vunpack.c.l.b16 %v367
        %v734 = vunpack.c.l.b16 %v368
        %v735 = vunpack.c.l.b16 %v369
        %v736 = vunpack.c.l.b16 %v370
        %v737 = vunpack.c.l.b16 %v371
        %v738 = vunpack.c.l.b16 %v372
        %v739 = vunpack.c.l.b16 %v373
        %v740 = vunpack.c.l.b16 %v374
        %v741 = vunpack.c.l.b16 %v375
        %v742 = vunpack.c.l.b16 %v376
        %v743 = vunpack.c.l.b16 %v377
        %v744 = vunpack.c.l.b16 %v378
        %v745 = vunpack.c.l.b16 %v379
        %v746 = vunpack.c.l.b16 %v380
        %v747 = vunpack.c.l.b16 %v381
        %v748 = vunpack.c.l.b16 %v382
        %v749 = vunpack.c.l.b16 %v383
        %v750 = vunpack.c.l.b16 %v384
        %v751 = vunpack.c.l.b16 %v385
        %v752 = vunpack.c.l.b16 %v386
        %v753 = vunpack.c.l.b16 %v387
        %v754 = vunpack.c.l.b16 %v388
        %v755 = vunpack.c.l.b16 %v389
        %v756 = vunpack.c.l.b16 %v390
        %v757 = vunpack.c.l.b16 %v391
        %v758 = vunpack.c.l.b16 %v392
        %v759 = vunpack.c.l.b16 %v393
        %v760 = vunpack.c.l.b16 %v394
        %v761 = vunpack.c.l.b16 %v395
        %v762 = vunpack.c.l.b16 %v396
        %v763 = vunpack.c.l.b16 %v397
        %v764 = vunpack.c.l.b16 %v398
        %v765 = vunpack.c.l.b16 %v399
        %v766 = vunpack.c.l.b16 %v400
        %v767 = vunpack.c.l.b16 %v401
        %v768 = vunpack.c.l.b16 %v402
        %v769 = vunpack.c.l.b16 %v403
        %v770 = vunpack.c.l.b16 %v404
        %v771 = vunpack.c.l.b16 %v405
        %v772 = vunpack.c.l.b16 %v406
        %v773 = vunpack.c.l.b16 %v407
        %v774 = vunpack.c.l.b16 %v408
        %v775 = vunpack.c.l.b16 %v409
        %v776 = vunpack.c.l.b16 %v410
        %v777 = vunpack.c.l.b16 %v411
        %v778 = vunpack.c.l.b16 %v412
        %v779 = vunpack.c.l.b16 %v413
        %v780 = vunpack.c.l.b16 %v414
        %v781 = vunpack.c.l.b16 %v415
        %v782 = vunpack.c.l.b16 %v416
        %v783 = vunpack.c.l.b16 %v417
        %v784 = vunpack.c.l.b16 %v418
        %v785 = vunpack.c.l.b16 %v419
        %v786 = vunpack.c.l.b16 %v420
        %v787 = vunpack.c.l.b16 %v421
        %v788 = vunpack.c.l.b16 %v422
        %v789 = vunpack.c.l.b16 %v423
        %v790 = vunpack.c.l.b16 %v424
        %v791 = vunpack.c.l.b16 %v425
        %v792 = vunpack.c.l.b16 %v426
        %v793 = vunpack.c.l.b16 %v427
        %v794 = vunpack.c.l.b16 %v428
        %v795 = vunpack.c.l.b16 %v429
        %v796 = vunpack.c.l.b16 %v430
        %v797 = vunpack.c.l.b16 %v431
        %v798 = vunpack.c.l.b16 %v432
        %v799 = vunpack.c.l.b16 %v433
        %v800 = vunpack.c.l.b16 %v434
        %v801 = vunpack.c.l.b16 %v435
        %v802 = vunpack.c.l.b16 %v436
        %v803 = vunpack.c.l.b16 %v437
        %v804 = vunpack.c.l.b16 %v438
        %v805 = vunpack.c.l.b16 %v439
        %v806 = vpack.c.b16 %v663, %v662
        %v807 = vpack.c.b16 %v665, %v664
        %v808 = vpack.c.b16 %v667, %v666
        %v809 = vpack.c.b16 %v669, %v668
        %v810 = vpack.c.b16 %v671, %v670
        %v811 = vpack.c.b16 %v673, %v672
        %v812 = vpack.c.b16 %v675, %v674
        %v813 = vpack.c.b16 %v677, %v676
        %v814 = vpack.c.b16 %v679, %v678
        %v815 = vpack.c.b16 %v681, %v680
        %v816 = vpack.c.b16 %v683, %v682
        %v817 = vpack.c.b16 %v685, %v684
        %v818 = vpack.c.b16 %v687, %v686
        %v819 = vpack.c.b16 %v689, %v688
        %v820 = vpack.c.b16 %v691, %v690
        %v821 = vpack.c.b16 %v693, %v692
        %v822 = vpack.c.b16 %v695, %v694
        %v823 = vpack.c.b16 %v697, %v696
        %v824 = vpack.c.b16 %v699, %v698
        %v825 = vpack.c.b16 %v701, %v700
        %v826 = vpack.c.b16 %v703, %v702
        %v827 = vpack.c.b16 %v705, %v704
        %v828 = vpack.c.b16 %v707, %v706
        %v829 = vpack.c.b16 %v709, %v708
        %v830 = vpack.c.b16 %v711, %v710
        %v831 = vpack.c.b16 %v713, %v712
        %v832 = vpack.c.b16 %v715, %v714
        %v833 = vpack.c.b16 %v717, %v716
        %v834 = vpack.c.b16 %v719, %v718
        %v835 = vpack.c.b16 %v721, %v720
        %v836 = vpack.c.b16 %v723, %v722
        %v837 = vpack.c.b16 %v725, %v724
        %v838 = vpack.c.b16 %v727, %v726
        %v839 = vpack.c.b16 %v729, %v728
        %v840 = vpack.c.b16 %v731, %v730
        %v841 = vpack.c.b16 %v733, %v732
        %v842 = vpack.c.b16 %v735, %v734
        %v843 = vpack.c.b16 %v737, %v736
        %v844 = vpack.c.b16 %v739, %v738
        %v845 = vpack.c.b16 %v741, %v740
        %v846 = vpack.c.b16 %v743, %v742
        %v847 = vpack.c.b16 %v745, %v744
        %v848 = vpack.c.b16 %v747, %v746
        %v849 = vpack.c.b16 %v749, %v748
        %v850 = vpack.c.b16 %v751, %v750
        %v851 = vpack.c.b16 %v753, %v752
        %v852 = vpack.c.b16 %v755, %v754
        %v853 = vpack.c.b16 %v757, %v756
        %v854 = vpack.c.b16 %v759, %v758
        %v855 = vpack.c.b16 %v761, %v760
        %v856 = vpack.c.b16 %v763, %v762
        %v857 = vpack.c.b16 %v765, %v764
        %v858 = vpack.c.b16 %v767, %v766
        %v859 = vpack.c.b16 %v769, %v768
        %v860 = vpack.c.b16 %v771, %v770
        %v861 = vpack.c.b16 %v773, %v772
        %v862 = vpack.c.b16 %v775, %v774
        %v863 = vpack.c.b16 %v777, %v776
        %v864 = vpack.c.b16 %v779, %v778
        %v865 = vpack.c.b16 %v781, %v780
        %v866 = vpack.c.b16 %v783, %v782
        %v867 = vpack.c.b16 %v785, %v784
        %v868 = vpack.c.b16 %v787, %v786
        %v869 = vpack.c.b16 %v789, %v788
        %v870 = vpack.c.b16 %v791, %v790
        %v871 = vpack.c.b16 %v793, %v792
        %v872 = vpack.c.b16 %v795, %v794
        %v873 = vpack.c.b16 %v797, %v796
        %v874 = vpack.c.b16 %v799, %v798
        %v875 = vpack.c.b16 %v801, %v800
        %v876 = vpack.c.b16 %v803, %v802
        %v877 = vpack.c.b16 %v805, %v804
        %950 = vmatprep.subr.bf16.mxu0 0
        %951 = vmatpush1.bf16.msra.mxu0 %v806
        %952 = vmatprep.subr.bf16.mxu0 0
        %953 = vmatpush1.bf16.msra.mxu0 %v807
        %954 = vmatprep.subr.bf16.mxu0 0
        %955 = vmatpush1.bf16.msra.mxu0 %v808
        %956 = vmatprep.subr.bf16.mxu0 0
        %957 = vmatpush1.bf16.msra.mxu0 %v809
        %958 = vmatprep.subr.bf16.mxu0 0
        %959 = vmatpush1.bf16.msra.mxu0 %v810
        %960 = vmatprep.subr.bf16.mxu0 0
        %961 = vmatpush1.bf16.msra.mxu0 %v811
        %962 = vmatprep.subr.bf16.mxu0 0
        %963 = vmatpush1.bf16.msra.mxu0 %v812
        %964 = vmatprep.subr.bf16.mxu0 0
        %965 = vmatpush1.bf16.msra.mxu0 %v813
        %966 = vmatprep.subr.bf16.mxu0 0
        %967 = vmatpush1.bf16.msra.mxu0 %v814
        %968 = vmatprep.subr.bf16.mxu0 0
        %969 = vmatpush1.bf16.msra.mxu0 %v815
        %970 = vmatprep.subr.bf16.mxu0 0
        %971 = vmatpush1.bf16.msra.mxu0 %v816
        %972 = vmatprep.subr.bf16.mxu0 0
        %973 = vmatpush1.bf16.msra.mxu0 %v817
        %974 = vmatprep.subr.bf16.mxu0 0
        %975 = vmatpush1.bf16.msra.mxu0 %v818
        %976 = vmatprep.subr.bf16.mxu0 0
        %977 = vmatpush1.bf16.msra.mxu0 %v819
        %978 = vmatprep.subr.bf16.mxu0 0
        %979 = vmatpush1.bf16.msra.mxu0 %v820
        %980 = vmatprep.subr.bf16.mxu0 0
        %981 = vmatpush1.bf16.msra.mxu0 %v821
        %982 = vmatprep.mubr.bf16.mxu0 %v483
        %983 = vmatmul.mubr.bf16.gmra.mrb[0].mxu0 %v482
        %v984 = vpop.f32.mrb[0].mxu0
        %v985 = vadd.f32 0.0, %v984
        %v986 = vpop.f32.mrb[0].mxu0
        %v987 = vpop.f32.mrb[0].mxu0
        %v988 = vadd.f32 0.0, %v987
        %v989 = vpop.f32.mrb[0].mxu0
        %990 = vmatprep.mubr.bf16.mxu0 %v492
        %991 = vmatmul.mubr.bf16.gmra.mrb[0].mxu0 %v491
        %v992 = vpop.f32.mrb[0].mxu0
        %v993 = vadd.f32 0.0, %v992
        %v994 = vpop.f32.mrb[0].mxu0
        %v995 = vpop.f32.mrb[0].mxu0
        %v996 = vpop.f32.mrb[0].mxu0
        %997 = vdwg.mxu0
        %998 = vmatprep.subr.bf16.mxu0 0
        %999 = vmatpush1.bf16.msra.mxu0 %v822
        %1000 = vmatprep.subr.bf16.mxu0 0
        %1001 = vmatpush1.bf16.msra.mxu0 %v823
        %1002 = vmatprep.subr.bf16.mxu0 0
        %1003 = vmatpush1.bf16.msra.mxu0 %v824
        %1004 = vmatprep.subr.bf16.mxu0 0
        %1005 = vmatpush1.bf16.msra.mxu0 %v825
        %1006 = vmatprep.subr.bf16.mxu0 0
        %1007 = vmatpush1.bf16.msra.mxu0 %v826
        %1008 = vmatprep.subr.bf16.mxu0 0
        %1009 = vmatpush1.bf16.msra.mxu0 %v827
        %1010 = vmatprep.subr.bf16.mxu0 0
        %1011 = vmatpush1.bf16.msra.mxu0 %v828
        %1012 = vmatprep.subr.bf16.mxu0 0
        %1013 = vmatpush1.bf16.msra.mxu0 %v829
        %1014 = vmatprep.subr.bf16.mxu0 0
        %1015 = vmatpush1.bf16.msra.mxu0 %v830
        %1016 = vmatprep.subr.bf16.mxu0 0
        %1017 = vmatpush1.bf16.msra.mxu0 %v831
        %1018 = vmatprep.subr.bf16.mxu0 0
        %1019 = vmatpush1.bf16.msra.mxu0 %v832
        %1020 = vmatprep.subr.bf16.mxu0 0
        %1021 = vmatpush1.bf16.msra.mxu0 %v833
        %1022 = vmatprep.subr.bf16.mxu0 0
        %1023 = vmatpush1.bf16.msra.mxu0 %v834
        %1024 = vmatprep.subr.bf16.mxu0 0
        %1025 = vmatpush1.bf16.msra.mxu0 %v835
        %1026 = vmatprep.subr.bf16.mxu0 0
        %1027 = vmatpush1.bf16.msra.mxu0 %v836
        %1028 = vmatprep.subr.bf16.mxu0 0
        %1029 = vmatpush1.bf16.msra.mxu0 %v837
        %1030 = vmatprep.mubr.bf16.mxu0 %v485
        %1031 = vmatmul.mubr.bf16.gmra.mrb[0].mxu0 %v484
        %v1032 = vpop.f32.mrb[0].mxu0
        %v1033 = vadd.f32 %v985, %v1032
        %v1034 = vpop.f32.mrb[0].mxu0
        %v1035 = vpop.f32.mrb[0].mxu0
        %v1036 = vadd.f32 %v988, %v1035
        %v1037 = vpop.f32.mrb[0].mxu0
        %1038 = vmatprep.mubr.bf16.mxu0 %v494
        %1039 = vmatmul.mubr.bf16.gmra.mrb[0].mxu0 %v493
        %v1040 = vpop.f32.mrb[0].mxu0
        %v1041 = vadd.f32 %v993, %v1040
        %v1042 = vpop.f32.mrb[0].mxu0
        %v1043 = vpop.f32.mrb[0].mxu0
        %v1044 = vpop.f32.mrb[0].mxu0
        %1045 = vdwg.mxu0
        %1046 = vmatprep.subr.bf16.mxu0 0
        %1047 = vmatpush1.bf16.msra.mxu0 %v838
        %1048 = vmatprep.subr.bf16.mxu0 0
        %1049 = vmatpush1.bf16.msra.mxu0 %v839
        %1050 = vmatprep.subr.bf16.mxu0 0
        %1051 = vmatpush1.bf16.msra.mxu0 %v840
        %1052 = vmatprep.subr.bf16.mxu0 0
        %1053 = vmatpush1.bf16.msra.mxu0 %v841
        %1054 = vmatprep.subr.bf16.mxu0 0
        %1055 = vmatpush1.bf16.msra.mxu0 %v842
        %1056 = vmatprep.subr.bf16.mxu0 0
        %1057 = vmatpush1.bf16.msra.mxu0 %v843
        %1058 = vmatprep.subr.bf16.mxu0 0
        %1059 = vmatpush1.bf16.msra.mxu0 %v844
        %1060 = vmatprep.subr.bf16.mxu0 0
        %1061 = vmatpush1.bf16.msra.mxu0 %v845
        %1062 = vmatprep.subr.bf16.mxu0 0
        %1063 = vmatpush1.bf16.msra.mxu0 %v846
        %1064 = vmatprep.subr.bf16.mxu0 0
        %1065 = vmatpush1.bf16.msra.mxu0 %v847
        %1066 = vmatprep.subr.bf16.mxu0 0
        %1067 = vmatpush1.bf16.msra.mxu0 %v848
        %1068 = vmatprep.subr.bf16.mxu0 0
        %1069 = vmatpush1.bf16.msra.mxu0 %v849
        %1070 = vmatprep.subr.bf16.mxu0 0
        %1071 = vmatpush1.bf16.msra.mxu0 %v850
        %1072 = vmatprep.subr.bf16.mxu0 0
        %1073 = vmatpush1.bf16.msra.mxu0 %v851
        %1074 = vmatprep.subr.bf16.mxu0 0
        %1075 = vmatpush1.bf16.msra.mxu0 %v852
        %1076 = vmatprep.subr.bf16.mxu0 0
        %1077 = vmatpush1.bf16.msra.mxu0 %v853
        %1078 = vmatprep.mubr.bf16.mxu0 %v487
        %1079 = vmatmul.mubr.bf16.gmra.mrb[0].mxu0 %v486
        %v1080 = vpop.f32.mrb[0].mxu0
        %v1081 = vadd.f32 %v1033, %v1080
        %v1082 = vpop.f32.mrb[0].mxu0
        %v1083 = vpop.f32.mrb[0].mxu0
        %v1084 = vadd.f32 %v1036, %v1083
        %v1085 = vpop.f32.mrb[0].mxu0
        %1086 = vmatprep.mubr.bf16.mxu0 %v496
        %1087 = vmatmul.mubr.bf16.gmra.mrb[0].mxu0 %v495
        %v1088 = vpop.f32.mrb[0].mxu0
        %v1089 = vadd.f32 %v1041, %v1088
        %v1090 = vpop.f32.mrb[0].mxu0
        %v1091 = vpop.f32.mrb[0].mxu0
        %v1092 = vpop.f32.mrb[0].mxu0
        %1093 = vdwg.mxu0
        %1094 = vmatprep.subr.bf16.mxu0 0
        %1095 = vmatpush1.bf16.msra.mxu0 %v854
        %1096 = vmatprep.subr.bf16.mxu0 0
        %1097 = vmatpush1.bf16.msra.mxu0 %v855
        %1098 = vmatprep.subr.bf16.mxu0 0
        %1099 = vmatpush1.bf16.msra.mxu0 %v856
        %1100 = vmatprep.subr.bf16.mxu0 0
        %1101 = vmatpush1.bf16.msra.mxu0 %v857
        %1102 = vmatprep.subr.bf16.mxu0 0
        %1103 = vmatpush1.bf16.msra.mxu0 %v858
        %1104 = vmatprep.subr.bf16.mxu0 0
        %1105 = vmatpush1.bf16.msra.mxu0 %v859
        %1106 = vmatprep.subr.bf16.mxu0 0
        %1107 = vmatpush1.bf16.msra.mxu0 %v860
        %1108 = vmatprep.subr.bf16.mxu0 0
        %1109 = vmatpush1.bf16.msra.mxu0 %v861
        %1110 = vmatprep.subr.bf16.mxu0 0
        %1111 = vmatpush1.bf16.msra.mxu0 %v862
        %1112 = vmatprep.subr.bf16.mxu0 0
        %1113 = vmatpush1.bf16.msra.mxu0 %v863
        %1114 = vmatprep.subr.bf16.mxu0 0
        %1115 = vmatpush1.bf16.msra.mxu0 %v864
        %1116 = vmatprep.subr.bf16.mxu0 0
        %1117 = vmatpush1.bf16.msra.mxu0 %v865
        %1118 = vmatprep.subr.bf16.mxu0 0
        %1119 = vmatpush1.bf16.msra.mxu0 %v866
        %1120 = vmatprep.subr.bf16.mxu0 0
        %1121 = vmatpush1.bf16.msra.mxu0 %v867
        %1122 = vmatprep.subr.bf16.mxu0 0
        %1123 = vmatpush1.bf16.msra.mxu0 %v868
        %1124 = vmatprep.subr.bf16.mxu0 0
        %1125 = vmatpush1.bf16.msra.mxu0 %v869
        %1126 = vmatprep.mubr.bf16.mxu0 %v489
        %1127 = vmatmul.mubr.bf16.gmra.mrb[0].mxu0 %v488
        %v1128 = vpop.f32.mrb[0].mxu0
        %v1129 = vadd.f32 %v1081, %v1128
        %v1130 = vpop.f32.mrb[0].mxu0
        %v1131 = vpop.f32.mrb[0].mxu0
        %v1132 = vadd.f32 %v1084, %v1131
        %v1133 = vpop.f32.mrb[0].mxu0
        %1134 = vmatprep.mubr.bf16.mxu0 %v498
        %1135 = vmatmul.mubr.bf16.gmra.mrb[0].mxu0 %v497
        %v1136 = vpop.f32.mrb[0].mxu0
        %v1137 = vadd.f32 %v1089, %v1136
        %v1138 = vpop.f32.mrb[0].mxu0
        %v1139 = vpop.f32.mrb[0].mxu0
        %v1140 = vpop.f32.mrb[0].mxu0
        %1141 = vdwg.mxu0
        %1142 = vmatprep.subr.bf16.mxu0 0
        %1143 = vmatpush1.bf16.msra.mxu0 %v870
        %1144 = vmatprep.subr.bf16.mxu0 0
        %1145 = vmatpush1.bf16.msra.mxu0 %v871
        %1146 = vmatprep.subr.bf16.mxu0 0
        %1147 = vmatpush1.bf16.msra.mxu0 %v872
        %1148 = vmatprep.subr.bf16.mxu0 0
        %1149 = vmatpush1.bf16.msra.mxu0 %v873
        %1150 = vmatprep.subr.bf16.mxu0 0
        %1151 = vmatpush1.bf16.msra.mxu0 %v874
        %1152 = vmatprep.subr.bf16.mxu0 0
        %1153 = vmatpush1.bf16.msra.mxu0 %v875
        %1154 = vmatprep.subr.bf16.mxu0 0
        %1155 = vmatpush1.bf16.msra.mxu0 %v876
        %1156 = vmatprep.subr.bf16.mxu0 0
        %1157 = vmatpush1.bf16.msra.mxu0 %v877
        %1158 = vmatprep.subr.bf16.mxu0 0
        %1159 = vmatpush1.bf16.msra.mxu0 0
        %1160 = vmatprep.subr.bf16.mxu0 0
        %1161 = vmatpush1.bf16.msra.mxu0 0
        %1162 = vmatprep.subr.bf16.mxu0 0
        %1163 = vmatpush1.bf16.msra.mxu0 0
        %1164 = vmatprep.subr.bf16.mxu0 0
        %1165 = vmatpush1.bf16.msra.mxu0 0
        %1166 = vmatprep.subr.bf16.mxu0 0
        %1167 = vmatpush1.bf16.msra.mxu0 0
        %1168 = vmatprep.subr.bf16.mxu0 0
        %1169 = vmatpush1.bf16.msra.mxu0 0
        %1170 = vmatprep.subr.bf16.mxu0 0
        %1171 = vmatpush1.bf16.msra.mxu0 0
        %1172 = vmatprep.subr.bf16.mxu0 0
        %1173 = vmatpush1.bf16.msra.mxu0 0
        %1174 = vmatprep.mubr.bf16.mxu0 0
        %1175 = vmatmul.mubr.bf16.gmra.mrb[0].mxu0 %v490
        %v1176 = vpop.f32.mrb[0].mxu0
        %v1177 = vadd.f32 %v1129, %v1176
        %v1178 = vpop.f32.mrb[0].mxu0
        %v1179 = vpop.f32.mrb[0].mxu0
        %v1180 = vadd.f32 %v1132, %v1179
        %v1181 = vpop.f32.mrb[0].mxu0
        %1182 = vmatprep.mubr.bf16.mxu0 0
        %1183 = vmatmul.mubr.bf16.gmra.mrb[0].mxu0 %v499
        %v1184 = vpop.f32.mrb[0].mxu0
        %v1185 = vadd.f32 %v1137, %v1184
        %v1186 = vpop.f32.mrb[0].mxu0
        %v1187 = vpop.f32.mrb[0].mxu0
        %v1188 = vpop.f32.mrb[0].mxu0
        %1189 = vdwg.mxu0
        %v1190 = vadd.f32 %v278, %v1177
        %v1191 = vadd.f32 %v279, %v1180
        %v1192 = vadd.f32 %v280, %v1185
        %1193 = vst [vmem:[#allocation2] sm:$0xff] %v1190
        %1194 = vst [vmem:[#allocation2 + $0x8] sm:$0xff] %v1191
        %1195 = vst [vmem:[#allocation2 + $0x10] sm:$0xff] %v1192
        %p1196 = scmp.eq.s32.totalorder %s19, 1
        // Predicated region
        $region63: #{_forward_impl.7} parent=53 // pred_check
          %p1197 = pneg %p1196
        $region64: #{_forward_impl.7} parent=53 // pred_check_branch
          %1199 = sbr.rel (%p1197) target = $region66
        $region65: #{_forward_impl.7} parent=53 // pred_region
          %v1200 = vld [vmem:[#allocation2] sm:$0xff]
          %v1201 = vld [vmem:[#allocation2 + $0x8] sm:$0xff]
          %v1202 = vld [vmem:[#allocation2 + $0x10] sm:$0xff]
          %v1203 = vld [vmem:[%s2] sm:$0x1]
          %v1205 = vlaneseq
          %v1206 = vshrl.u32 %v1205, 7
          %v1207 = vsub.s32 0, %v1206
          %v1208 = vrot.slane %v1203, %v1207
          %v1210 = vadd.f32 %v1200, %v1208
          %v1211 = vadd.f32 %v1201, %v1208
          %v1212 = vadd.f32 %v1202, %v1208
          %v1213 = vmax.f32 %v1210, 0.0
          %v1214 = vmax.f32 %v1211, 0.0
          %v1215 = vmax.f32 %v1212, 0.0
          %v1216 = vpack.c.bf16 %v1214, %v1213
          %v1217 = vpack.c.bf16 %v1215, %v1215
          %v1220 = vunpack.c.l.b16 %v1216
          %v1221 = vunpack.c.h.b16 %v1216
          %v1222 = vunpack.c.l.b16 %v1217
          %v1223 = vpack.c.b16 %v1220, %v1220
          %v1224 = vpack.c.b16 %v1221, %v1221
          %v1225 = vpack.c.b16 %v1222, %v1222
          %1229 = vst [vmem:[%s268] sm:$0xf] %v1223
          %1230 = vst [vmem:[%s268 + $0x4] sm:$0xf] %v1224
          %1231 = vst [vmem:[%s268 + $0x8] sm:$0xf] %v1225
        $region66: #{_forward_impl.7} parent=53 // pred_fallthru
          _
        %s1232 = smul.u32 3, %s18
        %p1233 = scmp.lt.s32.totalorder %s1232, 2
        %s1234 = scalar_select %p1233, %s1232, 2
        %s1235 = smul.addr %s1234, 4
        %s1236 = scalar_lea.vmem %s3, %s1235
        // Predicated region
        $region67: #{_forward_impl.7} parent=53 // pred_check
          %p1237 = pneg %p119
        $region68: #{_forward_impl.7} parent=53 // pred_check_branch
          %1239 = sbr.rel (%p1237) target = $region70
        $region69: #{_forward_impl.7} parent=53 // pred_region
          %s1240 = smul.u32 3, %s18
        $region70: #{_forward_impl.7} parent=53 // pred_fallthru
          _
        // Predicated region
        $region71: #{_forward_impl.7} parent=53 // pred_check
          %p1241 = pneg %p119
        $region72: #{_forward_impl.7} parent=53 // pred_check_branch
          %1243 = sbr.rel (%p1241) target = $region74
        $region73: #{_forward_impl.7} parent=53 // pred_region
          %s1244 = smul.u32 3, %s18
          %p1245 = scmp.lt.s32.totalorder %s1244, 2
          %s1246 = scalar_select %p1245, %s1244, 2
          %s1247 = smul.addr %s1246, 4
          %s1248 = scalar_lea.vmem %s3, %s1247
        $region74: #{_forward_impl.7} parent=53 // pred_fallthru
          _
      $region54: #{_forward_impl.7} parent=5 // pred_fallthru
        _
      %p1249 = scmp.le.s32.totalorder 2, %s9
      // Predicated region
      $region75: #{_forward_impl.7} parent=5 // pred_check
        %p1250 = pneg %p1249
      $region76: #{_forward_impl.7} parent=5 // pred_check_branch
        %1252 = sbr.rel (%p1250) target = $region78
      $region77: #{_forward_impl.7} parent=5 // pred_region
        %s1253 = ssub.s32 %s9, 2
      $region78: #{_forward_impl.7} parent=5 // pred_fallthru
        _
    $region6: #{_forward_impl.7} parent=1 // loop_footer
      %s13 = sadd.s32 1, %s9
    $region7: #{_forward_impl.7} parent=1 // loop_footer_branch
      %8 = sbr.rel target = $region3
    $region8: #{_forward_impl.7} parent=1 // loop_exit
      _

// kernel: _forward_impl.8
$region0: #{_forward_impl.8}
  #allocation0 [shape = 'u32[]', space=smem, size = 0x4, offset = 0x4, fixed_abs, tag = 'smem constant byte address 0x4 - core index']
  #allocation1 [shape = 'u32[144,128]{1,0:T(1,128)}', space=vmem, size = 0x12000, scoped, tag = 'internal scratch']
  #allocation2 [shape = 'f32[24,64]{1,0:T(8,128)}', space=vmem, size = 0x3000, scoped, tag = 'scratch operand']
  %s0 = inlined_call_operand.vmem [shape: bf16[24,1152], index: 0, kind: input, shape index: {}]
  %s1 = inlined_call_operand.vmem [shape: bf16[1152,64], index: 1, kind: input, shape index: {}]
  %s2 = inlined_call_operand.vmem [shape: f32[1,64], index: 2, kind: input, shape index: {}]
  %s3 = inlined_call_operand.vmem [shape: bf16[24,64], index: 3, kind: output, shape index: {}]
  %s4 = sld [smem:[#allocation0]]
  $region30: #{_forward_impl.8} parent=0
    _
  %s6 = ssub.s32 1, %s4
  %s7 = scalar_select 0, %s6, %s4
  // Predicated region
  $region2: #{_forward_impl.8} parent=0 // pred_check
    _
  $region3: #{_forward_impl.8} parent=0 // pred_check_branch
    %9 = sbr.rel (0) target = $region5
  $region4: #{_forward_impl.8} parent=0 // pred_region
    _
  $region5: #{_forward_impl.8} parent=0 // pred_fallthru
    _
  // Predicated region
  $region6: #{_forward_impl.8} parent=0 // pred_check
    _
  $region7: #{_forward_impl.8} parent=0 // pred_check_branch
    %11 = sbr.rel (0) target = $region9
  $region8: #{_forward_impl.8} parent=0 // pred_region
    _
  $region9: #{_forward_impl.8} parent=0 // pred_fallthru
    _
  // Predicated region
  $region10: #{_forward_impl.8} parent=0 // pred_check
    _
  $region11: #{_forward_impl.8} parent=0 // pred_check_branch
    %13 = sbr.rel (0) target = $region13
  $region12: #{_forward_impl.8} parent=0 // pred_region
    _
  $region13: #{_forward_impl.8} parent=0 // pred_fallthru
    _
  %p15 = scmp.eq.s32.totalorder 0, 0
  // Predicated region
  $region14: #{_forward_impl.8} parent=0 // pred_check
    %p16 = pneg %p15
  $region15: #{_forward_impl.8} parent=0 // pred_check_branch
    %18 = sbr.rel (%p16) target = $region17
  $region16: #{_forward_impl.8} parent=0 // pred_region
    %vm19 = vcmask 523264
    %20 = vst.msk [vmem:[#allocation2] sm:$0xff] %vm19, 0.0
    %21 = vst.msk [vmem:[#allocation2 + $0x8] sm:$0xff] %vm19, 0.0
    %22 = vst.msk [vmem:[#allocation2 + $0x10] sm:$0xff] %vm19, 0.0
  $region17: #{_forward_impl.8} parent=0 // pred_fallthru
    _
  %v23 = vld [vmem:[#allocation2] sm:$0xff]
  %v24 = vld [vmem:[#allocation2 + $0x8] sm:$0xff]
  %v25 = vld [vmem:[#allocation2 + $0x10] sm:$0xff]
  %v26 = vld [vmem:[%s0] sm:$0xff]
  %v27 = vld [vmem:[%s0 + $0x8] sm:$0xff]
  %v28 = vld [vmem:[%s0 + $0x10] sm:$0xff]
  %v29 = vld [vmem:[%s0 + $0x18] sm:$0xff]
  %v30 = vld [vmem:[%s0 + $0x20] sm:$0xf]
  %v31 = vld [vmem:[%s0 + $0x24] sm:$0xff]
  %v32 = vld [vmem:[%s0 + $0x2c] sm:$0xff]
  %v33 = vld [vmem:[%s0 + $0x34] sm:$0xff]
  %v34 = vld [vmem:[%s0 + $0x3c] sm:$0xff]
  %v35 = vld [vmem:[%s0 + $0x44] sm:$0xf]
  %v36 = vld [vmem:[%s0 + $0x48] sm:$0xff]
  %v37 = vld [vmem:[%s0 + $0x50] sm:$0xff]
  %v38 = vld [vmem:[%s0 + $0x58] sm:$0xff]
  %v39 = vld [vmem:[%s0 + $0x60] sm:$0xff]
  %v40 = vld [vmem:[%s0 + $0x68] sm:$0xf]
  %v41 = vld [vmem:[%s1] sm:$0xf]
  %v42 = vld [vmem:[%s1 + $0x4] sm:$0xf]
  %v43 = vld [vmem:[%s1 + $0x8] sm:$0xf]
  %v44 = vld [vmem:[%s1 + $0xc] sm:$0xf]
  %v45 = vld [vmem:[%s1 + $0x10] sm:$0xf]
  %v46 = vld [vmem:[%s1 + $0x14] sm:$0xf]
  %v47 = vld [vmem:[%s1 + $0x18] sm:$0xf]
  %v48 = vld [vmem:[%s1 + $0x1c] sm:$0xf]
  %v49 = vld [vmem:[%s1 + $0x20] sm:$0xf]
  %v50 = vld [vmem:[%s1 + $0x24] sm:$0xf]
  %v51 = vld [vmem:[%s1 + $0x28] sm:$0xf]
  %v52 = vld [vmem:[%s1 + $0x2c] sm:$0xf]
  %v53 = vld [vmem:[%s1 + $0x30] sm:$0xf]
  %v54 = vld [vmem:[%s1 + $0x34] sm:$0xf]
  %v55 = vld [vmem:[%s1 + $0x38] sm:$0xf]
  %v56 = vld [vmem:[%s1 + $0x3c] sm:$0xf]
  %v57 = vld [vmem:[%s1 + $0x40] sm:$0xf]
  %v58 = vld [vmem:[%s1 + $0x44] sm:$0xf]
  %v59 = vld [vmem:[%s1 + $0x48] sm:$0xf]
  %v60 = vld [vmem:[%s1 + $0x4c] sm:$0xf]
  %v61 = vld [vmem:[%s1 + $0x50] sm:$0xf]
  %v62 = vld [vmem:[%s1 + $0x54] sm:$0xf]
  %v63 = vld [vmem:[%s1 + $0x58] sm:$0xf]
  %v64 = vld [vmem:[%s1 + $0x5c] sm:$0xf]
  %v65 = vld [vmem:[%s1 + $0x60] sm:$0xf]
  %v66 = vld [vmem:[%s1 + $0x64] sm:$0xf]
  %v67 = vld [vmem:[%s1 + $0x68] sm:$0xf]
  %v68 = vld [vmem:[%s1 + $0x6c] sm:$0xf]
  %v69 = vld [vmem:[%s1 + $0x70] sm:$0xf]
  %v70 = vld [vmem:[%s1 + $0x74] sm:$0xf]
  %v71 = vld [vmem:[%s1 + $0x78] sm:$0xf]
  %v72 = vld [vmem:[%s1 + $0x7c] sm:$0xf]
  %v73 = vld [vmem:[%s1 + $0x80] sm:$0xf]
  %v74 = vld [vmem:[%s1 + $0x84] sm:$0xf]
  %v75 = vld [vmem:[%s1 + $0x88] sm:$0xf]
  %v76 = vld [vmem:[%s1 + $0x8c] sm:$0xf]
  %v77 = vld [vmem:[%s1 + $0x90] sm:$0xf]
  %v78 = vld [vmem:[%s1 + $0x94] sm:$0xf]
  %v79 = vld [vmem:[%s1 + $0x98] sm:$0xf]
  %v80 = vld [vmem:[%s1 + $0x9c] sm:$0xf]
  %v81 = vld [vmem:[%s1 + $0xa0] sm:$0xf]
  %v82 = vld [vmem:[%s1 + $0xa4] sm:$0xf]
  %v83 = vld [vmem:[%s1 + $0xa8] sm:$0xf]
  %v84 = vld [vmem:[%s1 + $0xac] sm:$0xf]
  %v85 = vld [vmem:[%s1 + $0xb0] sm:$0xf]
  %v86 = vld [vmem:[%s1 + $0xb4] sm:$0xf]
  %v87 = vld [vmem:[%s1 + $0xb8] sm:$0xf]
  %v88 = vld [vmem:[%s1 + $0xbc] sm:$0xf]
  %v89 = vld [vmem:[%s1 + $0xc0] sm:$0xf]
  %v90 = vld [vmem:[%s1 + $0xc4] sm:$0xf]
  %v91 = vld [vmem:[%s1 + $0xc8] sm:$0xf]
  %v92 = vld [vmem:[%s1 + $0xcc] sm:$0xf]
  %v93 = vld [vmem:[%s1 + $0xd0] sm:$0xf]
  %v94 = vld [vmem:[%s1 + $0xd4] sm:$0xf]
  %v95 = vld [vmem:[%s1 + $0xd8] sm:$0xf]
  %v96 = vld [vmem:[%s1 + $0xdc] sm:$0xf]
  %v97 = vld [vmem:[%s1 + $0xe0] sm:$0xf]
  %v98 = vld [vmem:[%s1 + $0xe4] sm:$0xf]
  %v99 = vld [vmem:[%s1 + $0xe8] sm:$0xf]
  %v100 = vld [vmem:[%s1 + $0xec] sm:$0xf]
  %v101 = vld [vmem:[%s1 + $0xf0] sm:$0xf]
  %v102 = vld [vmem:[%s1 + $0xf4] sm:$0xf]
  %v103 = vld [vmem:[%s1 + $0xf8] sm:$0xf]
  %v104 = vld [vmem:[%s1 + $0xfc] sm:$0xf]
  %v105 = vld [vmem:[%s1 + $0x100] sm:$0xf]
  %v106 = vld [vmem:[%s1 + $0x104] sm:$0xf]
  %v107 = vld [vmem:[%s1 + $0x108] sm:$0xf]
  %v108 = vld [vmem:[%s1 + $0x10c] sm:$0xf]
  %v109 = vld [vmem:[%s1 + $0x110] sm:$0xf]
  %v110 = vld [vmem:[%s1 + $0x114] sm:$0xf]
  %v111 = vld [vmem:[%s1 + $0x118] sm:$0xf]
  %v112 = vld [vmem:[%s1 + $0x11c] sm:$0xf]
  %v113 = vld [vmem:[%s1 + $0x120] sm:$0xf]
  %v114 = vld [vmem:[%s1 + $0x124] sm:$0xf]
  %v115 = vld [vmem:[%s1 + $0x128] sm:$0xf]
  %v116 = vld [vmem:[%s1 + $0x12c] sm:$0xf]
  %v117 = vld [vmem:[%s1 + $0x130] sm:$0xf]
  %v118 = vld [vmem:[%s1 + $0x134] sm:$0xf]
  %v119 = vld [vmem:[%s1 + $0x138] sm:$0xf]
  %v120 = vld [vmem:[%s1 + $0x13c] sm:$0xf]
  %v121 = vld [vmem:[%s1 + $0x140] sm:$0xf]
  %v122 = vld [vmem:[%s1 + $0x144] sm:$0xf]
  %v123 = vld [vmem:[%s1 + $0x148] sm:$0xf]
  %v124 = vld [vmem:[%s1 + $0x14c] sm:$0xf]
  %v125 = vld [vmem:[%s1 + $0x150] sm:$0xf]
  %v126 = vld [vmem:[%s1 + $0x154] sm:$0xf]
  %v127 = vld [vmem:[%s1 + $0x158] sm:$0xf]
  %v128 = vld [vmem:[%s1 + $0x15c] sm:$0xf]
  %v129 = vld [vmem:[%s1 + $0x160] sm:$0xf]
  %v130 = vld [vmem:[%s1 + $0x164] sm:$0xf]
  %v131 = vld [vmem:[%s1 + $0x168] sm:$0xf]
  %v132 = vld [vmem:[%s1 + $0x16c] sm:$0xf]
  %v133 = vld [vmem:[%s1 + $0x170] sm:$0xf]
  %v134 = vld [vmem:[%s1 + $0x174] sm:$0xf]
  %v135 = vld [vmem:[%s1 + $0x178] sm:$0xf]
  %v136 = vld [vmem:[%s1 + $0x17c] sm:$0xf]
  %v137 = vld [vmem:[%s1 + $0x180] sm:$0xf]
  %v138 = vld [vmem:[%s1 + $0x184] sm:$0xf]
  %v139 = vld [vmem:[%s1 + $0x188] sm:$0xf]
  %v140 = vld [vmem:[%s1 + $0x18c] sm:$0xf]
  %v141 = vld [vmem:[%s1 + $0x190] sm:$0xf]
  %v142 = vld [vmem:[%s1 + $0x194] sm:$0xf]
  %v143 = vld [vmem:[%s1 + $0x198] sm:$0xf]
  %v144 = vld [vmem:[%s1 + $0x19c] sm:$0xf]
  %v145 = vld [vmem:[%s1 + $0x1a0] sm:$0xf]
  %v146 = vld [vmem:[%s1 + $0x1a4] sm:$0xf]
  %v147 = vld [vmem:[%s1 + $0x1a8] sm:$0xf]
  %v148 = vld [vmem:[%s1 + $0x1ac] sm:$0xf]
  %v149 = vld [vmem:[%s1 + $0x1b0] sm:$0xf]
  %v150 = vld [vmem:[%s1 + $0x1b4] sm:$0xf]
  %v151 = vld [vmem:[%s1 + $0x1b8] sm:$0xf]
  %v152 = vld [vmem:[%s1 + $0x1bc] sm:$0xf]
  %v153 = vld [vmem:[%s1 + $0x1c0] sm:$0xf]
  %v154 = vld [vmem:[%s1 + $0x1c4] sm:$0xf]
  %v155 = vld [vmem:[%s1 + $0x1c8] sm:$0xf]
  %v156 = vld [vmem:[%s1 + $0x1cc] sm:$0xf]
  %v157 = vld [vmem:[%s1 + $0x1d0] sm:$0xf]
  %v158 = vld [vmem:[%s1 + $0x1d4] sm:$0xf]
  %v159 = vld [vmem:[%s1 + $0x1d8] sm:$0xf]
  %v160 = vld [vmem:[%s1 + $0x1dc] sm:$0xf]
  %v161 = vld [vmem:[%s1 + $0x1e0] sm:$0xf]
  %v162 = vld [vmem:[%s1 + $0x1e4] sm:$0xf]
  %v163 = vld [vmem:[%s1 + $0x1e8] sm:$0xf]
  %v164 = vld [vmem:[%s1 + $0x1ec] sm:$0xf]
  %v165 = vld [vmem:[%s1 + $0x1f0] sm:$0xf]
  %v166 = vld [vmem:[%s1 + $0x1f4] sm:$0xf]
  %v167 = vld [vmem:[%s1 + $0x1f8] sm:$0xf]
  %v168 = vld [vmem:[%s1 + $0x1fc] sm:$0xf]
  %v169 = vld [vmem:[%s1 + $0x200] sm:$0xf]
  %v170 = vld [vmem:[%s1 + $0x204] sm:$0xf]
  %v171 = vld [vmem:[%s1 + $0x208] sm:$0xf]
  %v172 = vld [vmem:[%s1 + $0x20c] sm:$0xf]
  %v173 = vld [vmem:[%s1 + $0x210] sm:$0xf]
  %v174 = vld [vmem:[%s1 + $0x214] sm:$0xf]
  %v175 = vld [vmem:[%s1 + $0x218] sm:$0xf]
  %v176 = vld [vmem:[%s1 + $0x21c] sm:$0xf]
  %v177 = vld [vmem:[%s1 + $0x220] sm:$0xf]
  %v178 = vld [vmem:[%s1 + $0x224] sm:$0xf]
  %v179 = vld [vmem:[%s1 + $0x228] sm:$0xf]
  %v180 = vld [vmem:[%s1 + $0x22c] sm:$0xf]
  %v181 = vld [vmem:[%s1 + $0x230] sm:$0xf]
  %v182 = vld [vmem:[%s1 + $0x234] sm:$0xf]
  %v183 = vld [vmem:[%s1 + $0x238] sm:$0xf]
  %v184 = vld [vmem:[%s1 + $0x23c] sm:$0xf]
  %v200 = vunpack.c.l.b16 %v26
  %v201 = vunpack.c.h.b16 %v26
  %v202 = vunpack.c.l.b16 %v27
  %v203 = vunpack.c.h.b16 %v27
  %v204 = vunpack.c.l.b16 %v28
  %v205 = vunpack.c.h.b16 %v28
  %v206 = vunpack.c.l.b16 %v29
  %v207 = vunpack.c.h.b16 %v29
  %v208 = vunpack.c.l.b16 %v30
  %v209 = vunpack.c.l.b16 %v31
  %v210 = vunpack.c.h.b16 %v31
  %v211 = vunpack.c.l.b16 %v32
  %v212 = vunpack.c.h.b16 %v32
  %v213 = vunpack.c.l.b16 %v33
  %v214 = vunpack.c.h.b16 %v33
  %v215 = vunpack.c.l.b16 %v34
  %v216 = vunpack.c.h.b16 %v34
  %v217 = vunpack.c.l.b16 %v35
  %v218 = vunpack.c.l.b16 %v36
  %v219 = vunpack.c.h.b16 %v36
  %v220 = vunpack.c.l.b16 %v37
  %v221 = vunpack.c.h.b16 %v37
  %v222 = vunpack.c.l.b16 %v38
  %v223 = vunpack.c.h.b16 %v38
  %v224 = vunpack.c.l.b16 %v39
  %v225 = vunpack.c.h.b16 %v39
  %v226 = vunpack.c.l.b16 %v40
  %v227 = vpack.c.b16 %v209, %v200
  %v228 = vpack.c.b16 %v210, %v201
  %v229 = vpack.c.b16 %v211, %v202
  %v230 = vpack.c.b16 %v212, %v203
  %v231 = vpack.c.b16 %v213, %v204
  %v232 = vpack.c.b16 %v214, %v205
  %v233 = vpack.c.b16 %v215, %v206
  %v234 = vpack.c.b16 %v216, %v207
  %v235 = vpack.c.b16 %v217, %v208
  %v236 = vpack.c.b16 %v218, %v218
  %v237 = vpack.c.b16 %v219, %v219
  %v238 = vpack.c.b16 %v220, %v220
  %v239 = vpack.c.b16 %v221, %v221
  %v240 = vpack.c.b16 %v222, %v222
  %v241 = vpack.c.b16 %v223, %v223
  %v242 = vpack.c.b16 %v224, %v224
  %v243 = vpack.c.b16 %v225, %v225
  %v244 = vpack.c.b16 %v226, %v226
  %v407 = vunpack.c.l.b16 %v41
  %v408 = vunpack.c.l.b16 %v42
  %v409 = vunpack.c.l.b16 %v43
  %v410 = vunpack.c.l.b16 %v44
  %v411 = vunpack.c.l.b16 %v45
  %v412 = vunpack.c.l.b16 %v46
  %v413 = vunpack.c.l.b16 %v47
  %v414 = vunpack.c.l.b16 %v48
  %v415 = vunpack.c.l.b16 %v49
  %v416 = vunpack.c.l.b16 %v50
  %v417 = vunpack.c.l.b16 %v51
  %v418 = vunpack.c.l.b16 %v52
  %v419 = vunpack.c.l.b16 %v53
  %v420 = vunpack.c.l.b16 %v54
  %v421 = vunpack.c.l.b16 %v55
  %v422 = vunpack.c.l.b16 %v56
  %v423 = vunpack.c.l.b16 %v57
  %v424 = vunpack.c.l.b16 %v58
  %v425 = vunpack.c.l.b16 %v59
  %v426 = vunpack.c.l.b16 %v60
  %v427 = vunpack.c.l.b16 %v61
  %v428 = vunpack.c.l.b16 %v62
  %v429 = vunpack.c.l.b16 %v63
  %v430 = vunpack.c.l.b16 %v64
  %v431 = vunpack.c.l.b16 %v65
  %v432 = vunpack.c.l.b16 %v66
  %v433 = vunpack.c.l.b16 %v67
  %v434 = vunpack.c.l.b16 %v68
  %v435 = vunpack.c.l.b16 %v69
  %v436 = vunpack.c.l.b16 %v70
  %v437 = vunpack.c.l.b16 %v71
  %v438 = vunpack.c.l.b16 %v72
  %v439 = vunpack.c.l.b16 %v73
  %v440 = vunpack.c.l.b16 %v74
  %v441 = vunpack.c.l.b16 %v75
  %v442 = vunpack.c.l.b16 %v76
  %v443 = vunpack.c.l.b16 %v77
  %v444 = vunpack.c.l.b16 %v78
  %v445 = vunpack.c.l.b16 %v79
  %v446 = vunpack.c.l.b16 %v80
  %v447 = vunpack.c.l.b16 %v81
  %v448 = vunpack.c.l.b16 %v82
  %v449 = vunpack.c.l.b16 %v83
  %v450 = vunpack.c.l.b16 %v84
  %v451 = vunpack.c.l.b16 %v85
  %v452 = vunpack.c.l.b16 %v86
  %v453 = vunpack.c.l.b16 %v87
  %v454 = vunpack.c.l.b16 %v88
  %v455 = vunpack.c.l.b16 %v89
  %v456 = vunpack.c.l.b16 %v90
  %v457 = vunpack.c.l.b16 %v91
  %v458 = vunpack.c.l.b16 %v92
  %v459 = vunpack.c.l.b16 %v93
  %v460 = vunpack.c.l.b16 %v94
  %v461 = vunpack.c.l.b16 %v95
  %v462 = vunpack.c.l.b16 %v96
  %v463 = vunpack.c.l.b16 %v97
  %v464 = vunpack.c.l.b16 %v98
  %v465 = vunpack.c.l.b16 %v99
  %v466 = vunpack.c.l.b16 %v100
  %v467 = vunpack.c.l.b16 %v101
  %v468 = vunpack.c.l.b16 %v102
  %v469 = vunpack.c.l.b16 %v103
  %v470 = vunpack.c.l.b16 %v104
  %v471 = vunpack.c.l.b16 %v105
  %v472 = vunpack.c.l.b16 %v106
  %v473 = vunpack.c.l.b16 %v107
  %v474 = vunpack.c.l.b16 %v108
  %v475 = vunpack.c.l.b16 %v109
  %v476 = vunpack.c.l.b16 %v110
  %v477 = vunpack.c.l.b16 %v111
  %v478 = vunpack.c.l.b16 %v112
  %v479 = vunpack.c.l.b16 %v113
  %v480 = vunpack.c.l.b16 %v114
  %v481 = vunpack.c.l.b16 %v115
  %v482 = vunpack.c.l.b16 %v116
  %v483 = vunpack.c.l.b16 %v117
  %v484 = vunpack.c.l.b16 %v118
  %v485 = vunpack.c.l.b16 %v119
  %v486 = vunpack.c.l.b16 %v120
  %v487 = vunpack.c.l.b16 %v121
  %v488 = vunpack.c.l.b16 %v122
  %v489 = vunpack.c.l.b16 %v123
  %v490 = vunpack.c.l.b16 %v124
  %v491 = vunpack.c.l.b16 %v125
  %v492 = vunpack.c.l.b16 %v126
  %v493 = vunpack.c.l.b16 %v127
  %v494 = vunpack.c.l.b16 %v128
  %v495 = vunpack.c.l.b16 %v129
  %v496 = vunpack.c.l.b16 %v130
  %v497 = vunpack.c.l.b16 %v131
  %v498 = vunpack.c.l.b16 %v132
  %v499 = vunpack.c.l.b16 %v133
  %v500 = vunpack.c.l.b16 %v134
  %v501 = vunpack.c.l.b16 %v135
  %v502 = vunpack.c.l.b16 %v136
  %v503 = vunpack.c.l.b16 %v137
  %v504 = vunpack.c.l.b16 %v138
  %v505 = vunpack.c.l.b16 %v139
  %v506 = vunpack.c.l.b16 %v140
  %v507 = vunpack.c.l.b16 %v141
  %v508 = vunpack.c.l.b16 %v142
  %v509 = vunpack.c.l.b16 %v143
  %v510 = vunpack.c.l.b16 %v144
  %v511 = vunpack.c.l.b16 %v145
  %v512 = vunpack.c.l.b16 %v146
  %v513 = vunpack.c.l.b16 %v147
  %v514 = vunpack.c.l.b16 %v148
  %v515 = vunpack.c.l.b16 %v149
  %v516 = vunpack.c.l.b16 %v150
  %v517 = vunpack.c.l.b16 %v151
  %v518 = vunpack.c.l.b16 %v152
  %v519 = vunpack.c.l.b16 %v153
  %v520 = vunpack.c.l.b16 %v154
  %v521 = vunpack.c.l.b16 %v155
  %v522 = vunpack.c.l.b16 %v156
  %v523 = vunpack.c.l.b16 %v157
  %v524 = vunpack.c.l.b16 %v158
  %v525 = vunpack.c.l.b16 %v159
  %v526 = vunpack.c.l.b16 %v160
  %v527 = vunpack.c.l.b16 %v161
  %v528 = vunpack.c.l.b16 %v162
  %v529 = vunpack.c.l.b16 %v163
  %v530 = vunpack.c.l.b16 %v164
  %v531 = vunpack.c.l.b16 %v165
  %v532 = vunpack.c.l.b16 %v166
  %v533 = vunpack.c.l.b16 %v167
  %v534 = vunpack.c.l.b16 %v168
  %v535 = vunpack.c.l.b16 %v169
  %v536 = vunpack.c.l.b16 %v170
  %v537 = vunpack.c.l.b16 %v171
  %v538 = vunpack.c.l.b16 %v172
  %v539 = vunpack.c.l.b16 %v173
  %v540 = vunpack.c.l.b16 %v174
  %v541 = vunpack.c.l.b16 %v175
  %v542 = vunpack.c.l.b16 %v176
  %v543 = vunpack.c.l.b16 %v177
  %v544 = vunpack.c.l.b16 %v178
  %v545 = vunpack.c.l.b16 %v179
  %v546 = vunpack.c.l.b16 %v180
  %v547 = vunpack.c.l.b16 %v181
  %v548 = vunpack.c.l.b16 %v182
  %v549 = vunpack.c.l.b16 %v183
  %v550 = vunpack.c.l.b16 %v184
  %v551 = vpack.c.b16 %v408, %v407
  %v552 = vpack.c.b16 %v410, %v409
  %v553 = vpack.c.b16 %v412, %v411
  %v554 = vpack.c.b16 %v414, %v413
  %v555 = vpack.c.b16 %v416, %v415
  %v556 = vpack.c.b16 %v418, %v417
  %v557 = vpack.c.b16 %v420, %v419
  %v558 = vpack.c.b16 %v422, %v421
  %v559 = vpack.c.b16 %v424, %v423
  %v560 = vpack.c.b16 %v426, %v425
  %v561 = vpack.c.b16 %v428, %v427
  %v562 = vpack.c.b16 %v430, %v429
  %v563 = vpack.c.b16 %v432, %v431
  %v564 = vpack.c.b16 %v434, %v433
  %v565 = vpack.c.b16 %v436, %v435
  %v566 = vpack.c.b16 %v438, %v437
  %v567 = vpack.c.b16 %v440, %v439
  %v568 = vpack.c.b16 %v442, %v441
  %v569 = vpack.c.b16 %v444, %v443
  %v570 = vpack.c.b16 %v446, %v445
  %v571 = vpack.c.b16 %v448, %v447
  %v572 = vpack.c.b16 %v450, %v449
  %v573 = vpack.c.b16 %v452, %v451
  %v574 = vpack.c.b16 %v454, %v453
  %v575 = vpack.c.b16 %v456, %v455
  %v576 = vpack.c.b16 %v458, %v457
  %v577 = vpack.c.b16 %v460, %v459
  %v578 = vpack.c.b16 %v462, %v461
  %v579 = vpack.c.b16 %v464, %v463
  %v580 = vpack.c.b16 %v466, %v465
  %v581 = vpack.c.b16 %v468, %v467
  %v582 = vpack.c.b16 %v470, %v469
  %v583 = vpack.c.b16 %v472, %v471
  %v584 = vpack.c.b16 %v474, %v473
  %v585 = vpack.c.b16 %v476, %v475
  %v586 = vpack.c.b16 %v478, %v477
  %v587 = vpack.c.b16 %v480, %v479
  %v588 = vpack.c.b16 %v482, %v481
  %v589 = vpack.c.b16 %v484, %v483
  %v590 = vpack.c.b16 %v486, %v485
  %v591 = vpack.c.b16 %v488, %v487
  %v592 = vpack.c.b16 %v490, %v489
  %v593 = vpack.c.b16 %v492, %v491
  %v594 = vpack.c.b16 %v494, %v493
  %v595 = vpack.c.b16 %v496, %v495
  %v596 = vpack.c.b16 %v498, %v497
  %v597 = vpack.c.b16 %v500, %v499
  %v598 = vpack.c.b16 %v502, %v501
  %v599 = vpack.c.b16 %v504, %v503
  %v600 = vpack.c.b16 %v506, %v505
  %v601 = vpack.c.b16 %v508, %v507
  %v602 = vpack.c.b16 %v510, %v509
  %v603 = vpack.c.b16 %v512, %v511
  %v604 = vpack.c.b16 %v514, %v513
  %v605 = vpack.c.b16 %v516, %v515
  %v606 = vpack.c.b16 %v518, %v517
  %v607 = vpack.c.b16 %v520, %v519
  %v608 = vpack.c.b16 %v522, %v521
  %v609 = vpack.c.b16 %v524, %v523
  %v610 = vpack.c.b16 %v526, %v525
  %v611 = vpack.c.b16 %v528, %v527
  %v612 = vpack.c.b16 %v530, %v529
  %v613 = vpack.c.b16 %v532, %v531
  %v614 = vpack.c.b16 %v534, %v533
  %v615 = vpack.c.b16 %v536, %v535
  %v616 = vpack.c.b16 %v538, %v537
  %v617 = vpack.c.b16 %v540, %v539
  %v618 = vpack.c.b16 %v542, %v541
  %v619 = vpack.c.b16 %v544, %v543
  %v620 = vpack.c.b16 %v546, %v545
  %v621 = vpack.c.b16 %v548, %v547
  %v622 = vpack.c.b16 %v550, %v549
  %695 = vmatprep.subr.bf16.mxu0 0
  %696 = vmatpush1.bf16.msra.mxu0 %v551
  %697 = vmatprep.subr.bf16.mxu0 0
  %698 = vmatpush1.bf16.msra.mxu0 %v552
  %699 = vmatprep.subr.bf16.mxu0 0
  %700 = vmatpush1.bf16.msra.mxu0 %v553
  %701 = vmatprep.subr.bf16.mxu0 0
  %702 = vmatpush1.bf16.msra.mxu0 %v554
  %703 = vmatprep.subr.bf16.mxu0 0
  %704 = vmatpush1.bf16.msra.mxu0 %v555
  %705 = vmatprep.subr.bf16.mxu0 0
  %706 = vmatpush1.bf16.msra.mxu0 %v556
  %707 = vmatprep.subr.bf16.mxu0 0
  %708 = vmatpush1.bf16.msra.mxu0 %v557
  %709 = vmatprep.subr.bf16.mxu0 0
  %710 = vmatpush1.bf16.msra.mxu0 %v558
  %711 = vmatprep.subr.bf16.mxu0 0
  %712 = vmatpush1.bf16.msra.mxu0 %v559
  %713 = vmatprep.subr.bf16.mxu0 0
  %714 = vmatpush1.bf16.msra.mxu0 %v560
  %715 = vmatprep.subr.bf16.mxu0 0
  %716 = vmatpush1.bf16.msra.mxu0 %v561
  %717 = vmatprep.subr.bf16.mxu0 0
  %718 = vmatpush1.bf16.msra.mxu0 %v562
  %719 = vmatprep.subr.bf16.mxu0 0
  %720 = vmatpush1.bf16.msra.mxu0 %v563
  %721 = vmatprep.subr.bf16.mxu0 0
  %722 = vmatpush1.bf16.msra.mxu0 %v564
  %723 = vmatprep.subr.bf16.mxu0 0
  %724 = vmatpush1.bf16.msra.mxu0 %v565
  %725 = vmatprep.subr.bf16.mxu0 0
  %726 = vmatpush1.bf16.msra.mxu0 %v566
  %727 = vmatprep.mubr.bf16.mxu0 %v228
  %728 = vmatmul.mubr.bf16.gmra.mrb[0].mxu0 %v227
  %v729 = vpop.f32.mrb[0].mxu0
  %v730 = vadd.f32 0.0, %v729
  %v731 = vpop.f32.mrb[0].mxu0
  %v732 = vpop.f32.mrb[0].mxu0
  %v733 = vadd.f32 0.0, %v732
  %v734 = vpop.f32.mrb[0].mxu0
  %735 = vmatprep.mubr.bf16.mxu0 %v237
  %736 = vmatmul.mubr.bf16.gmra.mrb[0].mxu0 %v236
  %v737 = vpop.f32.mrb[0].mxu0
  %v738 = vadd.f32 0.0, %v737
  %v739 = vpop.f32.mrb[0].mxu0
  %v740 = vpop.f32.mrb[0].mxu0
  %v741 = vpop.f32.mrb[0].mxu0
  %742 = vdwg.mxu0
  %743 = vmatprep.subr.bf16.mxu0 0
  %744 = vmatpush1.bf16.msra.mxu0 %v567
  %745 = vmatprep.subr.bf16.mxu0 0
  %746 = vmatpush1.bf16.msra.mxu0 %v568
  %747 = vmatprep.subr.bf16.mxu0 0
  %748 = vmatpush1.bf16.msra.mxu0 %v569
  %749 = vmatprep.subr.bf16.mxu0 0
  %750 = vmatpush1.bf16.msra.mxu0 %v570
  %751 = vmatprep.subr.bf16.mxu0 0
  %752 = vmatpush1.bf16.msra.mxu0 %v571
  %753 = vmatprep.subr.bf16.mxu0 0
  %754 = vmatpush1.bf16.msra.mxu0 %v572
  %755 = vmatprep.subr.bf16.mxu0 0
  %756 = vmatpush1.bf16.msra.mxu0 %v573
  %757 = vmatprep.subr.bf16.mxu0 0
  %758 = vmatpush1.bf16.msra.mxu0 %v574
  %759 = vmatprep.subr.bf16.mxu0 0
  %760 = vmatpush1.bf16.msra.mxu0 %v575
  %761 = vmatprep.subr.bf16.mxu0 0
  %762 = vmatpush1.bf16.msra.mxu0 %v576
  %763 = vmatprep.subr.bf16.mxu0 0
  %764 = vmatpush1.bf16.msra.mxu0 %v577
  %765 = vmatprep.subr.bf16.mxu0 0
  %766 = vmatpush1.bf16.msra.mxu0 %v578
  %767 = vmatprep.subr.bf16.mxu0 0
  %768 = vmatpush1.bf16.msra.mxu0 %v579
  %769 = vmatprep.subr.bf16.mxu0 0
  %770 = vmatpush1.bf16.msra.mxu0 %v580
  %771 = vmatprep.subr.bf16.mxu0 0
  %772 = vmatpush1.bf16.msra.mxu0 %v581
  %773 = vmatprep.subr.bf16.mxu0 0
  %774 = vmatpush1.bf16.msra.mxu0 %v582
  %775 = vmatprep.mubr.bf16.mxu0 %v230
  %776 = vmatmul.mubr.bf16.gmra.mrb[0].mxu0 %v229
  %v777 = vpop.f32.mrb[0].mxu0
  %v778 = vadd.f32 %v730, %v777
  %v779 = vpop.f32.mrb[0].mxu0
  %v780 = vpop.f32.mrb[0].mxu0
  %v781 = vadd.f32 %v733, %v780
  %v782 = vpop.f32.mrb[0].mxu0
  %783 = vmatprep.mubr.bf16.mxu0 %v239
  %784 = vmatmul.mubr.bf16.gmra.mrb[0].mxu0 %v238
  %v785 = vpop.f32.mrb[0].mxu0
  %v786 = vadd.f32 %v738, %v785
  %v787 = vpop.f32.mrb[0].mxu0
  %v788 = vpop.f32.mrb[0].mxu0
  %v789 = vpop.f32.mrb[0].mxu0
  %790 = vdwg.mxu0
  %791 = vmatprep.subr.bf16.mxu0 0
  %792 = vmatpush1.bf16.msra.mxu0 %v583
  %793 = vmatprep.subr.bf16.mxu0 0
  %794 = vmatpush1.bf16.msra.mxu0 %v584
  %795 = vmatprep.subr.bf16.mxu0 0
  %796 = vmatpush1.bf16.msra.mxu0 %v585
  %797 = vmatprep.subr.bf16.mxu0 0
  %798 = vmatpush1.bf16.msra.mxu0 %v586
  %799 = vmatprep.subr.bf16.mxu0 0
  %800 = vmatpush1.bf16.msra.mxu0 %v587
  %801 = vmatprep.subr.bf16.mxu0 0
  %802 = vmatpush1.bf16.msra.mxu0 %v588
  %803 = vmatprep.subr.bf16.mxu0 0
  %804 = vmatpush1.bf16.msra.mxu0 %v589
  %805 = vmatprep.subr.bf16.mxu0 0
  %806 = vmatpush1.bf16.msra.mxu0 %v590
  %807 = vmatprep.subr.bf16.mxu0 0
  %808 = vmatpush1.bf16.msra.mxu0 %v591
  %809 = vmatprep.subr.bf16.mxu0 0
  %810 = vmatpush1.bf16.msra.mxu0 %v592
  %811 = vmatprep.subr.bf16.mxu0 0
  %812 = vmatpush1.bf16.msra.mxu0 %v593
  %813 = vmatprep.subr.bf16.mxu0 0
  %814 = vmatpush1.bf16.msra.mxu0 %v594
  %815 = vmatprep.subr.bf16.mxu0 0
  %816 = vmatpush1.bf16.msra.mxu0 %v595
  %817 = vmatprep.subr.bf16.mxu0 0
  %818 = vmatpush1.bf16.msra.mxu0 %v596
  %819 = vmatprep.subr.bf16.mxu0 0
  %820 = vmatpush1.bf16.msra.mxu0 %v597
  %821 = vmatprep.subr.bf16.mxu0 0
  %822 = vmatpush1.bf16.msra.mxu0 %v598
  %823 = vmatprep.mubr.bf16.mxu0 %v232
  %824 = vmatmul.mubr.bf16.gmra.mrb[0].mxu0 %v231
  %v825 = vpop.f32.mrb[0].mxu0
  %v826 = vadd.f32 %v778, %v825
  %v827 = vpop.f32.mrb[0].mxu0
  %v828 = vpop.f32.mrb[0].mxu0
  %v829 = vadd.f32 %v781, %v828
  %v830 = vpop.f32.mrb[0].mxu0
  %831 = vmatprep.mubr.bf16.mxu0 %v241
  %832 = vmatmul.mubr.bf16.gmra.mrb[0].mxu0 %v240
  %v833 = vpop.f32.mrb[0].mxu0
  %v834 = vadd.f32 %v786, %v833
  %v835 = vpop.f32.mrb[0].mxu0
  %v836 = vpop.f32.mrb[0].mxu0
  %v837 = vpop.f32.mrb[0].mxu0
  %838 = vdwg.mxu0
  %839 = vmatprep.subr.bf16.mxu0 0
  %840 = vmatpush1.bf16.msra.mxu0 %v599
  %841 = vmatprep.subr.bf16.mxu0 0
  %842 = vmatpush1.bf16.msra.mxu0 %v600
  %843 = vmatprep.subr.bf16.mxu0 0
  %844 = vmatpush1.bf16.msra.mxu0 %v601
  %845 = vmatprep.subr.bf16.mxu0 0
  %846 = vmatpush1.bf16.msra.mxu0 %v602
  %847 = vmatprep.subr.bf16.mxu0 0
  %848 = vmatpush1.bf16.msra.mxu0 %v603
  %849 = vmatprep.subr.bf16.mxu0 0
  %850 = vmatpush1.bf16.msra.mxu0 %v604
  %851 = vmatprep.subr.bf16.mxu0 0
  %852 = vmatpush1.bf16.msra.mxu0 %v605
  %853 = vmatprep.subr.bf16.mxu0 0
  %854 = vmatpush1.bf16.msra.mxu0 %v606
  %855 = vmatprep.subr.bf16.mxu0 0
  %856 = vmatpush1.bf16.msra.mxu0 %v607
  %857 = vmatprep.subr.bf16.mxu0 0
  %858 = vmatpush1.bf16.msra.mxu0 %v608
  %859 = vmatprep.subr.bf16.mxu0 0
  %860 = vmatpush1.bf16.msra.mxu0 %v609
  %861 = vmatprep.subr.bf16.mxu0 0
  %862 = vmatpush1.bf16.msra.mxu0 %v610
  %863 = vmatprep.subr.bf16.mxu0 0
  %864 = vmatpush1.bf16.msra.mxu0 %v611
  %865 = vmatprep.subr.bf16.mxu0 0
  %866 = vmatpush1.bf16.msra.mxu0 %v612
  %867 = vmatprep.subr.bf16.mxu0 0
  %868 = vmatpush1.bf16.msra.mxu0 %v613
  %869 = vmatprep.subr.bf16.mxu0 0
  %870 = vmatpush1.bf16.msra.mxu0 %v614
  %871 = vmatprep.mubr.bf16.mxu0 %v234
  %872 = vmatmul.mubr.bf16.gmra.mrb[0].mxu0 %v233
  %v873 = vpop.f32.mrb[0].mxu0
  %v874 = vadd.f32 %v826, %v873
  %v875 = vpop.f32.mrb[0].mxu0
  %v876 = vpop.f32.mrb[0].mxu0
  %v877 = vadd.f32 %v829, %v876
  %v878 = vpop.f32.mrb[0].mxu0
  %879 = vmatprep.mubr.bf16.mxu0 %v243
  %880 = vmatmul.mubr.bf16.gmra.mrb[0].mxu0 %v242
  %v881 = vpop.f32.mrb[0].mxu0
  %v882 = vadd.f32 %v834, %v881
  %v883 = vpop.f32.mrb[0].mxu0
  %v884 = vpop.f32.mrb[0].mxu0
  %v885 = vpop.f32.mrb[0].mxu0
  %886 = vdwg.mxu0
  %887 = vmatprep.subr.bf16.mxu0 0
  %888 = vmatpush1.bf16.msra.mxu0 %v615
  %889 = vmatprep.subr.bf16.mxu0 0
  %890 = vmatpush1.bf16.msra.mxu0 %v616
  %891 = vmatprep.subr.bf16.mxu0 0
  %892 = vmatpush1.bf16.msra.mxu0 %v617
  %893 = vmatprep.subr.bf16.mxu0 0
  %894 = vmatpush1.bf16.msra.mxu0 %v618
  %895 = vmatprep.subr.bf16.mxu0 0
  %896 = vmatpush1.bf16.msra.mxu0 %v619
  %897 = vmatprep.subr.bf16.mxu0 0
  %898 = vmatpush1.bf16.msra.mxu0 %v620
  %899 = vmatprep.subr.bf16.mxu0 0
  %900 = vmatpush1.bf16.msra.mxu0 %v621
  %901 = vmatprep.subr.bf16.mxu0 0
  %902 = vmatpush1.bf16.msra.mxu0 %v622
  %903 = vmatprep.subr.bf16.mxu0 0
  %904 = vmatpush1.bf16.msra.mxu0 0
  %905 = vmatprep.subr.bf16.mxu0 0
  %906 = vmatpush1.bf16.msra.mxu0 0
  %907 = vmatprep.subr.bf16.mxu0 0
  %908 = vmatpush1.bf16.msra.mxu0 0
  %909 = vmatprep.subr.bf16.mxu0 0
  %910 = vmatpush1.bf16.msra.mxu0 0
  %911 = vmatprep.subr.bf16.mxu0 0
  %912 = vmatpush1.bf16.msra.mxu0 0
  %913 = vmatprep.subr.bf16.mxu0 0
  %914 = vmatpush1.bf16.msra.mxu0 0
  %915 = vmatprep.subr.bf16.mxu0 0
  %916 = vmatpush1.bf16.msra.mxu0 0
  %917 = vmatprep.subr.bf16.mxu0 0
  %918 = vmatpush1.bf16.msra.mxu0 0
  %919 = vmatprep.mubr.bf16.mxu0 0
  %920 = vmatmul.mubr.bf16.gmra.mrb[0].mxu0 %v235
  %v921 = vpop.f32.mrb[0].mxu0
  %v922 = vadd.f32 %v874, %v921
  %v923 = vpop.f32.mrb[0].mxu0
  %v924 = vpop.f32.mrb[0].mxu0
  %v925 = vadd.f32 %v877, %v924
  %v926 = vpop.f32.mrb[0].mxu0
  %927 = vmatprep.mubr.bf16.mxu0 0
  %928 = vmatmul.mubr.bf16.gmra.mrb[0].mxu0 %v244
  %v929 = vpop.f32.mrb[0].mxu0
  %v930 = vadd.f32 %v882, %v929
  %v931 = vpop.f32.mrb[0].mxu0
  %v932 = vpop.f32.mrb[0].mxu0
  %v933 = vpop.f32.mrb[0].mxu0
  %934 = vdwg.mxu0
  %v935 = vadd.f32 %v23, %v922
  %v936 = vadd.f32 %v24, %v925
  %v937 = vadd.f32 %v25, %v930
  %vm938 = vcmask 523264
  %939 = vst.msk [vmem:[#allocation2] sm:$0xff] %vm938, %v935
  %940 = vst.msk [vmem:[#allocation2 + $0x8] sm:$0xff] %vm938, %v936
  %941 = vst.msk [vmem:[#allocation2 + $0x10] sm:$0xff] %vm938, %v937
  // Predicated region
  $region18: #{_forward_impl.8} parent=0 // pred_check
    %p942 = pneg %p15
  $region19: #{_forward_impl.8} parent=0 // pred_check_branch
    %944 = sbr.rel (%p942) target = $region21
  $region20: #{_forward_impl.8} parent=0 // pred_region
    %v945 = vld [vmem:[#allocation2] sm:$0xff]
    %v946 = vld [vmem:[#allocation2 + $0x8] sm:$0xff]
    %v947 = vld [vmem:[#allocation2 + $0x10] sm:$0xff]
    %v948 = vld [vmem:[%s2] sm:$0x1]
    %v950 = vlaneseq
    %v951 = vshrl.u32 %v950, 7
    %v952 = vsub.s32 0, %v951
    %v953 = vrot.slane %v948, %v952
    %v955 = vadd.f32 %v945, %v953
    %v956 = vadd.f32 %v946, %v953
    %v957 = vadd.f32 %v947, %v953
    %v958 = vmax.f32 %v955, 0.0
    %v959 = vmax.f32 %v956, 0.0
    %v960 = vmax.f32 %v957, 0.0
    %v961 = vpack.c.bf16 %v959, %v958
    %v962 = vpack.c.bf16 %v960, %v960
    %v965 = vunpack.c.l.b16 %v961
    %v966 = vunpack.c.h.b16 %v961
    %v967 = vunpack.c.l.b16 %v962
    %v968 = vpack.c.b16 %v965, %v965
    %v969 = vpack.c.b16 %v966, %v966
    %v970 = vpack.c.b16 %v967, %v967
    %vm974 = vcmask 519168
    %975 = vst.msk [vmem:[%s3] sm:$0xf] %vm974, %v968
    %976 = vst.msk [vmem:[%s3 + $0x4] sm:$0xf] %vm974, %v969
    %977 = vst.msk [vmem:[%s3 + $0x8] sm:$0xf] %vm974, %v970
  $region21: #{_forward_impl.8} parent=0 // pred_fallthru
    _
  // Predicated region
  $region22: #{_forward_impl.8} parent=0 // pred_check
    _
  $region23: #{_forward_impl.8} parent=0 // pred_check_branch
    %979 = sbr.rel (0) target = $region25
  $region24: #{_forward_impl.8} parent=0 // pred_region
    _
  $region25: #{_forward_impl.8} parent=0 // pred_fallthru
    _
  // Predicated region
  $region26: #{_forward_impl.8} parent=0 // pred_check
    _
  $region27: #{_forward_impl.8} parent=0 // pred_check_branch
    %981 = sbr.rel (0) target = $region29
  $region28: #{_forward_impl.8} parent=0 // pred_region
    _
  $region29: #{_forward_impl.8} parent=0 // pred_fallthru
    _

// kernel: _forward_impl.9
$region0: #{_forward_impl.9}
  #allocation0 [shape = 'u32[]', space=smem, size = 0x4, offset = 0x4, fixed_abs, tag = 'smem constant byte address 0x4 - core index']
  #allocation1 [shape = 'u32[144,128]{1,0:T(1,128)}', space=vmem, size = 0x12000, scoped, tag = 'internal scratch']
  #allocation2 [shape = 'f32[8,128]{1,0:T(8,128)}', space=vmem, size = 0x1000, scoped, tag = 'scratch operand']
  %s0 = inlined_call_operand.vmem [shape: bf16[8,768], index: 0, kind: input, shape index: {}]
  %s1 = inlined_call_operand.vmem [shape: bf16[768,128], index: 1, kind: input, shape index: {}]
  %s2 = inlined_call_operand.vmem [shape: f32[1,128], index: 2, kind: input, shape index: {}]
  %s3 = inlined_call_operand.vmem [shape: f32[8,128], index: 3, kind: output, shape index: {}]
  %s4 = sld [smem:[#allocation0]]
  $region30: #{_forward_impl.9} parent=0
    _
  %s6 = ssub.s32 1, %s4
  %s7 = scalar_select 0, %s6, %s4
  // Predicated region
  $region2: #{_forward_impl.9} parent=0 // pred_check
    _
  $region3: #{_forward_impl.9} parent=0 // pred_check_branch
    %9 = sbr.rel (0) target = $region5
  $region4: #{_forward_impl.9} parent=0 // pred_region
    _
  $region5: #{_forward_impl.9} parent=0 // pred_fallthru
    _
  // Predicated region
  $region6: #{_forward_impl.9} parent=0 // pred_check
    _
  $region7: #{_forward_impl.9} parent=0 // pred_check_branch
    %11 = sbr.rel (0) target = $region9
  $region8: #{_forward_impl.9} parent=0 // pred_region
    _
  $region9: #{_forward_impl.9} parent=0 // pred_fallthru
    _
  // Predicated region
  $region10: #{_forward_impl.9} parent=0 // pred_check
    _
  $region11: #{_forward_impl.9} parent=0 // pred_check_branch
    %13 = sbr.rel (0) target = $region13
  $region12: #{_forward_impl.9} parent=0 // pred_region
    _
  $region13: #{_forward_impl.9} parent=0 // pred_fallthru
    _
  %p15 = scmp.eq.s32.totalorder 0, 0
  // Predicated region
  $region14: #{_forward_impl.9} parent=0 // pred_check
    %p16 = pneg %p15
  $region15: #{_forward_impl.9} parent=0 // pred_check_branch
    %18 = sbr.rel (%p16) target = $region17
  $region16: #{_forward_impl.9} parent=0 // pred_region
    %19 = vst [vmem:[#allocation2] sm:$0xff] 0.0
  $region17: #{_forward_impl.9} parent=0 // pred_fallthru
    _
  %v20 = vld [vmem:[#allocation2] sm:$0xff]
  %v21 = vld [vmem:[%s0] sm:$0xff]
  %v22 = vld [vmem:[%s0 + $0x8] sm:$0xff]
  %v23 = vld [vmem:[%s0 + $0x10] sm:$0xff]
  %v24 = vld [vmem:[%s1] sm:$0xf]
  %v25 = vld [vmem:[%s1 + $0x4] sm:$0xf]
  %v26 = vld [vmem:[%s1 + $0x8] sm:$0xf]
  %v27 = vld [vmem:[%s1 + $0xc] sm:$0xf]
  %v28 = vld [vmem:[%s1 + $0x10] sm:$0xf]
  %v29 = vld [vmem:[%s1 + $0x14] sm:$0xf]
  %v30 = vld [vmem:[%s1 + $0x18] sm:$0xf]
  %v31 = vld [vmem:[%s1 + $0x1c] sm:$0xf]
  %v32 = vld [vmem:[%s1 + $0x20] sm:$0xf]
  %v33 = vld [vmem:[%s1 + $0x24] sm:$0xf]
  %v34 = vld [vmem:[%s1 + $0x28] sm:$0xf]
  %v35 = vld [vmem:[%s1 + $0x2c] sm:$0xf]
  %v36 = vld [vmem:[%s1 + $0x30] sm:$0xf]
  %v37 = vld [vmem:[%s1 + $0x34] sm:$0xf]
  %v38 = vld [vmem:[%s1 + $0x38] sm:$0xf]
  %v39 = vld [vmem:[%s1 + $0x3c] sm:$0xf]
  %v40 = vld [vmem:[%s1 + $0x40] sm:$0xf]
  %v41 = vld [vmem:[%s1 + $0x44] sm:$0xf]
  %v42 = vld [vmem:[%s1 + $0x48] sm:$0xf]
  %v43 = vld [vmem:[%s1 + $0x4c] sm:$0xf]
  %v44 = vld [vmem:[%s1 + $0x50] sm:$0xf]
  %v45 = vld [vmem:[%s1 + $0x54] sm:$0xf]
  %v46 = vld [vmem:[%s1 + $0x58] sm:$0xf]
  %v47 = vld [vmem:[%s1 + $0x5c] sm:$0xf]
  %v48 = vld [vmem:[%s1 + $0x60] sm:$0xf]
  %v49 = vld [vmem:[%s1 + $0x64] sm:$0xf]
  %v50 = vld [vmem:[%s1 + $0x68] sm:$0xf]
  %v51 = vld [vmem:[%s1 + $0x6c] sm:$0xf]
  %v52 = vld [vmem:[%s1 + $0x70] sm:$0xf]
  %v53 = vld [vmem:[%s1 + $0x74] sm:$0xf]
  %v54 = vld [vmem:[%s1 + $0x78] sm:$0xf]
  %v55 = vld [vmem:[%s1 + $0x7c] sm:$0xf]
  %v56 = vld [vmem:[%s1 + $0x80] sm:$0xf]
  %v57 = vld [vmem:[%s1 + $0x84] sm:$0xf]
  %v58 = vld [vmem:[%s1 + $0x88] sm:$0xf]
  %v59 = vld [vmem:[%s1 + $0x8c] sm:$0xf]
  %v60 = vld [vmem:[%s1 + $0x90] sm:$0xf]
  %v61 = vld [vmem:[%s1 + $0x94] sm:$0xf]
  %v62 = vld [vmem:[%s1 + $0x98] sm:$0xf]
  %v63 = vld [vmem:[%s1 + $0x9c] sm:$0xf]
  %v64 = vld [vmem:[%s1 + $0xa0] sm:$0xf]
  %v65 = vld [vmem:[%s1 + $0xa4] sm:$0xf]
  %v66 = vld [vmem:[%s1 + $0xa8] sm:$0xf]
  %v67 = vld [vmem:[%s1 + $0xac] sm:$0xf]
  %v68 = vld [vmem:[%s1 + $0xb0] sm:$0xf]
  %v69 = vld [vmem:[%s1 + $0xb4] sm:$0xf]
  %v70 = vld [vmem:[%s1 + $0xb8] sm:$0xf]
  %v71 = vld [vmem:[%s1 + $0xbc] sm:$0xf]
  %v72 = vld [vmem:[%s1 + $0xc0] sm:$0xf]
  %v73 = vld [vmem:[%s1 + $0xc4] sm:$0xf]
  %v74 = vld [vmem:[%s1 + $0xc8] sm:$0xf]
  %v75 = vld [vmem:[%s1 + $0xcc] sm:$0xf]
  %v76 = vld [vmem:[%s1 + $0xd0] sm:$0xf]
  %v77 = vld [vmem:[%s1 + $0xd4] sm:$0xf]
  %v78 = vld [vmem:[%s1 + $0xd8] sm:$0xf]
  %v79 = vld [vmem:[%s1 + $0xdc] sm:$0xf]
  %v80 = vld [vmem:[%s1 + $0xe0] sm:$0xf]
  %v81 = vld [vmem:[%s1 + $0xe4] sm:$0xf]
  %v82 = vld [vmem:[%s1 + $0xe8] sm:$0xf]
  %v83 = vld [vmem:[%s1 + $0xec] sm:$0xf]
  %v84 = vld [vmem:[%s1 + $0xf0] sm:$0xf]
  %v85 = vld [vmem:[%s1 + $0xf4] sm:$0xf]
  %v86 = vld [vmem:[%s1 + $0xf8] sm:$0xf]
  %v87 = vld [vmem:[%s1 + $0xfc] sm:$0xf]
  %v88 = vld [vmem:[%s1 + $0x100] sm:$0xf]
  %v89 = vld [vmem:[%s1 + $0x104] sm:$0xf]
  %v90 = vld [vmem:[%s1 + $0x108] sm:$0xf]
  %v91 = vld [vmem:[%s1 + $0x10c] sm:$0xf]
  %v92 = vld [vmem:[%s1 + $0x110] sm:$0xf]
  %v93 = vld [vmem:[%s1 + $0x114] sm:$0xf]
  %v94 = vld [vmem:[%s1 + $0x118] sm:$0xf]
  %v95 = vld [vmem:[%s1 + $0x11c] sm:$0xf]
  %v96 = vld [vmem:[%s1 + $0x120] sm:$0xf]
  %v97 = vld [vmem:[%s1 + $0x124] sm:$0xf]
  %v98 = vld [vmem:[%s1 + $0x128] sm:$0xf]
  %v99 = vld [vmem:[%s1 + $0x12c] sm:$0xf]
  %v100 = vld [vmem:[%s1 + $0x130] sm:$0xf]
  %v101 = vld [vmem:[%s1 + $0x134] sm:$0xf]
  %v102 = vld [vmem:[%s1 + $0x138] sm:$0xf]
  %v103 = vld [vmem:[%s1 + $0x13c] sm:$0xf]
  %v104 = vld [vmem:[%s1 + $0x140] sm:$0xf]
  %v105 = vld [vmem:[%s1 + $0x144] sm:$0xf]
  %v106 = vld [vmem:[%s1 + $0x148] sm:$0xf]
  %v107 = vld [vmem:[%s1 + $0x14c] sm:$0xf]
  %v108 = vld [vmem:[%s1 + $0x150] sm:$0xf]
  %v109 = vld [vmem:[%s1 + $0x154] sm:$0xf]
  %v110 = vld [vmem:[%s1 + $0x158] sm:$0xf]
  %v111 = vld [vmem:[%s1 + $0x15c] sm:$0xf]
  %v112 = vld [vmem:[%s1 + $0x160] sm:$0xf]
  %v113 = vld [vmem:[%s1 + $0x164] sm:$0xf]
  %v114 = vld [vmem:[%s1 + $0x168] sm:$0xf]
  %v115 = vld [vmem:[%s1 + $0x16c] sm:$0xf]
  %v116 = vld [vmem:[%s1 + $0x170] sm:$0xf]
  %v117 = vld [vmem:[%s1 + $0x174] sm:$0xf]
  %v118 = vld [vmem:[%s1 + $0x178] sm:$0xf]
  %v119 = vld [vmem:[%s1 + $0x17c] sm:$0xf]
  %v123 = vunpack.c.l.b16 %v21
  %v124 = vunpack.c.h.b16 %v21
  %v125 = vunpack.c.l.b16 %v22
  %v126 = vunpack.c.h.b16 %v22
  %v127 = vunpack.c.l.b16 %v23
  %v128 = vunpack.c.h.b16 %v23
  %v129 = vpack.c.b16 %v123, %v123
  %v130 = vpack.c.b16 %v124, %v124
  %v131 = vpack.c.b16 %v125, %v125
  %v132 = vpack.c.b16 %v126, %v126
  %v133 = vpack.c.b16 %v127, %v127
  %v134 = vpack.c.b16 %v128, %v128
  %v237 = vunpack.c.l.b16 %v24
  %v238 = vunpack.c.l.b16 %v25
  %v239 = vunpack.c.l.b16 %v26
  %v240 = vunpack.c.l.b16 %v27
  %v241 = vunpack.c.l.b16 %v28
  %v242 = vunpack.c.l.b16 %v29
  %v243 = vunpack.c.l.b16 %v30
  %v244 = vunpack.c.l.b16 %v31
  %v245 = vunpack.c.l.b16 %v32
  %v246 = vunpack.c.l.b16 %v33
  %v247 = vunpack.c.l.b16 %v34
  %v248 = vunpack.c.l.b16 %v35
  %v249 = vunpack.c.l.b16 %v36
  %v250 = vunpack.c.l.b16 %v37
  %v251 = vunpack.c.l.b16 %v38
  %v252 = vunpack.c.l.b16 %v39
  %v253 = vunpack.c.l.b16 %v40
  %v254 = vunpack.c.l.b16 %v41
  %v255 = vunpack.c.l.b16 %v42
  %v256 = vunpack.c.l.b16 %v43
  %v257 = vunpack.c.l.b16 %v44
  %v258 = vunpack.c.l.b16 %v45
  %v259 = vunpack.c.l.b16 %v46
  %v260 = vunpack.c.l.b16 %v47
  %v261 = vunpack.c.l.b16 %v48
  %v262 = vunpack.c.l.b16 %v49
  %v263 = vunpack.c.l.b16 %v50
  %v264 = vunpack.c.l.b16 %v51
  %v265 = vunpack.c.l.b16 %v52
  %v266 = vunpack.c.l.b16 %v53
  %v267 = vunpack.c.l.b16 %v54
  %v268 = vunpack.c.l.b16 %v55
  %v269 = vunpack.c.l.b16 %v56
  %v270 = vunpack.c.l.b16 %v57
  %v271 = vunpack.c.l.b16 %v58
  %v272 = vunpack.c.l.b16 %v59
  %v273 = vunpack.c.l.b16 %v60
  %v274 = vunpack.c.l.b16 %v61
  %v275 = vunpack.c.l.b16 %v62
  %v276 = vunpack.c.l.b16 %v63
  %v277 = vunpack.c.l.b16 %v64
  %v278 = vunpack.c.l.b16 %v65
  %v279 = vunpack.c.l.b16 %v66
  %v280 = vunpack.c.l.b16 %v67
  %v281 = vunpack.c.l.b16 %v68
  %v282 = vunpack.c.l.b16 %v69
  %v283 = vunpack.c.l.b16 %v70
  %v284 = vunpack.c.l.b16 %v71
  %v285 = vunpack.c.l.b16 %v72
  %v286 = vunpack.c.l.b16 %v73
  %v287 = vunpack.c.l.b16 %v74
  %v288 = vunpack.c.l.b16 %v75
  %v289 = vunpack.c.l.b16 %v76
  %v290 = vunpack.c.l.b16 %v77
  %v291 = vunpack.c.l.b16 %v78
  %v292 = vunpack.c.l.b16 %v79
  %v293 = vunpack.c.l.b16 %v80
  %v294 = vunpack.c.l.b16 %v81
  %v295 = vunpack.c.l.b16 %v82
  %v296 = vunpack.c.l.b16 %v83
  %v297 = vunpack.c.l.b16 %v84
  %v298 = vunpack.c.l.b16 %v85
  %v299 = vunpack.c.l.b16 %v86
  %v300 = vunpack.c.l.b16 %v87
  %v301 = vunpack.c.l.b16 %v88
  %v302 = vunpack.c.l.b16 %v89
  %v303 = vunpack.c.l.b16 %v90
  %v304 = vunpack.c.l.b16 %v91
  %v305 = vunpack.c.l.b16 %v92
  %v306 = vunpack.c.l.b16 %v93
  %v307 = vunpack.c.l.b16 %v94
  %v308 = vunpack.c.l.b16 %v95
  %v309 = vunpack.c.l.b16 %v96
  %v310 = vunpack.c.l.b16 %v97
  %v311 = vunpack.c.l.b16 %v98
  %v312 = vunpack.c.l.b16 %v99
  %v313 = vunpack.c.l.b16 %v100
  %v314 = vunpack.c.l.b16 %v101
  %v315 = vunpack.c.l.b16 %v102
  %v316 = vunpack.c.l.b16 %v103
  %v317 = vunpack.c.l.b16 %v104
  %v318 = vunpack.c.l.b16 %v105
  %v319 = vunpack.c.l.b16 %v106
  %v320 = vunpack.c.l.b16 %v107
  %v321 = vunpack.c.l.b16 %v108
  %v322 = vunpack.c.l.b16 %v109
  %v323 = vunpack.c.l.b16 %v110
  %v324 = vunpack.c.l.b16 %v111
  %v325 = vunpack.c.l.b16 %v112
  %v326 = vunpack.c.l.b16 %v113
  %v327 = vunpack.c.l.b16 %v114
  %v328 = vunpack.c.l.b16 %v115
  %v329 = vunpack.c.l.b16 %v116
  %v330 = vunpack.c.l.b16 %v117
  %v331 = vunpack.c.l.b16 %v118
  %v332 = vunpack.c.l.b16 %v119
  %v333 = vpack.c.b16 %v238, %v237
  %v334 = vpack.c.b16 %v240, %v239
  %v335 = vpack.c.b16 %v242, %v241
  %v336 = vpack.c.b16 %v244, %v243
  %v337 = vpack.c.b16 %v246, %v245
  %v338 = vpack.c.b16 %v248, %v247
  %v339 = vpack.c.b16 %v250, %v249
  %v340 = vpack.c.b16 %v252, %v251
  %v341 = vpack.c.b16 %v254, %v253
  %v342 = vpack.c.b16 %v256, %v255
  %v343 = vpack.c.b16 %v258, %v257
  %v344 = vpack.c.b16 %v260, %v259
  %v345 = vpack.c.b16 %v262, %v261
  %v346 = vpack.c.b16 %v264, %v263
  %v347 = vpack.c.b16 %v266, %v265
  %v348 = vpack.c.b16 %v268, %v267
  %v349 = vpack.c.b16 %v270, %v269
  %v350 = vpack.c.b16 %v272, %v271
  %v351 = vpack.c.b16 %v274, %v273
  %v352 = vpack.c.b16 %v276, %v275
  %v353 = vpack.c.b16 %v278, %v277
  %v354 = vpack.c.b16 %v280, %v279
  %v355 = vpack.c.b16 %v282, %v281
  %v356 = vpack.c.b16 %v284, %v283
  %v357 = vpack.c.b16 %v286, %v285
  %v358 = vpack.c.b16 %v288, %v287
  %v359 = vpack.c.b16 %v290, %v289
  %v360 = vpack.c.b16 %v292, %v291
  %v361 = vpack.c.b16 %v294, %v293
  %v362 = vpack.c.b16 %v296, %v295
  %v363 = vpack.c.b16 %v298, %v297
  %v364 = vpack.c.b16 %v300, %v299
  %v365 = vpack.c.b16 %v302, %v301
  %v366 = vpack.c.b16 %v304, %v303
  %v367 = vpack.c.b16 %v306, %v305
  %v368 = vpack.c.b16 %v308, %v307
  %v369 = vpack.c.b16 %v310, %v309
  %v370 = vpack.c.b16 %v312, %v311
  %v371 = vpack.c.b16 %v314, %v313
  %v372 = vpack.c.b16 %v316, %v315
  %v373 = vpack.c.b16 %v318, %v317
  %v374 = vpack.c.b16 %v320, %v319
  %v375 = vpack.c.b16 %v322, %v321
  %v376 = vpack.c.b16 %v324, %v323
  %v377 = vpack.c.b16 %v326, %v325
  %v378 = vpack.c.b16 %v328, %v327
  %v379 = vpack.c.b16 %v330, %v329
  %v380 = vpack.c.b16 %v332, %v331
  %429 = vmatprep.subr.bf16.mxu0 0
  %430 = vmatpush1.bf16.msra.mxu0 %v333
  %431 = vmatprep.subr.bf16.mxu0 0
  %432 = vmatpush1.bf16.msra.mxu0 %v334
  %433 = vmatprep.subr.bf16.mxu0 0
  %434 = vmatpush1.bf16.msra.mxu0 %v335
  %435 = vmatprep.subr.bf16.mxu0 0
  %436 = vmatpush1.bf16.msra.mxu0 %v336
  %437 = vmatprep.subr.bf16.mxu0 0
  %438 = vmatpush1.bf16.msra.mxu0 %v337
  %439 = vmatprep.subr.bf16.mxu0 0
  %440 = vmatpush1.bf16.msra.mxu0 %v338
  %441 = vmatprep.subr.bf16.mxu0 0
  %442 = vmatpush1.bf16.msra.mxu0 %v339
  %443 = vmatprep.subr.bf16.mxu0 0
  %444 = vmatpush1.bf16.msra.mxu0 %v340
  %445 = vmatprep.subr.bf16.mxu0 0
  %446 = vmatpush1.bf16.msra.mxu0 %v341
  %447 = vmatprep.subr.bf16.mxu0 0
  %448 = vmatpush1.bf16.msra.mxu0 %v342
  %449 = vmatprep.subr.bf16.mxu0 0
  %450 = vmatpush1.bf16.msra.mxu0 %v343
  %451 = vmatprep.subr.bf16.mxu0 0
  %452 = vmatpush1.bf16.msra.mxu0 %v344
  %453 = vmatprep.subr.bf16.mxu0 0
  %454 = vmatpush1.bf16.msra.mxu0 %v345
  %455 = vmatprep.subr.bf16.mxu0 0
  %456 = vmatpush1.bf16.msra.mxu0 %v346
  %457 = vmatprep.subr.bf16.mxu0 0
  %458 = vmatpush1.bf16.msra.mxu0 %v347
  %459 = vmatprep.subr.bf16.mxu0 0
  %460 = vmatpush1.bf16.msra.mxu0 %v348
  %461 = vmatprep.mubr.bf16.mxu0 %v130
  %462 = vmatmul.mubr.bf16.gmra.mrb[0].mxu0 %v129
  %v463 = vpop.f32.mrb[0].mxu0
  %v464 = vadd.f32 0.0, %v463
  %v465 = vpop.f32.mrb[0].mxu0
  %v466 = vpop.f32.mrb[0].mxu0
  %v467 = vpop.f32.mrb[0].mxu0
  %468 = vdwg.mxu0
  %469 = vmatprep.subr.bf16.mxu0 0
  %470 = vmatpush1.bf16.msra.mxu0 %v349
  %471 = vmatprep.subr.bf16.mxu0 0
  %472 = vmatpush1.bf16.msra.mxu0 %v350
  %473 = vmatprep.subr.bf16.mxu0 0
  %474 = vmatpush1.bf16.msra.mxu0 %v351
  %475 = vmatprep.subr.bf16.mxu0 0
  %476 = vmatpush1.bf16.msra.mxu0 %v352
  %477 = vmatprep.subr.bf16.mxu0 0
  %478 = vmatpush1.bf16.msra.mxu0 %v353
  %479 = vmatprep.subr.bf16.mxu0 0
  %480 = vmatpush1.bf16.msra.mxu0 %v354
  %481 = vmatprep.subr.bf16.mxu0 0
  %482 = vmatpush1.bf16.msra.mxu0 %v355
  %483 = vmatprep.subr.bf16.mxu0 0
  %484 = vmatpush1.bf16.msra.mxu0 %v356
  %485 = vmatprep.subr.bf16.mxu0 0
  %486 = vmatpush1.bf16.msra.mxu0 %v357
  %487 = vmatprep.subr.bf16.mxu0 0
  %488 = vmatpush1.bf16.msra.mxu0 %v358
  %489 = vmatprep.subr.bf16.mxu0 0
  %490 = vmatpush1.bf16.msra.mxu0 %v359
  %491 = vmatprep.subr.bf16.mxu0 0
  %492 = vmatpush1.bf16.msra.mxu0 %v360
  %493 = vmatprep.subr.bf16.mxu0 0
  %494 = vmatpush1.bf16.msra.mxu0 %v361
  %495 = vmatprep.subr.bf16.mxu0 0
  %496 = vmatpush1.bf16.msra.mxu0 %v362
  %497 = vmatprep.subr.bf16.mxu0 0
  %498 = vmatpush1.bf16.msra.mxu0 %v363
  %499 = vmatprep.subr.bf16.mxu0 0
  %500 = vmatpush1.bf16.msra.mxu0 %v364
  %501 = vmatprep.mubr.bf16.mxu0 %v132
  %502 = vmatmul.mubr.bf16.gmra.mrb[0].mxu0 %v131
  %v503 = vpop.f32.mrb[0].mxu0
  %v504 = vadd.f32 %v464, %v503
  %v505 = vpop.f32.mrb[0].mxu0
  %v506 = vpop.f32.mrb[0].mxu0
  %v507 = vpop.f32.mrb[0].mxu0
  %508 = vdwg.mxu0
  %509 = vmatprep.subr.bf16.mxu0 0
  %510 = vmatpush1.bf16.msra.mxu0 %v365
  %511 = vmatprep.subr.bf16.mxu0 0
  %512 = vmatpush1.bf16.msra.mxu0 %v366
  %513 = vmatprep.subr.bf16.mxu0 0
  %514 = vmatpush1.bf16.msra.mxu0 %v367
  %515 = vmatprep.subr.bf16.mxu0 0
  %516 = vmatpush1.bf16.msra.mxu0 %v368
  %517 = vmatprep.subr.bf16.mxu0 0
  %518 = vmatpush1.bf16.msra.mxu0 %v369
  %519 = vmatprep.subr.bf16.mxu0 0
  %520 = vmatpush1.bf16.msra.mxu0 %v370
  %521 = vmatprep.subr.bf16.mxu0 0
  %522 = vmatpush1.bf16.msra.mxu0 %v371
  %523 = vmatprep.subr.bf16.mxu0 0
  %524 = vmatpush1.bf16.msra.mxu0 %v372
  %525 = vmatprep.subr.bf16.mxu0 0
  %526 = vmatpush1.bf16.msra.mxu0 %v373
  %527 = vmatprep.subr.bf16.mxu0 0
  %528 = vmatpush1.bf16.msra.mxu0 %v374
  %529 = vmatprep.subr.bf16.mxu0 0
  %530 = vmatpush1.bf16.msra.mxu0 %v375
  %531 = vmatprep.subr.bf16.mxu0 0
  %532 = vmatpush1.bf16.msra.mxu0 %v376
  %533 = vmatprep.subr.bf16.mxu0 0
  %534 = vmatpush1.bf16.msra.mxu0 %v377
  %535 = vmatprep.subr.bf16.mxu0 0
  %536 = vmatpush1.bf16.msra.mxu0 %v378
  %537 = vmatprep.subr.bf16.mxu0 0
  %538 = vmatpush1.bf16.msra.mxu0 %v379
  %539 = vmatprep.subr.bf16.mxu0 0
  %540 = vmatpush1.bf16.msra.mxu0 %v380
  %541 = vmatprep.mubr.bf16.mxu0 %v134
  %542 = vmatmul.mubr.bf16.gmra.mrb[0].mxu0 %v133
  %v543 = vpop.f32.mrb[0].mxu0
  %v544 = vadd.f32 %v504, %v543
  %v545 = vpop.f32.mrb[0].mxu0
  %v546 = vpop.f32.mrb[0].mxu0
  %v547 = vpop.f32.mrb[0].mxu0
  %548 = vdwg.mxu0
  %v549 = vadd.f32 %v20, %v544
  %550 = vst [vmem:[#allocation2] sm:$0xff] %v549
  // Predicated region
  $region18: #{_forward_impl.9} parent=0 // pred_check
    %p551 = pneg %p15
  $region19: #{_forward_impl.9} parent=0 // pred_check_branch
    %553 = sbr.rel (%p551) target = $region21
  $region20: #{_forward_impl.9} parent=0 // pred_region
    %v554 = vld [vmem:[#allocation2] sm:$0xff]
    %v555 = vld [vmem:[%s2] sm:$0x1]
    %v557 = vlaneseq
    %v558 = vshrl.u32 %v557, 7
    %v559 = vsub.s32 0, %v558
    %v560 = vrot.slane %v555, %v559
    %v562 = vadd.f32 %v554, %v560
    %v563 = vtanh.pop %v562
    %564 = vst [vmem:[%s3] sm:$0xff] %v563
  $region21: #{_forward_impl.9} parent=0 // pred_fallthru
    _
  // Predicated region
  $region22: #{_forward_impl.9} parent=0 // pred_check
    _
  $region23: #{_forward_impl.9} parent=0 // pred_check_branch
    %566 = sbr.rel (0) target = $region25
  $region24: #{_forward_impl.9} parent=0 // pred_region
    _
  $region25: #{_forward_impl.9} parent=0 // pred_fallthru
    _
  // Predicated region
  $region26: #{_forward_impl.9} parent=0 // pred_check
    _
  $region27: #{_forward_impl.9} parent=0 // pred_check_branch
    %568 = sbr.rel (0) target = $region29
  $region28: #{_forward_impl.9} parent=0 // pred_region
    _
  $region29: #{_forward_impl.9} parent=0 // pred_fallthru
    _

</llo_original>
